<compile_context>
chip_gen: v5e
topology: v5e:2x2
jax: 0.10.0
libtpu: 0.0.40
codegen_flags: <defaults>
</compile_context>

<pallas_src>
import functools

import jax
import jax.numpy as jnp
from jax.experimental import pallas as pl
from jax.experimental.pallas import tpu as pltpu

_EPS = 1e-5        # PyTorch InstanceNorm2d default eps
_COL_OFF = 8       # sublane-aligned column offset of the interior in scratch


def _reflect_pad_into(pad_ref, v, H, W, p):
    """Write reflection-padded `v` (H, W, C) into the bf16 scratch.

    Scratch layout: rows 0..H+2p-1 are the padded rows; the interior columns
    live at [_COL_OFF, _COL_OFF+W) (aligned store), the p reflected halo
    columns sit immediately left/right of the interior (narrow stores).
    """
    vb = v.astype(pad_ref.dtype)
    co = _COL_OFF
    # Interior: full-image, sublane-aligned store.
    pad_ref[p:H + p, co:co + W, :] = vb
    # Left / right reflected halo columns (1 column each -> tiny stores).
    for i in range(p):
        pad_ref[p:H + p, co - 1 - i:co - i, :] = vb[:, i + 1:i + 2, :]
        pad_ref[p:H + p, co + W + i:co + W + i + 1, :] = vb[:, W - 2 - i:W - 1 - i, :]
    # Top / bottom reflected rows (copied after column halos -> corners ok).
    for i in range(p):
        pad_ref[p - 1 - i:p - i, :, :] = pad_ref[p + 1 + i:p + 2 + i, :, :]
        pad_ref[H + p + i:H + p + i + 1, :, :] = pad_ref[H + p - 2 - i:H + p - 1 - i, :, :]


def _conv_instnorm(pad_ref, w_ref, gamma, beta, *, H, W, C, K):
    """VALID KxK conv on the padded bf16 scratch + instance norm + affine.

    Conv = K*K per-tap matmuls: (H*W, C)_bf16 x (C, C)_bf16 accumulated in
    f32 on the MXU.  Conv bias is omitted (cancels under instance norm).
    Returns (H*W, C) float32.
    """
    p = K // 2
    co = _COL_OFF
    HW = H * W
    acc = jnp.zeros((HW, C), jnp.float32)
    for kh in range(K):
        for kw in range(K):
            c0 = co - p + kw
            tap = pad_ref[kh:kh + H, c0:c0 + W, :]            # (H, W, C) bf16
            acc = acc + jnp.dot(tap.reshape(HW, C), w_ref[kh * K + kw],
                                preferred_element_type=jnp.float32)
    # Instance norm (biased variance, PyTorch semantics), single pass in f32.
    inv_hw = 1.0 / HW
    s = jnp.sum(acc, axis=0, keepdims=True)
    ss = jnp.sum(acc * acc, axis=0, keepdims=True)
    mean = s * inv_hw
    var = jnp.maximum(ss * inv_hw - mean * mean, 0.0)
    y = (acc - mean) * jax.lax.rsqrt(var + _EPS)
    return y * gamma + beta


def _residual_kernel(x_ref, w1_ref, w2_ref, g1_ref, b1_ref, g2_ref, b2_ref,
                     out_ref, pad_ref, *, H, W, C, K):
    """Full ResidualLayer forward for one batch sample, entirely in VMEM."""
    p = K // 2
    x = x_ref[0]                                              # (H, W, C)

    # ----- stage 1: reflect-pad -> conv1 -> IN -> ReLU -----------------------
    _reflect_pad_into(pad_ref, x, H, W, p)
    y1 = _conv_instnorm(pad_ref, w1_ref,
                        g1_ref[...].astype(jnp.float32),
                        b1_ref[...].astype(jnp.float32),
                        H=H, W=W, C=C, K=K)
    y1 = jnp.maximum(y1, 0.0).reshape(H, W, C)

    # ----- stage 2: reflect-pad -> conv2 -> IN -> + identity -----------------
    _reflect_pad_into(pad_ref, y1, H, W, p)
    y2 = _conv_instnorm(pad_ref, w2_ref,
                        g2_ref[...].astype(jnp.float32),
                        b2_ref[...].astype(jnp.float32),
                        H=H, W=W, C=C, K=K)
    out = y2.reshape(H, W, C) + x.astype(jnp.float32)
    out_ref[0] = out.astype(out_ref.dtype)


def _pad_last(a, cp):
    pad = [(0, 0)] * (a.ndim - 1) + [(0, cp - a.shape[-1])]
    return jnp.pad(a, pad)


def _prep_w(w, C, Cp):
    """HWIO (K, K, C, C) -> (K*K, Cp, Cp) bf16, zero-padded channels."""
    K = w.shape[0]
    w = jnp.pad(w, ((0, 0), (0, 0), (0, Cp - C), (0, Cp - C)))
    return w.reshape(K * K, Cp, Cp).astype(jnp.bfloat16)


def _vmem_limit_bytes():
    try:
        cap = pltpu.get_tpu_info().vmem_capacity_bytes
        return int(0.85 * cap)           # leave headroom for compiler scratch
    except Exception:
        return None                      # fall back to the compiler default


def residual_layer_nhwc(x, params):
    """ResidualLayer forward on NHWC input (N, H, W, C); returns NHWC.

    In a stacked residual trunk, keep activations NHWC (and channel-padded to
    a multiple of 128) across blocks so the pad/slice below happens only at
    network entry/exit.
    """
    N, H, W, C = x.shape
    K = params["w1"].shape[0]
    p = K // 2
    Hp = H + 2 * p
    Wb = W + 2 * _COL_OFF                                   # aligned scratch width
    Cp = ((C + 127) // 128) * 128                           # lane-dense channels

    xp = _pad_last(x, Cp)
    w1 = _prep_w(params["w1"], C, Cp)
    w2 = _prep_w(params["w2"], C, Cp)
    g1 = _pad_last(params["g1"], Cp).reshape(1, Cp).astype(jnp.float32)
    bt1 = _pad_last(params["bt1"], Cp).reshape(1, Cp).astype(jnp.float32)
    g2 = _pad_last(params["g2"], Cp).reshape(1, Cp).astype(jnp.float32)
    bt2 = _pad_last(params["bt2"], Cp).reshape(1, Cp).astype(jnp.float32)

    out = pl.pallas_call(
        functools.partial(_residual_kernel, H=H, W=W, C=Cp, K=K),
        out_shape=jax.ShapeDtypeStruct((N, H, W, Cp), x.dtype),
        grid_spec=pltpu.PrefetchScalarGridSpec(
            num_scalar_prefetch=0,
            grid=(N,),
            in_specs=[
                pl.BlockSpec((1, H, W, Cp), lambda n: (n, 0, 0, 0)),   # x
                pl.BlockSpec((K * K, Cp, Cp), lambda n: (0, 0, 0)),    # w1 (bf16)
                pl.BlockSpec((K * K, Cp, Cp), lambda n: (0, 0, 0)),    # w2 (bf16)
                pl.BlockSpec((1, Cp), lambda n: (0, 0)),               # gamma1
                pl.BlockSpec((1, Cp), lambda n: (0, 0)),               # beta1
                pl.BlockSpec((1, Cp), lambda n: (0, 0)),               # gamma2
                pl.BlockSpec((1, Cp), lambda n: (0, 0)),               # beta2
            ],
            out_specs=pl.BlockSpec((1, H, W, Cp), lambda n: (n, 0, 0, 0)),
            # bf16 reflect-pad scratch, reused by both conv stages.
            scratch_shapes=[pltpu.VMEM((Hp, Wb, Cp), jnp.bfloat16)],
        ),
        compiler_params=pltpu.CompilerParams(
            dimension_semantics=("parallel",),
            vmem_limit_bytes=_vmem_limit_bytes(),
        ),
    )(xp, w1, w2, g1, bt1, g2, bt2)

    return out[..., :C]                                     # drop channel padding


def residual_layer(x_nchw, params):
    """PyTorch-compatible NCHW wrapper around the NHWC Pallas core."""
    x = jnp.transpose(x_nchw, (0, 2, 3, 1))                 # NCHW -> NHWC
    out = residual_layer_nhwc(x, params)
    return jnp.transpose(out, (0, 3, 1, 2))                 # NHWC -> NCHW


# ------------------------- pure-JAX reference (for checking) -----------------
def _ref_block(x, w, b, gamma, beta, relu, residual):
    p = w.shape[0] // 2
    xp = jnp.pad(x, ((0, 0), (p, p), (p, p), (0, 0)), mode="reflect")
    y = jax.lax.conv_general_dilated(
        xp, w, window_strides=(1, 1), padding="VALID",
        dimension_numbers=("NHWC", "HWIO", "NHWC"))
    y = y + b
    mean = jnp.mean(y, axis=(1, 2), keepdims=True)
    var = jnp.var(y, axis=(1, 2), keepdims=True)
    y = (y - mean) * jax.lax.rsqrt(var + _EPS) * gamma + beta
    if relu:
        y = jnp.maximum(y, 0.0)
    if residual is not None:
        y = y + residual
    return y


def residual_layer_ref(x_nchw, params):
    x = jnp.transpose(x_nchw, (0, 2, 3, 1))
    h = _ref_block(x, params["w1"], params["b1"], params["g1"], params["bt1"],
                   relu=True, residual=None)
    out = _ref_block(h, params["w2"], params["b2"], params["g2"], params["bt2"],
                     relu=False, residual=x)
    return jnp.transpose(out, (0, 3, 1, 2))


if __name__ == "__main__":
    key = jax.random.PRNGKey(0)
    N, C, H, W = 2, 8, 16, 16   # small test shapes; module default channels=128 also works
    K = 3

    ks = jax.random.split(key, 9)
    x = jax.random.normal(ks[0], (N, C, H, W), jnp.float32)

    params = {
        # conv weights in HWIO (K, K, Cin, Cout); deterministic synthetic init.
        "w1": jax.random.normal(ks[1], (K, K, C, C), jnp.float32) * 0.1,
        "b1": jax.random.normal(ks[2], (C,), jnp.float32) * 0.1,
        "g1": jnp.ones((C,), jnp.float32) + 0.1 * jax.random.normal(ks[3], (C,), jnp.float32),
        "bt1": 0.1 * jax.random.normal(ks[4], (C,), jnp.float32),
        "w2": jax.random.normal(ks[5], (K, K, C, C), jnp.float32) * 0.1,
        "b2": jax.random.normal(ks[6], (C,), jnp.float32) * 0.1,
        "g2": jnp.ones((C,), jnp.float32) + 0.1 * jax.random.normal(ks[7], (C,), jnp.float32),
        "bt2": 0.1 * jax.random.normal(ks[8], (C,), jnp.float32),
    }

    out = jax.block_until_ready(residual_layer(x, params))
    ref = jax.block_until_ready(residual_layer_ref(x, params))
    assert out.shape == (N, C, H, W)
    err = jnp.max(jnp.abs(out - ref))
    # bf16 MXU operands (inputs, weights, inter-stage activation) vs. an f32
    # reference -> loosen tolerance accordingly.
    assert jnp.allclose(out, ref, rtol=5e-2, atol=5e-2), f"max abs err {err}"

    print("KERNEL_OK")
</pallas_src>

<mosaic_0001>
module attributes {stable_mosaic.version = 11 : i64} {
  func.func @_residual_kernel(%arg0: i32, %arg1: memref<1x16x16x128xf32, #tpu.memory_space<vmem>>, %arg2: memref<9x128x128xbf16, #tpu.memory_space<vmem>>, %arg3: memref<9x128x128xbf16, #tpu.memory_space<vmem>>, %arg4: memref<1x128xf32, #tpu.memory_space<vmem>>, %arg5: memref<1x128xf32, #tpu.memory_space<vmem>>, %arg6: memref<1x128xf32, #tpu.memory_space<vmem>>, %arg7: memref<1x128xf32, #tpu.memory_space<vmem>>, %arg8: memref<1x16x16x128xf32, #tpu.memory_space<vmem>>, %arg9: memref<18x32x128xbf16, #tpu.memory_space<vmem>>) attributes {dimension_semantics = [#tpu.dimension_semantics<parallel>], iteration_bounds = array<i64: 2>, scalar_prefetch = 0 : i64, scratch_operands = 1 : i64, tpu.core_type = #tpu.core_type<tc>, window_params = [{transform_indices = @transform_0, window_bounds = array<i64: 1, 16, 16, 128>}, {pipeline_mode = #tpu.pipeline_mode<synchronous>, transform_indices = @transform_1, window_bounds = array<i64: 9, 128, 128>}, {pipeline_mode = #tpu.pipeline_mode<synchronous>, transform_indices = @transform_2, window_bounds = array<i64: 9, 128, 128>}, {pipeline_mode = #tpu.pipeline_mode<synchronous>, transform_indices = @transform_3, window_bounds = array<i64: 1, 128>}, {pipeline_mode = #tpu.pipeline_mode<synchronous>, transform_indices = @transform_4, window_bounds = array<i64: 1, 128>}, {pipeline_mode = #tpu.pipeline_mode<synchronous>, transform_indices = @transform_5, window_bounds = array<i64: 1, 128>}, {pipeline_mode = #tpu.pipeline_mode<synchronous>, transform_indices = @transform_6, window_bounds = array<i64: 1, 128>}, {transform_indices = @transform_7, window_bounds = array<i64: 1, 16, 16, 128>}]} {
    %c0 = arith.constant 0 : index
    %c0_0 = arith.constant 0 : index
    %c0_1 = arith.constant 0 : index
    %c0_2 = arith.constant 0 : index
    %0 = vector.load %arg1[%c0, %c0_0, %c0_1, %c0_2] : memref<1x16x16x128xf32, #tpu.memory_space<vmem>>, vector<1x16x16x128xf32>
    %1 = vector.shape_cast %0 : vector<1x16x16x128xf32> to vector<16x16x128xf32>
    %2 = arith.truncf %1 : vector<16x16x128xf32> to vector<16x16x128xbf16>
    %c1 = arith.constant 1 : index
    %c8 = arith.constant 8 : index
    %c0_3 = arith.constant 0 : index
    %3 = vector.load %arg9[%c1, %c8, %c0_3] : memref<18x32x128xbf16, #tpu.memory_space<vmem>>, vector<16x16x128xbf16>
    tpu.vector_store %arg9[%c1, %c8, %c0_3], %2 {strides = array<i32>} : memref<18x32x128xbf16, #tpu.memory_space<vmem>>, vector<16x16x128xbf16>,
    %4 = vector.extract_strided_slice %2 {offsets = [0, 1, 0], sizes = [16, 1, 128], strides = [1, 1, 1]} : vector<16x16x128xbf16> to vector<16x1x128xbf16>
    %c1_4 = arith.constant 1 : index
    %c7 = arith.constant 7 : index
    %c0_5 = arith.constant 0 : index
    %5 = vector.load %arg9[%c1_4, %c7, %c0_5] : memref<18x32x128xbf16, #tpu.memory_space<vmem>>, vector<16x1x128xbf16>
    tpu.vector_store %arg9[%c1_4, %c7, %c0_5], %4 {strides = array<i32>} : memref<18x32x128xbf16, #tpu.memory_space<vmem>>, vector<16x1x128xbf16>,
    %6 = vector.extract_strided_slice %2 {offsets = [0, 14, 0], sizes = [16, 1, 128], strides = [1, 1, 1]} : vector<16x16x128xbf16> to vector<16x1x128xbf16>
    %c1_6 = arith.constant 1 : index
    %c24 = arith.constant 24 : index
    %c0_7 = arith.constant 0 : index
    %7 = vector.load %arg9[%c1_6, %c24, %c0_7] : memref<18x32x128xbf16, #tpu.memory_space<vmem>>, vector<16x1x128xbf16>
    tpu.vector_store %arg9[%c1_6, %c24, %c0_7], %6 {strides = array<i32>} : memref<18x32x128xbf16, #tpu.memory_space<vmem>>, vector<16x1x128xbf16>,
    %c2 = arith.constant 2 : index
    %c0_8 = arith.constant 0 : index
    %c0_9 = arith.constant 0 : index
    %8 = vector.load %arg9[%c2, %c0_8, %c0_9] : memref<18x32x128xbf16, #tpu.memory_space<vmem>>, vector<1x32x128xbf16>
    %c0_10 = arith.constant 0 : index
    %c0_11 = arith.constant 0 : index
    %c0_12 = arith.constant 0 : index
    %9 = vector.load %arg9[%c0_10, %c0_11, %c0_12] : memref<18x32x128xbf16, #tpu.memory_space<vmem>>, vector<1x32x128xbf16>
    tpu.vector_store %arg9[%c0_10, %c0_11, %c0_12], %8 {strides = array<i32>} : memref<18x32x128xbf16, #tpu.memory_space<vmem>>, vector<1x32x128xbf16>,
    %c15 = arith.constant 15 : index
    %c0_13 = arith.constant 0 : index
    %c0_14 = arith.constant 0 : index
    %10 = vector.load %arg9[%c15, %c0_13, %c0_14] : memref<18x32x128xbf16, #tpu.memory_space<vmem>>, vector<1x32x128xbf16>
    %c17 = arith.constant 17 : index
    %c0_15 = arith.constant 0 : index
    %c0_16 = arith.constant 0 : index
    %11 = vector.load %arg9[%c17, %c0_15, %c0_16] : memref<18x32x128xbf16, #tpu.memory_space<vmem>>, vector<1x32x128xbf16>
    tpu.vector_store %arg9[%c17, %c0_15, %c0_16], %10 {strides = array<i32>} : memref<18x32x128xbf16, #tpu.memory_space<vmem>>, vector<1x32x128xbf16>,
    %c0_17 = arith.constant 0 : index
    %c0_18 = arith.constant 0 : index
    %12 = vector.load %arg4[%c0_17, %c0_18] : memref<1x128xf32, #tpu.memory_space<vmem>>, vector<1x128xf32>
    %c0_19 = arith.constant 0 : index
    %c0_20 = arith.constant 0 : index
    %13 = vector.load %arg5[%c0_19, %c0_20] : memref<1x128xf32, #tpu.memory_space<vmem>>, vector<1x128xf32>
    %cst = arith.constant 0.000000e+00 : f32
    %14 = vector.broadcast %cst : f32 to vector<256x128xf32>
    %c0_21 = arith.constant 0 : index
    %c7_22 = arith.constant 7 : index
    %c0_23 = arith.constant 0 : index
    %15 = vector.load %arg9[%c0_21, %c7_22, %c0_23] : memref<18x32x128xbf16, #tpu.memory_space<vmem>>, vector<16x16x128xbf16>
    %16 = vector.shape_cast %15 : vector<16x16x128xbf16> to vector<256x128xbf16>
    %c0_24 = arith.constant 0 : index
    %c0_25 = arith.constant 0 : index
    %c0_26 = arith.constant 0 : index
    %17 = vector.load %arg2[%c0_24, %c0_25, %c0_26] : memref<9x128x128xbf16, #tpu.memory_space<vmem>>, vector<1x128x128xbf16>
    %18 = vector.shape_cast %17 : vector<1x128x128xbf16> to vector<128x128xbf16>
    %cst_27 = arith.constant dense<0.000000e+00> : vector<256x128xf32>
    %19 = tpu.matmul %16, %18, %cst_27 {dimension_numbers = #tpu.dot_dimension_numbers<[1], [0], [0], [1], [0, 0, 1, 1], [], []>} : vector<256x128xbf16>, vector<128x128xbf16>, vector<256x128xf32> -> vector<256x128xf32>
    %20 = arith.addf %14, %19 : vector<256x128xf32>
    %c0_28 = arith.constant 0 : index
    %c8_29 = arith.constant 8 : index
    %c0_30 = arith.constant 0 : index
    %21 = vector.load %arg9[%c0_28, %c8_29, %c0_30] : memref<18x32x128xbf16, #tpu.memory_space<vmem>>, vector<16x16x128xbf16>
    %22 = vector.shape_cast %21 : vector<16x16x128xbf16> to vector<256x128xbf16>
    %c1_31 = arith.constant 1 : index
    %c0_32 = arith.constant 0 : index
    %c0_33 = arith.constant 0 : index
    %23 = vector.load %arg2[%c1_31, %c0_32, %c0_33] : memref<9x128x128xbf16, #tpu.memory_space<vmem>>, vector<1x128x128xbf16>
    %24 = vector.shape_cast %23 : vector<1x128x128xbf16> to vector<128x128xbf16>
    %cst_34 = arith.constant dense<0.000000e+00> : vector<256x128xf32>
    %25 = tpu.matmul %22, %24, %cst_34 {dimension_numbers = #tpu.dot_dimension_numbers<[1], [0], [0], [1], [0, 0, 1, 1], [], []>} : vector<256x128xbf16>, vector<128x128xbf16>, vector<256x128xf32> -> vector<256x128xf32>
    %26 = arith.addf %20, %25 : vector<256x128xf32>
    %c0_35 = arith.constant 0 : index
    %c9 = arith.constant 9 : index
    %c0_36 = arith.constant 0 : index
    %27 = vector.load %arg9[%c0_35, %c9, %c0_36] : memref<18x32x128xbf16, #tpu.memory_space<vmem>>, vector<16x16x128xbf16>
    %28 = vector.shape_cast %27 : vector<16x16x128xbf16> to vector<256x128xbf16>
    %c2_37 = arith.constant 2 : index
    %c0_38 = arith.constant 0 : index
    %c0_39 = arith.constant 0 : index
    %29 = vector.load %arg2[%c2_37, %c0_38, %c0_39] : memref<9x128x128xbf16, #tpu.memory_space<vmem>>, vector<1x128x128xbf16>
    %30 = vector.shape_cast %29 : vector<1x128x128xbf16> to vector<128x128xbf16>
    %cst_40 = arith.constant dense<0.000000e+00> : vector<256x128xf32>
    %31 = tpu.matmul %28, %30, %cst_40 {dimension_numbers = #tpu.dot_dimension_numbers<[1], [0], [0], [1], [0, 0, 1, 1], [], []>} : vector<256x128xbf16>, vector<128x128xbf16>, vector<256x128xf32> -> vector<256x128xf32>
    %32 = arith.addf %26, %31 : vector<256x128xf32>
    %c1_41 = arith.constant 1 : index
    %c7_42 = arith.constant 7 : index
    %c0_43 = arith.constant 0 : index
    %33 = vector.load %arg9[%c1_41, %c7_42, %c0_43] : memref<18x32x128xbf16, #tpu.memory_space<vmem>>, vector<16x16x128xbf16>
    %34 = vector.shape_cast %33 : vector<16x16x128xbf16> to vector<256x128xbf16>
    %c3 = arith.constant 3 : index
    %c0_44 = arith.constant 0 : index
    %c0_45 = arith.constant 0 : index
    %35 = vector.load %arg2[%c3, %c0_44, %c0_45] : memref<9x128x128xbf16, #tpu.memory_space<vmem>>, vector<1x128x128xbf16>
    %36 = vector.shape_cast %35 : vector<1x128x128xbf16> to vector<128x128xbf16>
    %cst_46 = arith.constant dense<0.000000e+00> : vector<256x128xf32>
    %37 = tpu.matmul %34, %36, %cst_46 {dimension_numbers = #tpu.dot_dimension_numbers<[1], [0], [0], [1], [0, 0, 1, 1], [], []>} : vector<256x128xbf16>, vector<128x128xbf16>, vector<256x128xf32> -> vector<256x128xf32>
    %38 = arith.addf %32, %37 : vector<256x128xf32>
    %c1_47 = arith.constant 1 : index
    %c8_48 = arith.constant 8 : index
    %c0_49 = arith.constant 0 : index
    %39 = vector.load %arg9[%c1_47, %c8_48, %c0_49] : memref<18x32x128xbf16, #tpu.memory_space<vmem>>, vector<16x16x128xbf16>
    %40 = vector.shape_cast %39 : vector<16x16x128xbf16> to vector<256x128xbf16>
    %c4 = arith.constant 4 : index
    %c0_50 = arith.constant 0 : index
    %c0_51 = arith.constant 0 : index
    %41 = vector.load %arg2[%c4, %c0_50, %c0_51] : memref<9x128x128xbf16, #tpu.memory_space<vmem>>, vector<1x128x128xbf16>
    %42 = vector.shape_cast %41 : vector<1x128x128xbf16> to vector<128x128xbf16>
    %cst_52 = arith.constant dense<0.000000e+00> : vector<256x128xf32>
    %43 = tpu.matmul %40, %42, %cst_52 {dimension_numbers = #tpu.dot_dimension_numbers<[1], [0], [0], [1], [0, 0, 1, 1], [], []>} : vector<256x128xbf16>, vector<128x128xbf16>, vector<256x128xf32> -> vector<256x128xf32>
    %44 = arith.addf %38, %43 : vector<256x128xf32>
    %c1_53 = arith.constant 1 : index
    %c9_54 = arith.constant 9 : index
    %c0_55 = arith.constant 0 : index
    %45 = vector.load %arg9[%c1_53, %c9_54, %c0_55] : memref<18x32x128xbf16, #tpu.memory_space<vmem>>, vector<16x16x128xbf16>
    %46 = vector.shape_cast %45 : vector<16x16x128xbf16> to vector<256x128xbf16>
    %c5 = arith.constant 5 : index
    %c0_56 = arith.constant 0 : index
    %c0_57 = arith.constant 0 : index
    %47 = vector.load %arg2[%c5, %c0_56, %c0_57] : memref<9x128x128xbf16, #tpu.memory_space<vmem>>, vector<1x128x128xbf16>
    %48 = vector.shape_cast %47 : vector<1x128x128xbf16> to vector<128x128xbf16>
    %cst_58 = arith.constant dense<0.000000e+00> : vector<256x128xf32>
    %49 = tpu.matmul %46, %48, %cst_58 {dimension_numbers = #tpu.dot_dimension_numbers<[1], [0], [0], [1], [0, 0, 1, 1], [], []>} : vector<256x128xbf16>, vector<128x128xbf16>, vector<256x128xf32> -> vector<256x128xf32>
    %50 = arith.addf %44, %49 : vector<256x128xf32>
    %c2_59 = arith.constant 2 : index
    %c7_60 = arith.constant 7 : index
    %c0_61 = arith.constant 0 : index
    %51 = vector.load %arg9[%c2_59, %c7_60, %c0_61] : memref<18x32x128xbf16, #tpu.memory_space<vmem>>, vector<16x16x128xbf16>
    %52 = vector.shape_cast %51 : vector<16x16x128xbf16> to vector<256x128xbf16>
    %c6 = arith.constant 6 : index
    %c0_62 = arith.constant 0 : index
    %c0_63 = arith.constant 0 : index
    %53 = vector.load %arg2[%c6, %c0_62, %c0_63] : memref<9x128x128xbf16, #tpu.memory_space<vmem>>, vector<1x128x128xbf16>
    %54 = vector.shape_cast %53 : vector<1x128x128xbf16> to vector<128x128xbf16>
    %cst_64 = arith.constant dense<0.000000e+00> : vector<256x128xf32>
    %55 = tpu.matmul %52, %54, %cst_64 {dimension_numbers = #tpu.dot_dimension_numbers<[1], [0], [0], [1], [0, 0, 1, 1], [], []>} : vector<256x128xbf16>, vector<128x128xbf16>, vector<256x128xf32> -> vector<256x128xf32>
    %56 = arith.addf %50, %55 : vector<256x128xf32>
    %c2_65 = arith.constant 2 : index
    %c8_66 = arith.constant 8 : index
    %c0_67 = arith.constant 0 : index
    %57 = vector.load %arg9[%c2_65, %c8_66, %c0_67] : memref<18x32x128xbf16, #tpu.memory_space<vmem>>, vector<16x16x128xbf16>
    %58 = vector.shape_cast %57 : vector<16x16x128xbf16> to vector<256x128xbf16>
    %c7_68 = arith.constant 7 : index
    %c0_69 = arith.constant 0 : index
    %c0_70 = arith.constant 0 : index
    %59 = vector.load %arg2[%c7_68, %c0_69, %c0_70] : memref<9x128x128xbf16, #tpu.memory_space<vmem>>, vector<1x128x128xbf16>
    %60 = vector.shape_cast %59 : vector<1x128x128xbf16> to vector<128x128xbf16>
    %cst_71 = arith.constant dense<0.000000e+00> : vector<256x128xf32>
    %61 = tpu.matmul %58, %60, %cst_71 {dimension_numbers = #tpu.dot_dimension_numbers<[1], [0], [0], [1], [0, 0, 1, 1], [], []>} : vector<256x128xbf16>, vector<128x128xbf16>, vector<256x128xf32> -> vector<256x128xf32>
    %62 = arith.addf %56, %61 : vector<256x128xf32>
    %c2_72 = arith.constant 2 : index
    %c9_73 = arith.constant 9 : index
    %c0_74 = arith.constant 0 : index
    %63 = vector.load %arg9[%c2_72, %c9_73, %c0_74] : memref<18x32x128xbf16, #tpu.memory_space<vmem>>, vector<16x16x128xbf16>
    %64 = vector.shape_cast %63 : vector<16x16x128xbf16> to vector<256x128xbf16>
    %c8_75 = arith.constant 8 : index
    %c0_76 = arith.constant 0 : index
    %c0_77 = arith.constant 0 : index
    %65 = vector.load %arg2[%c8_75, %c0_76, %c0_77] : memref<9x128x128xbf16, #tpu.memory_space<vmem>>, vector<1x128x128xbf16>
    %66 = vector.shape_cast %65 : vector<1x128x128xbf16> to vector<128x128xbf16>
    %cst_78 = arith.constant dense<0.000000e+00> : vector<256x128xf32>
    %67 = tpu.matmul %64, %66, %cst_78 {dimension_numbers = #tpu.dot_dimension_numbers<[1], [0], [0], [1], [0, 0, 1, 1], [], []>} : vector<256x128xbf16>, vector<128x128xbf16>, vector<256x128xf32> -> vector<256x128xf32>
    %68 = arith.addf %62, %67 : vector<256x128xf32>
    %cst_79 = arith.constant dense<0.000000e+00> : vector<128xf32>
    %69 = vector.multi_reduction <add>, %68, %cst_79 [0] : vector<256x128xf32> to vector<128xf32>
    %70 = vector.shape_cast %69 : vector<128xf32> to vector<1x128xf32>
    %71 = arith.mulf %68, %68 : vector<256x128xf32>
    %cst_80 = arith.constant dense<0.000000e+00> : vector<128xf32>
    %72 = vector.multi_reduction <add>, %71, %cst_80 [0] : vector<256x128xf32> to vector<128xf32>
    %73 = vector.shape_cast %72 : vector<128xf32> to vector<1x128xf32>
    %cst_81 = arith.constant 3.906250e-03 : f32
    %74 = vector.broadcast %cst_81 : f32 to vector<1x128xf32>
    %75 = arith.mulf %70, %74 : vector<1x128xf32>
    %cst_82 = arith.constant 3.906250e-03 : f32
    %76 = vector.broadcast %cst_82 : f32 to vector<1x128xf32>
    %77 = arith.mulf %73, %76 : vector<1x128xf32>
    %78 = arith.mulf %75, %75 : vector<1x128xf32>
    %79 = arith.subf %77, %78 : vector<1x128xf32>
    %cst_83 = arith.constant 0.000000e+00 : f32
    %80 = vector.broadcast %cst_83 : f32 to vector<1x128xf32>
    %81 = arith.maximumf %79, %80 : vector<1x128xf32>
    %82 = vector.broadcast %75 : vector<1x128xf32> to vector<256x128xf32>
    %83 = arith.subf %68, %82 : vector<256x128xf32>
    %cst_84 = arith.constant 9.99999974E-6 : f32
    %84 = vector.broadcast %cst_84 : f32 to vector<1x128xf32>
    %85 = arith.addf %81, %84 : vector<1x128xf32>
    %86 = math.rsqrt %85 : vector<1x128xf32>
    %87 = vector.broadcast %86 : vector<1x128xf32> to vector<256x128xf32>
    %88 = arith.mulf %83, %87 : vector<256x128xf32>
    %89 = vector.broadcast %12 : vector<1x128xf32> to vector<256x128xf32>
    %90 = arith.mulf %88, %89 : vector<256x128xf32>
    %91 = vector.broadcast %13 : vector<1x128xf32> to vector<256x128xf32>
    %92 = arith.addf %90, %91 : vector<256x128xf32>
    %cst_85 = arith.constant 0.000000e+00 : f32
    %93 = vector.broadcast %cst_85 : f32 to vector<256x128xf32>
    %94 = arith.maximumf %92, %93 : vector<256x128xf32>
    %95 = vector.shape_cast %94 : vector<256x128xf32> to vector<16x16x128xf32>
    %96 = arith.truncf %95 : vector<16x16x128xf32> to vector<16x16x128xbf16>
    %c1_86 = arith.constant 1 : index
    %c8_87 = arith.constant 8 : index
    %c0_88 = arith.constant 0 : index
    %97 = vector.load %arg9[%c1_86, %c8_87, %c0_88] : memref<18x32x128xbf16, #tpu.memory_space<vmem>>, vector<16x16x128xbf16>
    tpu.vector_store %arg9[%c1_86, %c8_87, %c0_88], %96 {strides = array<i32>} : memref<18x32x128xbf16, #tpu.memory_space<vmem>>, vector<16x16x128xbf16>,
    %98 = vector.extract_strided_slice %96 {offsets = [0, 1, 0], sizes = [16, 1, 128], strides = [1, 1, 1]} : vector<16x16x128xbf16> to vector<16x1x128xbf16>
    %c1_89 = arith.constant 1 : index
    %c7_90 = arith.constant 7 : index
    %c0_91 = arith.constant 0 : index
    %99 = vector.load %arg9[%c1_89, %c7_90, %c0_91] : memref<18x32x128xbf16, #tpu.memory_space<vmem>>, vector<16x1x128xbf16>
    tpu.vector_store %arg9[%c1_89, %c7_90, %c0_91], %98 {strides = array<i32>} : memref<18x32x128xbf16, #tpu.memory_space<vmem>>, vector<16x1x128xbf16>,
    %100 = vector.extract_strided_slice %96 {offsets = [0, 14, 0], sizes = [16, 1, 128], strides = [1, 1, 1]} : vector<16x16x128xbf16> to vector<16x1x128xbf16>
    %c1_92 = arith.constant 1 : index
    %c24_93 = arith.constant 24 : index
    %c0_94 = arith.constant 0 : index
    %101 = vector.load %arg9[%c1_92, %c24_93, %c0_94] : memref<18x32x128xbf16, #tpu.memory_space<vmem>>, vector<16x1x128xbf16>
    tpu.vector_store %arg9[%c1_92, %c24_93, %c0_94], %100 {strides = array<i32>} : memref<18x32x128xbf16, #tpu.memory_space<vmem>>, vector<16x1x128xbf16>,
    %c2_95 = arith.constant 2 : index
    %c0_96 = arith.constant 0 : index
    %c0_97 = arith.constant 0 : index
    %102 = vector.load %arg9[%c2_95, %c0_96, %c0_97] : memref<18x32x128xbf16, #tpu.memory_space<vmem>>, vector<1x32x128xbf16>
    %c0_98 = arith.constant 0 : index
    %c0_99 = arith.constant 0 : index
    %c0_100 = arith.constant 0 : index
    %103 = vector.load %arg9[%c0_98, %c0_99, %c0_100] : memref<18x32x128xbf16, #tpu.memory_space<vmem>>, vector<1x32x128xbf16>
    tpu.vector_store %arg9[%c0_98, %c0_99, %c0_100], %102 {strides = array<i32>} : memref<18x32x128xbf16, #tpu.memory_space<vmem>>, vector<1x32x128xbf16>,
    %c15_101 = arith.constant 15 : index
    %c0_102 = arith.constant 0 : index
    %c0_103 = arith.constant 0 : index
    %104 = vector.load %arg9[%c15_101, %c0_102, %c0_103] : memref<18x32x128xbf16, #tpu.memory_space<vmem>>, vector<1x32x128xbf16>
    %c17_104 = arith.constant 17 : index
    %c0_105 = arith.constant 0 : index
    %c0_106 = arith.constant 0 : index
    %105 = vector.load %arg9[%c17_104, %c0_105, %c0_106] : memref<18x32x128xbf16, #tpu.memory_space<vmem>>, vector<1x32x128xbf16>
    tpu.vector_store %arg9[%c17_104, %c0_105, %c0_106], %104 {strides = array<i32>} : memref<18x32x128xbf16, #tpu.memory_space<vmem>>, vector<1x32x128xbf16>,
    %c0_107 = arith.constant 0 : index
    %c0_108 = arith.constant 0 : index
    %106 = vector.load %arg6[%c0_107, %c0_108] : memref<1x128xf32, #tpu.memory_space<vmem>>, vector<1x128xf32>
    %c0_109 = arith.constant 0 : index
    %c0_110 = arith.constant 0 : index
    %107 = vector.load %arg7[%c0_109, %c0_110] : memref<1x128xf32, #tpu.memory_space<vmem>>, vector<1x128xf32>
    %cst_111 = arith.constant 0.000000e+00 : f32
    %108 = vector.broadcast %cst_111 : f32 to vector<256x128xf32>
    %c0_112 = arith.constant 0 : index
    %c7_113 = arith.constant 7 : index
    %c0_114 = arith.constant 0 : index
    %109 = vector.load %arg9[%c0_112, %c7_113, %c0_114] : memref<18x32x128xbf16, #tpu.memory_space<vmem>>, vector<16x16x128xbf16>
    %110 = vector.shape_cast %109 : vector<16x16x128xbf16> to vector<256x128xbf16>
    %c0_115 = arith.constant 0 : index
    %c0_116 = arith.constant 0 : index
    %c0_117 = arith.constant 0 : index
    %111 = vector.load %arg3[%c0_115, %c0_116, %c0_117] : memref<9x128x128xbf16, #tpu.memory_space<vmem>>, vector<1x128x128xbf16>
    %112 = vector.shape_cast %111 : vector<1x128x128xbf16> to vector<128x128xbf16>
    %cst_118 = arith.constant dense<0.000000e+00> : vector<256x128xf32>
    %113 = tpu.matmul %110, %112, %cst_118 {dimension_numbers = #tpu.dot_dimension_numbers<[1], [0], [0], [1], [0, 0, 1, 1], [], []>} : vector<256x128xbf16>, vector<128x128xbf16>, vector<256x128xf32> -> vector<256x128xf32>
    %114 = arith.addf %108, %113 : vector<256x128xf32>
    %c0_119 = arith.constant 0 : index
    %c8_120 = arith.constant 8 : index
    %c0_121 = arith.constant 0 : index
    %115 = vector.load %arg9[%c0_119, %c8_120, %c0_121] : memref<18x32x128xbf16, #tpu.memory_space<vmem>>, vector<16x16x128xbf16>
    %116 = vector.shape_cast %115 : vector<16x16x128xbf16> to vector<256x128xbf16>
    %c1_122 = arith.constant 1 : index
    %c0_123 = arith.constant 0 : index
    %c0_124 = arith.constant 0 : index
    %117 = vector.load %arg3[%c1_122, %c0_123, %c0_124] : memref<9x128x128xbf16, #tpu.memory_space<vmem>>, vector<1x128x128xbf16>
    %118 = vector.shape_cast %117 : vector<1x128x128xbf16> to vector<128x128xbf16>
    %cst_125 = arith.constant dense<0.000000e+00> : vector<256x128xf32>
    %119 = tpu.matmul %116, %118, %cst_125 {dimension_numbers = #tpu.dot_dimension_numbers<[1], [0], [0], [1], [0, 0, 1, 1], [], []>} : vector<256x128xbf16>, vector<128x128xbf16>, vector<256x128xf32> -> vector<256x128xf32>
    %120 = arith.addf %114, %119 : vector<256x128xf32>
    %c0_126 = arith.constant 0 : index
    %c9_127 = arith.constant 9 : index
    %c0_128 = arith.constant 0 : index
    %121 = vector.load %arg9[%c0_126, %c9_127, %c0_128] : memref<18x32x128xbf16, #tpu.memory_space<vmem>>, vector<16x16x128xbf16>
    %122 = vector.shape_cast %121 : vector<16x16x128xbf16> to vector<256x128xbf16>
    %c2_129 = arith.constant 2 : index
    %c0_130 = arith.constant 0 : index
    %c0_131 = arith.constant 0 : index
    %123 = vector.load %arg3[%c2_129, %c0_130, %c0_131] : memref<9x128x128xbf16, #tpu.memory_space<vmem>>, vector<1x128x128xbf16>
    %124 = vector.shape_cast %123 : vector<1x128x128xbf16> to vector<128x128xbf16>
    %cst_132 = arith.constant dense<0.000000e+00> : vector<256x128xf32>
    %125 = tpu.matmul %122, %124, %cst_132 {dimension_numbers = #tpu.dot_dimension_numbers<[1], [0], [0], [1], [0, 0, 1, 1], [], []>} : vector<256x128xbf16>, vector<128x128xbf16>, vector<256x128xf32> -> vector<256x128xf32>
    %126 = arith.addf %120, %125 : vector<256x128xf32>
    %c1_133 = arith.constant 1 : index
    %c7_134 = arith.constant 7 : index
    %c0_135 = arith.constant 0 : index
    %127 = vector.load %arg9[%c1_133, %c7_134, %c0_135] : memref<18x32x128xbf16, #tpu.memory_space<vmem>>, vector<16x16x128xbf16>
    %128 = vector.shape_cast %127 : vector<16x16x128xbf16> to vector<256x128xbf16>
    %c3_136 = arith.constant 3 : index
    %c0_137 = arith.constant 0 : index
    %c0_138 = arith.constant 0 : index
    %129 = vector.load %arg3[%c3_136, %c0_137, %c0_138] : memref<9x128x128xbf16, #tpu.memory_space<vmem>>, vector<1x128x128xbf16>
    %130 = vector.shape_cast %129 : vector<1x128x128xbf16> to vector<128x128xbf16>
    %cst_139 = arith.constant dense<0.000000e+00> : vector<256x128xf32>
    %131 = tpu.matmul %128, %130, %cst_139 {dimension_numbers = #tpu.dot_dimension_numbers<[1], [0], [0], [1], [0, 0, 1, 1], [], []>} : vector<256x128xbf16>, vector<128x128xbf16>, vector<256x128xf32> -> vector<256x128xf32>
    %132 = arith.addf %126, %131 : vector<256x128xf32>
    %c1_140 = arith.constant 1 : index
    %c8_141 = arith.constant 8 : index
    %c0_142 = arith.constant 0 : index
    %133 = vector.load %arg9[%c1_140, %c8_141, %c0_142] : memref<18x32x128xbf16, #tpu.memory_space<vmem>>, vector<16x16x128xbf16>
    %134 = vector.shape_cast %133 : vector<16x16x128xbf16> to vector<256x128xbf16>
    %c4_143 = arith.constant 4 : index
    %c0_144 = arith.constant 0 : index
    %c0_145 = arith.constant 0 : index
    %135 = vector.load %arg3[%c4_143, %c0_144, %c0_145] : memref<9x128x128xbf16, #tpu.memory_space<vmem>>, vector<1x128x128xbf16>
    %136 = vector.shape_cast %135 : vector<1x128x128xbf16> to vector<128x128xbf16>
    %cst_146 = arith.constant dense<0.000000e+00> : vector<256x128xf32>
    %137 = tpu.matmul %134, %136, %cst_146 {dimension_numbers = #tpu.dot_dimension_numbers<[1], [0], [0], [1], [0, 0, 1, 1], [], []>} : vector<256x128xbf16>, vector<128x128xbf16>, vector<256x128xf32> -> vector<256x128xf32>
    %138 = arith.addf %132, %137 : vector<256x128xf32>
    %c1_147 = arith.constant 1 : index
    %c9_148 = arith.constant 9 : index
    %c0_149 = arith.constant 0 : index
    %139 = vector.load %arg9[%c1_147, %c9_148, %c0_149] : memref<18x32x128xbf16, #tpu.memory_space<vmem>>, vector<16x16x128xbf16>
    %140 = vector.shape_cast %139 : vector<16x16x128xbf16> to vector<256x128xbf16>
    %c5_150 = arith.constant 5 : index
    %c0_151 = arith.constant 0 : index
    %c0_152 = arith.constant 0 : index
    %141 = vector.load %arg3[%c5_150, %c0_151, %c0_152] : memref<9x128x128xbf16, #tpu.memory_space<vmem>>, vector<1x128x128xbf16>
    %142 = vector.shape_cast %141 : vector<1x128x128xbf16> to vector<128x128xbf16>
    %cst_153 = arith.constant dense<0.000000e+00> : vector<256x128xf32>
    %143 = tpu.matmul %140, %142, %cst_153 {dimension_numbers = #tpu.dot_dimension_numbers<[1], [0], [0], [1], [0, 0, 1, 1], [], []>} : vector<256x128xbf16>, vector<128x128xbf16>, vector<256x128xf32> -> vector<256x128xf32>
    %144 = arith.addf %138, %143 : vector<256x128xf32>
    %c2_154 = arith.constant 2 : index
    %c7_155 = arith.constant 7 : index
    %c0_156 = arith.constant 0 : index
    %145 = vector.load %arg9[%c2_154, %c7_155, %c0_156] : memref<18x32x128xbf16, #tpu.memory_space<vmem>>, vector<16x16x128xbf16>
    %146 = vector.shape_cast %145 : vector<16x16x128xbf16> to vector<256x128xbf16>
    %c6_157 = arith.constant 6 : index
    %c0_158 = arith.constant 0 : index
    %c0_159 = arith.constant 0 : index
    %147 = vector.load %arg3[%c6_157, %c0_158, %c0_159] : memref<9x128x128xbf16, #tpu.memory_space<vmem>>, vector<1x128x128xbf16>
    %148 = vector.shape_cast %147 : vector<1x128x128xbf16> to vector<128x128xbf16>
    %cst_160 = arith.constant dense<0.000000e+00> : vector<256x128xf32>
    %149 = tpu.matmul %146, %148, %cst_160 {dimension_numbers = #tpu.dot_dimension_numbers<[1], [0], [0], [1], [0, 0, 1, 1], [], []>} : vector<256x128xbf16>, vector<128x128xbf16>, vector<256x128xf32> -> vector<256x128xf32>
    %150 = arith.addf %144, %149 : vector<256x128xf32>
    %c2_161 = arith.constant 2 : index
    %c8_162 = arith.constant 8 : index
    %c0_163 = arith.constant 0 : index
    %151 = vector.load %arg9[%c2_161, %c8_162, %c0_163] : memref<18x32x128xbf16, #tpu.memory_space<vmem>>, vector<16x16x128xbf16>
    %152 = vector.shape_cast %151 : vector<16x16x128xbf16> to vector<256x128xbf16>
    %c7_164 = arith.constant 7 : index
    %c0_165 = arith.constant 0 : index
    %c0_166 = arith.constant 0 : index
    %153 = vector.load %arg3[%c7_164, %c0_165, %c0_166] : memref<9x128x128xbf16, #tpu.memory_space<vmem>>, vector<1x128x128xbf16>
    %154 = vector.shape_cast %153 : vector<1x128x128xbf16> to vector<128x128xbf16>
    %cst_167 = arith.constant dense<0.000000e+00> : vector<256x128xf32>
    %155 = tpu.matmul %152, %154, %cst_167 {dimension_numbers = #tpu.dot_dimension_numbers<[1], [0], [0], [1], [0, 0, 1, 1], [], []>} : vector<256x128xbf16>, vector<128x128xbf16>, vector<256x128xf32> -> vector<256x128xf32>
    %156 = arith.addf %150, %155 : vector<256x128xf32>
    %c2_168 = arith.constant 2 : index
    %c9_169 = arith.constant 9 : index
    %c0_170 = arith.constant 0 : index
    %157 = vector.load %arg9[%c2_168, %c9_169, %c0_170] : memref<18x32x128xbf16, #tpu.memory_space<vmem>>, vector<16x16x128xbf16>
    %158 = vector.shape_cast %157 : vector<16x16x128xbf16> to vector<256x128xbf16>
    %c8_171 = arith.constant 8 : index
    %c0_172 = arith.constant 0 : index
    %c0_173 = arith.constant 0 : index
    %159 = vector.load %arg3[%c8_171, %c0_172, %c0_173] : memref<9x128x128xbf16, #tpu.memory_space<vmem>>, vector<1x128x128xbf16>
    %160 = vector.shape_cast %159 : vector<1x128x128xbf16> to vector<128x128xbf16>
    %cst_174 = arith.constant dense<0.000000e+00> : vector<256x128xf32>
    %161 = tpu.matmul %158, %160, %cst_174 {dimension_numbers = #tpu.dot_dimension_numbers<[1], [0], [0], [1], [0, 0, 1, 1], [], []>} : vector<256x128xbf16>, vector<128x128xbf16>, vector<256x128xf32> -> vector<256x128xf32>
    %162 = arith.addf %156, %161 : vector<256x128xf32>
    %cst_175 = arith.constant dense<0.000000e+00> : vector<128xf32>
    %163 = vector.multi_reduction <add>, %162, %cst_175 [0] : vector<256x128xf32> to vector<128xf32>
    %164 = vector.shape_cast %163 : vector<128xf32> to vector<1x128xf32>
    %165 = arith.mulf %162, %162 : vector<256x128xf32>
    %cst_176 = arith.constant dense<0.000000e+00> : vector<128xf32>
    %166 = vector.multi_reduction <add>, %165, %cst_176 [0] : vector<256x128xf32> to vector<128xf32>
    %167 = vector.shape_cast %166 : vector<128xf32> to vector<1x128xf32>
    %cst_177 = arith.constant 3.906250e-03 : f32
    %168 = vector.broadcast %cst_177 : f32 to vector<1x128xf32>
    %169 = arith.mulf %164, %168 : vector<1x128xf32>
    %cst_178 = arith.constant 3.906250e-03 : f32
    %170 = vector.broadcast %cst_178 : f32 to vector<1x128xf32>
    %171 = arith.mulf %167, %170 : vector<1x128xf32>
    %172 = arith.mulf %169, %169 : vector<1x128xf32>
    %173 = arith.subf %171, %172 : vector<1x128xf32>
    %cst_179 = arith.constant 0.000000e+00 : f32
    %174 = vector.broadcast %cst_179 : f32 to vector<1x128xf32>
    %175 = arith.maximumf %173, %174 : vector<1x128xf32>
    %176 = vector.broadcast %169 : vector<1x128xf32> to vector<256x128xf32>
    %177 = arith.subf %162, %176 : vector<256x128xf32>
    %cst_180 = arith.constant 9.99999974E-6 : f32
    %178 = vector.broadcast %cst_180 : f32 to vector<1x128xf32>
    %179 = arith.addf %175, %178 : vector<1x128xf32>
    %180 = math.rsqrt %179 : vector<1x128xf32>
    %181 = vector.broadcast %180 : vector<1x128xf32> to vector<256x128xf32>
    %182 = arith.mulf %177, %181 : vector<256x128xf32>
    %183 = vector.broadcast %106 : vector<1x128xf32> to vector<256x128xf32>
    %184 = arith.mulf %182, %183 : vector<256x128xf32>
    %185 = vector.broadcast %107 : vector<1x128xf32> to vector<256x128xf32>
    %186 = arith.addf %184, %185 : vector<256x128xf32>
    %187 = vector.shape_cast %186 : vector<256x128xf32> to vector<16x16x128xf32>
    %188 = arith.addf %187, %1 : vector<16x16x128xf32>
    %c0_181 = arith.constant 0 : index
    %c0_182 = arith.constant 0 : index
    %c0_183 = arith.constant 0 : index
    %c0_184 = arith.constant 0 : index
    %189 = vector.load %arg8[%c0_181, %c0_182, %c0_183, %c0_184] : memref<1x16x16x128xf32, #tpu.memory_space<vmem>>, vector<1x16x16x128xf32>
    %190 = vector.shape_cast %189 : vector<1x16x16x128xf32> to vector<16x16x128xf32>
    %191 = vector.shape_cast %188 : vector<16x16x128xf32> to vector<1x16x16x128xf32>
    tpu.vector_store %arg8[%c0_181, %c0_182, %c0_183, %c0_184], %191 {strides = array<i32>} : memref<1x16x16x128xf32, #tpu.memory_space<vmem>>, vector<1x16x16x128xf32>,
    return
  }
  func.func @transform_0(%arg0: i32) -> (i32, i32, i32, i32) {
    %c0_i32 = arith.constant 0 : i32
    %c0_i32_0 = arith.constant 0 : i32
    %c0_i32_1 = arith.constant 0 : i32
    %c0_i32_2 = arith.constant 0 : i32
    return %arg0, %c0_i32, %c0_i32_0, %c0_i32_1 : i32, i32, i32, i32
  }
  func.func @transform_1(%arg0: i32) -> (i32, i32, i32) {
    %c0_i32 = arith.constant 0 : i32
    %c0_i32_0 = arith.constant 0 : i32
    %c0_i32_1 = arith.constant 0 : i32
    %c0_i32_2 = arith.constant 0 : i32
    return %c0_i32, %c0_i32_0, %c0_i32_1 : i32, i32, i32
  }
  func.func @transform_2(%arg0: i32) -> (i32, i32, i32) {
    %c0_i32 = arith.constant 0 : i32
    %c0_i32_0 = arith.constant 0 : i32
    %c0_i32_1 = arith.constant 0 : i32
    %c0_i32_2 = arith.constant 0 : i32
    return %c0_i32, %c0_i32_0, %c0_i32_1 : i32, i32, i32
  }
  func.func @transform_3(%arg0: i32) -> (i32, i32) {
    %c0_i32 = arith.constant 0 : i32
    %c0_i32_0 = arith.constant 0 : i32
    %c0_i32_1 = arith.constant 0 : i32
    return %c0_i32, %c0_i32_0 : i32, i32
  }
  func.func @transform_4(%arg0: i32) -> (i32, i32) {
    %c0_i32 = arith.constant 0 : i32
    %c0_i32_0 = arith.constant 0 : i32
    %c0_i32_1 = arith.constant 0 : i32
    return %c0_i32, %c0_i32_0 : i32, i32
  }
  func.func @transform_5(%arg0: i32) -> (i32, i32) {
    %c0_i32 = arith.constant 0 : i32
    %c0_i32_0 = arith.constant 0 : i32
    %c0_i32_1 = arith.constant 0 : i32
    return %c0_i32, %c0_i32_0 : i32, i32
  }
  func.func @transform_6(%arg0: i32) -> (i32, i32) {
    %c0_i32 = arith.constant 0 : i32
    %c0_i32_0 = arith.constant 0 : i32
    %c0_i32_1 = arith.constant 0 : i32
    return %c0_i32, %c0_i32_0 : i32, i32
  }
  func.func @transform_7(%arg0: i32) -> (i32, i32, i32, i32) {
    %c0_i32 = arith.constant 0 : i32
    %c0_i32_0 = arith.constant 0 : i32
    %c0_i32_1 = arith.constant 0 : i32
    %c0_i32_2 = arith.constant 0 : i32
    return %arg0, %c0_i32, %c0_i32_0, %c0_i32_1 : i32, i32, i32, i32
  }
}

</mosaic_0001>

<llo_original>
// kernel: tpu_custom_call.1
$region0: #{tpu_custom_call.1}
  #allocation0 [shape = 'u32[]', space=smem, size = 0x4, offset = 0x4, fixed_abs, tag = 'smem constant byte address 0x4 - core index']
  #allocation1 [shape = 'u32[72,128]{1,0:T(1,128)}', space=vmem, size = 0x9000, scoped, tag = 'internal scratch']
  #allocation2 [shape = 'bf16[18,32,128]{2,1,0:T(8,128)(2,1)}', space=vmem, size = 0x24000, scoped, tag = 'scratch operand']
  %s0 = inlined_call_operand.hbm [shape: f32[2,16,16,128], index: 0, kind: input, shape index: {}]
  %s1 = inlined_call_operand.hbm [shape: bf16[9,128,128], index: 1, kind: input, shape index: {}]
  %s2 = inlined_call_operand.hbm [shape: bf16[9,128,128], index: 2, kind: input, shape index: {}]
  %s3 = inlined_call_operand.vmem [shape: f32[1,128], index: 3, kind: input, shape index: {}]
  %s4 = inlined_call_operand.vmem [shape: f32[1,128], index: 4, kind: input, shape index: {}]
  %s5 = inlined_call_operand.vmem [shape: f32[1,128], index: 5, kind: input, shape index: {}]
  %s6 = inlined_call_operand.vmem [shape: f32[1,128], index: 6, kind: input, shape index: {}]
  %s7 = inlined_call_operand.hbm [shape: f32[2,16,16,128], index: 7, kind: output, shape index: {}]
  %s8 = sld [smem:[#allocation0]]
  $region73: #{tpu_custom_call.1} parent=0
    _
  %s10 = ssub.s32 1, %s8
  %s11 = scalar_select 0, %s10, %s8
  $region1: #{tpu_custom_call.1} parent=0
    #allocation3 [shape = 'u8[262144]{0}', space=vmem, size = 0x40000, scoped, tag = 'input window, operand 0']
    #allocation4 [shape = 's32[2]{0}', space=sflag, size = 0x8, scoped, tag = 'scoped memory for tpu_custom_call.1']
    #allocation5 [shape = 's32[2]{0}', space=sflag, size = 0x8, scoped, tag = 'scoped memory for tpu_custom_call.1']
    #allocation6 [shape = 'u8[294912]{0}', space=vmem, size = 0x48000, scoped, tag = 'input window, operand 1, single buffered']
    #allocation7 [shape = 's32[1]{0}', space=sflag, size = 0x4, scoped, tag = 'scoped memory for tpu_custom_call.1']
    #allocation8 [shape = 'u8[294912]{0}', space=vmem, size = 0x48000, scoped, tag = 'input window, operand 2, single buffered']
    #allocation9 [shape = 'u8[262144]{0}', space=vmem, size = 0x40000, scoped, tag = 'output window, operand 0']
    %12 = vsyncpa [#allocation4], 0
    %s13 = scalar_lea.sflag [#allocation4], 1
    %14 = vsyncpa %s13, 0
    %15 = vsyncpa [#allocation7], 0
    %16 = vsyncpa [#allocation5], 0
    %s17 = scalar_lea.sflag [#allocation5], 1
    %18 = vsyncpa %s17, 0
    loop: start=0, step=1, limit=4
    $region2: #{tpu_custom_call.1} parent=1 // loop_pre_header
      _
    $region3: #{tpu_custom_call.1} parent=1 // loop_header
      %s20 = sphi 0, %s24
      %p21 = scmp.ge.s32.totalorder %s20, 4
      %s30 = sphi 0, %s32
      %s33 = sphi 0, %s30
      %s34 = sphi 0, %s33
      %s50 = sphi 0, %s34
      %s54 = sphi 0, %s54
      %s56 = sphi 0, %s54
      %s57 = sphi 0, %s56
      %s71 = sphi 0, %s57
      %s75 = sphi 0, %s75
      %s77 = sphi 0, %s75
      %s78 = sphi 0, %s77
      %s92 = sphi 0, %s78
      %s96 = sphi 0, %s96
      %s98 = sphi 0, %s96
      %s99 = sphi 0, %s98
      %s113 = sphi 0, %s99
      %s117 = sphi 0, %s117
      %s119 = sphi 0, %s117
      %s120 = sphi 0, %s119
      %s134 = sphi 0, %s120
      %s138 = sphi 0, %s138
      %s140 = sphi 0, %s138
      %s141 = sphi 0, %s140
      %s155 = sphi 0, %s141
      %s159 = sphi 0, %s159
      %s161 = sphi 0, %s159
      %s162 = sphi 0, %s161
      %s176 = sphi 0, %s162
      %s182 = sphi 0, %s184
      %s185 = sphi 0, %s182
      %s186 = sphi 0, %s185
      %s202 = sphi 0, %s186
    $region4: #{tpu_custom_call.1} parent=1 // loop_header_branch
      %23 = sbr.rel (%p21) target = $region8
    $region5: #{tpu_custom_call.1} parent=1 // loop_body
      %s25 = ssub.s32 %s20, 1
      %s26 = ssub.s32 %s20, 2
      %s27 = sadd.s32 %s20, 1
      %s28 = ssub.s32 %s20, %s27
      %p29 = scmp.eq.s32.totalorder %s28, 0
      %s31 = sadd.s32 %s30, 1
      %s32 = scalar_select %p29, %s30, %s31
      %p35 = pneg %p29
      %p36 = scmp.eq.s32.totalorder %s20, 1
      %p37 = por %p35, %p36
      %p38 = scmp.ne.s32.totalorder %s30, %s33
      %p39 = scmp.eq.s32.totalorder %s20, 0
      %p40 = por %p38, %p39
      %p41 = scmp.ne.s32.totalorder %s30, %s33
      %p42 = scmp.eq.s32.totalorder %s25, 1
      %p43 = por %p41, %p42
      %p44 = scmp.ne.s32.totalorder %s33, %s34
      %p45 = scmp.eq.s32.totalorder %s25, 0
      %p46 = por %p44, %p45
      %p47 = scmp.ne.s32.totalorder %s33, %s34
      %p48 = scmp.eq.s32.totalorder %s26, 1
      %p49 = por %p47, %p48
      %p51 = scmp.ne.s32.totalorder %s34, %s50
      %p52 = scmp.eq.s32.totalorder %s26, 0
      %p53 = por %p51, %p52
      %s55 = sadd.s32 %s54, 1
      %p58 = scmp.eq.s32.totalorder %s20, 1
      %p59 = scmp.ne.s32.totalorder %s54, %s56
      %p60 = scmp.eq.s32.totalorder %s20, 0
      %p61 = por %p59, %p60
      %p62 = scmp.ne.s32.totalorder %s54, %s56
      %p63 = scmp.eq.s32.totalorder %s25, 1
      %p64 = por %p62, %p63
      %p65 = scmp.ne.s32.totalorder %s56, %s57
      %p66 = scmp.eq.s32.totalorder %s25, 0
      %p67 = por %p65, %p66
      %p68 = scmp.ne.s32.totalorder %s56, %s57
      %p69 = scmp.eq.s32.totalorder %s26, 1
      %p70 = por %p68, %p69
      %p72 = scmp.ne.s32.totalorder %s57, %s71
      %p73 = scmp.eq.s32.totalorder %s26, 0
      %p74 = por %p72, %p73
      %s76 = sadd.s32 %s75, 1
      %p79 = scmp.eq.s32.totalorder %s20, 1
      %p80 = scmp.ne.s32.totalorder %s75, %s77
      %p81 = scmp.eq.s32.totalorder %s20, 0
      %p82 = por %p80, %p81
      %p83 = scmp.ne.s32.totalorder %s75, %s77
      %p84 = scmp.eq.s32.totalorder %s25, 1
      %p85 = por %p83, %p84
      %p86 = scmp.ne.s32.totalorder %s77, %s78
      %p87 = scmp.eq.s32.totalorder %s25, 0
      %p88 = por %p86, %p87
      %p89 = scmp.ne.s32.totalorder %s77, %s78
      %p90 = scmp.eq.s32.totalorder %s26, 1
      %p91 = por %p89, %p90
      %p93 = scmp.ne.s32.totalorder %s78, %s92
      %p94 = scmp.eq.s32.totalorder %s26, 0
      %p95 = por %p93, %p94
      %s97 = sadd.s32 %s96, 1
      %p100 = scmp.eq.s32.totalorder %s20, 1
      %p101 = scmp.ne.s32.totalorder %s96, %s98
      %p102 = scmp.eq.s32.totalorder %s20, 0
      %p103 = por %p101, %p102
      %p104 = scmp.ne.s32.totalorder %s96, %s98
      %p105 = scmp.eq.s32.totalorder %s25, 1
      %p106 = por %p104, %p105
      %p107 = scmp.ne.s32.totalorder %s98, %s99
      %p108 = scmp.eq.s32.totalorder %s25, 0
      %p109 = por %p107, %p108
      %p110 = scmp.ne.s32.totalorder %s98, %s99
      %p111 = scmp.eq.s32.totalorder %s26, 1
      %p112 = por %p110, %p111
      %p114 = scmp.ne.s32.totalorder %s99, %s113
      %p115 = scmp.eq.s32.totalorder %s26, 0
      %p116 = por %p114, %p115
      %s118 = sadd.s32 %s117, 1
      %p121 = scmp.eq.s32.totalorder %s20, 1
      %p122 = scmp.ne.s32.totalorder %s117, %s119
      %p123 = scmp.eq.s32.totalorder %s20, 0
      %p124 = por %p122, %p123
      %p125 = scmp.ne.s32.totalorder %s117, %s119
      %p126 = scmp.eq.s32.totalorder %s25, 1
      %p127 = por %p125, %p126
      %p128 = scmp.ne.s32.totalorder %s119, %s120
      %p129 = scmp.eq.s32.totalorder %s25, 0
      %p130 = por %p128, %p129
      %p131 = scmp.ne.s32.totalorder %s119, %s120
      %p132 = scmp.eq.s32.totalorder %s26, 1
      %p133 = por %p131, %p132
      %p135 = scmp.ne.s32.totalorder %s120, %s134
      %p136 = scmp.eq.s32.totalorder %s26, 0
      %p137 = por %p135, %p136
      %s139 = sadd.s32 %s138, 1
      %p142 = scmp.eq.s32.totalorder %s20, 1
      %p143 = scmp.ne.s32.totalorder %s138, %s140
      %p144 = scmp.eq.s32.totalorder %s20, 0
      %p145 = por %p143, %p144
      %p146 = scmp.ne.s32.totalorder %s138, %s140
      %p147 = scmp.eq.s32.totalorder %s25, 1
      %p148 = por %p146, %p147
      %p149 = scmp.ne.s32.totalorder %s140, %s141
      %p150 = scmp.eq.s32.totalorder %s25, 0
      %p151 = por %p149, %p150
      %p152 = scmp.ne.s32.totalorder %s140, %s141
      %p153 = scmp.eq.s32.totalorder %s26, 1
      %p154 = por %p152, %p153
      %p156 = scmp.ne.s32.totalorder %s141, %s155
      %p157 = scmp.eq.s32.totalorder %s26, 0
      %p158 = por %p156, %p157
      %s160 = sadd.s32 %s159, 1
      %p163 = scmp.eq.s32.totalorder %s20, 1
      %p164 = scmp.ne.s32.totalorder %s159, %s161
      %p165 = scmp.eq.s32.totalorder %s20, 0
      %p166 = por %p164, %p165
      %p167 = scmp.ne.s32.totalorder %s159, %s161
      %p168 = scmp.eq.s32.totalorder %s25, 1
      %p169 = por %p167, %p168
      %p170 = scmp.ne.s32.totalorder %s161, %s162
      %p171 = scmp.eq.s32.totalorder %s25, 0
      %p172 = por %p170, %p171
      %p173 = scmp.ne.s32.totalorder %s161, %s162
      %p174 = scmp.eq.s32.totalorder %s26, 1
      %p175 = por %p173, %p174
      %p177 = scmp.ne.s32.totalorder %s162, %s176
      %p178 = scmp.eq.s32.totalorder %s26, 0
      %p179 = por %p177, %p178
      %s180 = ssub.s32 %s20, %s27
      %p181 = scmp.eq.s32.totalorder %s180, 0
      %s183 = sadd.s32 %s182, 1
      %s184 = scalar_select %p181, %s182, %s183
      %p187 = pneg %p181
      %p188 = scmp.eq.s32.totalorder %s20, 1
      %p189 = por %p187, %p188
      %p190 = scmp.ne.s32.totalorder %s182, %s185
      %p191 = scmp.eq.s32.totalorder %s20, 0
      %p192 = por %p190, %p191
      %p193 = scmp.ne.s32.totalorder %s182, %s185
      %p194 = scmp.eq.s32.totalorder %s25, 1
      %p195 = por %p193, %p194
      %p196 = scmp.ne.s32.totalorder %s185, %s186
      %p197 = scmp.eq.s32.totalorder %s25, 0
      %p198 = por %p196, %p197
      %p199 = scmp.ne.s32.totalorder %s185, %s186
      %p200 = scmp.eq.s32.totalorder %s26, 1
      %p201 = por %p199, %p200
      %p203 = scmp.ne.s32.totalorder %s186, %s202
      %p204 = scmp.eq.s32.totalorder %s26, 0
      %p205 = por %p203, %p204
      %p206 = scmp.le.s32.totalorder 1, %s20
      %p207 = scmp.lt.s32.totalorder %s20, 3
      %p208 = pnand %p206, %p207
      %p209 = pneg %p208
      // Predicated region
      $region9: #{tpu_custom_call.1} parent=5 // pred_check
        _
      $region10: #{tpu_custom_call.1} parent=5 // pred_check_branch
        %211 = sbr.rel (%p208) target = $region12
      $region11: #{tpu_custom_call.1} parent=5 // pred_region
        %s212 = ssub.s32 %s20, 1
        // Predicated region
        $region13: #{tpu_custom_call.1} parent=11 // pred_check
          %p213 = pneg %p67
        $region14: #{tpu_custom_call.1} parent=11 // pred_check_branch
          %215 = sbr.rel (%p213) target = $region16
        $region15: #{tpu_custom_call.1} parent=11 // pred_region
          %217 = vsyncadd [#allocation7], 0
          %s218 = sshll.u32 %s1, 4
          %s219 = int_to_ptr.hbm [resolvable:$true] %s218
          %s220 = sshll.u32 [#allocation6], 4
          %s221 = int_to_ptr.vmem [resolvable:$true] %s220
          %226 = dma.hbm_to_vmem [thread:$0]  %s219, 9216, %s221, [#allocation7], 64, 64, 4
        $region16: #{tpu_custom_call.1} parent=11 // pred_fallthru
          _
        // Predicated region
        $region17: #{tpu_custom_call.1} parent=11 // pred_check
          %p227 = pneg %p88
        $region18: #{tpu_custom_call.1} parent=11 // pred_check_branch
          %229 = sbr.rel (%p227) target = $region20
        $region19: #{tpu_custom_call.1} parent=11 // pred_region
          %231 = vsyncadd [#allocation7], 0
          %s232 = sshll.u32 %s2, 4
          %s233 = int_to_ptr.hbm [resolvable:$true] %s232
          %s234 = sshll.u32 [#allocation8], 4
          %s235 = int_to_ptr.vmem [resolvable:$true] %s234
          %240 = dma.hbm_to_vmem [thread:$0]  %s233, 9216, %s235, [#allocation7], 64, 64, 4
        $region20: #{tpu_custom_call.1} parent=11 // pred_fallthru
          _
        // Predicated region
        $region21: #{tpu_custom_call.1} parent=11 // pred_check
          %p241 = pneg %p109
        $region22: #{tpu_custom_call.1} parent=11 // pred_check_branch
          %243 = sbr.rel (%p241) target = $region24
        $region23: #{tpu_custom_call.1} parent=11 // pred_region
          _
        $region24: #{tpu_custom_call.1} parent=11 // pred_fallthru
          _
        // Predicated region
        $region25: #{tpu_custom_call.1} parent=11 // pred_check
          %p244 = pneg %p130
        $region26: #{tpu_custom_call.1} parent=11 // pred_check_branch
          %246 = sbr.rel (%p244) target = $region28
        $region27: #{tpu_custom_call.1} parent=11 // pred_region
          _
        $region28: #{tpu_custom_call.1} parent=11 // pred_fallthru
          _
        // Predicated region
        $region29: #{tpu_custom_call.1} parent=11 // pred_check
          %p247 = pneg %p151
        $region30: #{tpu_custom_call.1} parent=11 // pred_check_branch
          %249 = sbr.rel (%p247) target = $region32
        $region31: #{tpu_custom_call.1} parent=11 // pred_region
          _
        $region32: #{tpu_custom_call.1} parent=11 // pred_fallthru
          _
        // Predicated region
        $region33: #{tpu_custom_call.1} parent=11 // pred_check
          %p250 = pneg %p172
        $region34: #{tpu_custom_call.1} parent=11 // pred_check_branch
          %252 = sbr.rel (%p250) target = $region36
        $region35: #{tpu_custom_call.1} parent=11 // pred_region
          _
        $region36: #{tpu_custom_call.1} parent=11 // pred_fallthru
          _
      $region12: #{tpu_custom_call.1} parent=5 // pred_fallthru
        _
      %p253 = scmp.lt.s32.totalorder %s20, 2
      // Predicated region
      $region37: #{tpu_custom_call.1} parent=5 // pred_check
        %p254 = pneg %p253
      $region38: #{tpu_custom_call.1} parent=5 // pred_check_branch
        %256 = sbr.rel (%p254) target = $region40
      $region39: #{tpu_custom_call.1} parent=5 // pred_region
        // Predicated region
        $region41: #{tpu_custom_call.1} parent=39 // pred_check
          %p257 = pneg %p40
        $region42: #{tpu_custom_call.1} parent=39 // pred_check_branch
          %259 = sbr.rel (%p257) target = $region44
        $region43: #{tpu_custom_call.1} parent=39 // pred_region
          %s260 = sand.u32 %s30, 1
          %s261 = scalar_lea.sflag [#allocation4], %s260
          %s262 = sand.u32 %s30, 1
          %s263 = smul.addr %s262, 256
          %s264 = scalar_lea.vmem [#allocation3], %s263
          %266 = vsyncadd %s261, 0
          %s267 = smul.addr %s20, 32
          %s268 = smul.addr %s267, 8
          %s269 = scalar_lea.hbm %s0, %s268
          %s270 = sshll.u32 %s269, 4
          %s271 = int_to_ptr.hbm [resolvable:$true] %s270
          %s272 = sshll.u32 %s264, 4
          %s273 = int_to_ptr.vmem [resolvable:$true] %s272
          %278 = dma.hbm_to_vmem [thread:$0]  %s271, 4096, %s273, %s261, 128, 128, 8
        $region44: #{tpu_custom_call.1} parent=39 // pred_fallthru
          _
      $region40: #{tpu_custom_call.1} parent=5 // pred_fallthru
        _
      %p279 = scmp.le.s32.totalorder 1, %s20
      %p280 = scmp.lt.s32.totalorder %s20, 3
      %p281 = pnand %p279, %p280
      %p282 = pneg %p281
      // Predicated region
      $region45: #{tpu_custom_call.1} parent=5 // pred_check
        _
      $region46: #{tpu_custom_call.1} parent=5 // pred_check_branch
        %284 = sbr.rel (%p281) target = $region48
      $region47: #{tpu_custom_call.1} parent=5 // pred_region
        %s285 = ssub.s32 %s20, 1
        %s286 = sand.u32 %s33, 1
        %s287 = scalar_lea.sflag [#allocation4], %s286
        %s288 = sand.u32 %s33, 1
        %s289 = smul.addr %s288, 256
        %s290 = scalar_lea.vmem [#allocation3], %s289
        // Predicated region
        $region49: #{tpu_custom_call.1} parent=47 // pred_check
          %p291 = pneg %p46
        $region50: #{tpu_custom_call.1} parent=47 // pred_check_branch
          %293 = sbr.rel (%p291) target = $region52
        $region51: #{tpu_custom_call.1} parent=47 // pred_region
          %295 = dma.done %s287, 4096
        $region52: #{tpu_custom_call.1} parent=47 // pred_fallthru
          _
        // Predicated region
        $region53: #{tpu_custom_call.1} parent=47 // pred_check
          %p296 = pneg %p67
        $region54: #{tpu_custom_call.1} parent=47 // pred_check_branch
          %298 = sbr.rel (%p296) target = $region56
        $region55: #{tpu_custom_call.1} parent=47 // pred_region
          %300 = dma.done [#allocation7], 9216
        $region56: #{tpu_custom_call.1} parent=47 // pred_fallthru
          _
        // Predicated region
        $region57: #{tpu_custom_call.1} parent=47 // pred_check
          %p301 = pneg %p88
        $region58: #{tpu_custom_call.1} parent=47 // pred_check_branch
          %303 = sbr.rel (%p301) target = $region60
        $region59: #{tpu_custom_call.1} parent=47 // pred_region
          %305 = dma.done [#allocation7], 9216
        $region60: #{tpu_custom_call.1} parent=47 // pred_fallthru
          _
        %s306 = sand.u32 %s33, 1
        %s307 = scalar_lea.sflag [#allocation4], %s306
        %s308 = sand.u32 %s33, 1
        %s309 = smul.addr %s308, 256
        %s310 = scalar_lea.vmem [#allocation3], %s309
        %p311 = pneg %p46
        %p312 = pneg %p43
        %p313 = pneg %p67
        %p314 = pneg %p64
        %p315 = pneg %p88
        %p316 = pneg %p85
        %p317 = pneg %p109
        %p318 = pneg %p106
        %p319 = pneg %p130
        %p320 = pneg %p127
        %p321 = pneg %p151
        %p322 = pneg %p148
        %p323 = pneg %p172
        %p324 = pneg %p169
        %p325 = pneg %p198
        %p326 = pneg %p195
        %s327 = sand.u32 %s185, 1
        %s328 = scalar_lea.sflag [#allocation5], %s327
        %s329 = sand.u32 %s185, 1
        %s330 = smul.addr %s329, 256
        %s331 = scalar_lea.vmem [#allocation9], %s330
        %v332 = vld [vmem:[%s290] sm:$0xff]
        %v333 = vld [vmem:[%s290 + $0x8] sm:$0xff]
        %v334 = vld [vmem:[%s290 + $0x10] sm:$0xff]
        %v335 = vld [vmem:[%s290 + $0x18] sm:$0xff]
        %v336 = vld [vmem:[%s290 + $0x20] sm:$0xff]
        %v337 = vld [vmem:[%s290 + $0x28] sm:$0xff]
        %v338 = vld [vmem:[%s290 + $0x30] sm:$0xff]
        %v339 = vld [vmem:[%s290 + $0x38] sm:$0xff]
        %v340 = vld [vmem:[%s290 + $0x40] sm:$0xff]
        %v341 = vld [vmem:[%s290 + $0x48] sm:$0xff]
        %v342 = vld [vmem:[%s290 + $0x50] sm:$0xff]
        %v343 = vld [vmem:[%s290 + $0x58] sm:$0xff]
        %v344 = vld [vmem:[%s290 + $0x60] sm:$0xff]
        %v345 = vld [vmem:[%s290 + $0x68] sm:$0xff]
        %v346 = vld [vmem:[%s290 + $0x70] sm:$0xff]
        %v347 = vld [vmem:[%s290 + $0x78] sm:$0xff]
        %v348 = vld [vmem:[%s290 + $0x80] sm:$0xff]
        %v349 = vld [vmem:[%s290 + $0x88] sm:$0xff]
        %v350 = vld [vmem:[%s290 + $0x90] sm:$0xff]
        %v351 = vld [vmem:[%s290 + $0x98] sm:$0xff]
        %v352 = vld [vmem:[%s290 + $0xa0] sm:$0xff]
        %v353 = vld [vmem:[%s290 + $0xa8] sm:$0xff]
        %v354 = vld [vmem:[%s290 + $0xb0] sm:$0xff]
        %v355 = vld [vmem:[%s290 + $0xb8] sm:$0xff]
        %v356 = vld [vmem:[%s290 + $0xc0] sm:$0xff]
        %v357 = vld [vmem:[%s290 + $0xc8] sm:$0xff]
        %v358 = vld [vmem:[%s290 + $0xd0] sm:$0xff]
        %v359 = vld [vmem:[%s290 + $0xd8] sm:$0xff]
        %v360 = vld [vmem:[%s290 + $0xe0] sm:$0xff]
        %v361 = vld [vmem:[%s290 + $0xe8] sm:$0xff]
        %v362 = vld [vmem:[%s290 + $0xf0] sm:$0xff]
        %v363 = vld [vmem:[%s290 + $0xf8] sm:$0xff]
        %v364 = vpack.c.bf16 %v332, %v332
        %v365 = vpack.c.bf16 %v333, %v333
        %v366 = vpack.c.bf16 %v334, %v334
        %v367 = vpack.c.bf16 %v335, %v335
        %v368 = vpack.c.bf16 %v336, %v336
        %v369 = vpack.c.bf16 %v337, %v337
        %v370 = vpack.c.bf16 %v338, %v338
        %v371 = vpack.c.bf16 %v339, %v339
        %v372 = vpack.c.bf16 %v340, %v340
        %v373 = vpack.c.bf16 %v341, %v341
        %v374 = vpack.c.bf16 %v342, %v342
        %v375 = vpack.c.bf16 %v343, %v343
        %v376 = vpack.c.bf16 %v344, %v344
        %v377 = vpack.c.bf16 %v345, %v345
        %v378 = vpack.c.bf16 %v346, %v346
        %v379 = vpack.c.bf16 %v347, %v347
        %v380 = vpack.c.bf16 %v348, %v348
        %v381 = vpack.c.bf16 %v349, %v349
        %v382 = vpack.c.bf16 %v350, %v350
        %v383 = vpack.c.bf16 %v351, %v351
        %v384 = vpack.c.bf16 %v352, %v352
        %v385 = vpack.c.bf16 %v353, %v353
        %v386 = vpack.c.bf16 %v354, %v354
        %v387 = vpack.c.bf16 %v355, %v355
        %v388 = vpack.c.bf16 %v356, %v356
        %v389 = vpack.c.bf16 %v357, %v357
        %v390 = vpack.c.bf16 %v358, %v358
        %v391 = vpack.c.bf16 %v359, %v359
        %v392 = vpack.c.bf16 %v360, %v360
        %v393 = vpack.c.bf16 %v361, %v361
        %v394 = vpack.c.bf16 %v362, %v362
        %v395 = vpack.c.bf16 %v363, %v363
        %s396 = scalar_lea.vmem [#allocation2], 16
        %397 = vst [vmem:[%s396 + $0x4] sm:$0xf] %v364
        %398 = vst [vmem:[%s396 + $0x8] sm:$0xf] %v365
        %399 = vst [vmem:[%s396 + $0x14] sm:$0xf] %v366
        %400 = vst [vmem:[%s396 + $0x18] sm:$0xf] %v367
        %401 = vst [vmem:[%s396 + $0x24] sm:$0xf] %v368
        %402 = vst [vmem:[%s396 + $0x28] sm:$0xf] %v369
        %403 = vst [vmem:[%s396 + $0x34] sm:$0xf] %v370
        %404 = vst [vmem:[%s396 + $0x38] sm:$0xf] %v371
        %405 = vst [vmem:[%s396 + $0x44] sm:$0xf] %v372
        %406 = vst [vmem:[%s396 + $0x48] sm:$0xf] %v373
        %407 = vst [vmem:[%s396 + $0x54] sm:$0xf] %v374
        %408 = vst [vmem:[%s396 + $0x58] sm:$0xf] %v375
        %409 = vst [vmem:[%s396 + $0x64] sm:$0xf] %v376
        %410 = vst [vmem:[%s396 + $0x68] sm:$0xf] %v377
        %411 = vst [vmem:[%s396 + $0x74] sm:$0xf] %v378
        %412 = vst [vmem:[%s396 + $0x78] sm:$0xf] %v379
        %413 = vst [vmem:[%s396 + $0x84] sm:$0xf] %v380
        %414 = vst [vmem:[%s396 + $0x88] sm:$0xf] %v381
        %415 = vst [vmem:[%s396 + $0x94] sm:$0xf] %v382
        %416 = vst [vmem:[%s396 + $0x98] sm:$0xf] %v383
        %417 = vst [vmem:[%s396 + $0xa4] sm:$0xf] %v384
        %418 = vst [vmem:[%s396 + $0xa8] sm:$0xf] %v385
        %419 = vst [vmem:[%s396 + $0xb4] sm:$0xf] %v386
        %420 = vst [vmem:[%s396 + $0xb8] sm:$0xf] %v387
        %421 = vst [vmem:[%s396 + $0xc4] sm:$0xf] %v388
        %422 = vst [vmem:[%s396 + $0xc8] sm:$0xf] %v389
        %423 = vst [vmem:[%s396 + $0xd4] sm:$0xf] %v390
        %424 = vst [vmem:[%s396 + $0xd8] sm:$0xf] %v391
        %425 = vst [vmem:[%s396 + $0xe4] sm:$0xf] %v392
        %426 = vst [vmem:[%s396 + $0xe8] sm:$0xf] %v393
        %427 = vst [vmem:[%s396 + $0xf4] sm:$0xf] %v394
        %428 = vst [vmem:[%s396 + $0xf8] sm:$0xf] %v395
        %v445 = vrot.slane %v364, 5
        %v446 = vrot.slane %v366, 5
        %v447 = vrot.slane %v368, 5
        %v448 = vrot.slane %v370, 5
        %v449 = vrot.slane %v372, 5
        %v450 = vrot.slane %v374, 5
        %v451 = vrot.slane %v376, 5
        %v452 = vrot.slane %v378, 5
        %v453 = vrot.slane %v380, 5
        %v454 = vrot.slane %v382, 5
        %v455 = vrot.slane %v384, 5
        %v456 = vrot.slane %v386, 5
        %v457 = vrot.slane %v388, 5
        %v458 = vrot.slane %v390, 5
        %v459 = vrot.slane %v392, 5
        %v460 = vrot.slane %v394, 5
        %vm477 = vcmask 1043459
        %vm478 = vsmask.f32 7950
        %vm479 = vmand %vm477, %vm478
        %v480 = vld [vmem:[%s396] sm:$0x8]
        %v481 = vsel %vm479, %v445, %v480
        %482 = vst [vmem:[%s396] sm:$0x8] %v481
        %v483 = vld [vmem:[%s396 + $0x10] sm:$0x8]
        %v484 = vsel %vm479, %v446, %v483
        %485 = vst [vmem:[%s396 + $0x10] sm:$0x8] %v484
        %v486 = vld [vmem:[%s396 + $0x20] sm:$0x8]
        %v487 = vsel %vm479, %v447, %v486
        %488 = vst [vmem:[%s396 + $0x20] sm:$0x8] %v487
        %v489 = vld [vmem:[%s396 + $0x30] sm:$0x8]
        %v490 = vsel %vm479, %v448, %v489
        %491 = vst [vmem:[%s396 + $0x30] sm:$0x8] %v490
        %v492 = vld [vmem:[%s396 + $0x40] sm:$0x8]
        %v493 = vsel %vm479, %v449, %v492
        %494 = vst [vmem:[%s396 + $0x40] sm:$0x8] %v493
        %v495 = vld [vmem:[%s396 + $0x50] sm:$0x8]
        %v496 = vsel %vm479, %v450, %v495
        %497 = vst [vmem:[%s396 + $0x50] sm:$0x8] %v496
        %v498 = vld [vmem:[%s396 + $0x60] sm:$0x8]
        %v499 = vsel %vm479, %v451, %v498
        %500 = vst [vmem:[%s396 + $0x60] sm:$0x8] %v499
        %v501 = vld [vmem:[%s396 + $0x70] sm:$0x8]
        %v502 = vsel %vm479, %v452, %v501
        %503 = vst [vmem:[%s396 + $0x70] sm:$0x8] %v502
        %v504 = vld [vmem:[%s396 + $0x80] sm:$0x8]
        %v505 = vsel %vm479, %v453, %v504
        %506 = vst [vmem:[%s396 + $0x80] sm:$0x8] %v505
        %v507 = vld [vmem:[%s396 + $0x90] sm:$0x8]
        %v508 = vsel %vm479, %v454, %v507
        %509 = vst [vmem:[%s396 + $0x90] sm:$0x8] %v508
        %v510 = vld [vmem:[%s396 + $0xa0] sm:$0x8]
        %v511 = vsel %vm479, %v455, %v510
        %512 = vst [vmem:[%s396 + $0xa0] sm:$0x8] %v511
        %v513 = vld [vmem:[%s396 + $0xb0] sm:$0x8]
        %v514 = vsel %vm479, %v456, %v513
        %515 = vst [vmem:[%s396 + $0xb0] sm:$0x8] %v514
        %v516 = vld [vmem:[%s396 + $0xc0] sm:$0x8]
        %v517 = vsel %vm479, %v457, %v516
        %518 = vst [vmem:[%s396 + $0xc0] sm:$0x8] %v517
        %v519 = vld [vmem:[%s396 + $0xd0] sm:$0x8]
        %v520 = vsel %vm479, %v458, %v519
        %521 = vst [vmem:[%s396 + $0xd0] sm:$0x8] %v520
        %v522 = vld [vmem:[%s396 + $0xe0] sm:$0x8]
        %v523 = vsel %vm479, %v459, %v522
        %524 = vst [vmem:[%s396 + $0xe0] sm:$0x8] %v523
        %v525 = vld [vmem:[%s396 + $0xf0] sm:$0x8]
        %v526 = vsel %vm479, %v460, %v525
        %527 = vst [vmem:[%s396 + $0xf0] sm:$0x8] %v526
        %v544 = vrot.slane %v365, 7
        %v545 = vrot.slane %v544, 4
        %v546 = vrot.slane %v367, 7
        %v547 = vrot.slane %v546, 4
        %v548 = vrot.slane %v369, 7
        %v549 = vrot.slane %v548, 4
        %v550 = vrot.slane %v371, 7
        %v551 = vrot.slane %v550, 4
        %v552 = vrot.slane %v373, 7
        %v553 = vrot.slane %v552, 4
        %v554 = vrot.slane %v375, 7
        %v555 = vrot.slane %v554, 4
        %v556 = vrot.slane %v377, 7
        %v557 = vrot.slane %v556, 4
        %v558 = vrot.slane %v379, 7
        %v559 = vrot.slane %v558, 4
        %v560 = vrot.slane %v381, 7
        %v561 = vrot.slane %v560, 4
        %v562 = vrot.slane %v383, 7
        %v563 = vrot.slane %v562, 4
        %v564 = vrot.slane %v385, 7
        %v565 = vrot.slane %v564, 4
        %v566 = vrot.slane %v387, 7
        %v567 = vrot.slane %v566, 4
        %v568 = vrot.slane %v389, 7
        %v569 = vrot.slane %v568, 4
        %v570 = vrot.slane %v391, 7
        %v571 = vrot.slane %v570, 4
        %v572 = vrot.slane %v393, 7
        %v573 = vrot.slane %v572, 4
        %v574 = vrot.slane %v395, 7
        %v575 = vrot.slane %v574, 4
        %vm592 = vcmask 1040384
        %vm593 = vsmask.f32 256
        %vm594 = vmand %vm592, %vm593
        %v595 = vld [vmem:[%s396 + $0xc] sm:$0x1]
        %v596 = vsel %vm594, %v545, %v595
        %597 = vst [vmem:[%s396 + $0xc] sm:$0x1] %v596
        %v598 = vld [vmem:[%s396 + $0x1c] sm:$0x1]
        %v599 = vsel %vm594, %v547, %v598
        %600 = vst [vmem:[%s396 + $0x1c] sm:$0x1] %v599
        %v601 = vld [vmem:[%s396 + $0x2c] sm:$0x1]
        %v602 = vsel %vm594, %v549, %v601
        %603 = vst [vmem:[%s396 + $0x2c] sm:$0x1] %v602
        %v604 = vld [vmem:[%s396 + $0x3c] sm:$0x1]
        %v605 = vsel %vm594, %v551, %v604
        %606 = vst [vmem:[%s396 + $0x3c] sm:$0x1] %v605
        %v607 = vld [vmem:[%s396 + $0x4c] sm:$0x1]
        %v608 = vsel %vm594, %v553, %v607
        %609 = vst [vmem:[%s396 + $0x4c] sm:$0x1] %v608
        %v610 = vld [vmem:[%s396 + $0x5c] sm:$0x1]
        %v611 = vsel %vm594, %v555, %v610
        %612 = vst [vmem:[%s396 + $0x5c] sm:$0x1] %v611
        %v613 = vld [vmem:[%s396 + $0x6c] sm:$0x1]
        %v614 = vsel %vm594, %v557, %v613
        %615 = vst [vmem:[%s396 + $0x6c] sm:$0x1] %v614
        %v616 = vld [vmem:[%s396 + $0x7c] sm:$0x1]
        %v617 = vsel %vm594, %v559, %v616
        %618 = vst [vmem:[%s396 + $0x7c] sm:$0x1] %v617
        %v619 = vld [vmem:[%s396 + $0x8c] sm:$0x1]
        %v620 = vsel %vm594, %v561, %v619
        %621 = vst [vmem:[%s396 + $0x8c] sm:$0x1] %v620
        %v622 = vld [vmem:[%s396 + $0x9c] sm:$0x1]
        %v623 = vsel %vm594, %v563, %v622
        %624 = vst [vmem:[%s396 + $0x9c] sm:$0x1] %v623
        %v625 = vld [vmem:[%s396 + $0xac] sm:$0x1]
        %v626 = vsel %vm594, %v565, %v625
        %627 = vst [vmem:[%s396 + $0xac] sm:$0x1] %v626
        %v628 = vld [vmem:[%s396 + $0xbc] sm:$0x1]
        %v629 = vsel %vm594, %v567, %v628
        %630 = vst [vmem:[%s396 + $0xbc] sm:$0x1] %v629
        %v631 = vld [vmem:[%s396 + $0xcc] sm:$0x1]
        %v632 = vsel %vm594, %v569, %v631
        %633 = vst [vmem:[%s396 + $0xcc] sm:$0x1] %v632
        %v634 = vld [vmem:[%s396 + $0xdc] sm:$0x1]
        %v635 = vsel %vm594, %v571, %v634
        %636 = vst [vmem:[%s396 + $0xdc] sm:$0x1] %v635
        %v637 = vld [vmem:[%s396 + $0xec] sm:$0x1]
        %v638 = vsel %vm594, %v573, %v637
        %639 = vst [vmem:[%s396 + $0xec] sm:$0x1] %v638
        %v640 = vld [vmem:[%s396 + $0xfc] sm:$0x1]
        %v641 = vsel %vm594, %v575, %v640
        %642 = vst [vmem:[%s396 + $0xfc] sm:$0x1] %v641
        %s643 = scalar_lea.vmem [#allocation2], 32
        %v644 = vld [vmem:[%s643] sm:$0xf]
        %v645 = vld [vmem:[%s643 + $0x4] sm:$0xf]
        %v646 = vld [vmem:[%s643 + $0x8] sm:$0xf]
        %v647 = vld [vmem:[%s643 + $0xc] sm:$0xf]
        %648 = vst [vmem:[#allocation2] sm:$0xf] %v644
        %649 = vst [vmem:[#allocation2 + $0x4] sm:$0xf] %v645
        %650 = vst [vmem:[#allocation2 + $0x8] sm:$0xf] %v646
        %651 = vst [vmem:[#allocation2 + $0xc] sm:$0xf] %v647
        %s652 = scalar_lea.vmem [#allocation2], 240
        %v653 = vld [vmem:[%s652] sm:$0xf]
        %v654 = vld [vmem:[%s652 + $0x4] sm:$0xf]
        %v655 = vld [vmem:[%s652 + $0x8] sm:$0xf]
        %v656 = vld [vmem:[%s652 + $0xc] sm:$0xf]
        %s657 = scalar_lea.vmem [#allocation2], 272
        %658 = vst [vmem:[%s657] sm:$0xf] %v653
        %659 = vst [vmem:[%s657 + $0x4] sm:$0xf] %v654
        %660 = vst [vmem:[%s657 + $0x8] sm:$0xf] %v655
        %661 = vst [vmem:[%s657 + $0xc] sm:$0xf] %v656
        %v662 = vld [vmem:[%s3] sm:$0x1]
        %v663 = vld [vmem:[%s4] sm:$0x1]
        %v664 = vld [vmem:[#allocation2] sm:$0x8]
        %v665 = vld [vmem:[#allocation2 + $0x4] sm:$0xf]
        %v666 = vld [vmem:[#allocation2 + $0x8] sm:$0xf]
        %v667 = vld [vmem:[#allocation2 + $0x10] sm:$0x8]
        %v668 = vld [vmem:[#allocation2 + $0x14] sm:$0xf]
        %v669 = vld [vmem:[#allocation2 + $0x18] sm:$0xf]
        %v670 = vld [vmem:[#allocation2 + $0x20] sm:$0x8]
        %v671 = vld [vmem:[#allocation2 + $0x24] sm:$0xf]
        %v672 = vld [vmem:[#allocation2 + $0x28] sm:$0xf]
        %v673 = vld [vmem:[#allocation2 + $0x30] sm:$0x8]
        %v674 = vld [vmem:[#allocation2 + $0x34] sm:$0xf]
        %v675 = vld [vmem:[#allocation2 + $0x38] sm:$0xf]
        %v676 = vld [vmem:[#allocation2 + $0x40] sm:$0x8]
        %v677 = vld [vmem:[#allocation2 + $0x44] sm:$0xf]
        %v678 = vld [vmem:[#allocation2 + $0x48] sm:$0xf]
        %v679 = vld [vmem:[#allocation2 + $0x50] sm:$0x8]
        %v680 = vld [vmem:[#allocation2 + $0x54] sm:$0xf]
        %v681 = vld [vmem:[#allocation2 + $0x58] sm:$0xf]
        %v682 = vld [vmem:[#allocation2 + $0x60] sm:$0x8]
        %v683 = vld [vmem:[#allocation2 + $0x64] sm:$0xf]
        %v684 = vld [vmem:[#allocation2 + $0x68] sm:$0xf]
        %v685 = vld [vmem:[#allocation2 + $0x70] sm:$0x8]
        %v686 = vld [vmem:[#allocation2 + $0x74] sm:$0xf]
        %v687 = vld [vmem:[#allocation2 + $0x78] sm:$0xf]
        %v688 = vld [vmem:[#allocation2 + $0x80] sm:$0x8]
        %v689 = vld [vmem:[#allocation2 + $0x84] sm:$0xf]
        %v690 = vld [vmem:[#allocation2 + $0x88] sm:$0xf]
        %v691 = vld [vmem:[#allocation2 + $0x90] sm:$0x8]
        %v692 = vld [vmem:[#allocation2 + $0x94] sm:$0xf]
        %v693 = vld [vmem:[#allocation2 + $0x98] sm:$0xf]
        %v694 = vld [vmem:[#allocation2 + $0xa0] sm:$0x8]
        %v695 = vld [vmem:[#allocation2 + $0xa4] sm:$0xf]
        %v696 = vld [vmem:[#allocation2 + $0xa8] sm:$0xf]
        %v697 = vld [vmem:[#allocation2 + $0xb0] sm:$0x8]
        %v698 = vld [vmem:[#allocation2 + $0xb4] sm:$0xf]
        %v699 = vld [vmem:[#allocation2 + $0xb8] sm:$0xf]
        %v700 = vld [vmem:[#allocation2 + $0xc0] sm:$0x8]
        %v701 = vld [vmem:[#allocation2 + $0xc4] sm:$0xf]
        %v702 = vld [vmem:[#allocation2 + $0xc8] sm:$0xf]
        %v703 = vld [vmem:[#allocation2 + $0xd0] sm:$0x8]
        %v704 = vld [vmem:[#allocation2 + $0xd4] sm:$0xf]
        %v705 = vld [vmem:[#allocation2 + $0xd8] sm:$0xf]
        %v706 = vld [vmem:[#allocation2 + $0xe0] sm:$0x8]
        %v707 = vld [vmem:[#allocation2 + $0xe4] sm:$0xf]
        %v708 = vld [vmem:[#allocation2 + $0xe8] sm:$0xf]
        %v709 = vld [vmem:[#allocation2 + $0xf0] sm:$0x8]
        %v710 = vld [vmem:[#allocation2 + $0xf4] sm:$0xf]
        %v711 = vld [vmem:[#allocation2 + $0xf8] sm:$0xf]
        %vm712 = vsmask.f32 4368
        %vm713 = vmor %vm593, %vm712
        %v715 = vshrl.u32 %v664, 16
        %v717 = vrot.slane %v715, 7
        %v718 = vrot.slane %v717, 4
        %v720 = vshrl.u32 %v665, 16
        %v722 = vrot.slane %v720, 7
        %v723 = vshll.u32 %v665, 16
        %v725 = vor.u32 %v722, %v723
        %v726 = vsel %vm713, %v718, %v725
        %v727 = vrot.slane %v722, 4
        %v729 = vshrl.u32 %v666, 16
        %v731 = vrot.slane %v729, 7
        %v732 = vshll.u32 %v666, 16
        %v734 = vor.u32 %v731, %v732
        %v735 = vsel %vm713, %v727, %v734
        %v737 = vshrl.u32 %v667, 16
        %v739 = vrot.slane %v737, 7
        %v740 = vrot.slane %v739, 4
        %v742 = vshrl.u32 %v668, 16
        %v744 = vrot.slane %v742, 7
        %v745 = vshll.u32 %v668, 16
        %v747 = vor.u32 %v744, %v745
        %v748 = vsel %vm713, %v740, %v747
        %v749 = vrot.slane %v744, 4
        %v751 = vshrl.u32 %v669, 16
        %v753 = vrot.slane %v751, 7
        %v754 = vshll.u32 %v669, 16
        %v756 = vor.u32 %v753, %v754
        %v757 = vsel %vm713, %v749, %v756
        %v759 = vshrl.u32 %v670, 16
        %v761 = vrot.slane %v759, 7
        %v762 = vrot.slane %v761, 4
        %v764 = vshrl.u32 %v671, 16
        %v766 = vrot.slane %v764, 7
        %v767 = vshll.u32 %v671, 16
        %v769 = vor.u32 %v766, %v767
        %v770 = vsel %vm713, %v762, %v769
        %v771 = vrot.slane %v766, 4
        %v773 = vshrl.u32 %v672, 16
        %v775 = vrot.slane %v773, 7
        %v776 = vshll.u32 %v672, 16
        %v778 = vor.u32 %v775, %v776
        %v779 = vsel %vm713, %v771, %v778
        %v781 = vshrl.u32 %v673, 16
        %v783 = vrot.slane %v781, 7
        %v784 = vrot.slane %v783, 4
        %v786 = vshrl.u32 %v674, 16
        %v788 = vrot.slane %v786, 7
        %v789 = vshll.u32 %v674, 16
        %v791 = vor.u32 %v788, %v789
        %v792 = vsel %vm713, %v784, %v791
        %v793 = vrot.slane %v788, 4
        %v795 = vshrl.u32 %v675, 16
        %v797 = vrot.slane %v795, 7
        %v798 = vshll.u32 %v675, 16
        %v800 = vor.u32 %v797, %v798
        %v801 = vsel %vm713, %v793, %v800
        %v803 = vshrl.u32 %v676, 16
        %v805 = vrot.slane %v803, 7
        %v806 = vrot.slane %v805, 4
        %v808 = vshrl.u32 %v677, 16
        %v810 = vrot.slane %v808, 7
        %v811 = vshll.u32 %v677, 16
        %v813 = vor.u32 %v810, %v811
        %v814 = vsel %vm713, %v806, %v813
        %v815 = vrot.slane %v810, 4
        %v817 = vshrl.u32 %v678, 16
        %v819 = vrot.slane %v817, 7
        %v820 = vshll.u32 %v678, 16
        %v822 = vor.u32 %v819, %v820
        %v823 = vsel %vm713, %v815, %v822
        %v825 = vshrl.u32 %v679, 16
        %v827 = vrot.slane %v825, 7
        %v828 = vrot.slane %v827, 4
        %v830 = vshrl.u32 %v680, 16
        %v832 = vrot.slane %v830, 7
        %v833 = vshll.u32 %v680, 16
        %v835 = vor.u32 %v832, %v833
        %v836 = vsel %vm713, %v828, %v835
        %v837 = vrot.slane %v832, 4
        %v839 = vshrl.u32 %v681, 16
        %v841 = vrot.slane %v839, 7
        %v842 = vshll.u32 %v681, 16
        %v844 = vor.u32 %v841, %v842
        %v845 = vsel %vm713, %v837, %v844
        %v847 = vshrl.u32 %v682, 16
        %v849 = vrot.slane %v847, 7
        %v850 = vrot.slane %v849, 4
        %v852 = vshrl.u32 %v683, 16
        %v854 = vrot.slane %v852, 7
        %v855 = vshll.u32 %v683, 16
        %v857 = vor.u32 %v854, %v855
        %v858 = vsel %vm713, %v850, %v857
        %v859 = vrot.slane %v854, 4
        %v861 = vshrl.u32 %v684, 16
        %v863 = vrot.slane %v861, 7
        %v864 = vshll.u32 %v684, 16
        %v866 = vor.u32 %v863, %v864
        %v867 = vsel %vm713, %v859, %v866
        %v869 = vshrl.u32 %v685, 16
        %v871 = vrot.slane %v869, 7
        %v872 = vrot.slane %v871, 4
        %v874 = vshrl.u32 %v686, 16
        %v876 = vrot.slane %v874, 7
        %v877 = vshll.u32 %v686, 16
        %v879 = vor.u32 %v876, %v877
        %v880 = vsel %vm713, %v872, %v879
        %v881 = vrot.slane %v876, 4
        %v883 = vshrl.u32 %v687, 16
        %v885 = vrot.slane %v883, 7
        %v886 = vshll.u32 %v687, 16
        %v888 = vor.u32 %v885, %v886
        %v889 = vsel %vm713, %v881, %v888
        %v891 = vshrl.u32 %v688, 16
        %v893 = vrot.slane %v891, 7
        %v894 = vrot.slane %v893, 4
        %v896 = vshrl.u32 %v689, 16
        %v898 = vrot.slane %v896, 7
        %v899 = vshll.u32 %v689, 16
        %v901 = vor.u32 %v898, %v899
        %v902 = vsel %vm713, %v894, %v901
        %v903 = vrot.slane %v898, 4
        %v905 = vshrl.u32 %v690, 16
        %v907 = vrot.slane %v905, 7
        %v908 = vshll.u32 %v690, 16
        %v910 = vor.u32 %v907, %v908
        %v911 = vsel %vm713, %v903, %v910
        %v913 = vshrl.u32 %v691, 16
        %v915 = vrot.slane %v913, 7
        %v916 = vrot.slane %v915, 4
        %v918 = vshrl.u32 %v692, 16
        %v920 = vrot.slane %v918, 7
        %v921 = vshll.u32 %v692, 16
        %v923 = vor.u32 %v920, %v921
        %v924 = vsel %vm713, %v916, %v923
        %v925 = vrot.slane %v920, 4
        %v927 = vshrl.u32 %v693, 16
        %v929 = vrot.slane %v927, 7
        %v930 = vshll.u32 %v693, 16
        %v932 = vor.u32 %v929, %v930
        %v933 = vsel %vm713, %v925, %v932
        %v935 = vshrl.u32 %v694, 16
        %v937 = vrot.slane %v935, 7
        %v938 = vrot.slane %v937, 4
        %v940 = vshrl.u32 %v695, 16
        %v942 = vrot.slane %v940, 7
        %v943 = vshll.u32 %v695, 16
        %v945 = vor.u32 %v942, %v943
        %v946 = vsel %vm713, %v938, %v945
        %v947 = vrot.slane %v942, 4
        %v949 = vshrl.u32 %v696, 16
        %v951 = vrot.slane %v949, 7
        %v952 = vshll.u32 %v696, 16
        %v954 = vor.u32 %v951, %v952
        %v955 = vsel %vm713, %v947, %v954
        %v957 = vshrl.u32 %v697, 16
        %v959 = vrot.slane %v957, 7
        %v960 = vrot.slane %v959, 4
        %v962 = vshrl.u32 %v698, 16
        %v964 = vrot.slane %v962, 7
        %v965 = vshll.u32 %v698, 16
        %v967 = vor.u32 %v964, %v965
        %v968 = vsel %vm713, %v960, %v967
        %v969 = vrot.slane %v964, 4
        %v971 = vshrl.u32 %v699, 16
        %v973 = vrot.slane %v971, 7
        %v974 = vshll.u32 %v699, 16
        %v976 = vor.u32 %v973, %v974
        %v977 = vsel %vm713, %v969, %v976
        %v979 = vshrl.u32 %v700, 16
        %v981 = vrot.slane %v979, 7
        %v982 = vrot.slane %v981, 4
        %v984 = vshrl.u32 %v701, 16
        %v986 = vrot.slane %v984, 7
        %v987 = vshll.u32 %v701, 16
        %v989 = vor.u32 %v986, %v987
        %v990 = vsel %vm713, %v982, %v989
        %v991 = vrot.slane %v986, 4
        %v993 = vshrl.u32 %v702, 16
        %v995 = vrot.slane %v993, 7
        %v996 = vshll.u32 %v702, 16
        %v998 = vor.u32 %v995, %v996
        %v999 = vsel %vm713, %v991, %v998
        %v1001 = vshrl.u32 %v703, 16
        %v1003 = vrot.slane %v1001, 7
        %v1004 = vrot.slane %v1003, 4
        %v1006 = vshrl.u32 %v704, 16
        %v1008 = vrot.slane %v1006, 7
        %v1009 = vshll.u32 %v704, 16
        %v1011 = vor.u32 %v1008, %v1009
        %v1012 = vsel %vm713, %v1004, %v1011
        %v1013 = vrot.slane %v1008, 4
        %v1015 = vshrl.u32 %v705, 16
        %v1017 = vrot.slane %v1015, 7
        %v1018 = vshll.u32 %v705, 16
        %v1020 = vor.u32 %v1017, %v1018
        %v1021 = vsel %vm713, %v1013, %v1020
        %v1023 = vshrl.u32 %v706, 16
        %v1025 = vrot.slane %v1023, 7
        %v1026 = vrot.slane %v1025, 4
        %v1028 = vshrl.u32 %v707, 16
        %v1030 = vrot.slane %v1028, 7
        %v1031 = vshll.u32 %v707, 16
        %v1033 = vor.u32 %v1030, %v1031
        %v1034 = vsel %vm713, %v1026, %v1033
        %v1035 = vrot.slane %v1030, 4
        %v1037 = vshrl.u32 %v708, 16
        %v1039 = vrot.slane %v1037, 7
        %v1040 = vshll.u32 %v708, 16
        %v1042 = vor.u32 %v1039, %v1040
        %v1043 = vsel %vm713, %v1035, %v1042
        %v1045 = vshrl.u32 %v709, 16
        %v1047 = vrot.slane %v1045, 7
        %v1048 = vrot.slane %v1047, 4
        %v1050 = vshrl.u32 %v710, 16
        %v1052 = vrot.slane %v1050, 7
        %v1053 = vshll.u32 %v710, 16
        %v1055 = vor.u32 %v1052, %v1053
        %v1056 = vsel %vm713, %v1048, %v1055
        %v1057 = vrot.slane %v1052, 4
        %v1059 = vshrl.u32 %v711, 16
        %v1061 = vrot.slane %v1059, 7
        %v1062 = vshll.u32 %v711, 16
        %v1064 = vor.u32 %v1061, %v1062
        %v1065 = vsel %vm713, %v1057, %v1064
        %v1066 = vld [vmem:[#allocation6] sm:$0xf]
        %v1067 = vld [vmem:[#allocation6 + $0x4] sm:$0xf]
        %v1068 = vld [vmem:[#allocation6 + $0x8] sm:$0xf]
        %v1069 = vld [vmem:[#allocation6 + $0xc] sm:$0xf]
        %v1070 = vld [vmem:[#allocation6 + $0x10] sm:$0xf]
        %v1071 = vld [vmem:[#allocation6 + $0x14] sm:$0xf]
        %v1072 = vld [vmem:[#allocation6 + $0x18] sm:$0xf]
        %v1073 = vld [vmem:[#allocation6 + $0x1c] sm:$0xf]
        %v1074 = vld [vmem:[#allocation6 + $0x20] sm:$0xf]
        %v1075 = vld [vmem:[#allocation6 + $0x24] sm:$0xf]
        %v1076 = vld [vmem:[#allocation6 + $0x28] sm:$0xf]
        %v1077 = vld [vmem:[#allocation6 + $0x2c] sm:$0xf]
        %v1078 = vld [vmem:[#allocation6 + $0x30] sm:$0xf]
        %v1079 = vld [vmem:[#allocation6 + $0x34] sm:$0xf]
        %v1080 = vld [vmem:[#allocation6 + $0x38] sm:$0xf]
        %v1081 = vld [vmem:[#allocation6 + $0x3c] sm:$0xf]
        %s1082 = scalar_lea.vmem [#allocation6], 64
        %v1083 = vld [vmem:[%s1082] sm:$0xf]
        %v1084 = vld [vmem:[%s1082 + $0x4] sm:$0xf]
        %v1085 = vld [vmem:[%s1082 + $0x8] sm:$0xf]
        %v1086 = vld [vmem:[%s1082 + $0xc] sm:$0xf]
        %v1087 = vld [vmem:[%s1082 + $0x10] sm:$0xf]
        %v1088 = vld [vmem:[%s1082 + $0x14] sm:$0xf]
        %v1089 = vld [vmem:[%s1082 + $0x18] sm:$0xf]
        %v1090 = vld [vmem:[%s1082 + $0x1c] sm:$0xf]
        %v1091 = vld [vmem:[%s1082 + $0x20] sm:$0xf]
        %v1092 = vld [vmem:[%s1082 + $0x24] sm:$0xf]
        %v1093 = vld [vmem:[%s1082 + $0x28] sm:$0xf]
        %v1094 = vld [vmem:[%s1082 + $0x2c] sm:$0xf]
        %v1095 = vld [vmem:[%s1082 + $0x30] sm:$0xf]
        %v1096 = vld [vmem:[%s1082 + $0x34] sm:$0xf]
        %v1097 = vld [vmem:[%s1082 + $0x38] sm:$0xf]
        %v1098 = vld [vmem:[%s1082 + $0x3c] sm:$0xf]
        %v1131 = vunpack.c.l.b16 %v665
        %v1132 = vunpack.c.l.b16 %v666
        %v1133 = vunpack.c.l.b16 %v668
        %v1134 = vunpack.c.l.b16 %v669
        %v1135 = vunpack.c.l.b16 %v671
        %v1136 = vunpack.c.l.b16 %v672
        %v1137 = vunpack.c.l.b16 %v674
        %v1138 = vunpack.c.l.b16 %v675
        %v1139 = vunpack.c.l.b16 %v677
        %v1140 = vunpack.c.l.b16 %v678
        %v1141 = vunpack.c.l.b16 %v680
        %v1142 = vunpack.c.l.b16 %v681
        %v1143 = vunpack.c.l.b16 %v683
        %v1144 = vunpack.c.l.b16 %v684
        %v1145 = vunpack.c.l.b16 %v686
        %v1146 = vunpack.c.l.b16 %v687
        %v1147 = vunpack.c.l.b16 %v689
        %v1148 = vunpack.c.l.b16 %v690
        %v1149 = vunpack.c.l.b16 %v692
        %v1150 = vunpack.c.l.b16 %v693
        %v1151 = vunpack.c.l.b16 %v695
        %v1152 = vunpack.c.l.b16 %v696
        %v1153 = vunpack.c.l.b16 %v698
        %v1154 = vunpack.c.l.b16 %v699
        %v1155 = vunpack.c.l.b16 %v701
        %v1156 = vunpack.c.l.b16 %v702
        %v1157 = vunpack.c.l.b16 %v704
        %v1158 = vunpack.c.l.b16 %v705
        %v1159 = vunpack.c.l.b16 %v707
        %v1160 = vunpack.c.l.b16 %v708
        %v1161 = vunpack.c.l.b16 %v710
        %v1162 = vunpack.c.l.b16 %v711
        %v1163 = vpack.c.b16 %v1132, %v1131
        %v1164 = vpack.c.b16 %v1134, %v1133
        %v1165 = vpack.c.b16 %v1136, %v1135
        %v1166 = vpack.c.b16 %v1138, %v1137
        %v1167 = vpack.c.b16 %v1140, %v1139
        %v1168 = vpack.c.b16 %v1142, %v1141
        %v1169 = vpack.c.b16 %v1144, %v1143
        %v1170 = vpack.c.b16 %v1146, %v1145
        %v1171 = vpack.c.b16 %v1148, %v1147
        %v1172 = vpack.c.b16 %v1150, %v1149
        %v1173 = vpack.c.b16 %v1152, %v1151
        %v1174 = vpack.c.b16 %v1154, %v1153
        %v1175 = vpack.c.b16 %v1156, %v1155
        %v1176 = vpack.c.b16 %v1158, %v1157
        %v1177 = vpack.c.b16 %v1160, %v1159
        %v1178 = vpack.c.b16 %v1162, %v1161
        %v1211 = vunpack.c.l.b16 %v1083
        %v1212 = vunpack.c.l.b16 %v1084
        %v1213 = vunpack.c.l.b16 %v1085
        %v1214 = vunpack.c.l.b16 %v1086
        %v1215 = vunpack.c.l.b16 %v1087
        %v1216 = vunpack.c.l.b16 %v1088
        %v1217 = vunpack.c.l.b16 %v1089
        %v1218 = vunpack.c.l.b16 %v1090
        %v1219 = vunpack.c.l.b16 %v1091
        %v1220 = vunpack.c.l.b16 %v1092
        %v1221 = vunpack.c.l.b16 %v1093
        %v1222 = vunpack.c.l.b16 %v1094
        %v1223 = vunpack.c.l.b16 %v1095
        %v1224 = vunpack.c.l.b16 %v1096
        %v1225 = vunpack.c.l.b16 %v1097
        %v1226 = vunpack.c.l.b16 %v1098
        %v1227 = vpack.c.b16 %v1212, %v1211
        %v1228 = vpack.c.b16 %v1214, %v1213
        %v1229 = vpack.c.b16 %v1216, %v1215
        %v1230 = vpack.c.b16 %v1218, %v1217
        %v1231 = vpack.c.b16 %v1220, %v1219
        %v1232 = vpack.c.b16 %v1222, %v1221
        %v1233 = vpack.c.b16 %v1224, %v1223
        %v1234 = vpack.c.b16 %v1226, %v1225
        %1243 = vmatpush.bf16.msra.mxu0 %v1234
        %1244 = vmatpush.bf16.msra.mxu0 %v1233
        %1245 = vmatpush.bf16.msra.mxu0 %v1232
        %1246 = vmatpush.bf16.msra.mxu0 %v1231
        %1247 = vmatpush.bf16.msra.mxu0 %v1230
        %1248 = vmatpush.bf16.msra.mxu0 %v1229
        %1249 = vmatpush.bf16.msra.mxu0 %v1228
        %1250 = vmatpush.bf16.msra.mxu0 %v1227
        %1251 = vmatmul.bf16.gmra.mxu0 %v1163
        %v1252 = vpop.f32.mrf.mxu0
        %v1253 = vadd.f32 0.0, %v1252
        %v1254 = vpop.f32.mrf.mxu0
        %v1255 = vadd.f32 0.0, %v1254
        %1256 = vmatmul.bf16.gmra.mxu0 %v1164
        %v1257 = vpop.f32.mrf.mxu0
        %v1258 = vadd.f32 0.0, %v1257
        %v1259 = vpop.f32.mrf.mxu0
        %v1260 = vadd.f32 0.0, %v1259
        %1261 = vmatmul.bf16.gmra.mxu0 %v1165
        %v1262 = vpop.f32.mrf.mxu0
        %v1263 = vadd.f32 0.0, %v1262
        %v1264 = vpop.f32.mrf.mxu0
        %v1265 = vadd.f32 0.0, %v1264
        %1266 = vmatmul.bf16.gmra.mxu0 %v1166
        %v1267 = vpop.f32.mrf.mxu0
        %v1268 = vadd.f32 0.0, %v1267
        %v1269 = vpop.f32.mrf.mxu0
        %v1270 = vadd.f32 0.0, %v1269
        %1271 = vmatmul.bf16.gmra.mxu0 %v1167
        %v1272 = vpop.f32.mrf.mxu0
        %v1273 = vadd.f32 0.0, %v1272
        %v1274 = vpop.f32.mrf.mxu0
        %v1275 = vadd.f32 0.0, %v1274
        %1276 = vmatmul.bf16.gmra.mxu0 %v1168
        %v1277 = vpop.f32.mrf.mxu0
        %v1278 = vadd.f32 0.0, %v1277
        %v1279 = vpop.f32.mrf.mxu0
        %v1280 = vadd.f32 0.0, %v1279
        %1281 = vmatmul.bf16.gmra.mxu0 %v1169
        %v1282 = vpop.f32.mrf.mxu0
        %v1283 = vadd.f32 0.0, %v1282
        %v1284 = vpop.f32.mrf.mxu0
        %v1285 = vadd.f32 0.0, %v1284
        %1286 = vmatmul.bf16.gmra.mxu0 %v1170
        %v1287 = vpop.f32.mrf.mxu0
        %v1288 = vadd.f32 0.0, %v1287
        %v1289 = vpop.f32.mrf.mxu0
        %v1290 = vadd.f32 0.0, %v1289
        %1291 = vmatmul.bf16.gmra.mxu0 %v1171
        %v1292 = vpop.f32.mrf.mxu0
        %v1293 = vadd.f32 0.0, %v1292
        %v1294 = vpop.f32.mrf.mxu0
        %v1295 = vadd.f32 0.0, %v1294
        %1296 = vmatmul.bf16.gmra.mxu0 %v1172
        %v1297 = vpop.f32.mrf.mxu0
        %v1298 = vadd.f32 0.0, %v1297
        %v1299 = vpop.f32.mrf.mxu0
        %v1300 = vadd.f32 0.0, %v1299
        %1301 = vmatmul.bf16.gmra.mxu0 %v1173
        %v1302 = vpop.f32.mrf.mxu0
        %v1303 = vadd.f32 0.0, %v1302
        %v1304 = vpop.f32.mrf.mxu0
        %v1305 = vadd.f32 0.0, %v1304
        %1306 = vmatmul.bf16.gmra.mxu0 %v1174
        %v1307 = vpop.f32.mrf.mxu0
        %v1308 = vadd.f32 0.0, %v1307
        %v1309 = vpop.f32.mrf.mxu0
        %v1310 = vadd.f32 0.0, %v1309
        %1311 = vmatmul.bf16.gmra.mxu0 %v1175
        %v1312 = vpop.f32.mrf.mxu0
        %v1313 = vadd.f32 0.0, %v1312
        %v1314 = vpop.f32.mrf.mxu0
        %v1315 = vadd.f32 0.0, %v1314
        %1316 = vmatmul.bf16.gmra.mxu0 %v1176
        %v1317 = vpop.f32.mrf.mxu0
        %v1318 = vadd.f32 0.0, %v1317
        %v1319 = vpop.f32.mrf.mxu0
        %v1320 = vadd.f32 0.0, %v1319
        %1321 = vmatmul.bf16.gmra.mxu0 %v1177
        %v1322 = vpop.f32.mrf.mxu0
        %v1323 = vadd.f32 0.0, %v1322
        %v1324 = vpop.f32.mrf.mxu0
        %v1325 = vadd.f32 0.0, %v1324
        %1326 = vmatmul.bf16.gmra.mxu0 %v1178
        %v1327 = vpop.f32.mrf.mxu0
        %v1328 = vadd.f32 0.0, %v1327
        %v1329 = vpop.f32.mrf.mxu0
        %v1330 = vadd.f32 0.0, %v1329
        %1331 = vdwg.mxu0
        %v1332 = vunpack.c.l.b16 %v726
        %v1333 = vunpack.c.l.b16 %v735
        %v1334 = vunpack.c.l.b16 %v748
        %v1335 = vunpack.c.l.b16 %v757
        %v1336 = vunpack.c.l.b16 %v770
        %v1337 = vunpack.c.l.b16 %v779
        %v1338 = vunpack.c.l.b16 %v792
        %v1339 = vunpack.c.l.b16 %v801
        %v1340 = vunpack.c.l.b16 %v814
        %v1341 = vunpack.c.l.b16 %v823
        %v1342 = vunpack.c.l.b16 %v836
        %v1343 = vunpack.c.l.b16 %v845
        %v1344 = vunpack.c.l.b16 %v858
        %v1345 = vunpack.c.l.b16 %v867
        %v1346 = vunpack.c.l.b16 %v880
        %v1347 = vunpack.c.l.b16 %v889
        %v1348 = vunpack.c.l.b16 %v902
        %v1349 = vunpack.c.l.b16 %v911
        %v1350 = vunpack.c.l.b16 %v924
        %v1351 = vunpack.c.l.b16 %v933
        %v1352 = vunpack.c.l.b16 %v946
        %v1353 = vunpack.c.l.b16 %v955
        %v1354 = vunpack.c.l.b16 %v968
        %v1355 = vunpack.c.l.b16 %v977
        %v1356 = vunpack.c.l.b16 %v990
        %v1357 = vunpack.c.l.b16 %v999
        %v1358 = vunpack.c.l.b16 %v1012
        %v1359 = vunpack.c.l.b16 %v1021
        %v1360 = vunpack.c.l.b16 %v1034
        %v1361 = vunpack.c.l.b16 %v1043
        %v1362 = vunpack.c.l.b16 %v1056
        %v1363 = vunpack.c.l.b16 %v1065
        %v1364 = vpack.c.b16 %v1333, %v1332
        %v1365 = vpack.c.b16 %v1335, %v1334
        %v1366 = vpack.c.b16 %v1337, %v1336
        %v1367 = vpack.c.b16 %v1339, %v1338
        %v1368 = vpack.c.b16 %v1341, %v1340
        %v1369 = vpack.c.b16 %v1343, %v1342
        %v1370 = vpack.c.b16 %v1345, %v1344
        %v1371 = vpack.c.b16 %v1347, %v1346
        %v1372 = vpack.c.b16 %v1349, %v1348
        %v1373 = vpack.c.b16 %v1351, %v1350
        %v1374 = vpack.c.b16 %v1353, %v1352
        %v1375 = vpack.c.b16 %v1355, %v1354
        %v1376 = vpack.c.b16 %v1357, %v1356
        %v1377 = vpack.c.b16 %v1359, %v1358
        %v1378 = vpack.c.b16 %v1361, %v1360
        %v1379 = vpack.c.b16 %v1363, %v1362
        %v1412 = vunpack.c.l.b16 %v1066
        %v1413 = vunpack.c.l.b16 %v1067
        %v1414 = vunpack.c.l.b16 %v1068
        %v1415 = vunpack.c.l.b16 %v1069
        %v1416 = vunpack.c.l.b16 %v1070
        %v1417 = vunpack.c.l.b16 %v1071
        %v1418 = vunpack.c.l.b16 %v1072
        %v1419 = vunpack.c.l.b16 %v1073
        %v1420 = vunpack.c.l.b16 %v1074
        %v1421 = vunpack.c.l.b16 %v1075
        %v1422 = vunpack.c.l.b16 %v1076
        %v1423 = vunpack.c.l.b16 %v1077
        %v1424 = vunpack.c.l.b16 %v1078
        %v1425 = vunpack.c.l.b16 %v1079
        %v1426 = vunpack.c.l.b16 %v1080
        %v1427 = vunpack.c.l.b16 %v1081
        %v1428 = vpack.c.b16 %v1413, %v1412
        %v1429 = vpack.c.b16 %v1415, %v1414
        %v1430 = vpack.c.b16 %v1417, %v1416
        %v1431 = vpack.c.b16 %v1419, %v1418
        %v1432 = vpack.c.b16 %v1421, %v1420
        %v1433 = vpack.c.b16 %v1423, %v1422
        %v1434 = vpack.c.b16 %v1425, %v1424
        %v1435 = vpack.c.b16 %v1427, %v1426
        %1444 = vmatpush.bf16.msra.mxu0 %v1435
        %1445 = vmatpush.bf16.msra.mxu0 %v1434
        %1446 = vmatpush.bf16.msra.mxu0 %v1433
        %1447 = vmatpush.bf16.msra.mxu0 %v1432
        %1448 = vmatpush.bf16.msra.mxu0 %v1431
        %1449 = vmatpush.bf16.msra.mxu0 %v1430
        %1450 = vmatpush.bf16.msra.mxu0 %v1429
        %1451 = vmatpush.bf16.msra.mxu0 %v1428
        %1452 = vmatmul.bf16.gmra.mxu0 %v1364
        %v1453 = vpop.f32.mrf.mxu0
        %v1454 = vadd.f32 %v1253, %v1453
        %v1455 = vpop.f32.mrf.mxu0
        %v1456 = vadd.f32 %v1255, %v1455
        %1457 = vmatmul.bf16.gmra.mxu0 %v1365
        %v1458 = vpop.f32.mrf.mxu0
        %v1459 = vadd.f32 %v1258, %v1458
        %v1460 = vpop.f32.mrf.mxu0
        %v1461 = vadd.f32 %v1260, %v1460
        %1462 = vmatmul.bf16.gmra.mxu0 %v1366
        %v1463 = vpop.f32.mrf.mxu0
        %v1464 = vadd.f32 %v1263, %v1463
        %v1465 = vpop.f32.mrf.mxu0
        %v1466 = vadd.f32 %v1265, %v1465
        %1467 = vmatmul.bf16.gmra.mxu0 %v1367
        %v1468 = vpop.f32.mrf.mxu0
        %v1469 = vadd.f32 %v1268, %v1468
        %v1470 = vpop.f32.mrf.mxu0
        %v1471 = vadd.f32 %v1270, %v1470
        %1472 = vmatmul.bf16.gmra.mxu0 %v1368
        %v1473 = vpop.f32.mrf.mxu0
        %v1474 = vadd.f32 %v1273, %v1473
        %v1475 = vpop.f32.mrf.mxu0
        %v1476 = vadd.f32 %v1275, %v1475
        %1477 = vmatmul.bf16.gmra.mxu0 %v1369
        %v1478 = vpop.f32.mrf.mxu0
        %v1479 = vadd.f32 %v1278, %v1478
        %v1480 = vpop.f32.mrf.mxu0
        %v1481 = vadd.f32 %v1280, %v1480
        %1482 = vmatmul.bf16.gmra.mxu0 %v1370
        %v1483 = vpop.f32.mrf.mxu0
        %v1484 = vadd.f32 %v1283, %v1483
        %v1485 = vpop.f32.mrf.mxu0
        %v1486 = vadd.f32 %v1285, %v1485
        %1487 = vmatmul.bf16.gmra.mxu0 %v1371
        %v1488 = vpop.f32.mrf.mxu0
        %v1489 = vadd.f32 %v1288, %v1488
        %v1490 = vpop.f32.mrf.mxu0
        %v1491 = vadd.f32 %v1290, %v1490
        %1492 = vmatmul.bf16.gmra.mxu0 %v1372
        %v1493 = vpop.f32.mrf.mxu0
        %v1494 = vadd.f32 %v1293, %v1493
        %v1495 = vpop.f32.mrf.mxu0
        %v1496 = vadd.f32 %v1295, %v1495
        %1497 = vmatmul.bf16.gmra.mxu0 %v1373
        %v1498 = vpop.f32.mrf.mxu0
        %v1499 = vadd.f32 %v1298, %v1498
        %v1500 = vpop.f32.mrf.mxu0
        %v1501 = vadd.f32 %v1300, %v1500
        %1502 = vmatmul.bf16.gmra.mxu0 %v1374
        %v1503 = vpop.f32.mrf.mxu0
        %v1504 = vadd.f32 %v1303, %v1503
        %v1505 = vpop.f32.mrf.mxu0
        %v1506 = vadd.f32 %v1305, %v1505
        %1507 = vmatmul.bf16.gmra.mxu0 %v1375
        %v1508 = vpop.f32.mrf.mxu0
        %v1509 = vadd.f32 %v1308, %v1508
        %v1510 = vpop.f32.mrf.mxu0
        %v1511 = vadd.f32 %v1310, %v1510
        %1512 = vmatmul.bf16.gmra.mxu0 %v1376
        %v1513 = vpop.f32.mrf.mxu0
        %v1514 = vadd.f32 %v1313, %v1513
        %v1515 = vpop.f32.mrf.mxu0
        %v1516 = vadd.f32 %v1315, %v1515
        %1517 = vmatmul.bf16.gmra.mxu0 %v1377
        %v1518 = vpop.f32.mrf.mxu0
        %v1519 = vadd.f32 %v1318, %v1518
        %v1520 = vpop.f32.mrf.mxu0
        %v1521 = vadd.f32 %v1320, %v1520
        %1522 = vmatmul.bf16.gmra.mxu0 %v1378
        %v1523 = vpop.f32.mrf.mxu0
        %v1524 = vadd.f32 %v1323, %v1523
        %v1525 = vpop.f32.mrf.mxu0
        %v1526 = vadd.f32 %v1325, %v1525
        %1527 = vmatmul.bf16.gmra.mxu0 %v1379
        %v1528 = vpop.f32.mrf.mxu0
        %v1529 = vadd.f32 %v1328, %v1528
        %v1530 = vpop.f32.mrf.mxu0
        %v1531 = vadd.f32 %v1330, %v1530
        %1532 = vdwg.mxu0
        %v1533 = vld [vmem:[#allocation2 + $0x4] sm:$0xf]
        %v1534 = vld [vmem:[#allocation2 + $0x8] sm:$0xf]
        %v1535 = vld [vmem:[#allocation2 + $0xc] sm:$0x1]
        %v1536 = vld [vmem:[#allocation2 + $0x14] sm:$0xf]
        %v1537 = vld [vmem:[#allocation2 + $0x18] sm:$0xf]
        %v1538 = vld [vmem:[#allocation2 + $0x1c] sm:$0x1]
        %v1539 = vld [vmem:[#allocation2 + $0x24] sm:$0xf]
        %v1540 = vld [vmem:[#allocation2 + $0x28] sm:$0xf]
        %v1541 = vld [vmem:[#allocation2 + $0x2c] sm:$0x1]
        %v1542 = vld [vmem:[#allocation2 + $0x34] sm:$0xf]
        %v1543 = vld [vmem:[#allocation2 + $0x38] sm:$0xf]
        %v1544 = vld [vmem:[#allocation2 + $0x3c] sm:$0x1]
        %v1545 = vld [vmem:[#allocation2 + $0x44] sm:$0xf]
        %v1546 = vld [vmem:[#allocation2 + $0x48] sm:$0xf]
        %v1547 = vld [vmem:[#allocation2 + $0x4c] sm:$0x1]
        %v1548 = vld [vmem:[#allocation2 + $0x54] sm:$0xf]
        %v1549 = vld [vmem:[#allocation2 + $0x58] sm:$0xf]
        %v1550 = vld [vmem:[#allocation2 + $0x5c] sm:$0x1]
        %v1551 = vld [vmem:[#allocation2 + $0x64] sm:$0xf]
        %v1552 = vld [vmem:[#allocation2 + $0x68] sm:$0xf]
        %v1553 = vld [vmem:[#allocation2 + $0x6c] sm:$0x1]
        %v1554 = vld [vmem:[#allocation2 + $0x74] sm:$0xf]
        %v1555 = vld [vmem:[#allocation2 + $0x78] sm:$0xf]
        %v1556 = vld [vmem:[#allocation2 + $0x7c] sm:$0x1]
        %v1557 = vld [vmem:[#allocation2 + $0x84] sm:$0xf]
        %v1558 = vld [vmem:[#allocation2 + $0x88] sm:$0xf]
        %v1559 = vld [vmem:[#allocation2 + $0x8c] sm:$0x1]
        %v1560 = vld [vmem:[#allocation2 + $0x94] sm:$0xf]
        %v1561 = vld [vmem:[#allocation2 + $0x98] sm:$0xf]
        %v1562 = vld [vmem:[#allocation2 + $0x9c] sm:$0x1]
        %v1563 = vld [vmem:[#allocation2 + $0xa4] sm:$0xf]
        %v1564 = vld [vmem:[#allocation2 + $0xa8] sm:$0xf]
        %v1565 = vld [vmem:[#allocation2 + $0xac] sm:$0x1]
        %v1566 = vld [vmem:[#allocation2 + $0xb4] sm:$0xf]
        %v1567 = vld [vmem:[#allocation2 + $0xb8] sm:$0xf]
        %v1568 = vld [vmem:[#allocation2 + $0xbc] sm:$0x1]
        %v1569 = vld [vmem:[#allocation2 + $0xc4] sm:$0xf]
        %v1570 = vld [vmem:[#allocation2 + $0xc8] sm:$0xf]
        %v1571 = vld [vmem:[#allocation2 + $0xcc] sm:$0x1]
        %v1572 = vld [vmem:[#allocation2 + $0xd4] sm:$0xf]
        %v1573 = vld [vmem:[#allocation2 + $0xd8] sm:$0xf]
        %v1574 = vld [vmem:[#allocation2 + $0xdc] sm:$0x1]
        %v1575 = vld [vmem:[#allocation2 + $0xe4] sm:$0xf]
        %v1576 = vld [vmem:[#allocation2 + $0xe8] sm:$0xf]
        %v1577 = vld [vmem:[#allocation2 + $0xec] sm:$0x1]
        %v1578 = vld [vmem:[#allocation2 + $0xf4] sm:$0xf]
        %v1579 = vld [vmem:[#allocation2 + $0xf8] sm:$0xf]
        %v1580 = vld [vmem:[#allocation2 + $0xfc] sm:$0x1]
        %vm1581 = vsmask.f32 3328
        %vm1582 = vsmask.f32 7440
        %vm1583 = vmor %vm1581, %vm1582
        %v1585 = vshrl.u32 %v1533, 16
        %v1587 = vrot.slane %v1585, 4
        %v1588 = vshll.u32 %v1533, 16
        %v1590 = vrot.slane %v1588, 5
        %v1591 = vor.u32 %v1587, %v1590
        %v1592 = vrot.slane %v1591, 4
        %v1594 = vshll.u32 %v1534, 16
        %v1596 = vrot.slane %v1594, 5
        %v1597 = vsel %vm1583, %v1592, %v1596
        %v1598 = vshrl.u32 %v1534, 16
        %v1600 = vrot.slane %v1598, 4
        %v1601 = vor.u32 %v1600, %v1596
        %v1602 = vrot.slane %v1601, 4
        %v1604 = vshll.u32 %v1535, 16
        %v1606 = vrot.slane %v1604, 5
        %v1607 = vsel %vm1583, %v1602, %v1606
        %v1609 = vshrl.u32 %v1536, 16
        %v1611 = vrot.slane %v1609, 4
        %v1612 = vshll.u32 %v1536, 16
        %v1614 = vrot.slane %v1612, 5
        %v1615 = vor.u32 %v1611, %v1614
        %v1616 = vrot.slane %v1615, 4
        %v1618 = vshll.u32 %v1537, 16
        %v1620 = vrot.slane %v1618, 5
        %v1621 = vsel %vm1583, %v1616, %v1620
        %v1622 = vshrl.u32 %v1537, 16
        %v1624 = vrot.slane %v1622, 4
        %v1625 = vor.u32 %v1624, %v1620
        %v1626 = vrot.slane %v1625, 4
        %v1628 = vshll.u32 %v1538, 16
        %v1630 = vrot.slane %v1628, 5
        %v1631 = vsel %vm1583, %v1626, %v1630
        %v1633 = vshrl.u32 %v1539, 16
        %v1635 = vrot.slane %v1633, 4
        %v1636 = vshll.u32 %v1539, 16
        %v1638 = vrot.slane %v1636, 5
        %v1639 = vor.u32 %v1635, %v1638
        %v1640 = vrot.slane %v1639, 4
        %v1642 = vshll.u32 %v1540, 16
        %v1644 = vrot.slane %v1642, 5
        %v1645 = vsel %vm1583, %v1640, %v1644
        %v1646 = vshrl.u32 %v1540, 16
        %v1648 = vrot.slane %v1646, 4
        %v1649 = vor.u32 %v1648, %v1644
        %v1650 = vrot.slane %v1649, 4
        %v1652 = vshll.u32 %v1541, 16
        %v1654 = vrot.slane %v1652, 5
        %v1655 = vsel %vm1583, %v1650, %v1654
        %v1657 = vshrl.u32 %v1542, 16
        %v1659 = vrot.slane %v1657, 4
        %v1660 = vshll.u32 %v1542, 16
        %v1662 = vrot.slane %v1660, 5
        %v1663 = vor.u32 %v1659, %v1662
        %v1664 = vrot.slane %v1663, 4
        %v1666 = vshll.u32 %v1543, 16
        %v1668 = vrot.slane %v1666, 5
        %v1669 = vsel %vm1583, %v1664, %v1668
        %v1670 = vshrl.u32 %v1543, 16
        %v1672 = vrot.slane %v1670, 4
        %v1673 = vor.u32 %v1672, %v1668
        %v1674 = vrot.slane %v1673, 4
        %v1676 = vshll.u32 %v1544, 16
        %v1678 = vrot.slane %v1676, 5
        %v1679 = vsel %vm1583, %v1674, %v1678
        %v1681 = vshrl.u32 %v1545, 16
        %v1683 = vrot.slane %v1681, 4
        %v1684 = vshll.u32 %v1545, 16
        %v1686 = vrot.slane %v1684, 5
        %v1687 = vor.u32 %v1683, %v1686
        %v1688 = vrot.slane %v1687, 4
        %v1690 = vshll.u32 %v1546, 16
        %v1692 = vrot.slane %v1690, 5
        %v1693 = vsel %vm1583, %v1688, %v1692
        %v1694 = vshrl.u32 %v1546, 16
        %v1696 = vrot.slane %v1694, 4
        %v1697 = vor.u32 %v1696, %v1692
        %v1698 = vrot.slane %v1697, 4
        %v1700 = vshll.u32 %v1547, 16
        %v1702 = vrot.slane %v1700, 5
        %v1703 = vsel %vm1583, %v1698, %v1702
        %v1705 = vshrl.u32 %v1548, 16
        %v1707 = vrot.slane %v1705, 4
        %v1708 = vshll.u32 %v1548, 16
        %v1710 = vrot.slane %v1708, 5
        %v1711 = vor.u32 %v1707, %v1710
        %v1712 = vrot.slane %v1711, 4
        %v1714 = vshll.u32 %v1549, 16
        %v1716 = vrot.slane %v1714, 5
        %v1717 = vsel %vm1583, %v1712, %v1716
        %v1718 = vshrl.u32 %v1549, 16
        %v1720 = vrot.slane %v1718, 4
        %v1721 = vor.u32 %v1720, %v1716
        %v1722 = vrot.slane %v1721, 4
        %v1724 = vshll.u32 %v1550, 16
        %v1726 = vrot.slane %v1724, 5
        %v1727 = vsel %vm1583, %v1722, %v1726
        %v1729 = vshrl.u32 %v1551, 16
        %v1731 = vrot.slane %v1729, 4
        %v1732 = vshll.u32 %v1551, 16
        %v1734 = vrot.slane %v1732, 5
        %v1735 = vor.u32 %v1731, %v1734
        %v1736 = vrot.slane %v1735, 4
        %v1738 = vshll.u32 %v1552, 16
        %v1740 = vrot.slane %v1738, 5
        %v1741 = vsel %vm1583, %v1736, %v1740
        %v1742 = vshrl.u32 %v1552, 16
        %v1744 = vrot.slane %v1742, 4
        %v1745 = vor.u32 %v1744, %v1740
        %v1746 = vrot.slane %v1745, 4
        %v1748 = vshll.u32 %v1553, 16
        %v1750 = vrot.slane %v1748, 5
        %v1751 = vsel %vm1583, %v1746, %v1750
        %v1753 = vshrl.u32 %v1554, 16
        %v1755 = vrot.slane %v1753, 4
        %v1756 = vshll.u32 %v1554, 16
        %v1758 = vrot.slane %v1756, 5
        %v1759 = vor.u32 %v1755, %v1758
        %v1760 = vrot.slane %v1759, 4
        %v1762 = vshll.u32 %v1555, 16
        %v1764 = vrot.slane %v1762, 5
        %v1765 = vsel %vm1583, %v1760, %v1764
        %v1766 = vshrl.u32 %v1555, 16
        %v1768 = vrot.slane %v1766, 4
        %v1769 = vor.u32 %v1768, %v1764
        %v1770 = vrot.slane %v1769, 4
        %v1772 = vshll.u32 %v1556, 16
        %v1774 = vrot.slane %v1772, 5
        %v1775 = vsel %vm1583, %v1770, %v1774
        %v1777 = vshrl.u32 %v1557, 16
        %v1779 = vrot.slane %v1777, 4
        %v1780 = vshll.u32 %v1557, 16
        %v1782 = vrot.slane %v1780, 5
        %v1783 = vor.u32 %v1779, %v1782
        %v1784 = vrot.slane %v1783, 4
        %v1786 = vshll.u32 %v1558, 16
        %v1788 = vrot.slane %v1786, 5
        %v1789 = vsel %vm1583, %v1784, %v1788
        %v1790 = vshrl.u32 %v1558, 16
        %v1792 = vrot.slane %v1790, 4
        %v1793 = vor.u32 %v1792, %v1788
        %v1794 = vrot.slane %v1793, 4
        %v1796 = vshll.u32 %v1559, 16
        %v1798 = vrot.slane %v1796, 5
        %v1799 = vsel %vm1583, %v1794, %v1798
        %v1801 = vshrl.u32 %v1560, 16
        %v1803 = vrot.slane %v1801, 4
        %v1804 = vshll.u32 %v1560, 16
        %v1806 = vrot.slane %v1804, 5
        %v1807 = vor.u32 %v1803, %v1806
        %v1808 = vrot.slane %v1807, 4
        %v1810 = vshll.u32 %v1561, 16
        %v1812 = vrot.slane %v1810, 5
        %v1813 = vsel %vm1583, %v1808, %v1812
        %v1814 = vshrl.u32 %v1561, 16
        %v1816 = vrot.slane %v1814, 4
        %v1817 = vor.u32 %v1816, %v1812
        %v1818 = vrot.slane %v1817, 4
        %v1820 = vshll.u32 %v1562, 16
        %v1822 = vrot.slane %v1820, 5
        %v1823 = vsel %vm1583, %v1818, %v1822
        %v1825 = vshrl.u32 %v1563, 16
        %v1827 = vrot.slane %v1825, 4
        %v1828 = vshll.u32 %v1563, 16
        %v1830 = vrot.slane %v1828, 5
        %v1831 = vor.u32 %v1827, %v1830
        %v1832 = vrot.slane %v1831, 4
        %v1834 = vshll.u32 %v1564, 16
        %v1836 = vrot.slane %v1834, 5
        %v1837 = vsel %vm1583, %v1832, %v1836
        %v1838 = vshrl.u32 %v1564, 16
        %v1840 = vrot.slane %v1838, 4
        %v1841 = vor.u32 %v1840, %v1836
        %v1842 = vrot.slane %v1841, 4
        %v1844 = vshll.u32 %v1565, 16
        %v1846 = vrot.slane %v1844, 5
        %v1847 = vsel %vm1583, %v1842, %v1846
        %v1849 = vshrl.u32 %v1566, 16
        %v1851 = vrot.slane %v1849, 4
        %v1852 = vshll.u32 %v1566, 16
        %v1854 = vrot.slane %v1852, 5
        %v1855 = vor.u32 %v1851, %v1854
        %v1856 = vrot.slane %v1855, 4
        %v1858 = vshll.u32 %v1567, 16
        %v1860 = vrot.slane %v1858, 5
        %v1861 = vsel %vm1583, %v1856, %v1860
        %v1862 = vshrl.u32 %v1567, 16
        %v1864 = vrot.slane %v1862, 4
        %v1865 = vor.u32 %v1864, %v1860
        %v1866 = vrot.slane %v1865, 4
        %v1868 = vshll.u32 %v1568, 16
        %v1870 = vrot.slane %v1868, 5
        %v1871 = vsel %vm1583, %v1866, %v1870
        %v1873 = vshrl.u32 %v1569, 16
        %v1875 = vrot.slane %v1873, 4
        %v1876 = vshll.u32 %v1569, 16
        %v1878 = vrot.slane %v1876, 5
        %v1879 = vor.u32 %v1875, %v1878
        %v1880 = vrot.slane %v1879, 4
        %v1882 = vshll.u32 %v1570, 16
        %v1884 = vrot.slane %v1882, 5
        %v1885 = vsel %vm1583, %v1880, %v1884
        %v1886 = vshrl.u32 %v1570, 16
        %v1888 = vrot.slane %v1886, 4
        %v1889 = vor.u32 %v1888, %v1884
        %v1890 = vrot.slane %v1889, 4
        %v1892 = vshll.u32 %v1571, 16
        %v1894 = vrot.slane %v1892, 5
        %v1895 = vsel %vm1583, %v1890, %v1894
        %v1897 = vshrl.u32 %v1572, 16
        %v1899 = vrot.slane %v1897, 4
        %v1900 = vshll.u32 %v1572, 16
        %v1902 = vrot.slane %v1900, 5
        %v1903 = vor.u32 %v1899, %v1902
        %v1904 = vrot.slane %v1903, 4
        %v1906 = vshll.u32 %v1573, 16
        %v1908 = vrot.slane %v1906, 5
        %v1909 = vsel %vm1583, %v1904, %v1908
        %v1910 = vshrl.u32 %v1573, 16
        %v1912 = vrot.slane %v1910, 4
        %v1913 = vor.u32 %v1912, %v1908
        %v1914 = vrot.slane %v1913, 4
        %v1916 = vshll.u32 %v1574, 16
        %v1918 = vrot.slane %v1916, 5
        %v1919 = vsel %vm1583, %v1914, %v1918
        %v1921 = vshrl.u32 %v1575, 16
        %v1923 = vrot.slane %v1921, 4
        %v1924 = vshll.u32 %v1575, 16
        %v1926 = vrot.slane %v1924, 5
        %v1927 = vor.u32 %v1923, %v1926
        %v1928 = vrot.slane %v1927, 4
        %v1930 = vshll.u32 %v1576, 16
        %v1932 = vrot.slane %v1930, 5
        %v1933 = vsel %vm1583, %v1928, %v1932
        %v1934 = vshrl.u32 %v1576, 16
        %v1936 = vrot.slane %v1934, 4
        %v1937 = vor.u32 %v1936, %v1932
        %v1938 = vrot.slane %v1937, 4
        %v1940 = vshll.u32 %v1577, 16
        %v1942 = vrot.slane %v1940, 5
        %v1943 = vsel %vm1583, %v1938, %v1942
        %v1945 = vshrl.u32 %v1578, 16
        %v1947 = vrot.slane %v1945, 4
        %v1948 = vshll.u32 %v1578, 16
        %v1950 = vrot.slane %v1948, 5
        %v1951 = vor.u32 %v1947, %v1950
        %v1952 = vrot.slane %v1951, 4
        %v1954 = vshll.u32 %v1579, 16
        %v1956 = vrot.slane %v1954, 5
        %v1957 = vsel %vm1583, %v1952, %v1956
        %v1958 = vshrl.u32 %v1579, 16
        %v1960 = vrot.slane %v1958, 4
        %v1961 = vor.u32 %v1960, %v1956
        %v1962 = vrot.slane %v1961, 4
        %v1964 = vshll.u32 %v1580, 16
        %v1966 = vrot.slane %v1964, 5
        %v1967 = vsel %vm1583, %v1962, %v1966
        %s1968 = scalar_lea.vmem [#allocation6], 128
        %v1969 = vld [vmem:[%s1968] sm:$0xf]
        %v1970 = vld [vmem:[%s1968 + $0x4] sm:$0xf]
        %v1971 = vld [vmem:[%s1968 + $0x8] sm:$0xf]
        %v1972 = vld [vmem:[%s1968 + $0xc] sm:$0xf]
        %v1973 = vld [vmem:[%s1968 + $0x10] sm:$0xf]
        %v1974 = vld [vmem:[%s1968 + $0x14] sm:$0xf]
        %v1975 = vld [vmem:[%s1968 + $0x18] sm:$0xf]
        %v1976 = vld [vmem:[%s1968 + $0x1c] sm:$0xf]
        %v1977 = vld [vmem:[%s1968 + $0x20] sm:$0xf]
        %v1978 = vld [vmem:[%s1968 + $0x24] sm:$0xf]
        %v1979 = vld [vmem:[%s1968 + $0x28] sm:$0xf]
        %v1980 = vld [vmem:[%s1968 + $0x2c] sm:$0xf]
        %v1981 = vld [vmem:[%s1968 + $0x30] sm:$0xf]
        %v1982 = vld [vmem:[%s1968 + $0x34] sm:$0xf]
        %v1983 = vld [vmem:[%s1968 + $0x38] sm:$0xf]
        %v1984 = vld [vmem:[%s1968 + $0x3c] sm:$0xf]
        %v1985 = vunpack.c.l.b16 %v1597
        %v1986 = vunpack.c.l.b16 %v1607
        %v1987 = vunpack.c.l.b16 %v1621
        %v1988 = vunpack.c.l.b16 %v1631
        %v1989 = vunpack.c.l.b16 %v1645
        %v1990 = vunpack.c.l.b16 %v1655
        %v1991 = vunpack.c.l.b16 %v1669
        %v1992 = vunpack.c.l.b16 %v1679
        %v1993 = vunpack.c.l.b16 %v1693
        %v1994 = vunpack.c.l.b16 %v1703
        %v1995 = vunpack.c.l.b16 %v1717
        %v1996 = vunpack.c.l.b16 %v1727
        %v1997 = vunpack.c.l.b16 %v1741
        %v1998 = vunpack.c.l.b16 %v1751
        %v1999 = vunpack.c.l.b16 %v1765
        %v2000 = vunpack.c.l.b16 %v1775
        %v2001 = vunpack.c.l.b16 %v1789
        %v2002 = vunpack.c.l.b16 %v1799
        %v2003 = vunpack.c.l.b16 %v1813
        %v2004 = vunpack.c.l.b16 %v1823
        %v2005 = vunpack.c.l.b16 %v1837
        %v2006 = vunpack.c.l.b16 %v1847
        %v2007 = vunpack.c.l.b16 %v1861
        %v2008 = vunpack.c.l.b16 %v1871
        %v2009 = vunpack.c.l.b16 %v1885
        %v2010 = vunpack.c.l.b16 %v1895
        %v2011 = vunpack.c.l.b16 %v1909
        %v2012 = vunpack.c.l.b16 %v1919
        %v2013 = vunpack.c.l.b16 %v1933
        %v2014 = vunpack.c.l.b16 %v1943
        %v2015 = vunpack.c.l.b16 %v1957
        %v2016 = vunpack.c.l.b16 %v1967
        %v2017 = vpack.c.b16 %v1986, %v1985
        %v2018 = vpack.c.b16 %v1988, %v1987
        %v2019 = vpack.c.b16 %v1990, %v1989
        %v2020 = vpack.c.b16 %v1992, %v1991
        %v2021 = vpack.c.b16 %v1994, %v1993
        %v2022 = vpack.c.b16 %v1996, %v1995
        %v2023 = vpack.c.b16 %v1998, %v1997
        %v2024 = vpack.c.b16 %v2000, %v1999
        %v2025 = vpack.c.b16 %v2002, %v2001
        %v2026 = vpack.c.b16 %v2004, %v2003
        %v2027 = vpack.c.b16 %v2006, %v2005
        %v2028 = vpack.c.b16 %v2008, %v2007
        %v2029 = vpack.c.b16 %v2010, %v2009
        %v2030 = vpack.c.b16 %v2012, %v2011
        %v2031 = vpack.c.b16 %v2014, %v2013
        %v2032 = vpack.c.b16 %v2016, %v2015
        %v2065 = vunpack.c.l.b16 %v1969
        %v2066 = vunpack.c.l.b16 %v1970
        %v2067 = vunpack.c.l.b16 %v1971
        %v2068 = vunpack.c.l.b16 %v1972
        %v2069 = vunpack.c.l.b16 %v1973
        %v2070 = vunpack.c.l.b16 %v1974
        %v2071 = vunpack.c.l.b16 %v1975
        %v2072 = vunpack.c.l.b16 %v1976
        %v2073 = vunpack.c.l.b16 %v1977
        %v2074 = vunpack.c.l.b16 %v1978
        %v2075 = vunpack.c.l.b16 %v1979
        %v2076 = vunpack.c.l.b16 %v1980
        %v2077 = vunpack.c.l.b16 %v1981
        %v2078 = vunpack.c.l.b16 %v1982
        %v2079 = vunpack.c.l.b16 %v1983
        %v2080 = vunpack.c.l.b16 %v1984
        %v2081 = vpack.c.b16 %v2066, %v2065
        %v2082 = vpack.c.b16 %v2068, %v2067
        %v2083 = vpack.c.b16 %v2070, %v2069
        %v2084 = vpack.c.b16 %v2072, %v2071
        %v2085 = vpack.c.b16 %v2074, %v2073
        %v2086 = vpack.c.b16 %v2076, %v2075
        %v2087 = vpack.c.b16 %v2078, %v2077
        %v2088 = vpack.c.b16 %v2080, %v2079
        %2097 = vmatpush.bf16.msra.mxu0 %v2088
        %2098 = vmatpush.bf16.msra.mxu0 %v2087
        %2099 = vmatpush.bf16.msra.mxu0 %v2086
        %2100 = vmatpush.bf16.msra.mxu0 %v2085
        %2101 = vmatpush.bf16.msra.mxu0 %v2084
        %2102 = vmatpush.bf16.msra.mxu0 %v2083
        %2103 = vmatpush.bf16.msra.mxu0 %v2082
        %2104 = vmatpush.bf16.msra.mxu0 %v2081
        %2105 = vmatmul.bf16.gmra.mxu0 %v2017
        %v2106 = vpop.f32.mrf.mxu0
        %v2107 = vadd.f32 0.0, %v2106
        %v2108 = vpop.f32.mrf.mxu0
        %v2109 = vadd.f32 0.0, %v2108
        %2110 = vmatmul.bf16.gmra.mxu0 %v2018
        %v2111 = vpop.f32.mrf.mxu0
        %v2112 = vadd.f32 0.0, %v2111
        %v2113 = vpop.f32.mrf.mxu0
        %v2114 = vadd.f32 0.0, %v2113
        %2115 = vmatmul.bf16.gmra.mxu0 %v2019
        %v2116 = vpop.f32.mrf.mxu0
        %v2117 = vadd.f32 0.0, %v2116
        %v2118 = vpop.f32.mrf.mxu0
        %v2119 = vadd.f32 0.0, %v2118
        %2120 = vmatmul.bf16.gmra.mxu0 %v2020
        %v2121 = vpop.f32.mrf.mxu0
        %v2122 = vadd.f32 0.0, %v2121
        %v2123 = vpop.f32.mrf.mxu0
        %v2124 = vadd.f32 0.0, %v2123
        %2125 = vmatmul.bf16.gmra.mxu0 %v2021
        %v2126 = vpop.f32.mrf.mxu0
        %v2127 = vadd.f32 0.0, %v2126
        %v2128 = vpop.f32.mrf.mxu0
        %v2129 = vadd.f32 0.0, %v2128
        %2130 = vmatmul.bf16.gmra.mxu0 %v2022
        %v2131 = vpop.f32.mrf.mxu0
        %v2132 = vadd.f32 0.0, %v2131
        %v2133 = vpop.f32.mrf.mxu0
        %v2134 = vadd.f32 0.0, %v2133
        %2135 = vmatmul.bf16.gmra.mxu0 %v2023
        %v2136 = vpop.f32.mrf.mxu0
        %v2137 = vadd.f32 0.0, %v2136
        %v2138 = vpop.f32.mrf.mxu0
        %v2139 = vadd.f32 0.0, %v2138
        %2140 = vmatmul.bf16.gmra.mxu0 %v2024
        %v2141 = vpop.f32.mrf.mxu0
        %v2142 = vadd.f32 0.0, %v2141
        %v2143 = vpop.f32.mrf.mxu0
        %v2144 = vadd.f32 0.0, %v2143
        %2145 = vmatmul.bf16.gmra.mxu0 %v2025
        %v2146 = vpop.f32.mrf.mxu0
        %v2147 = vadd.f32 0.0, %v2146
        %v2148 = vpop.f32.mrf.mxu0
        %v2149 = vadd.f32 0.0, %v2148
        %2150 = vmatmul.bf16.gmra.mxu0 %v2026
        %v2151 = vpop.f32.mrf.mxu0
        %v2152 = vadd.f32 0.0, %v2151
        %v2153 = vpop.f32.mrf.mxu0
        %v2154 = vadd.f32 0.0, %v2153
        %2155 = vmatmul.bf16.gmra.mxu0 %v2027
        %v2156 = vpop.f32.mrf.mxu0
        %v2157 = vadd.f32 0.0, %v2156
        %v2158 = vpop.f32.mrf.mxu0
        %v2159 = vadd.f32 0.0, %v2158
        %2160 = vmatmul.bf16.gmra.mxu0 %v2028
        %v2161 = vpop.f32.mrf.mxu0
        %v2162 = vadd.f32 0.0, %v2161
        %v2163 = vpop.f32.mrf.mxu0
        %v2164 = vadd.f32 0.0, %v2163
        %2165 = vmatmul.bf16.gmra.mxu0 %v2029
        %v2166 = vpop.f32.mrf.mxu0
        %v2167 = vadd.f32 0.0, %v2166
        %v2168 = vpop.f32.mrf.mxu0
        %v2169 = vadd.f32 0.0, %v2168
        %2170 = vmatmul.bf16.gmra.mxu0 %v2030
        %v2171 = vpop.f32.mrf.mxu0
        %v2172 = vadd.f32 0.0, %v2171
        %v2173 = vpop.f32.mrf.mxu0
        %v2174 = vadd.f32 0.0, %v2173
        %2175 = vmatmul.bf16.gmra.mxu0 %v2031
        %v2176 = vpop.f32.mrf.mxu0
        %v2177 = vadd.f32 0.0, %v2176
        %v2178 = vpop.f32.mrf.mxu0
        %v2179 = vadd.f32 0.0, %v2178
        %2180 = vmatmul.bf16.gmra.mxu0 %v2032
        %v2181 = vpop.f32.mrf.mxu0
        %v2182 = vadd.f32 0.0, %v2181
        %v2183 = vpop.f32.mrf.mxu0
        %v2184 = vadd.f32 0.0, %v2183
        %2185 = vdwg.mxu0
        %v2186 = vadd.f32 %v1454, %v2107
        %v2187 = vadd.f32 %v1456, %v2109
        %v2188 = vadd.f32 %v1459, %v2112
        %v2189 = vadd.f32 %v1461, %v2114
        %v2190 = vadd.f32 %v1464, %v2117
        %v2191 = vadd.f32 %v1466, %v2119
        %v2192 = vadd.f32 %v1469, %v2122
        %v2193 = vadd.f32 %v1471, %v2124
        %v2194 = vadd.f32 %v1474, %v2127
        %v2195 = vadd.f32 %v1476, %v2129
        %v2196 = vadd.f32 %v1479, %v2132
        %v2197 = vadd.f32 %v1481, %v2134
        %v2198 = vadd.f32 %v1484, %v2137
        %v2199 = vadd.f32 %v1486, %v2139
        %v2200 = vadd.f32 %v1489, %v2142
        %v2201 = vadd.f32 %v1491, %v2144
        %v2202 = vadd.f32 %v1494, %v2147
        %v2203 = vadd.f32 %v1496, %v2149
        %v2204 = vadd.f32 %v1499, %v2152
        %v2205 = vadd.f32 %v1501, %v2154
        %v2206 = vadd.f32 %v1504, %v2157
        %v2207 = vadd.f32 %v1506, %v2159
        %v2208 = vadd.f32 %v1509, %v2162
        %v2209 = vadd.f32 %v1511, %v2164
        %v2210 = vadd.f32 %v1514, %v2167
        %v2211 = vadd.f32 %v1516, %v2169
        %v2212 = vadd.f32 %v1519, %v2172
        %v2213 = vadd.f32 %v1521, %v2174
        %v2214 = vadd.f32 %v1524, %v2177
        %v2215 = vadd.f32 %v1526, %v2179
        %v2216 = vadd.f32 %v1529, %v2182
        %v2217 = vadd.f32 %v1531, %v2184
        %v2218 = vld [vmem:[%s396] sm:$0x8]
        %v2219 = vld [vmem:[%s396 + $0x4] sm:$0xf]
        %v2220 = vld [vmem:[%s396 + $0x8] sm:$0xf]
        %v2221 = vld [vmem:[%s396 + $0x10] sm:$0x8]
        %v2222 = vld [vmem:[%s396 + $0x14] sm:$0xf]
        %v2223 = vld [vmem:[%s396 + $0x18] sm:$0xf]
        %v2224 = vld [vmem:[%s396 + $0x20] sm:$0x8]
        %v2225 = vld [vmem:[%s396 + $0x24] sm:$0xf]
        %v2226 = vld [vmem:[%s396 + $0x28] sm:$0xf]
        %v2227 = vld [vmem:[%s396 + $0x30] sm:$0x8]
        %v2228 = vld [vmem:[%s396 + $0x34] sm:$0xf]
        %v2229 = vld [vmem:[%s396 + $0x38] sm:$0xf]
        %v2230 = vld [vmem:[%s396 + $0x40] sm:$0x8]
        %v2231 = vld [vmem:[%s396 + $0x44] sm:$0xf]
        %v2232 = vld [vmem:[%s396 + $0x48] sm:$0xf]
        %v2233 = vld [vmem:[%s396 + $0x50] sm:$0x8]
        %v2234 = vld [vmem:[%s396 + $0x54] sm:$0xf]
        %v2235 = vld [vmem:[%s396 + $0x58] sm:$0xf]
        %v2236 = vld [vmem:[%s396 + $0x60] sm:$0x8]
        %v2237 = vld [vmem:[%s396 + $0x64] sm:$0xf]
        %v2238 = vld [vmem:[%s396 + $0x68] sm:$0xf]
        %v2239 = vld [vmem:[%s396 + $0x70] sm:$0x8]
        %v2240 = vld [vmem:[%s396 + $0x74] sm:$0xf]
        %v2241 = vld [vmem:[%s396 + $0x78] sm:$0xf]
        %v2242 = vld [vmem:[%s396 + $0x80] sm:$0x8]
        %v2243 = vld [vmem:[%s396 + $0x84] sm:$0xf]
        %v2244 = vld [vmem:[%s396 + $0x88] sm:$0xf]
        %v2245 = vld [vmem:[%s396 + $0x90] sm:$0x8]
        %v2246 = vld [vmem:[%s396 + $0x94] sm:$0xf]
        %v2247 = vld [vmem:[%s396 + $0x98] sm:$0xf]
        %v2248 = vld [vmem:[%s396 + $0xa0] sm:$0x8]
        %v2249 = vld [vmem:[%s396 + $0xa4] sm:$0xf]
        %v2250 = vld [vmem:[%s396 + $0xa8] sm:$0xf]
        %v2251 = vld [vmem:[%s396 + $0xb0] sm:$0x8]
        %v2252 = vld [vmem:[%s396 + $0xb4] sm:$0xf]
        %v2253 = vld [vmem:[%s396 + $0xb8] sm:$0xf]
        %v2254 = vld [vmem:[%s396 + $0xc0] sm:$0x8]
        %v2255 = vld [vmem:[%s396 + $0xc4] sm:$0xf]
        %v2256 = vld [vmem:[%s396 + $0xc8] sm:$0xf]
        %v2257 = vld [vmem:[%s396 + $0xd0] sm:$0x8]
        %v2258 = vld [vmem:[%s396 + $0xd4] sm:$0xf]
        %v2259 = vld [vmem:[%s396 + $0xd8] sm:$0xf]
        %v2260 = vld [vmem:[%s396 + $0xe0] sm:$0x8]
        %v2261 = vld [vmem:[%s396 + $0xe4] sm:$0xf]
        %v2262 = vld [vmem:[%s396 + $0xe8] sm:$0xf]
        %v2263 = vld [vmem:[%s396 + $0xf0] sm:$0x8]
        %v2264 = vld [vmem:[%s396 + $0xf4] sm:$0xf]
        %v2265 = vld [vmem:[%s396 + $0xf8] sm:$0xf]
        %v2267 = vshrl.u32 %v2218, 16
        %v2269 = vrot.slane %v2267, 7
        %v2270 = vrot.slane %v2269, 4
        %v2272 = vshrl.u32 %v2219, 16
        %v2274 = vrot.slane %v2272, 7
        %v2275 = vshll.u32 %v2219, 16
        %v2277 = vor.u32 %v2274, %v2275
        %v2278 = vsel %vm713, %v2270, %v2277
        %v2279 = vrot.slane %v2274, 4
        %v2281 = vshrl.u32 %v2220, 16
        %v2283 = vrot.slane %v2281, 7
        %v2284 = vshll.u32 %v2220, 16
        %v2286 = vor.u32 %v2283, %v2284
        %v2287 = vsel %vm713, %v2279, %v2286
        %v2289 = vshrl.u32 %v2221, 16
        %v2291 = vrot.slane %v2289, 7
        %v2292 = vrot.slane %v2291, 4
        %v2294 = vshrl.u32 %v2222, 16
        %v2296 = vrot.slane %v2294, 7
        %v2297 = vshll.u32 %v2222, 16
        %v2299 = vor.u32 %v2296, %v2297
        %v2300 = vsel %vm713, %v2292, %v2299
        %v2301 = vrot.slane %v2296, 4
        %v2303 = vshrl.u32 %v2223, 16
        %v2305 = vrot.slane %v2303, 7
        %v2306 = vshll.u32 %v2223, 16
        %v2308 = vor.u32 %v2305, %v2306
        %v2309 = vsel %vm713, %v2301, %v2308
        %v2311 = vshrl.u32 %v2224, 16
        %v2313 = vrot.slane %v2311, 7
        %v2314 = vrot.slane %v2313, 4
        %v2316 = vshrl.u32 %v2225, 16
        %v2318 = vrot.slane %v2316, 7
        %v2319 = vshll.u32 %v2225, 16
        %v2321 = vor.u32 %v2318, %v2319
        %v2322 = vsel %vm713, %v2314, %v2321
        %v2323 = vrot.slane %v2318, 4
        %v2325 = vshrl.u32 %v2226, 16
        %v2327 = vrot.slane %v2325, 7
        %v2328 = vshll.u32 %v2226, 16
        %v2330 = vor.u32 %v2327, %v2328
        %v2331 = vsel %vm713, %v2323, %v2330
        %v2333 = vshrl.u32 %v2227, 16
        %v2335 = vrot.slane %v2333, 7
        %v2336 = vrot.slane %v2335, 4
        %v2338 = vshrl.u32 %v2228, 16
        %v2340 = vrot.slane %v2338, 7
        %v2341 = vshll.u32 %v2228, 16
        %v2343 = vor.u32 %v2340, %v2341
        %v2344 = vsel %vm713, %v2336, %v2343
        %v2345 = vrot.slane %v2340, 4
        %v2347 = vshrl.u32 %v2229, 16
        %v2349 = vrot.slane %v2347, 7
        %v2350 = vshll.u32 %v2229, 16
        %v2352 = vor.u32 %v2349, %v2350
        %v2353 = vsel %vm713, %v2345, %v2352
        %v2355 = vshrl.u32 %v2230, 16
        %v2357 = vrot.slane %v2355, 7
        %v2358 = vrot.slane %v2357, 4
        %v2360 = vshrl.u32 %v2231, 16
        %v2362 = vrot.slane %v2360, 7
        %v2363 = vshll.u32 %v2231, 16
        %v2365 = vor.u32 %v2362, %v2363
        %v2366 = vsel %vm713, %v2358, %v2365
        %v2367 = vrot.slane %v2362, 4
        %v2369 = vshrl.u32 %v2232, 16
        %v2371 = vrot.slane %v2369, 7
        %v2372 = vshll.u32 %v2232, 16
        %v2374 = vor.u32 %v2371, %v2372
        %v2375 = vsel %vm713, %v2367, %v2374
        %v2377 = vshrl.u32 %v2233, 16
        %v2379 = vrot.slane %v2377, 7
        %v2380 = vrot.slane %v2379, 4
        %v2382 = vshrl.u32 %v2234, 16
        %v2384 = vrot.slane %v2382, 7
        %v2385 = vshll.u32 %v2234, 16
        %v2387 = vor.u32 %v2384, %v2385
        %v2388 = vsel %vm713, %v2380, %v2387
        %v2389 = vrot.slane %v2384, 4
        %v2391 = vshrl.u32 %v2235, 16
        %v2393 = vrot.slane %v2391, 7
        %v2394 = vshll.u32 %v2235, 16
        %v2396 = vor.u32 %v2393, %v2394
        %v2397 = vsel %vm713, %v2389, %v2396
        %v2399 = vshrl.u32 %v2236, 16
        %v2401 = vrot.slane %v2399, 7
        %v2402 = vrot.slane %v2401, 4
        %v2404 = vshrl.u32 %v2237, 16
        %v2406 = vrot.slane %v2404, 7
        %v2407 = vshll.u32 %v2237, 16
        %v2409 = vor.u32 %v2406, %v2407
        %v2410 = vsel %vm713, %v2402, %v2409
        %v2411 = vrot.slane %v2406, 4
        %v2413 = vshrl.u32 %v2238, 16
        %v2415 = vrot.slane %v2413, 7
        %v2416 = vshll.u32 %v2238, 16
        %v2418 = vor.u32 %v2415, %v2416
        %v2419 = vsel %vm713, %v2411, %v2418
        %v2421 = vshrl.u32 %v2239, 16
        %v2423 = vrot.slane %v2421, 7
        %v2424 = vrot.slane %v2423, 4
        %v2426 = vshrl.u32 %v2240, 16
        %v2428 = vrot.slane %v2426, 7
        %v2429 = vshll.u32 %v2240, 16
        %v2431 = vor.u32 %v2428, %v2429
        %v2432 = vsel %vm713, %v2424, %v2431
        %v2433 = vrot.slane %v2428, 4
        %v2435 = vshrl.u32 %v2241, 16
        %v2437 = vrot.slane %v2435, 7
        %v2438 = vshll.u32 %v2241, 16
        %v2440 = vor.u32 %v2437, %v2438
        %v2441 = vsel %vm713, %v2433, %v2440
        %v2443 = vshrl.u32 %v2242, 16
        %v2445 = vrot.slane %v2443, 7
        %v2446 = vrot.slane %v2445, 4
        %v2448 = vshrl.u32 %v2243, 16
        %v2450 = vrot.slane %v2448, 7
        %v2451 = vshll.u32 %v2243, 16
        %v2453 = vor.u32 %v2450, %v2451
        %v2454 = vsel %vm713, %v2446, %v2453
        %v2455 = vrot.slane %v2450, 4
        %v2457 = vshrl.u32 %v2244, 16
        %v2459 = vrot.slane %v2457, 7
        %v2460 = vshll.u32 %v2244, 16
        %v2462 = vor.u32 %v2459, %v2460
        %v2463 = vsel %vm713, %v2455, %v2462
        %v2465 = vshrl.u32 %v2245, 16
        %v2467 = vrot.slane %v2465, 7
        %v2468 = vrot.slane %v2467, 4
        %v2470 = vshrl.u32 %v2246, 16
        %v2472 = vrot.slane %v2470, 7
        %v2473 = vshll.u32 %v2246, 16
        %v2475 = vor.u32 %v2472, %v2473
        %v2476 = vsel %vm713, %v2468, %v2475
        %v2477 = vrot.slane %v2472, 4
        %v2479 = vshrl.u32 %v2247, 16
        %v2481 = vrot.slane %v2479, 7
        %v2482 = vshll.u32 %v2247, 16
        %v2484 = vor.u32 %v2481, %v2482
        %v2485 = vsel %vm713, %v2477, %v2484
        %v2487 = vshrl.u32 %v2248, 16
        %v2489 = vrot.slane %v2487, 7
        %v2490 = vrot.slane %v2489, 4
        %v2492 = vshrl.u32 %v2249, 16
        %v2494 = vrot.slane %v2492, 7
        %v2495 = vshll.u32 %v2249, 16
        %v2497 = vor.u32 %v2494, %v2495
        %v2498 = vsel %vm713, %v2490, %v2497
        %v2499 = vrot.slane %v2494, 4
        %v2501 = vshrl.u32 %v2250, 16
        %v2503 = vrot.slane %v2501, 7
        %v2504 = vshll.u32 %v2250, 16
        %v2506 = vor.u32 %v2503, %v2504
        %v2507 = vsel %vm713, %v2499, %v2506
        %v2509 = vshrl.u32 %v2251, 16
        %v2511 = vrot.slane %v2509, 7
        %v2512 = vrot.slane %v2511, 4
        %v2514 = vshrl.u32 %v2252, 16
        %v2516 = vrot.slane %v2514, 7
        %v2517 = vshll.u32 %v2252, 16
        %v2519 = vor.u32 %v2516, %v2517
        %v2520 = vsel %vm713, %v2512, %v2519
        %v2521 = vrot.slane %v2516, 4
        %v2523 = vshrl.u32 %v2253, 16
        %v2525 = vrot.slane %v2523, 7
        %v2526 = vshll.u32 %v2253, 16
        %v2528 = vor.u32 %v2525, %v2526
        %v2529 = vsel %vm713, %v2521, %v2528
        %v2531 = vshrl.u32 %v2254, 16
        %v2533 = vrot.slane %v2531, 7
        %v2534 = vrot.slane %v2533, 4
        %v2536 = vshrl.u32 %v2255, 16
        %v2538 = vrot.slane %v2536, 7
        %v2539 = vshll.u32 %v2255, 16
        %v2541 = vor.u32 %v2538, %v2539
        %v2542 = vsel %vm713, %v2534, %v2541
        %v2543 = vrot.slane %v2538, 4
        %v2545 = vshrl.u32 %v2256, 16
        %v2547 = vrot.slane %v2545, 7
        %v2548 = vshll.u32 %v2256, 16
        %v2550 = vor.u32 %v2547, %v2548
        %v2551 = vsel %vm713, %v2543, %v2550
        %v2553 = vshrl.u32 %v2257, 16
        %v2555 = vrot.slane %v2553, 7
        %v2556 = vrot.slane %v2555, 4
        %v2558 = vshrl.u32 %v2258, 16
        %v2560 = vrot.slane %v2558, 7
        %v2561 = vshll.u32 %v2258, 16
        %v2563 = vor.u32 %v2560, %v2561
        %v2564 = vsel %vm713, %v2556, %v2563
        %v2565 = vrot.slane %v2560, 4
        %v2567 = vshrl.u32 %v2259, 16
        %v2569 = vrot.slane %v2567, 7
        %v2570 = vshll.u32 %v2259, 16
        %v2572 = vor.u32 %v2569, %v2570
        %v2573 = vsel %vm713, %v2565, %v2572
        %v2575 = vshrl.u32 %v2260, 16
        %v2577 = vrot.slane %v2575, 7
        %v2578 = vrot.slane %v2577, 4
        %v2580 = vshrl.u32 %v2261, 16
        %v2582 = vrot.slane %v2580, 7
        %v2583 = vshll.u32 %v2261, 16
        %v2585 = vor.u32 %v2582, %v2583
        %v2586 = vsel %vm713, %v2578, %v2585
        %v2587 = vrot.slane %v2582, 4
        %v2589 = vshrl.u32 %v2262, 16
        %v2591 = vrot.slane %v2589, 7
        %v2592 = vshll.u32 %v2262, 16
        %v2594 = vor.u32 %v2591, %v2592
        %v2595 = vsel %vm713, %v2587, %v2594
        %v2597 = vshrl.u32 %v2263, 16
        %v2599 = vrot.slane %v2597, 7
        %v2600 = vrot.slane %v2599, 4
        %v2602 = vshrl.u32 %v2264, 16
        %v2604 = vrot.slane %v2602, 7
        %v2605 = vshll.u32 %v2264, 16
        %v2607 = vor.u32 %v2604, %v2605
        %v2608 = vsel %vm713, %v2600, %v2607
        %v2609 = vrot.slane %v2604, 4
        %v2611 = vshrl.u32 %v2265, 16
        %v2613 = vrot.slane %v2611, 7
        %v2614 = vshll.u32 %v2265, 16
        %v2616 = vor.u32 %v2613, %v2614
        %v2617 = vsel %vm713, %v2609, %v2616
        %s2618 = scalar_lea.vmem [#allocation6], 192
        %v2619 = vld [vmem:[%s2618] sm:$0xf]
        %v2620 = vld [vmem:[%s2618 + $0x4] sm:$0xf]
        %v2621 = vld [vmem:[%s2618 + $0x8] sm:$0xf]
        %v2622 = vld [vmem:[%s2618 + $0xc] sm:$0xf]
        %v2623 = vld [vmem:[%s2618 + $0x10] sm:$0xf]
        %v2624 = vld [vmem:[%s2618 + $0x14] sm:$0xf]
        %v2625 = vld [vmem:[%s2618 + $0x18] sm:$0xf]
        %v2626 = vld [vmem:[%s2618 + $0x1c] sm:$0xf]
        %v2627 = vld [vmem:[%s2618 + $0x20] sm:$0xf]
        %v2628 = vld [vmem:[%s2618 + $0x24] sm:$0xf]
        %v2629 = vld [vmem:[%s2618 + $0x28] sm:$0xf]
        %v2630 = vld [vmem:[%s2618 + $0x2c] sm:$0xf]
        %v2631 = vld [vmem:[%s2618 + $0x30] sm:$0xf]
        %v2632 = vld [vmem:[%s2618 + $0x34] sm:$0xf]
        %v2633 = vld [vmem:[%s2618 + $0x38] sm:$0xf]
        %v2634 = vld [vmem:[%s2618 + $0x3c] sm:$0xf]
        %v2635 = vunpack.c.l.b16 %v2278
        %v2636 = vunpack.c.l.b16 %v2287
        %v2637 = vunpack.c.l.b16 %v2300
        %v2638 = vunpack.c.l.b16 %v2309
        %v2639 = vunpack.c.l.b16 %v2322
        %v2640 = vunpack.c.l.b16 %v2331
        %v2641 = vunpack.c.l.b16 %v2344
        %v2642 = vunpack.c.l.b16 %v2353
        %v2643 = vunpack.c.l.b16 %v2366
        %v2644 = vunpack.c.l.b16 %v2375
        %v2645 = vunpack.c.l.b16 %v2388
        %v2646 = vunpack.c.l.b16 %v2397
        %v2647 = vunpack.c.l.b16 %v2410
        %v2648 = vunpack.c.l.b16 %v2419
        %v2649 = vunpack.c.l.b16 %v2432
        %v2650 = vunpack.c.l.b16 %v2441
        %v2651 = vunpack.c.l.b16 %v2454
        %v2652 = vunpack.c.l.b16 %v2463
        %v2653 = vunpack.c.l.b16 %v2476
        %v2654 = vunpack.c.l.b16 %v2485
        %v2655 = vunpack.c.l.b16 %v2498
        %v2656 = vunpack.c.l.b16 %v2507
        %v2657 = vunpack.c.l.b16 %v2520
        %v2658 = vunpack.c.l.b16 %v2529
        %v2659 = vunpack.c.l.b16 %v2542
        %v2660 = vunpack.c.l.b16 %v2551
        %v2661 = vunpack.c.l.b16 %v2564
        %v2662 = vunpack.c.l.b16 %v2573
        %v2663 = vunpack.c.l.b16 %v2586
        %v2664 = vunpack.c.l.b16 %v2595
        %v2665 = vunpack.c.l.b16 %v2608
        %v2666 = vunpack.c.l.b16 %v2617
        %v2667 = vpack.c.b16 %v2636, %v2635
        %v2668 = vpack.c.b16 %v2638, %v2637
        %v2669 = vpack.c.b16 %v2640, %v2639
        %v2670 = vpack.c.b16 %v2642, %v2641
        %v2671 = vpack.c.b16 %v2644, %v2643
        %v2672 = vpack.c.b16 %v2646, %v2645
        %v2673 = vpack.c.b16 %v2648, %v2647
        %v2674 = vpack.c.b16 %v2650, %v2649
        %v2675 = vpack.c.b16 %v2652, %v2651
        %v2676 = vpack.c.b16 %v2654, %v2653
        %v2677 = vpack.c.b16 %v2656, %v2655
        %v2678 = vpack.c.b16 %v2658, %v2657
        %v2679 = vpack.c.b16 %v2660, %v2659
        %v2680 = vpack.c.b16 %v2662, %v2661
        %v2681 = vpack.c.b16 %v2664, %v2663
        %v2682 = vpack.c.b16 %v2666, %v2665
        %v2715 = vunpack.c.l.b16 %v2619
        %v2716 = vunpack.c.l.b16 %v2620
        %v2717 = vunpack.c.l.b16 %v2621
        %v2718 = vunpack.c.l.b16 %v2622
        %v2719 = vunpack.c.l.b16 %v2623
        %v2720 = vunpack.c.l.b16 %v2624
        %v2721 = vunpack.c.l.b16 %v2625
        %v2722 = vunpack.c.l.b16 %v2626
        %v2723 = vunpack.c.l.b16 %v2627
        %v2724 = vunpack.c.l.b16 %v2628
        %v2725 = vunpack.c.l.b16 %v2629
        %v2726 = vunpack.c.l.b16 %v2630
        %v2727 = vunpack.c.l.b16 %v2631
        %v2728 = vunpack.c.l.b16 %v2632
        %v2729 = vunpack.c.l.b16 %v2633
        %v2730 = vunpack.c.l.b16 %v2634
        %v2731 = vpack.c.b16 %v2716, %v2715
        %v2732 = vpack.c.b16 %v2718, %v2717
        %v2733 = vpack.c.b16 %v2720, %v2719
        %v2734 = vpack.c.b16 %v2722, %v2721
        %v2735 = vpack.c.b16 %v2724, %v2723
        %v2736 = vpack.c.b16 %v2726, %v2725
        %v2737 = vpack.c.b16 %v2728, %v2727
        %v2738 = vpack.c.b16 %v2730, %v2729
        %2747 = vmatpush.bf16.msra.mxu0 %v2738
        %2748 = vmatpush.bf16.msra.mxu0 %v2737
        %2749 = vmatpush.bf16.msra.mxu0 %v2736
        %2750 = vmatpush.bf16.msra.mxu0 %v2735
        %2751 = vmatpush.bf16.msra.mxu0 %v2734
        %2752 = vmatpush.bf16.msra.mxu0 %v2733
        %2753 = vmatpush.bf16.msra.mxu0 %v2732
        %2754 = vmatpush.bf16.msra.mxu0 %v2731
        %2755 = vmatmul.bf16.gmra.mxu0 %v2667
        %v2756 = vpop.f32.mrf.mxu0
        %v2757 = vadd.f32 0.0, %v2756
        %v2758 = vpop.f32.mrf.mxu0
        %v2759 = vadd.f32 0.0, %v2758
        %2760 = vmatmul.bf16.gmra.mxu0 %v2668
        %v2761 = vpop.f32.mrf.mxu0
        %v2762 = vadd.f32 0.0, %v2761
        %v2763 = vpop.f32.mrf.mxu0
        %v2764 = vadd.f32 0.0, %v2763
        %2765 = vmatmul.bf16.gmra.mxu0 %v2669
        %v2766 = vpop.f32.mrf.mxu0
        %v2767 = vadd.f32 0.0, %v2766
        %v2768 = vpop.f32.mrf.mxu0
        %v2769 = vadd.f32 0.0, %v2768
        %2770 = vmatmul.bf16.gmra.mxu0 %v2670
        %v2771 = vpop.f32.mrf.mxu0
        %v2772 = vadd.f32 0.0, %v2771
        %v2773 = vpop.f32.mrf.mxu0
        %v2774 = vadd.f32 0.0, %v2773
        %2775 = vmatmul.bf16.gmra.mxu0 %v2671
        %v2776 = vpop.f32.mrf.mxu0
        %v2777 = vadd.f32 0.0, %v2776
        %v2778 = vpop.f32.mrf.mxu0
        %v2779 = vadd.f32 0.0, %v2778
        %2780 = vmatmul.bf16.gmra.mxu0 %v2672
        %v2781 = vpop.f32.mrf.mxu0
        %v2782 = vadd.f32 0.0, %v2781
        %v2783 = vpop.f32.mrf.mxu0
        %v2784 = vadd.f32 0.0, %v2783
        %2785 = vmatmul.bf16.gmra.mxu0 %v2673
        %v2786 = vpop.f32.mrf.mxu0
        %v2787 = vadd.f32 0.0, %v2786
        %v2788 = vpop.f32.mrf.mxu0
        %v2789 = vadd.f32 0.0, %v2788
        %2790 = vmatmul.bf16.gmra.mxu0 %v2674
        %v2791 = vpop.f32.mrf.mxu0
        %v2792 = vadd.f32 0.0, %v2791
        %v2793 = vpop.f32.mrf.mxu0
        %v2794 = vadd.f32 0.0, %v2793
        %2795 = vmatmul.bf16.gmra.mxu0 %v2675
        %v2796 = vpop.f32.mrf.mxu0
        %v2797 = vadd.f32 0.0, %v2796
        %v2798 = vpop.f32.mrf.mxu0
        %v2799 = vadd.f32 0.0, %v2798
        %2800 = vmatmul.bf16.gmra.mxu0 %v2676
        %v2801 = vpop.f32.mrf.mxu0
        %v2802 = vadd.f32 0.0, %v2801
        %v2803 = vpop.f32.mrf.mxu0
        %v2804 = vadd.f32 0.0, %v2803
        %2805 = vmatmul.bf16.gmra.mxu0 %v2677
        %v2806 = vpop.f32.mrf.mxu0
        %v2807 = vadd.f32 0.0, %v2806
        %v2808 = vpop.f32.mrf.mxu0
        %v2809 = vadd.f32 0.0, %v2808
        %2810 = vmatmul.bf16.gmra.mxu0 %v2678
        %v2811 = vpop.f32.mrf.mxu0
        %v2812 = vadd.f32 0.0, %v2811
        %v2813 = vpop.f32.mrf.mxu0
        %v2814 = vadd.f32 0.0, %v2813
        %2815 = vmatmul.bf16.gmra.mxu0 %v2679
        %v2816 = vpop.f32.mrf.mxu0
        %v2817 = vadd.f32 0.0, %v2816
        %v2818 = vpop.f32.mrf.mxu0
        %v2819 = vadd.f32 0.0, %v2818
        %2820 = vmatmul.bf16.gmra.mxu0 %v2680
        %v2821 = vpop.f32.mrf.mxu0
        %v2822 = vadd.f32 0.0, %v2821
        %v2823 = vpop.f32.mrf.mxu0
        %v2824 = vadd.f32 0.0, %v2823
        %2825 = vmatmul.bf16.gmra.mxu0 %v2681
        %v2826 = vpop.f32.mrf.mxu0
        %v2827 = vadd.f32 0.0, %v2826
        %v2828 = vpop.f32.mrf.mxu0
        %v2829 = vadd.f32 0.0, %v2828
        %2830 = vmatmul.bf16.gmra.mxu0 %v2682
        %v2831 = vpop.f32.mrf.mxu0
        %v2832 = vadd.f32 0.0, %v2831
        %v2833 = vpop.f32.mrf.mxu0
        %v2834 = vadd.f32 0.0, %v2833
        %2835 = vdwg.mxu0
        %v2836 = vadd.f32 %v2186, %v2757
        %v2837 = vadd.f32 %v2187, %v2759
        %v2838 = vadd.f32 %v2188, %v2762
        %v2839 = vadd.f32 %v2189, %v2764
        %v2840 = vadd.f32 %v2190, %v2767
        %v2841 = vadd.f32 %v2191, %v2769
        %v2842 = vadd.f32 %v2192, %v2772
        %v2843 = vadd.f32 %v2193, %v2774
        %v2844 = vadd.f32 %v2194, %v2777
        %v2845 = vadd.f32 %v2195, %v2779
        %v2846 = vadd.f32 %v2196, %v2782
        %v2847 = vadd.f32 %v2197, %v2784
        %v2848 = vadd.f32 %v2198, %v2787
        %v2849 = vadd.f32 %v2199, %v2789
        %v2850 = vadd.f32 %v2200, %v2792
        %v2851 = vadd.f32 %v2201, %v2794
        %v2852 = vadd.f32 %v2202, %v2797
        %v2853 = vadd.f32 %v2203, %v2799
        %v2854 = vadd.f32 %v2204, %v2802
        %v2855 = vadd.f32 %v2205, %v2804
        %v2856 = vadd.f32 %v2206, %v2807
        %v2857 = vadd.f32 %v2207, %v2809
        %v2858 = vadd.f32 %v2208, %v2812
        %v2859 = vadd.f32 %v2209, %v2814
        %v2860 = vadd.f32 %v2210, %v2817
        %v2861 = vadd.f32 %v2211, %v2819
        %v2862 = vadd.f32 %v2212, %v2822
        %v2863 = vadd.f32 %v2213, %v2824
        %v2864 = vadd.f32 %v2214, %v2827
        %v2865 = vadd.f32 %v2215, %v2829
        %v2866 = vadd.f32 %v2216, %v2832
        %v2867 = vadd.f32 %v2217, %v2834
        %s2868 = scalar_lea.vmem [#allocation6], 256
        %v2869 = vld [vmem:[%s2868] sm:$0xf]
        %v2870 = vld [vmem:[%s2868 + $0x4] sm:$0xf]
        %v2871 = vld [vmem:[%s2868 + $0x8] sm:$0xf]
        %v2872 = vld [vmem:[%s2868 + $0xc] sm:$0xf]
        %v2873 = vld [vmem:[%s2868 + $0x10] sm:$0xf]
        %v2874 = vld [vmem:[%s2868 + $0x14] sm:$0xf]
        %v2875 = vld [vmem:[%s2868 + $0x18] sm:$0xf]
        %v2876 = vld [vmem:[%s2868 + $0x1c] sm:$0xf]
        %v2877 = vld [vmem:[%s2868 + $0x20] sm:$0xf]
        %v2878 = vld [vmem:[%s2868 + $0x24] sm:$0xf]
        %v2879 = vld [vmem:[%s2868 + $0x28] sm:$0xf]
        %v2880 = vld [vmem:[%s2868 + $0x2c] sm:$0xf]
        %v2881 = vld [vmem:[%s2868 + $0x30] sm:$0xf]
        %v2882 = vld [vmem:[%s2868 + $0x34] sm:$0xf]
        %v2883 = vld [vmem:[%s2868 + $0x38] sm:$0xf]
        %v2884 = vld [vmem:[%s2868 + $0x3c] sm:$0xf]
        %v2917 = vunpack.c.l.b16 %v2219
        %v2918 = vunpack.c.l.b16 %v2220
        %v2919 = vunpack.c.l.b16 %v2222
        %v2920 = vunpack.c.l.b16 %v2223
        %v2921 = vunpack.c.l.b16 %v2225
        %v2922 = vunpack.c.l.b16 %v2226
        %v2923 = vunpack.c.l.b16 %v2228
        %v2924 = vunpack.c.l.b16 %v2229
        %v2925 = vunpack.c.l.b16 %v2231
        %v2926 = vunpack.c.l.b16 %v2232
        %v2927 = vunpack.c.l.b16 %v2234
        %v2928 = vunpack.c.l.b16 %v2235
        %v2929 = vunpack.c.l.b16 %v2237
        %v2930 = vunpack.c.l.b16 %v2238
        %v2931 = vunpack.c.l.b16 %v2240
        %v2932 = vunpack.c.l.b16 %v2241
        %v2933 = vunpack.c.l.b16 %v2243
        %v2934 = vunpack.c.l.b16 %v2244
        %v2935 = vunpack.c.l.b16 %v2246
        %v2936 = vunpack.c.l.b16 %v2247
        %v2937 = vunpack.c.l.b16 %v2249
        %v2938 = vunpack.c.l.b16 %v2250
        %v2939 = vunpack.c.l.b16 %v2252
        %v2940 = vunpack.c.l.b16 %v2253
        %v2941 = vunpack.c.l.b16 %v2255
        %v2942 = vunpack.c.l.b16 %v2256
        %v2943 = vunpack.c.l.b16 %v2258
        %v2944 = vunpack.c.l.b16 %v2259
        %v2945 = vunpack.c.l.b16 %v2261
        %v2946 = vunpack.c.l.b16 %v2262
        %v2947 = vunpack.c.l.b16 %v2264
        %v2948 = vunpack.c.l.b16 %v2265
        %v2949 = vpack.c.b16 %v2918, %v2917
        %v2950 = vpack.c.b16 %v2920, %v2919
        %v2951 = vpack.c.b16 %v2922, %v2921
        %v2952 = vpack.c.b16 %v2924, %v2923
        %v2953 = vpack.c.b16 %v2926, %v2925
        %v2954 = vpack.c.b16 %v2928, %v2927
        %v2955 = vpack.c.b16 %v2930, %v2929
        %v2956 = vpack.c.b16 %v2932, %v2931
        %v2957 = vpack.c.b16 %v2934, %v2933
        %v2958 = vpack.c.b16 %v2936, %v2935
        %v2959 = vpack.c.b16 %v2938, %v2937
        %v2960 = vpack.c.b16 %v2940, %v2939
        %v2961 = vpack.c.b16 %v2942, %v2941
        %v2962 = vpack.c.b16 %v2944, %v2943
        %v2963 = vpack.c.b16 %v2946, %v2945
        %v2964 = vpack.c.b16 %v2948, %v2947
        %v2997 = vunpack.c.l.b16 %v2869
        %v2998 = vunpack.c.l.b16 %v2870
        %v2999 = vunpack.c.l.b16 %v2871
        %v3000 = vunpack.c.l.b16 %v2872
        %v3001 = vunpack.c.l.b16 %v2873
        %v3002 = vunpack.c.l.b16 %v2874
        %v3003 = vunpack.c.l.b16 %v2875
        %v3004 = vunpack.c.l.b16 %v2876
        %v3005 = vunpack.c.l.b16 %v2877
        %v3006 = vunpack.c.l.b16 %v2878
        %v3007 = vunpack.c.l.b16 %v2879
        %v3008 = vunpack.c.l.b16 %v2880
        %v3009 = vunpack.c.l.b16 %v2881
        %v3010 = vunpack.c.l.b16 %v2882
        %v3011 = vunpack.c.l.b16 %v2883
        %v3012 = vunpack.c.l.b16 %v2884
        %v3013 = vpack.c.b16 %v2998, %v2997
        %v3014 = vpack.c.b16 %v3000, %v2999
        %v3015 = vpack.c.b16 %v3002, %v3001
        %v3016 = vpack.c.b16 %v3004, %v3003
        %v3017 = vpack.c.b16 %v3006, %v3005
        %v3018 = vpack.c.b16 %v3008, %v3007
        %v3019 = vpack.c.b16 %v3010, %v3009
        %v3020 = vpack.c.b16 %v3012, %v3011
        %3029 = vmatpush.bf16.msra.mxu0 %v3020
        %3030 = vmatpush.bf16.msra.mxu0 %v3019
        %3031 = vmatpush.bf16.msra.mxu0 %v3018
        %3032 = vmatpush.bf16.msra.mxu0 %v3017
        %3033 = vmatpush.bf16.msra.mxu0 %v3016
        %3034 = vmatpush.bf16.msra.mxu0 %v3015
        %3035 = vmatpush.bf16.msra.mxu0 %v3014
        %3036 = vmatpush.bf16.msra.mxu0 %v3013
        %3037 = vmatmul.bf16.gmra.mxu0 %v2949
        %v3038 = vpop.f32.mrf.mxu0
        %v3039 = vadd.f32 0.0, %v3038
        %v3040 = vpop.f32.mrf.mxu0
        %v3041 = vadd.f32 0.0, %v3040
        %3042 = vmatmul.bf16.gmra.mxu0 %v2950
        %v3043 = vpop.f32.mrf.mxu0
        %v3044 = vadd.f32 0.0, %v3043
        %v3045 = vpop.f32.mrf.mxu0
        %v3046 = vadd.f32 0.0, %v3045
        %3047 = vmatmul.bf16.gmra.mxu0 %v2951
        %v3048 = vpop.f32.mrf.mxu0
        %v3049 = vadd.f32 0.0, %v3048
        %v3050 = vpop.f32.mrf.mxu0
        %v3051 = vadd.f32 0.0, %v3050
        %3052 = vmatmul.bf16.gmra.mxu0 %v2952
        %v3053 = vpop.f32.mrf.mxu0
        %v3054 = vadd.f32 0.0, %v3053
        %v3055 = vpop.f32.mrf.mxu0
        %v3056 = vadd.f32 0.0, %v3055
        %3057 = vmatmul.bf16.gmra.mxu0 %v2953
        %v3058 = vpop.f32.mrf.mxu0
        %v3059 = vadd.f32 0.0, %v3058
        %v3060 = vpop.f32.mrf.mxu0
        %v3061 = vadd.f32 0.0, %v3060
        %3062 = vmatmul.bf16.gmra.mxu0 %v2954
        %v3063 = vpop.f32.mrf.mxu0
        %v3064 = vadd.f32 0.0, %v3063
        %v3065 = vpop.f32.mrf.mxu0
        %v3066 = vadd.f32 0.0, %v3065
        %3067 = vmatmul.bf16.gmra.mxu0 %v2955
        %v3068 = vpop.f32.mrf.mxu0
        %v3069 = vadd.f32 0.0, %v3068
        %v3070 = vpop.f32.mrf.mxu0
        %v3071 = vadd.f32 0.0, %v3070
        %3072 = vmatmul.bf16.gmra.mxu0 %v2956
        %v3073 = vpop.f32.mrf.mxu0
        %v3074 = vadd.f32 0.0, %v3073
        %v3075 = vpop.f32.mrf.mxu0
        %v3076 = vadd.f32 0.0, %v3075
        %3077 = vmatmul.bf16.gmra.mxu0 %v2957
        %v3078 = vpop.f32.mrf.mxu0
        %v3079 = vadd.f32 0.0, %v3078
        %v3080 = vpop.f32.mrf.mxu0
        %v3081 = vadd.f32 0.0, %v3080
        %3082 = vmatmul.bf16.gmra.mxu0 %v2958
        %v3083 = vpop.f32.mrf.mxu0
        %v3084 = vadd.f32 0.0, %v3083
        %v3085 = vpop.f32.mrf.mxu0
        %v3086 = vadd.f32 0.0, %v3085
        %3087 = vmatmul.bf16.gmra.mxu0 %v2959
        %v3088 = vpop.f32.mrf.mxu0
        %v3089 = vadd.f32 0.0, %v3088
        %v3090 = vpop.f32.mrf.mxu0
        %v3091 = vadd.f32 0.0, %v3090
        %3092 = vmatmul.bf16.gmra.mxu0 %v2960
        %v3093 = vpop.f32.mrf.mxu0
        %v3094 = vadd.f32 0.0, %v3093
        %v3095 = vpop.f32.mrf.mxu0
        %v3096 = vadd.f32 0.0, %v3095
        %3097 = vmatmul.bf16.gmra.mxu0 %v2961
        %v3098 = vpop.f32.mrf.mxu0
        %v3099 = vadd.f32 0.0, %v3098
        %v3100 = vpop.f32.mrf.mxu0
        %v3101 = vadd.f32 0.0, %v3100
        %3102 = vmatmul.bf16.gmra.mxu0 %v2962
        %v3103 = vpop.f32.mrf.mxu0
        %v3104 = vadd.f32 0.0, %v3103
        %v3105 = vpop.f32.mrf.mxu0
        %v3106 = vadd.f32 0.0, %v3105
        %3107 = vmatmul.bf16.gmra.mxu0 %v2963
        %v3108 = vpop.f32.mrf.mxu0
        %v3109 = vadd.f32 0.0, %v3108
        %v3110 = vpop.f32.mrf.mxu0
        %v3111 = vadd.f32 0.0, %v3110
        %3112 = vmatmul.bf16.gmra.mxu0 %v2964
        %v3113 = vpop.f32.mrf.mxu0
        %v3114 = vadd.f32 0.0, %v3113
        %v3115 = vpop.f32.mrf.mxu0
        %v3116 = vadd.f32 0.0, %v3115
        %3117 = vdwg.mxu0
        %v3118 = vadd.f32 %v2836, %v3039
        %v3119 = vadd.f32 %v2837, %v3041
        %v3120 = vadd.f32 %v2838, %v3044
        %v3121 = vadd.f32 %v2839, %v3046
        %v3122 = vadd.f32 %v2840, %v3049
        %v3123 = vadd.f32 %v2841, %v3051
        %v3124 = vadd.f32 %v2842, %v3054
        %v3125 = vadd.f32 %v2843, %v3056
        %v3126 = vadd.f32 %v2844, %v3059
        %v3127 = vadd.f32 %v2845, %v3061
        %v3128 = vadd.f32 %v2846, %v3064
        %v3129 = vadd.f32 %v2847, %v3066
        %v3130 = vadd.f32 %v2848, %v3069
        %v3131 = vadd.f32 %v2849, %v3071
        %v3132 = vadd.f32 %v2850, %v3074
        %v3133 = vadd.f32 %v2851, %v3076
        %v3134 = vadd.f32 %v2852, %v3079
        %v3135 = vadd.f32 %v2853, %v3081
        %v3136 = vadd.f32 %v2854, %v3084
        %v3137 = vadd.f32 %v2855, %v3086
        %v3138 = vadd.f32 %v2856, %v3089
        %v3139 = vadd.f32 %v2857, %v3091
        %v3140 = vadd.f32 %v2858, %v3094
        %v3141 = vadd.f32 %v2859, %v3096
        %v3142 = vadd.f32 %v2860, %v3099
        %v3143 = vadd.f32 %v2861, %v3101
        %v3144 = vadd.f32 %v2862, %v3104
        %v3145 = vadd.f32 %v2863, %v3106
        %v3146 = vadd.f32 %v2864, %v3109
        %v3147 = vadd.f32 %v2865, %v3111
        %v3148 = vadd.f32 %v2866, %v3114
        %v3149 = vadd.f32 %v2867, %v3116
        %v3150 = vld [vmem:[%s396 + $0x4] sm:$0xf]
        %v3151 = vld [vmem:[%s396 + $0x8] sm:$0xf]
        %v3152 = vld [vmem:[%s396 + $0xc] sm:$0x1]
        %v3153 = vld [vmem:[%s396 + $0x14] sm:$0xf]
        %v3154 = vld [vmem:[%s396 + $0x18] sm:$0xf]
        %v3155 = vld [vmem:[%s396 + $0x1c] sm:$0x1]
        %v3156 = vld [vmem:[%s396 + $0x24] sm:$0xf]
        %v3157 = vld [vmem:[%s396 + $0x28] sm:$0xf]
        %v3158 = vld [vmem:[%s396 + $0x2c] sm:$0x1]
        %v3159 = vld [vmem:[%s396 + $0x34] sm:$0xf]
        %v3160 = vld [vmem:[%s396 + $0x38] sm:$0xf]
        %v3161 = vld [vmem:[%s396 + $0x3c] sm:$0x1]
        %v3162 = vld [vmem:[%s396 + $0x44] sm:$0xf]
        %v3163 = vld [vmem:[%s396 + $0x48] sm:$0xf]
        %v3164 = vld [vmem:[%s396 + $0x4c] sm:$0x1]
        %v3165 = vld [vmem:[%s396 + $0x54] sm:$0xf]
        %v3166 = vld [vmem:[%s396 + $0x58] sm:$0xf]
        %v3167 = vld [vmem:[%s396 + $0x5c] sm:$0x1]
        %v3168 = vld [vmem:[%s396 + $0x64] sm:$0xf]
        %v3169 = vld [vmem:[%s396 + $0x68] sm:$0xf]
        %v3170 = vld [vmem:[%s396 + $0x6c] sm:$0x1]
        %v3171 = vld [vmem:[%s396 + $0x74] sm:$0xf]
        %v3172 = vld [vmem:[%s396 + $0x78] sm:$0xf]
        %v3173 = vld [vmem:[%s396 + $0x7c] sm:$0x1]
        %v3174 = vld [vmem:[%s396 + $0x84] sm:$0xf]
        %v3175 = vld [vmem:[%s396 + $0x88] sm:$0xf]
        %v3176 = vld [vmem:[%s396 + $0x8c] sm:$0x1]
        %v3177 = vld [vmem:[%s396 + $0x94] sm:$0xf]
        %v3178 = vld [vmem:[%s396 + $0x98] sm:$0xf]
        %v3179 = vld [vmem:[%s396 + $0x9c] sm:$0x1]
        %v3180 = vld [vmem:[%s396 + $0xa4] sm:$0xf]
        %v3181 = vld [vmem:[%s396 + $0xa8] sm:$0xf]
        %v3182 = vld [vmem:[%s396 + $0xac] sm:$0x1]
        %v3183 = vld [vmem:[%s396 + $0xb4] sm:$0xf]
        %v3184 = vld [vmem:[%s396 + $0xb8] sm:$0xf]
        %v3185 = vld [vmem:[%s396 + $0xbc] sm:$0x1]
        %v3186 = vld [vmem:[%s396 + $0xc4] sm:$0xf]
        %v3187 = vld [vmem:[%s396 + $0xc8] sm:$0xf]
        %v3188 = vld [vmem:[%s396 + $0xcc] sm:$0x1]
        %v3189 = vld [vmem:[%s396 + $0xd4] sm:$0xf]
        %v3190 = vld [vmem:[%s396 + $0xd8] sm:$0xf]
        %v3191 = vld [vmem:[%s396 + $0xdc] sm:$0x1]
        %v3192 = vld [vmem:[%s396 + $0xe4] sm:$0xf]
        %v3193 = vld [vmem:[%s396 + $0xe8] sm:$0xf]
        %v3194 = vld [vmem:[%s396 + $0xec] sm:$0x1]
        %v3195 = vld [vmem:[%s396 + $0xf4] sm:$0xf]
        %v3196 = vld [vmem:[%s396 + $0xf8] sm:$0xf]
        %v3197 = vld [vmem:[%s396 + $0xfc] sm:$0x1]
        %v3199 = vshrl.u32 %v3150, 16
        %v3201 = vrot.slane %v3199, 4
        %v3202 = vshll.u32 %v3150, 16
        %v3204 = vrot.slane %v3202, 5
        %v3205 = vor.u32 %v3201, %v3204
        %v3206 = vrot.slane %v3205, 4
        %v3208 = vshll.u32 %v3151, 16
        %v3210 = vrot.slane %v3208, 5
        %v3211 = vsel %vm1583, %v3206, %v3210
        %v3212 = vshrl.u32 %v3151, 16
        %v3214 = vrot.slane %v3212, 4
        %v3215 = vor.u32 %v3214, %v3210
        %v3216 = vrot.slane %v3215, 4
        %v3218 = vshll.u32 %v3152, 16
        %v3220 = vrot.slane %v3218, 5
        %v3221 = vsel %vm1583, %v3216, %v3220
        %v3223 = vshrl.u32 %v3153, 16
        %v3225 = vrot.slane %v3223, 4
        %v3226 = vshll.u32 %v3153, 16
        %v3228 = vrot.slane %v3226, 5
        %v3229 = vor.u32 %v3225, %v3228
        %v3230 = vrot.slane %v3229, 4
        %v3232 = vshll.u32 %v3154, 16
        %v3234 = vrot.slane %v3232, 5
        %v3235 = vsel %vm1583, %v3230, %v3234
        %v3236 = vshrl.u32 %v3154, 16
        %v3238 = vrot.slane %v3236, 4
        %v3239 = vor.u32 %v3238, %v3234
        %v3240 = vrot.slane %v3239, 4
        %v3242 = vshll.u32 %v3155, 16
        %v3244 = vrot.slane %v3242, 5
        %v3245 = vsel %vm1583, %v3240, %v3244
        %v3247 = vshrl.u32 %v3156, 16
        %v3249 = vrot.slane %v3247, 4
        %v3250 = vshll.u32 %v3156, 16
        %v3252 = vrot.slane %v3250, 5
        %v3253 = vor.u32 %v3249, %v3252
        %v3254 = vrot.slane %v3253, 4
        %v3256 = vshll.u32 %v3157, 16
        %v3258 = vrot.slane %v3256, 5
        %v3259 = vsel %vm1583, %v3254, %v3258
        %v3260 = vshrl.u32 %v3157, 16
        %v3262 = vrot.slane %v3260, 4
        %v3263 = vor.u32 %v3262, %v3258
        %v3264 = vrot.slane %v3263, 4
        %v3266 = vshll.u32 %v3158, 16
        %v3268 = vrot.slane %v3266, 5
        %v3269 = vsel %vm1583, %v3264, %v3268
        %v3271 = vshrl.u32 %v3159, 16
        %v3273 = vrot.slane %v3271, 4
        %v3274 = vshll.u32 %v3159, 16
        %v3276 = vrot.slane %v3274, 5
        %v3277 = vor.u32 %v3273, %v3276
        %v3278 = vrot.slane %v3277, 4
        %v3280 = vshll.u32 %v3160, 16
        %v3282 = vrot.slane %v3280, 5
        %v3283 = vsel %vm1583, %v3278, %v3282
        %v3284 = vshrl.u32 %v3160, 16
        %v3286 = vrot.slane %v3284, 4
        %v3287 = vor.u32 %v3286, %v3282
        %v3288 = vrot.slane %v3287, 4
        %v3290 = vshll.u32 %v3161, 16
        %v3292 = vrot.slane %v3290, 5
        %v3293 = vsel %vm1583, %v3288, %v3292
        %v3295 = vshrl.u32 %v3162, 16
        %v3297 = vrot.slane %v3295, 4
        %v3298 = vshll.u32 %v3162, 16
        %v3300 = vrot.slane %v3298, 5
        %v3301 = vor.u32 %v3297, %v3300
        %v3302 = vrot.slane %v3301, 4
        %v3304 = vshll.u32 %v3163, 16
        %v3306 = vrot.slane %v3304, 5
        %v3307 = vsel %vm1583, %v3302, %v3306
        %v3308 = vshrl.u32 %v3163, 16
        %v3310 = vrot.slane %v3308, 4
        %v3311 = vor.u32 %v3310, %v3306
        %v3312 = vrot.slane %v3311, 4
        %v3314 = vshll.u32 %v3164, 16
        %v3316 = vrot.slane %v3314, 5
        %v3317 = vsel %vm1583, %v3312, %v3316
        %v3319 = vshrl.u32 %v3165, 16
        %v3321 = vrot.slane %v3319, 4
        %v3322 = vshll.u32 %v3165, 16
        %v3324 = vrot.slane %v3322, 5
        %v3325 = vor.u32 %v3321, %v3324
        %v3326 = vrot.slane %v3325, 4
        %v3328 = vshll.u32 %v3166, 16
        %v3330 = vrot.slane %v3328, 5
        %v3331 = vsel %vm1583, %v3326, %v3330
        %v3332 = vshrl.u32 %v3166, 16
        %v3334 = vrot.slane %v3332, 4
        %v3335 = vor.u32 %v3334, %v3330
        %v3336 = vrot.slane %v3335, 4
        %v3338 = vshll.u32 %v3167, 16
        %v3340 = vrot.slane %v3338, 5
        %v3341 = vsel %vm1583, %v3336, %v3340
        %v3343 = vshrl.u32 %v3168, 16
        %v3345 = vrot.slane %v3343, 4
        %v3346 = vshll.u32 %v3168, 16
        %v3348 = vrot.slane %v3346, 5
        %v3349 = vor.u32 %v3345, %v3348
        %v3350 = vrot.slane %v3349, 4
        %v3352 = vshll.u32 %v3169, 16
        %v3354 = vrot.slane %v3352, 5
        %v3355 = vsel %vm1583, %v3350, %v3354
        %v3356 = vshrl.u32 %v3169, 16
        %v3358 = vrot.slane %v3356, 4
        %v3359 = vor.u32 %v3358, %v3354
        %v3360 = vrot.slane %v3359, 4
        %v3362 = vshll.u32 %v3170, 16
        %v3364 = vrot.slane %v3362, 5
        %v3365 = vsel %vm1583, %v3360, %v3364
        %v3367 = vshrl.u32 %v3171, 16
        %v3369 = vrot.slane %v3367, 4
        %v3370 = vshll.u32 %v3171, 16
        %v3372 = vrot.slane %v3370, 5
        %v3373 = vor.u32 %v3369, %v3372
        %v3374 = vrot.slane %v3373, 4
        %v3376 = vshll.u32 %v3172, 16
        %v3378 = vrot.slane %v3376, 5
        %v3379 = vsel %vm1583, %v3374, %v3378
        %v3380 = vshrl.u32 %v3172, 16
        %v3382 = vrot.slane %v3380, 4
        %v3383 = vor.u32 %v3382, %v3378
        %v3384 = vrot.slane %v3383, 4
        %v3386 = vshll.u32 %v3173, 16
        %v3388 = vrot.slane %v3386, 5
        %v3389 = vsel %vm1583, %v3384, %v3388
        %v3391 = vshrl.u32 %v3174, 16
        %v3393 = vrot.slane %v3391, 4
        %v3394 = vshll.u32 %v3174, 16
        %v3396 = vrot.slane %v3394, 5
        %v3397 = vor.u32 %v3393, %v3396
        %v3398 = vrot.slane %v3397, 4
        %v3400 = vshll.u32 %v3175, 16
        %v3402 = vrot.slane %v3400, 5
        %v3403 = vsel %vm1583, %v3398, %v3402
        %v3404 = vshrl.u32 %v3175, 16
        %v3406 = vrot.slane %v3404, 4
        %v3407 = vor.u32 %v3406, %v3402
        %v3408 = vrot.slane %v3407, 4
        %v3410 = vshll.u32 %v3176, 16
        %v3412 = vrot.slane %v3410, 5
        %v3413 = vsel %vm1583, %v3408, %v3412
        %v3415 = vshrl.u32 %v3177, 16
        %v3417 = vrot.slane %v3415, 4
        %v3418 = vshll.u32 %v3177, 16
        %v3420 = vrot.slane %v3418, 5
        %v3421 = vor.u32 %v3417, %v3420
        %v3422 = vrot.slane %v3421, 4
        %v3424 = vshll.u32 %v3178, 16
        %v3426 = vrot.slane %v3424, 5
        %v3427 = vsel %vm1583, %v3422, %v3426
        %v3428 = vshrl.u32 %v3178, 16
        %v3430 = vrot.slane %v3428, 4
        %v3431 = vor.u32 %v3430, %v3426
        %v3432 = vrot.slane %v3431, 4
        %v3434 = vshll.u32 %v3179, 16
        %v3436 = vrot.slane %v3434, 5
        %v3437 = vsel %vm1583, %v3432, %v3436
        %v3439 = vshrl.u32 %v3180, 16
        %v3441 = vrot.slane %v3439, 4
        %v3442 = vshll.u32 %v3180, 16
        %v3444 = vrot.slane %v3442, 5
        %v3445 = vor.u32 %v3441, %v3444
        %v3446 = vrot.slane %v3445, 4
        %v3448 = vshll.u32 %v3181, 16
        %v3450 = vrot.slane %v3448, 5
        %v3451 = vsel %vm1583, %v3446, %v3450
        %v3452 = vshrl.u32 %v3181, 16
        %v3454 = vrot.slane %v3452, 4
        %v3455 = vor.u32 %v3454, %v3450
        %v3456 = vrot.slane %v3455, 4
        %v3458 = vshll.u32 %v3182, 16
        %v3460 = vrot.slane %v3458, 5
        %v3461 = vsel %vm1583, %v3456, %v3460
        %v3463 = vshrl.u32 %v3183, 16
        %v3465 = vrot.slane %v3463, 4
        %v3466 = vshll.u32 %v3183, 16
        %v3468 = vrot.slane %v3466, 5
        %v3469 = vor.u32 %v3465, %v3468
        %v3470 = vrot.slane %v3469, 4
        %v3472 = vshll.u32 %v3184, 16
        %v3474 = vrot.slane %v3472, 5
        %v3475 = vsel %vm1583, %v3470, %v3474
        %v3476 = vshrl.u32 %v3184, 16
        %v3478 = vrot.slane %v3476, 4
        %v3479 = vor.u32 %v3478, %v3474
        %v3480 = vrot.slane %v3479, 4
        %v3482 = vshll.u32 %v3185, 16
        %v3484 = vrot.slane %v3482, 5
        %v3485 = vsel %vm1583, %v3480, %v3484
        %v3487 = vshrl.u32 %v3186, 16
        %v3489 = vrot.slane %v3487, 4
        %v3490 = vshll.u32 %v3186, 16
        %v3492 = vrot.slane %v3490, 5
        %v3493 = vor.u32 %v3489, %v3492
        %v3494 = vrot.slane %v3493, 4
        %v3496 = vshll.u32 %v3187, 16
        %v3498 = vrot.slane %v3496, 5
        %v3499 = vsel %vm1583, %v3494, %v3498
        %v3500 = vshrl.u32 %v3187, 16
        %v3502 = vrot.slane %v3500, 4
        %v3503 = vor.u32 %v3502, %v3498
        %v3504 = vrot.slane %v3503, 4
        %v3506 = vshll.u32 %v3188, 16
        %v3508 = vrot.slane %v3506, 5
        %v3509 = vsel %vm1583, %v3504, %v3508
        %v3511 = vshrl.u32 %v3189, 16
        %v3513 = vrot.slane %v3511, 4
        %v3514 = vshll.u32 %v3189, 16
        %v3516 = vrot.slane %v3514, 5
        %v3517 = vor.u32 %v3513, %v3516
        %v3518 = vrot.slane %v3517, 4
        %v3520 = vshll.u32 %v3190, 16
        %v3522 = vrot.slane %v3520, 5
        %v3523 = vsel %vm1583, %v3518, %v3522
        %v3524 = vshrl.u32 %v3190, 16
        %v3526 = vrot.slane %v3524, 4
        %v3527 = vor.u32 %v3526, %v3522
        %v3528 = vrot.slane %v3527, 4
        %v3530 = vshll.u32 %v3191, 16
        %v3532 = vrot.slane %v3530, 5
        %v3533 = vsel %vm1583, %v3528, %v3532
        %v3535 = vshrl.u32 %v3192, 16
        %v3537 = vrot.slane %v3535, 4
        %v3538 = vshll.u32 %v3192, 16
        %v3540 = vrot.slane %v3538, 5
        %v3541 = vor.u32 %v3537, %v3540
        %v3542 = vrot.slane %v3541, 4
        %v3544 = vshll.u32 %v3193, 16
        %v3546 = vrot.slane %v3544, 5
        %v3547 = vsel %vm1583, %v3542, %v3546
        %v3548 = vshrl.u32 %v3193, 16
        %v3550 = vrot.slane %v3548, 4
        %v3551 = vor.u32 %v3550, %v3546
        %v3552 = vrot.slane %v3551, 4
        %v3554 = vshll.u32 %v3194, 16
        %v3556 = vrot.slane %v3554, 5
        %v3557 = vsel %vm1583, %v3552, %v3556
        %v3559 = vshrl.u32 %v3195, 16
        %v3561 = vrot.slane %v3559, 4
        %v3562 = vshll.u32 %v3195, 16
        %v3564 = vrot.slane %v3562, 5
        %v3565 = vor.u32 %v3561, %v3564
        %v3566 = vrot.slane %v3565, 4
        %v3568 = vshll.u32 %v3196, 16
        %v3570 = vrot.slane %v3568, 5
        %v3571 = vsel %vm1583, %v3566, %v3570
        %v3572 = vshrl.u32 %v3196, 16
        %v3574 = vrot.slane %v3572, 4
        %v3575 = vor.u32 %v3574, %v3570
        %v3576 = vrot.slane %v3575, 4
        %v3578 = vshll.u32 %v3197, 16
        %v3580 = vrot.slane %v3578, 5
        %v3581 = vsel %vm1583, %v3576, %v3580
        %s3582 = scalar_lea.vmem [#allocation6], 320
        %v3583 = vld [vmem:[%s3582] sm:$0xf]
        %v3584 = vld [vmem:[%s3582 + $0x4] sm:$0xf]
        %v3585 = vld [vmem:[%s3582 + $0x8] sm:$0xf]
        %v3586 = vld [vmem:[%s3582 + $0xc] sm:$0xf]
        %v3587 = vld [vmem:[%s3582 + $0x10] sm:$0xf]
        %v3588 = vld [vmem:[%s3582 + $0x14] sm:$0xf]
        %v3589 = vld [vmem:[%s3582 + $0x18] sm:$0xf]
        %v3590 = vld [vmem:[%s3582 + $0x1c] sm:$0xf]
        %v3591 = vld [vmem:[%s3582 + $0x20] sm:$0xf]
        %v3592 = vld [vmem:[%s3582 + $0x24] sm:$0xf]
        %v3593 = vld [vmem:[%s3582 + $0x28] sm:$0xf]
        %v3594 = vld [vmem:[%s3582 + $0x2c] sm:$0xf]
        %v3595 = vld [vmem:[%s3582 + $0x30] sm:$0xf]
        %v3596 = vld [vmem:[%s3582 + $0x34] sm:$0xf]
        %v3597 = vld [vmem:[%s3582 + $0x38] sm:$0xf]
        %v3598 = vld [vmem:[%s3582 + $0x3c] sm:$0xf]
        %v3599 = vunpack.c.l.b16 %v3211
        %v3600 = vunpack.c.l.b16 %v3221
        %v3601 = vunpack.c.l.b16 %v3235
        %v3602 = vunpack.c.l.b16 %v3245
        %v3603 = vunpack.c.l.b16 %v3259
        %v3604 = vunpack.c.l.b16 %v3269
        %v3605 = vunpack.c.l.b16 %v3283
        %v3606 = vunpack.c.l.b16 %v3293
        %v3607 = vunpack.c.l.b16 %v3307
        %v3608 = vunpack.c.l.b16 %v3317
        %v3609 = vunpack.c.l.b16 %v3331
        %v3610 = vunpack.c.l.b16 %v3341
        %v3611 = vunpack.c.l.b16 %v3355
        %v3612 = vunpack.c.l.b16 %v3365
        %v3613 = vunpack.c.l.b16 %v3379
        %v3614 = vunpack.c.l.b16 %v3389
        %v3615 = vunpack.c.l.b16 %v3403
        %v3616 = vunpack.c.l.b16 %v3413
        %v3617 = vunpack.c.l.b16 %v3427
        %v3618 = vunpack.c.l.b16 %v3437
        %v3619 = vunpack.c.l.b16 %v3451
        %v3620 = vunpack.c.l.b16 %v3461
        %v3621 = vunpack.c.l.b16 %v3475
        %v3622 = vunpack.c.l.b16 %v3485
        %v3623 = vunpack.c.l.b16 %v3499
        %v3624 = vunpack.c.l.b16 %v3509
        %v3625 = vunpack.c.l.b16 %v3523
        %v3626 = vunpack.c.l.b16 %v3533
        %v3627 = vunpack.c.l.b16 %v3547
        %v3628 = vunpack.c.l.b16 %v3557
        %v3629 = vunpack.c.l.b16 %v3571
        %v3630 = vunpack.c.l.b16 %v3581
        %v3631 = vpack.c.b16 %v3600, %v3599
        %v3632 = vpack.c.b16 %v3602, %v3601
        %v3633 = vpack.c.b16 %v3604, %v3603
        %v3634 = vpack.c.b16 %v3606, %v3605
        %v3635 = vpack.c.b16 %v3608, %v3607
        %v3636 = vpack.c.b16 %v3610, %v3609
        %v3637 = vpack.c.b16 %v3612, %v3611
        %v3638 = vpack.c.b16 %v3614, %v3613
        %v3639 = vpack.c.b16 %v3616, %v3615
        %v3640 = vpack.c.b16 %v3618, %v3617
        %v3641 = vpack.c.b16 %v3620, %v3619
        %v3642 = vpack.c.b16 %v3622, %v3621
        %v3643 = vpack.c.b16 %v3624, %v3623
        %v3644 = vpack.c.b16 %v3626, %v3625
        %v3645 = vpack.c.b16 %v3628, %v3627
        %v3646 = vpack.c.b16 %v3630, %v3629
        %v3679 = vunpack.c.l.b16 %v3583
        %v3680 = vunpack.c.l.b16 %v3584
        %v3681 = vunpack.c.l.b16 %v3585
        %v3682 = vunpack.c.l.b16 %v3586
        %v3683 = vunpack.c.l.b16 %v3587
        %v3684 = vunpack.c.l.b16 %v3588
        %v3685 = vunpack.c.l.b16 %v3589
        %v3686 = vunpack.c.l.b16 %v3590
        %v3687 = vunpack.c.l.b16 %v3591
        %v3688 = vunpack.c.l.b16 %v3592
        %v3689 = vunpack.c.l.b16 %v3593
        %v3690 = vunpack.c.l.b16 %v3594
        %v3691 = vunpack.c.l.b16 %v3595
        %v3692 = vunpack.c.l.b16 %v3596
        %v3693 = vunpack.c.l.b16 %v3597
        %v3694 = vunpack.c.l.b16 %v3598
        %v3695 = vpack.c.b16 %v3680, %v3679
        %v3696 = vpack.c.b16 %v3682, %v3681
        %v3697 = vpack.c.b16 %v3684, %v3683
        %v3698 = vpack.c.b16 %v3686, %v3685
        %v3699 = vpack.c.b16 %v3688, %v3687
        %v3700 = vpack.c.b16 %v3690, %v3689
        %v3701 = vpack.c.b16 %v3692, %v3691
        %v3702 = vpack.c.b16 %v3694, %v3693
        %3711 = vmatpush.bf16.msra.mxu0 %v3702
        %3712 = vmatpush.bf16.msra.mxu0 %v3701
        %3713 = vmatpush.bf16.msra.mxu0 %v3700
        %3714 = vmatpush.bf16.msra.mxu0 %v3699
        %3715 = vmatpush.bf16.msra.mxu0 %v3698
        %3716 = vmatpush.bf16.msra.mxu0 %v3697
        %3717 = vmatpush.bf16.msra.mxu0 %v3696
        %3718 = vmatpush.bf16.msra.mxu0 %v3695
        %3719 = vmatmul.bf16.gmra.mxu0 %v3631
        %v3720 = vpop.f32.mrf.mxu0
        %v3721 = vadd.f32 0.0, %v3720
        %v3722 = vpop.f32.mrf.mxu0
        %v3723 = vadd.f32 0.0, %v3722
        %3724 = vmatmul.bf16.gmra.mxu0 %v3632
        %v3725 = vpop.f32.mrf.mxu0
        %v3726 = vadd.f32 0.0, %v3725
        %v3727 = vpop.f32.mrf.mxu0
        %v3728 = vadd.f32 0.0, %v3727
        %3729 = vmatmul.bf16.gmra.mxu0 %v3633
        %v3730 = vpop.f32.mrf.mxu0
        %v3731 = vadd.f32 0.0, %v3730
        %v3732 = vpop.f32.mrf.mxu0
        %v3733 = vadd.f32 0.0, %v3732
        %3734 = vmatmul.bf16.gmra.mxu0 %v3634
        %v3735 = vpop.f32.mrf.mxu0
        %v3736 = vadd.f32 0.0, %v3735
        %v3737 = vpop.f32.mrf.mxu0
        %v3738 = vadd.f32 0.0, %v3737
        %3739 = vmatmul.bf16.gmra.mxu0 %v3635
        %v3740 = vpop.f32.mrf.mxu0
        %v3741 = vadd.f32 0.0, %v3740
        %v3742 = vpop.f32.mrf.mxu0
        %v3743 = vadd.f32 0.0, %v3742
        %3744 = vmatmul.bf16.gmra.mxu0 %v3636
        %v3745 = vpop.f32.mrf.mxu0
        %v3746 = vadd.f32 0.0, %v3745
        %v3747 = vpop.f32.mrf.mxu0
        %v3748 = vadd.f32 0.0, %v3747
        %3749 = vmatmul.bf16.gmra.mxu0 %v3637
        %v3750 = vpop.f32.mrf.mxu0
        %v3751 = vadd.f32 0.0, %v3750
        %v3752 = vpop.f32.mrf.mxu0
        %v3753 = vadd.f32 0.0, %v3752
        %3754 = vmatmul.bf16.gmra.mxu0 %v3638
        %v3755 = vpop.f32.mrf.mxu0
        %v3756 = vadd.f32 0.0, %v3755
        %v3757 = vpop.f32.mrf.mxu0
        %v3758 = vadd.f32 0.0, %v3757
        %3759 = vmatmul.bf16.gmra.mxu0 %v3639
        %v3760 = vpop.f32.mrf.mxu0
        %v3761 = vadd.f32 0.0, %v3760
        %v3762 = vpop.f32.mrf.mxu0
        %v3763 = vadd.f32 0.0, %v3762
        %3764 = vmatmul.bf16.gmra.mxu0 %v3640
        %v3765 = vpop.f32.mrf.mxu0
        %v3766 = vadd.f32 0.0, %v3765
        %v3767 = vpop.f32.mrf.mxu0
        %v3768 = vadd.f32 0.0, %v3767
        %3769 = vmatmul.bf16.gmra.mxu0 %v3641
        %v3770 = vpop.f32.mrf.mxu0
        %v3771 = vadd.f32 0.0, %v3770
        %v3772 = vpop.f32.mrf.mxu0
        %v3773 = vadd.f32 0.0, %v3772
        %3774 = vmatmul.bf16.gmra.mxu0 %v3642
        %v3775 = vpop.f32.mrf.mxu0
        %v3776 = vadd.f32 0.0, %v3775
        %v3777 = vpop.f32.mrf.mxu0
        %v3778 = vadd.f32 0.0, %v3777
        %3779 = vmatmul.bf16.gmra.mxu0 %v3643
        %v3780 = vpop.f32.mrf.mxu0
        %v3781 = vadd.f32 0.0, %v3780
        %v3782 = vpop.f32.mrf.mxu0
        %v3783 = vadd.f32 0.0, %v3782
        %3784 = vmatmul.bf16.gmra.mxu0 %v3644
        %v3785 = vpop.f32.mrf.mxu0
        %v3786 = vadd.f32 0.0, %v3785
        %v3787 = vpop.f32.mrf.mxu0
        %v3788 = vadd.f32 0.0, %v3787
        %3789 = vmatmul.bf16.gmra.mxu0 %v3645
        %v3790 = vpop.f32.mrf.mxu0
        %v3791 = vadd.f32 0.0, %v3790
        %v3792 = vpop.f32.mrf.mxu0
        %v3793 = vadd.f32 0.0, %v3792
        %3794 = vmatmul.bf16.gmra.mxu0 %v3646
        %v3795 = vpop.f32.mrf.mxu0
        %v3796 = vadd.f32 0.0, %v3795
        %v3797 = vpop.f32.mrf.mxu0
        %v3798 = vadd.f32 0.0, %v3797
        %3799 = vdwg.mxu0
        %v3800 = vadd.f32 %v3118, %v3721
        %v3801 = vadd.f32 %v3119, %v3723
        %v3802 = vadd.f32 %v3120, %v3726
        %v3803 = vadd.f32 %v3121, %v3728
        %v3804 = vadd.f32 %v3122, %v3731
        %v3805 = vadd.f32 %v3123, %v3733
        %v3806 = vadd.f32 %v3124, %v3736
        %v3807 = vadd.f32 %v3125, %v3738
        %v3808 = vadd.f32 %v3126, %v3741
        %v3809 = vadd.f32 %v3127, %v3743
        %v3810 = vadd.f32 %v3128, %v3746
        %v3811 = vadd.f32 %v3129, %v3748
        %v3812 = vadd.f32 %v3130, %v3751
        %v3813 = vadd.f32 %v3131, %v3753
        %v3814 = vadd.f32 %v3132, %v3756
        %v3815 = vadd.f32 %v3133, %v3758
        %v3816 = vadd.f32 %v3134, %v3761
        %v3817 = vadd.f32 %v3135, %v3763
        %v3818 = vadd.f32 %v3136, %v3766
        %v3819 = vadd.f32 %v3137, %v3768
        %v3820 = vadd.f32 %v3138, %v3771
        %v3821 = vadd.f32 %v3139, %v3773
        %v3822 = vadd.f32 %v3140, %v3776
        %v3823 = vadd.f32 %v3141, %v3778
        %v3824 = vadd.f32 %v3142, %v3781
        %v3825 = vadd.f32 %v3143, %v3783
        %v3826 = vadd.f32 %v3144, %v3786
        %v3827 = vadd.f32 %v3145, %v3788
        %v3828 = vadd.f32 %v3146, %v3791
        %v3829 = vadd.f32 %v3147, %v3793
        %v3830 = vadd.f32 %v3148, %v3796
        %v3831 = vadd.f32 %v3149, %v3798
        %v3832 = vld [vmem:[%s643] sm:$0x8]
        %v3833 = vld [vmem:[%s643 + $0x4] sm:$0xf]
        %v3834 = vld [vmem:[%s643 + $0x8] sm:$0xf]
        %v3835 = vld [vmem:[%s643 + $0x10] sm:$0x8]
        %v3836 = vld [vmem:[%s643 + $0x14] sm:$0xf]
        %v3837 = vld [vmem:[%s643 + $0x18] sm:$0xf]
        %v3838 = vld [vmem:[%s643 + $0x20] sm:$0x8]
        %v3839 = vld [vmem:[%s643 + $0x24] sm:$0xf]
        %v3840 = vld [vmem:[%s643 + $0x28] sm:$0xf]
        %v3841 = vld [vmem:[%s643 + $0x30] sm:$0x8]
        %v3842 = vld [vmem:[%s643 + $0x34] sm:$0xf]
        %v3843 = vld [vmem:[%s643 + $0x38] sm:$0xf]
        %v3844 = vld [vmem:[%s643 + $0x40] sm:$0x8]
        %v3845 = vld [vmem:[%s643 + $0x44] sm:$0xf]
        %v3846 = vld [vmem:[%s643 + $0x48] sm:$0xf]
        %v3847 = vld [vmem:[%s643 + $0x50] sm:$0x8]
        %v3848 = vld [vmem:[%s643 + $0x54] sm:$0xf]
        %v3849 = vld [vmem:[%s643 + $0x58] sm:$0xf]
        %v3850 = vld [vmem:[%s643 + $0x60] sm:$0x8]
        %v3851 = vld [vmem:[%s643 + $0x64] sm:$0xf]
        %v3852 = vld [vmem:[%s643 + $0x68] sm:$0xf]
        %v3853 = vld [vmem:[%s643 + $0x70] sm:$0x8]
        %v3854 = vld [vmem:[%s643 + $0x74] sm:$0xf]
        %v3855 = vld [vmem:[%s643 + $0x78] sm:$0xf]
        %v3856 = vld [vmem:[%s643 + $0x80] sm:$0x8]
        %v3857 = vld [vmem:[%s643 + $0x84] sm:$0xf]
        %v3858 = vld [vmem:[%s643 + $0x88] sm:$0xf]
        %v3859 = vld [vmem:[%s643 + $0x90] sm:$0x8]
        %v3860 = vld [vmem:[%s643 + $0x94] sm:$0xf]
        %v3861 = vld [vmem:[%s643 + $0x98] sm:$0xf]
        %v3862 = vld [vmem:[%s643 + $0xa0] sm:$0x8]
        %v3863 = vld [vmem:[%s643 + $0xa4] sm:$0xf]
        %v3864 = vld [vmem:[%s643 + $0xa8] sm:$0xf]
        %v3865 = vld [vmem:[%s643 + $0xb0] sm:$0x8]
        %v3866 = vld [vmem:[%s643 + $0xb4] sm:$0xf]
        %v3867 = vld [vmem:[%s643 + $0xb8] sm:$0xf]
        %v3868 = vld [vmem:[%s643 + $0xc0] sm:$0x8]
        %v3869 = vld [vmem:[%s643 + $0xc4] sm:$0xf]
        %v3870 = vld [vmem:[%s643 + $0xc8] sm:$0xf]
        %v3871 = vld [vmem:[%s643 + $0xd0] sm:$0x8]
        %v3872 = vld [vmem:[%s643 + $0xd4] sm:$0xf]
        %v3873 = vld [vmem:[%s643 + $0xd8] sm:$0xf]
        %v3874 = vld [vmem:[%s643 + $0xe0] sm:$0x8]
        %v3875 = vld [vmem:[%s643 + $0xe4] sm:$0xf]
        %v3876 = vld [vmem:[%s643 + $0xe8] sm:$0xf]
        %v3877 = vld [vmem:[%s643 + $0xf0] sm:$0x8]
        %v3878 = vld [vmem:[%s643 + $0xf4] sm:$0xf]
        %v3879 = vld [vmem:[%s643 + $0xf8] sm:$0xf]
        %v3881 = vshrl.u32 %v3832, 16
        %v3883 = vrot.slane %v3881, 7
        %v3884 = vrot.slane %v3883, 4
        %v3886 = vshrl.u32 %v3833, 16
        %v3888 = vrot.slane %v3886, 7
        %v3889 = vshll.u32 %v3833, 16
        %v3891 = vor.u32 %v3888, %v3889
        %v3892 = vsel %vm713, %v3884, %v3891
        %v3893 = vrot.slane %v3888, 4
        %v3895 = vshrl.u32 %v3834, 16
        %v3897 = vrot.slane %v3895, 7
        %v3898 = vshll.u32 %v3834, 16
        %v3900 = vor.u32 %v3897, %v3898
        %v3901 = vsel %vm713, %v3893, %v3900
        %v3903 = vshrl.u32 %v3835, 16
        %v3905 = vrot.slane %v3903, 7
        %v3906 = vrot.slane %v3905, 4
        %v3908 = vshrl.u32 %v3836, 16
        %v3910 = vrot.slane %v3908, 7
        %v3911 = vshll.u32 %v3836, 16
        %v3913 = vor.u32 %v3910, %v3911
        %v3914 = vsel %vm713, %v3906, %v3913
        %v3915 = vrot.slane %v3910, 4
        %v3917 = vshrl.u32 %v3837, 16
        %v3919 = vrot.slane %v3917, 7
        %v3920 = vshll.u32 %v3837, 16
        %v3922 = vor.u32 %v3919, %v3920
        %v3923 = vsel %vm713, %v3915, %v3922
        %v3925 = vshrl.u32 %v3838, 16
        %v3927 = vrot.slane %v3925, 7
        %v3928 = vrot.slane %v3927, 4
        %v3930 = vshrl.u32 %v3839, 16
        %v3932 = vrot.slane %v3930, 7
        %v3933 = vshll.u32 %v3839, 16
        %v3935 = vor.u32 %v3932, %v3933
        %v3936 = vsel %vm713, %v3928, %v3935
        %v3937 = vrot.slane %v3932, 4
        %v3939 = vshrl.u32 %v3840, 16
        %v3941 = vrot.slane %v3939, 7
        %v3942 = vshll.u32 %v3840, 16
        %v3944 = vor.u32 %v3941, %v3942
        %v3945 = vsel %vm713, %v3937, %v3944
        %v3947 = vshrl.u32 %v3841, 16
        %v3949 = vrot.slane %v3947, 7
        %v3950 = vrot.slane %v3949, 4
        %v3952 = vshrl.u32 %v3842, 16
        %v3954 = vrot.slane %v3952, 7
        %v3955 = vshll.u32 %v3842, 16
        %v3957 = vor.u32 %v3954, %v3955
        %v3958 = vsel %vm713, %v3950, %v3957
        %v3959 = vrot.slane %v3954, 4
        %v3961 = vshrl.u32 %v3843, 16
        %v3963 = vrot.slane %v3961, 7
        %v3964 = vshll.u32 %v3843, 16
        %v3966 = vor.u32 %v3963, %v3964
        %v3967 = vsel %vm713, %v3959, %v3966
        %v3969 = vshrl.u32 %v3844, 16
        %v3971 = vrot.slane %v3969, 7
        %v3972 = vrot.slane %v3971, 4
        %v3974 = vshrl.u32 %v3845, 16
        %v3976 = vrot.slane %v3974, 7
        %v3977 = vshll.u32 %v3845, 16
        %v3979 = vor.u32 %v3976, %v3977
        %v3980 = vsel %vm713, %v3972, %v3979
        %v3981 = vrot.slane %v3976, 4
        %v3983 = vshrl.u32 %v3846, 16
        %v3985 = vrot.slane %v3983, 7
        %v3986 = vshll.u32 %v3846, 16
        %v3988 = vor.u32 %v3985, %v3986
        %v3989 = vsel %vm713, %v3981, %v3988
        %v3991 = vshrl.u32 %v3847, 16
        %v3993 = vrot.slane %v3991, 7
        %v3994 = vrot.slane %v3993, 4
        %v3996 = vshrl.u32 %v3848, 16
        %v3998 = vrot.slane %v3996, 7
        %v3999 = vshll.u32 %v3848, 16
        %v4001 = vor.u32 %v3998, %v3999
        %v4002 = vsel %vm713, %v3994, %v4001
        %v4003 = vrot.slane %v3998, 4
        %v4005 = vshrl.u32 %v3849, 16
        %v4007 = vrot.slane %v4005, 7
        %v4008 = vshll.u32 %v3849, 16
        %v4010 = vor.u32 %v4007, %v4008
        %v4011 = vsel %vm713, %v4003, %v4010
        %v4013 = vshrl.u32 %v3850, 16
        %v4015 = vrot.slane %v4013, 7
        %v4016 = vrot.slane %v4015, 4
        %v4018 = vshrl.u32 %v3851, 16
        %v4020 = vrot.slane %v4018, 7
        %v4021 = vshll.u32 %v3851, 16
        %v4023 = vor.u32 %v4020, %v4021
        %v4024 = vsel %vm713, %v4016, %v4023
        %v4025 = vrot.slane %v4020, 4
        %v4027 = vshrl.u32 %v3852, 16
        %v4029 = vrot.slane %v4027, 7
        %v4030 = vshll.u32 %v3852, 16
        %v4032 = vor.u32 %v4029, %v4030
        %v4033 = vsel %vm713, %v4025, %v4032
        %v4035 = vshrl.u32 %v3853, 16
        %v4037 = vrot.slane %v4035, 7
        %v4038 = vrot.slane %v4037, 4
        %v4040 = vshrl.u32 %v3854, 16
        %v4042 = vrot.slane %v4040, 7
        %v4043 = vshll.u32 %v3854, 16
        %v4045 = vor.u32 %v4042, %v4043
        %v4046 = vsel %vm713, %v4038, %v4045
        %v4047 = vrot.slane %v4042, 4
        %v4049 = vshrl.u32 %v3855, 16
        %v4051 = vrot.slane %v4049, 7
        %v4052 = vshll.u32 %v3855, 16
        %v4054 = vor.u32 %v4051, %v4052
        %v4055 = vsel %vm713, %v4047, %v4054
        %v4057 = vshrl.u32 %v3856, 16
        %v4059 = vrot.slane %v4057, 7
        %v4060 = vrot.slane %v4059, 4
        %v4062 = vshrl.u32 %v3857, 16
        %v4064 = vrot.slane %v4062, 7
        %v4065 = vshll.u32 %v3857, 16
        %v4067 = vor.u32 %v4064, %v4065
        %v4068 = vsel %vm713, %v4060, %v4067
        %v4069 = vrot.slane %v4064, 4
        %v4071 = vshrl.u32 %v3858, 16
        %v4073 = vrot.slane %v4071, 7
        %v4074 = vshll.u32 %v3858, 16
        %v4076 = vor.u32 %v4073, %v4074
        %v4077 = vsel %vm713, %v4069, %v4076
        %v4079 = vshrl.u32 %v3859, 16
        %v4081 = vrot.slane %v4079, 7
        %v4082 = vrot.slane %v4081, 4
        %v4084 = vshrl.u32 %v3860, 16
        %v4086 = vrot.slane %v4084, 7
        %v4087 = vshll.u32 %v3860, 16
        %v4089 = vor.u32 %v4086, %v4087
        %v4090 = vsel %vm713, %v4082, %v4089
        %v4091 = vrot.slane %v4086, 4
        %v4093 = vshrl.u32 %v3861, 16
        %v4095 = vrot.slane %v4093, 7
        %v4096 = vshll.u32 %v3861, 16
        %v4098 = vor.u32 %v4095, %v4096
        %v4099 = vsel %vm713, %v4091, %v4098
        %v4101 = vshrl.u32 %v3862, 16
        %v4103 = vrot.slane %v4101, 7
        %v4104 = vrot.slane %v4103, 4
        %v4106 = vshrl.u32 %v3863, 16
        %v4108 = vrot.slane %v4106, 7
        %v4109 = vshll.u32 %v3863, 16
        %v4111 = vor.u32 %v4108, %v4109
        %v4112 = vsel %vm713, %v4104, %v4111
        %v4113 = vrot.slane %v4108, 4
        %v4115 = vshrl.u32 %v3864, 16
        %v4117 = vrot.slane %v4115, 7
        %v4118 = vshll.u32 %v3864, 16
        %v4120 = vor.u32 %v4117, %v4118
        %v4121 = vsel %vm713, %v4113, %v4120
        %v4123 = vshrl.u32 %v3865, 16
        %v4125 = vrot.slane %v4123, 7
        %v4126 = vrot.slane %v4125, 4
        %v4128 = vshrl.u32 %v3866, 16
        %v4130 = vrot.slane %v4128, 7
        %v4131 = vshll.u32 %v3866, 16
        %v4133 = vor.u32 %v4130, %v4131
        %v4134 = vsel %vm713, %v4126, %v4133
        %v4135 = vrot.slane %v4130, 4
        %v4137 = vshrl.u32 %v3867, 16
        %v4139 = vrot.slane %v4137, 7
        %v4140 = vshll.u32 %v3867, 16
        %v4142 = vor.u32 %v4139, %v4140
        %v4143 = vsel %vm713, %v4135, %v4142
        %v4145 = vshrl.u32 %v3868, 16
        %v4147 = vrot.slane %v4145, 7
        %v4148 = vrot.slane %v4147, 4
        %v4150 = vshrl.u32 %v3869, 16
        %v4152 = vrot.slane %v4150, 7
        %v4153 = vshll.u32 %v3869, 16
        %v4155 = vor.u32 %v4152, %v4153
        %v4156 = vsel %vm713, %v4148, %v4155
        %v4157 = vrot.slane %v4152, 4
        %v4159 = vshrl.u32 %v3870, 16
        %v4161 = vrot.slane %v4159, 7
        %v4162 = vshll.u32 %v3870, 16
        %v4164 = vor.u32 %v4161, %v4162
        %v4165 = vsel %vm713, %v4157, %v4164
        %v4167 = vshrl.u32 %v3871, 16
        %v4169 = vrot.slane %v4167, 7
        %v4170 = vrot.slane %v4169, 4
        %v4172 = vshrl.u32 %v3872, 16
        %v4174 = vrot.slane %v4172, 7
        %v4175 = vshll.u32 %v3872, 16
        %v4177 = vor.u32 %v4174, %v4175
        %v4178 = vsel %vm713, %v4170, %v4177
        %v4179 = vrot.slane %v4174, 4
        %v4181 = vshrl.u32 %v3873, 16
        %v4183 = vrot.slane %v4181, 7
        %v4184 = vshll.u32 %v3873, 16
        %v4186 = vor.u32 %v4183, %v4184
        %v4187 = vsel %vm713, %v4179, %v4186
        %v4189 = vshrl.u32 %v3874, 16
        %v4191 = vrot.slane %v4189, 7
        %v4192 = vrot.slane %v4191, 4
        %v4194 = vshrl.u32 %v3875, 16
        %v4196 = vrot.slane %v4194, 7
        %v4197 = vshll.u32 %v3875, 16
        %v4199 = vor.u32 %v4196, %v4197
        %v4200 = vsel %vm713, %v4192, %v4199
        %v4201 = vrot.slane %v4196, 4
        %v4203 = vshrl.u32 %v3876, 16
        %v4205 = vrot.slane %v4203, 7
        %v4206 = vshll.u32 %v3876, 16
        %v4208 = vor.u32 %v4205, %v4206
        %v4209 = vsel %vm713, %v4201, %v4208
        %v4211 = vshrl.u32 %v3877, 16
        %v4213 = vrot.slane %v4211, 7
        %v4214 = vrot.slane %v4213, 4
        %v4216 = vshrl.u32 %v3878, 16
        %v4218 = vrot.slane %v4216, 7
        %v4219 = vshll.u32 %v3878, 16
        %v4221 = vor.u32 %v4218, %v4219
        %v4222 = vsel %vm713, %v4214, %v4221
        %v4223 = vrot.slane %v4218, 4
        %v4225 = vshrl.u32 %v3879, 16
        %v4227 = vrot.slane %v4225, 7
        %v4228 = vshll.u32 %v3879, 16
        %v4230 = vor.u32 %v4227, %v4228
        %v4231 = vsel %vm713, %v4223, %v4230
        %s4232 = scalar_lea.vmem [#allocation6], 384
        %v4233 = vld [vmem:[%s4232] sm:$0xf]
        %v4234 = vld [vmem:[%s4232 + $0x4] sm:$0xf]
        %v4235 = vld [vmem:[%s4232 + $0x8] sm:$0xf]
        %v4236 = vld [vmem:[%s4232 + $0xc] sm:$0xf]
        %v4237 = vld [vmem:[%s4232 + $0x10] sm:$0xf]
        %v4238 = vld [vmem:[%s4232 + $0x14] sm:$0xf]
        %v4239 = vld [vmem:[%s4232 + $0x18] sm:$0xf]
        %v4240 = vld [vmem:[%s4232 + $0x1c] sm:$0xf]
        %v4241 = vld [vmem:[%s4232 + $0x20] sm:$0xf]
        %v4242 = vld [vmem:[%s4232 + $0x24] sm:$0xf]
        %v4243 = vld [vmem:[%s4232 + $0x28] sm:$0xf]
        %v4244 = vld [vmem:[%s4232 + $0x2c] sm:$0xf]
        %v4245 = vld [vmem:[%s4232 + $0x30] sm:$0xf]
        %v4246 = vld [vmem:[%s4232 + $0x34] sm:$0xf]
        %v4247 = vld [vmem:[%s4232 + $0x38] sm:$0xf]
        %v4248 = vld [vmem:[%s4232 + $0x3c] sm:$0xf]
        %v4249 = vunpack.c.l.b16 %v3892
        %v4250 = vunpack.c.l.b16 %v3901
        %v4251 = vunpack.c.l.b16 %v3914
        %v4252 = vunpack.c.l.b16 %v3923
        %v4253 = vunpack.c.l.b16 %v3936
        %v4254 = vunpack.c.l.b16 %v3945
        %v4255 = vunpack.c.l.b16 %v3958
        %v4256 = vunpack.c.l.b16 %v3967
        %v4257 = vunpack.c.l.b16 %v3980
        %v4258 = vunpack.c.l.b16 %v3989
        %v4259 = vunpack.c.l.b16 %v4002
        %v4260 = vunpack.c.l.b16 %v4011
        %v4261 = vunpack.c.l.b16 %v4024
        %v4262 = vunpack.c.l.b16 %v4033
        %v4263 = vunpack.c.l.b16 %v4046
        %v4264 = vunpack.c.l.b16 %v4055
        %v4265 = vunpack.c.l.b16 %v4068
        %v4266 = vunpack.c.l.b16 %v4077
        %v4267 = vunpack.c.l.b16 %v4090
        %v4268 = vunpack.c.l.b16 %v4099
        %v4269 = vunpack.c.l.b16 %v4112
        %v4270 = vunpack.c.l.b16 %v4121
        %v4271 = vunpack.c.l.b16 %v4134
        %v4272 = vunpack.c.l.b16 %v4143
        %v4273 = vunpack.c.l.b16 %v4156
        %v4274 = vunpack.c.l.b16 %v4165
        %v4275 = vunpack.c.l.b16 %v4178
        %v4276 = vunpack.c.l.b16 %v4187
        %v4277 = vunpack.c.l.b16 %v4200
        %v4278 = vunpack.c.l.b16 %v4209
        %v4279 = vunpack.c.l.b16 %v4222
        %v4280 = vunpack.c.l.b16 %v4231
        %v4281 = vpack.c.b16 %v4250, %v4249
        %v4282 = vpack.c.b16 %v4252, %v4251
        %v4283 = vpack.c.b16 %v4254, %v4253
        %v4284 = vpack.c.b16 %v4256, %v4255
        %v4285 = vpack.c.b16 %v4258, %v4257
        %v4286 = vpack.c.b16 %v4260, %v4259
        %v4287 = vpack.c.b16 %v4262, %v4261
        %v4288 = vpack.c.b16 %v4264, %v4263
        %v4289 = vpack.c.b16 %v4266, %v4265
        %v4290 = vpack.c.b16 %v4268, %v4267
        %v4291 = vpack.c.b16 %v4270, %v4269
        %v4292 = vpack.c.b16 %v4272, %v4271
        %v4293 = vpack.c.b16 %v4274, %v4273
        %v4294 = vpack.c.b16 %v4276, %v4275
        %v4295 = vpack.c.b16 %v4278, %v4277
        %v4296 = vpack.c.b16 %v4280, %v4279
        %v4329 = vunpack.c.l.b16 %v4233
        %v4330 = vunpack.c.l.b16 %v4234
        %v4331 = vunpack.c.l.b16 %v4235
        %v4332 = vunpack.c.l.b16 %v4236
        %v4333 = vunpack.c.l.b16 %v4237
        %v4334 = vunpack.c.l.b16 %v4238
        %v4335 = vunpack.c.l.b16 %v4239
        %v4336 = vunpack.c.l.b16 %v4240
        %v4337 = vunpack.c.l.b16 %v4241
        %v4338 = vunpack.c.l.b16 %v4242
        %v4339 = vunpack.c.l.b16 %v4243
        %v4340 = vunpack.c.l.b16 %v4244
        %v4341 = vunpack.c.l.b16 %v4245
        %v4342 = vunpack.c.l.b16 %v4246
        %v4343 = vunpack.c.l.b16 %v4247
        %v4344 = vunpack.c.l.b16 %v4248
        %v4345 = vpack.c.b16 %v4330, %v4329
        %v4346 = vpack.c.b16 %v4332, %v4331
        %v4347 = vpack.c.b16 %v4334, %v4333
        %v4348 = vpack.c.b16 %v4336, %v4335
        %v4349 = vpack.c.b16 %v4338, %v4337
        %v4350 = vpack.c.b16 %v4340, %v4339
        %v4351 = vpack.c.b16 %v4342, %v4341
        %v4352 = vpack.c.b16 %v4344, %v4343
        %4361 = vmatpush.bf16.msra.mxu0 %v4352
        %4362 = vmatpush.bf16.msra.mxu0 %v4351
        %4363 = vmatpush.bf16.msra.mxu0 %v4350
        %4364 = vmatpush.bf16.msra.mxu0 %v4349
        %4365 = vmatpush.bf16.msra.mxu0 %v4348
        %4366 = vmatpush.bf16.msra.mxu0 %v4347
        %4367 = vmatpush.bf16.msra.mxu0 %v4346
        %4368 = vmatpush.bf16.msra.mxu0 %v4345
        %4369 = vmatmul.bf16.gmra.mxu0 %v4281
        %v4370 = vpop.f32.mrf.mxu0
        %v4371 = vadd.f32 0.0, %v4370
        %v4372 = vpop.f32.mrf.mxu0
        %v4373 = vadd.f32 0.0, %v4372
        %4374 = vmatmul.bf16.gmra.mxu0 %v4282
        %v4375 = vpop.f32.mrf.mxu0
        %v4376 = vadd.f32 0.0, %v4375
        %v4377 = vpop.f32.mrf.mxu0
        %v4378 = vadd.f32 0.0, %v4377
        %4379 = vmatmul.bf16.gmra.mxu0 %v4283
        %v4380 = vpop.f32.mrf.mxu0
        %v4381 = vadd.f32 0.0, %v4380
        %v4382 = vpop.f32.mrf.mxu0
        %v4383 = vadd.f32 0.0, %v4382
        %4384 = vmatmul.bf16.gmra.mxu0 %v4284
        %v4385 = vpop.f32.mrf.mxu0
        %v4386 = vadd.f32 0.0, %v4385
        %v4387 = vpop.f32.mrf.mxu0
        %v4388 = vadd.f32 0.0, %v4387
        %4389 = vmatmul.bf16.gmra.mxu0 %v4285
        %v4390 = vpop.f32.mrf.mxu0
        %v4391 = vadd.f32 0.0, %v4390
        %v4392 = vpop.f32.mrf.mxu0
        %v4393 = vadd.f32 0.0, %v4392
        %4394 = vmatmul.bf16.gmra.mxu0 %v4286
        %v4395 = vpop.f32.mrf.mxu0
        %v4396 = vadd.f32 0.0, %v4395
        %v4397 = vpop.f32.mrf.mxu0
        %v4398 = vadd.f32 0.0, %v4397
        %4399 = vmatmul.bf16.gmra.mxu0 %v4287
        %v4400 = vpop.f32.mrf.mxu0
        %v4401 = vadd.f32 0.0, %v4400
        %v4402 = vpop.f32.mrf.mxu0
        %v4403 = vadd.f32 0.0, %v4402
        %4404 = vmatmul.bf16.gmra.mxu0 %v4288
        %v4405 = vpop.f32.mrf.mxu0
        %v4406 = vadd.f32 0.0, %v4405
        %v4407 = vpop.f32.mrf.mxu0
        %v4408 = vadd.f32 0.0, %v4407
        %4409 = vmatmul.bf16.gmra.mxu0 %v4289
        %v4410 = vpop.f32.mrf.mxu0
        %v4411 = vadd.f32 0.0, %v4410
        %v4412 = vpop.f32.mrf.mxu0
        %v4413 = vadd.f32 0.0, %v4412
        %4414 = vmatmul.bf16.gmra.mxu0 %v4290
        %v4415 = vpop.f32.mrf.mxu0
        %v4416 = vadd.f32 0.0, %v4415
        %v4417 = vpop.f32.mrf.mxu0
        %v4418 = vadd.f32 0.0, %v4417
        %4419 = vmatmul.bf16.gmra.mxu0 %v4291
        %v4420 = vpop.f32.mrf.mxu0
        %v4421 = vadd.f32 0.0, %v4420
        %v4422 = vpop.f32.mrf.mxu0
        %v4423 = vadd.f32 0.0, %v4422
        %4424 = vmatmul.bf16.gmra.mxu0 %v4292
        %v4425 = vpop.f32.mrf.mxu0
        %v4426 = vadd.f32 0.0, %v4425
        %v4427 = vpop.f32.mrf.mxu0
        %v4428 = vadd.f32 0.0, %v4427
        %4429 = vmatmul.bf16.gmra.mxu0 %v4293
        %v4430 = vpop.f32.mrf.mxu0
        %v4431 = vadd.f32 0.0, %v4430
        %v4432 = vpop.f32.mrf.mxu0
        %v4433 = vadd.f32 0.0, %v4432
        %4434 = vmatmul.bf16.gmra.mxu0 %v4294
        %v4435 = vpop.f32.mrf.mxu0
        %v4436 = vadd.f32 0.0, %v4435
        %v4437 = vpop.f32.mrf.mxu0
        %v4438 = vadd.f32 0.0, %v4437
        %4439 = vmatmul.bf16.gmra.mxu0 %v4295
        %v4440 = vpop.f32.mrf.mxu0
        %v4441 = vadd.f32 0.0, %v4440
        %v4442 = vpop.f32.mrf.mxu0
        %v4443 = vadd.f32 0.0, %v4442
        %4444 = vmatmul.bf16.gmra.mxu0 %v4296
        %v4445 = vpop.f32.mrf.mxu0
        %v4446 = vadd.f32 0.0, %v4445
        %v4447 = vpop.f32.mrf.mxu0
        %v4448 = vadd.f32 0.0, %v4447
        %4449 = vdwg.mxu0
        %v4450 = vadd.f32 %v3800, %v4371
        %v4451 = vadd.f32 %v3801, %v4373
        %v4452 = vadd.f32 %v3802, %v4376
        %v4453 = vadd.f32 %v3803, %v4378
        %v4454 = vadd.f32 %v3804, %v4381
        %v4455 = vadd.f32 %v3805, %v4383
        %v4456 = vadd.f32 %v3806, %v4386
        %v4457 = vadd.f32 %v3807, %v4388
        %v4458 = vadd.f32 %v3808, %v4391
        %v4459 = vadd.f32 %v3809, %v4393
        %v4460 = vadd.f32 %v3810, %v4396
        %v4461 = vadd.f32 %v3811, %v4398
        %v4462 = vadd.f32 %v3812, %v4401
        %v4463 = vadd.f32 %v3813, %v4403
        %v4464 = vadd.f32 %v3814, %v4406
        %v4465 = vadd.f32 %v3815, %v4408
        %v4466 = vadd.f32 %v3816, %v4411
        %v4467 = vadd.f32 %v3817, %v4413
        %v4468 = vadd.f32 %v3818, %v4416
        %v4469 = vadd.f32 %v3819, %v4418
        %v4470 = vadd.f32 %v3820, %v4421
        %v4471 = vadd.f32 %v3821, %v4423
        %v4472 = vadd.f32 %v3822, %v4426
        %v4473 = vadd.f32 %v3823, %v4428
        %v4474 = vadd.f32 %v3824, %v4431
        %v4475 = vadd.f32 %v3825, %v4433
        %v4476 = vadd.f32 %v3826, %v4436
        %v4477 = vadd.f32 %v3827, %v4438
        %v4478 = vadd.f32 %v3828, %v4441
        %v4479 = vadd.f32 %v3829, %v4443
        %v4480 = vadd.f32 %v3830, %v4446
        %v4481 = vadd.f32 %v3831, %v4448
        %s4482 = scalar_lea.vmem [#allocation6], 448
        %v4483 = vld [vmem:[%s4482] sm:$0xf]
        %v4484 = vld [vmem:[%s4482 + $0x4] sm:$0xf]
        %v4485 = vld [vmem:[%s4482 + $0x8] sm:$0xf]
        %v4486 = vld [vmem:[%s4482 + $0xc] sm:$0xf]
        %v4487 = vld [vmem:[%s4482 + $0x10] sm:$0xf]
        %v4488 = vld [vmem:[%s4482 + $0x14] sm:$0xf]
        %v4489 = vld [vmem:[%s4482 + $0x18] sm:$0xf]
        %v4490 = vld [vmem:[%s4482 + $0x1c] sm:$0xf]
        %v4491 = vld [vmem:[%s4482 + $0x20] sm:$0xf]
        %v4492 = vld [vmem:[%s4482 + $0x24] sm:$0xf]
        %v4493 = vld [vmem:[%s4482 + $0x28] sm:$0xf]
        %v4494 = vld [vmem:[%s4482 + $0x2c] sm:$0xf]
        %v4495 = vld [vmem:[%s4482 + $0x30] sm:$0xf]
        %v4496 = vld [vmem:[%s4482 + $0x34] sm:$0xf]
        %v4497 = vld [vmem:[%s4482 + $0x38] sm:$0xf]
        %v4498 = vld [vmem:[%s4482 + $0x3c] sm:$0xf]
        %v4531 = vunpack.c.l.b16 %v3833
        %v4532 = vunpack.c.l.b16 %v3834
        %v4533 = vunpack.c.l.b16 %v3836
        %v4534 = vunpack.c.l.b16 %v3837
        %v4535 = vunpack.c.l.b16 %v3839
        %v4536 = vunpack.c.l.b16 %v3840
        %v4537 = vunpack.c.l.b16 %v3842
        %v4538 = vunpack.c.l.b16 %v3843
        %v4539 = vunpack.c.l.b16 %v3845
        %v4540 = vunpack.c.l.b16 %v3846
        %v4541 = vunpack.c.l.b16 %v3848
        %v4542 = vunpack.c.l.b16 %v3849
        %v4543 = vunpack.c.l.b16 %v3851
        %v4544 = vunpack.c.l.b16 %v3852
        %v4545 = vunpack.c.l.b16 %v3854
        %v4546 = vunpack.c.l.b16 %v3855
        %v4547 = vunpack.c.l.b16 %v3857
        %v4548 = vunpack.c.l.b16 %v3858
        %v4549 = vunpack.c.l.b16 %v3860
        %v4550 = vunpack.c.l.b16 %v3861
        %v4551 = vunpack.c.l.b16 %v3863
        %v4552 = vunpack.c.l.b16 %v3864
        %v4553 = vunpack.c.l.b16 %v3866
        %v4554 = vunpack.c.l.b16 %v3867
        %v4555 = vunpack.c.l.b16 %v3869
        %v4556 = vunpack.c.l.b16 %v3870
        %v4557 = vunpack.c.l.b16 %v3872
        %v4558 = vunpack.c.l.b16 %v3873
        %v4559 = vunpack.c.l.b16 %v3875
        %v4560 = vunpack.c.l.b16 %v3876
        %v4561 = vunpack.c.l.b16 %v3878
        %v4562 = vunpack.c.l.b16 %v3879
        %v4563 = vpack.c.b16 %v4532, %v4531
        %v4564 = vpack.c.b16 %v4534, %v4533
        %v4565 = vpack.c.b16 %v4536, %v4535
        %v4566 = vpack.c.b16 %v4538, %v4537
        %v4567 = vpack.c.b16 %v4540, %v4539
        %v4568 = vpack.c.b16 %v4542, %v4541
        %v4569 = vpack.c.b16 %v4544, %v4543
        %v4570 = vpack.c.b16 %v4546, %v4545
        %v4571 = vpack.c.b16 %v4548, %v4547
        %v4572 = vpack.c.b16 %v4550, %v4549
        %v4573 = vpack.c.b16 %v4552, %v4551
        %v4574 = vpack.c.b16 %v4554, %v4553
        %v4575 = vpack.c.b16 %v4556, %v4555
        %v4576 = vpack.c.b16 %v4558, %v4557
        %v4577 = vpack.c.b16 %v4560, %v4559
        %v4578 = vpack.c.b16 %v4562, %v4561
        %v4611 = vunpack.c.l.b16 %v4483
        %v4612 = vunpack.c.l.b16 %v4484
        %v4613 = vunpack.c.l.b16 %v4485
        %v4614 = vunpack.c.l.b16 %v4486
        %v4615 = vunpack.c.l.b16 %v4487
        %v4616 = vunpack.c.l.b16 %v4488
        %v4617 = vunpack.c.l.b16 %v4489
        %v4618 = vunpack.c.l.b16 %v4490
        %v4619 = vunpack.c.l.b16 %v4491
        %v4620 = vunpack.c.l.b16 %v4492
        %v4621 = vunpack.c.l.b16 %v4493
        %v4622 = vunpack.c.l.b16 %v4494
        %v4623 = vunpack.c.l.b16 %v4495
        %v4624 = vunpack.c.l.b16 %v4496
        %v4625 = vunpack.c.l.b16 %v4497
        %v4626 = vunpack.c.l.b16 %v4498
        %v4627 = vpack.c.b16 %v4612, %v4611
        %v4628 = vpack.c.b16 %v4614, %v4613
        %v4629 = vpack.c.b16 %v4616, %v4615
        %v4630 = vpack.c.b16 %v4618, %v4617
        %v4631 = vpack.c.b16 %v4620, %v4619
        %v4632 = vpack.c.b16 %v4622, %v4621
        %v4633 = vpack.c.b16 %v4624, %v4623
        %v4634 = vpack.c.b16 %v4626, %v4625
        %4643 = vmatpush.bf16.msra.mxu0 %v4634
        %4644 = vmatpush.bf16.msra.mxu0 %v4633
        %4645 = vmatpush.bf16.msra.mxu0 %v4632
        %4646 = vmatpush.bf16.msra.mxu0 %v4631
        %4647 = vmatpush.bf16.msra.mxu0 %v4630
        %4648 = vmatpush.bf16.msra.mxu0 %v4629
        %4649 = vmatpush.bf16.msra.mxu0 %v4628
        %4650 = vmatpush.bf16.msra.mxu0 %v4627
        %4651 = vmatmul.bf16.gmra.mxu0 %v4563
        %v4652 = vpop.f32.mrf.mxu0
        %v4653 = vadd.f32 0.0, %v4652
        %v4654 = vpop.f32.mrf.mxu0
        %v4655 = vadd.f32 0.0, %v4654
        %4656 = vmatmul.bf16.gmra.mxu0 %v4564
        %v4657 = vpop.f32.mrf.mxu0
        %v4658 = vadd.f32 0.0, %v4657
        %v4659 = vpop.f32.mrf.mxu0
        %v4660 = vadd.f32 0.0, %v4659
        %4661 = vmatmul.bf16.gmra.mxu0 %v4565
        %v4662 = vpop.f32.mrf.mxu0
        %v4663 = vadd.f32 0.0, %v4662
        %v4664 = vpop.f32.mrf.mxu0
        %v4665 = vadd.f32 0.0, %v4664
        %4666 = vmatmul.bf16.gmra.mxu0 %v4566
        %v4667 = vpop.f32.mrf.mxu0
        %v4668 = vadd.f32 0.0, %v4667
        %v4669 = vpop.f32.mrf.mxu0
        %v4670 = vadd.f32 0.0, %v4669
        %4671 = vmatmul.bf16.gmra.mxu0 %v4567
        %v4672 = vpop.f32.mrf.mxu0
        %v4673 = vadd.f32 0.0, %v4672
        %v4674 = vpop.f32.mrf.mxu0
        %v4675 = vadd.f32 0.0, %v4674
        %4676 = vmatmul.bf16.gmra.mxu0 %v4568
        %v4677 = vpop.f32.mrf.mxu0
        %v4678 = vadd.f32 0.0, %v4677
        %v4679 = vpop.f32.mrf.mxu0
        %v4680 = vadd.f32 0.0, %v4679
        %4681 = vmatmul.bf16.gmra.mxu0 %v4569
        %v4682 = vpop.f32.mrf.mxu0
        %v4683 = vadd.f32 0.0, %v4682
        %v4684 = vpop.f32.mrf.mxu0
        %v4685 = vadd.f32 0.0, %v4684
        %4686 = vmatmul.bf16.gmra.mxu0 %v4570
        %v4687 = vpop.f32.mrf.mxu0
        %v4688 = vadd.f32 0.0, %v4687
        %v4689 = vpop.f32.mrf.mxu0
        %v4690 = vadd.f32 0.0, %v4689
        %4691 = vmatmul.bf16.gmra.mxu0 %v4571
        %v4692 = vpop.f32.mrf.mxu0
        %v4693 = vadd.f32 0.0, %v4692
        %v4694 = vpop.f32.mrf.mxu0
        %v4695 = vadd.f32 0.0, %v4694
        %4696 = vmatmul.bf16.gmra.mxu0 %v4572
        %v4697 = vpop.f32.mrf.mxu0
        %v4698 = vadd.f32 0.0, %v4697
        %v4699 = vpop.f32.mrf.mxu0
        %v4700 = vadd.f32 0.0, %v4699
        %4701 = vmatmul.bf16.gmra.mxu0 %v4573
        %v4702 = vpop.f32.mrf.mxu0
        %v4703 = vadd.f32 0.0, %v4702
        %v4704 = vpop.f32.mrf.mxu0
        %v4705 = vadd.f32 0.0, %v4704
        %4706 = vmatmul.bf16.gmra.mxu0 %v4574
        %v4707 = vpop.f32.mrf.mxu0
        %v4708 = vadd.f32 0.0, %v4707
        %v4709 = vpop.f32.mrf.mxu0
        %v4710 = vadd.f32 0.0, %v4709
        %4711 = vmatmul.bf16.gmra.mxu0 %v4575
        %v4712 = vpop.f32.mrf.mxu0
        %v4713 = vadd.f32 0.0, %v4712
        %v4714 = vpop.f32.mrf.mxu0
        %v4715 = vadd.f32 0.0, %v4714
        %4716 = vmatmul.bf16.gmra.mxu0 %v4576
        %v4717 = vpop.f32.mrf.mxu0
        %v4718 = vadd.f32 0.0, %v4717
        %v4719 = vpop.f32.mrf.mxu0
        %v4720 = vadd.f32 0.0, %v4719
        %4721 = vmatmul.bf16.gmra.mxu0 %v4577
        %v4722 = vpop.f32.mrf.mxu0
        %v4723 = vadd.f32 0.0, %v4722
        %v4724 = vpop.f32.mrf.mxu0
        %v4725 = vadd.f32 0.0, %v4724
        %4726 = vmatmul.bf16.gmra.mxu0 %v4578
        %v4727 = vpop.f32.mrf.mxu0
        %v4728 = vadd.f32 0.0, %v4727
        %v4729 = vpop.f32.mrf.mxu0
        %v4730 = vadd.f32 0.0, %v4729
        %4731 = vdwg.mxu0
        %v4732 = vadd.f32 %v4450, %v4653
        %v4733 = vadd.f32 %v4451, %v4655
        %v4734 = vadd.f32 %v4452, %v4658
        %v4735 = vadd.f32 %v4453, %v4660
        %v4736 = vadd.f32 %v4454, %v4663
        %v4737 = vadd.f32 %v4455, %v4665
        %v4738 = vadd.f32 %v4456, %v4668
        %v4739 = vadd.f32 %v4457, %v4670
        %v4740 = vadd.f32 %v4458, %v4673
        %v4741 = vadd.f32 %v4459, %v4675
        %v4742 = vadd.f32 %v4460, %v4678
        %v4743 = vadd.f32 %v4461, %v4680
        %v4744 = vadd.f32 %v4462, %v4683
        %v4745 = vadd.f32 %v4463, %v4685
        %v4746 = vadd.f32 %v4464, %v4688
        %v4747 = vadd.f32 %v4465, %v4690
        %v4748 = vadd.f32 %v4466, %v4693
        %v4749 = vadd.f32 %v4467, %v4695
        %v4750 = vadd.f32 %v4468, %v4698
        %v4751 = vadd.f32 %v4469, %v4700
        %v4752 = vadd.f32 %v4470, %v4703
        %v4753 = vadd.f32 %v4471, %v4705
        %v4754 = vadd.f32 %v4472, %v4708
        %v4755 = vadd.f32 %v4473, %v4710
        %v4756 = vadd.f32 %v4474, %v4713
        %v4757 = vadd.f32 %v4475, %v4715
        %v4758 = vadd.f32 %v4476, %v4718
        %v4759 = vadd.f32 %v4477, %v4720
        %v4760 = vadd.f32 %v4478, %v4723
        %v4761 = vadd.f32 %v4479, %v4725
        %v4762 = vadd.f32 %v4480, %v4728
        %v4763 = vadd.f32 %v4481, %v4730
        %v4764 = vld [vmem:[%s643 + $0x4] sm:$0xf]
        %v4765 = vld [vmem:[%s643 + $0x8] sm:$0xf]
        %v4766 = vld [vmem:[%s643 + $0xc] sm:$0x1]
        %v4767 = vld [vmem:[%s643 + $0x14] sm:$0xf]
        %v4768 = vld [vmem:[%s643 + $0x18] sm:$0xf]
        %v4769 = vld [vmem:[%s643 + $0x1c] sm:$0x1]
        %v4770 = vld [vmem:[%s643 + $0x24] sm:$0xf]
        %v4771 = vld [vmem:[%s643 + $0x28] sm:$0xf]
        %v4772 = vld [vmem:[%s643 + $0x2c] sm:$0x1]
        %v4773 = vld [vmem:[%s643 + $0x34] sm:$0xf]
        %v4774 = vld [vmem:[%s643 + $0x38] sm:$0xf]
        %v4775 = vld [vmem:[%s643 + $0x3c] sm:$0x1]
        %v4776 = vld [vmem:[%s643 + $0x44] sm:$0xf]
        %v4777 = vld [vmem:[%s643 + $0x48] sm:$0xf]
        %v4778 = vld [vmem:[%s643 + $0x4c] sm:$0x1]
        %v4779 = vld [vmem:[%s643 + $0x54] sm:$0xf]
        %v4780 = vld [vmem:[%s643 + $0x58] sm:$0xf]
        %v4781 = vld [vmem:[%s643 + $0x5c] sm:$0x1]
        %v4782 = vld [vmem:[%s643 + $0x64] sm:$0xf]
        %v4783 = vld [vmem:[%s643 + $0x68] sm:$0xf]
        %v4784 = vld [vmem:[%s643 + $0x6c] sm:$0x1]
        %v4785 = vld [vmem:[%s643 + $0x74] sm:$0xf]
        %v4786 = vld [vmem:[%s643 + $0x78] sm:$0xf]
        %v4787 = vld [vmem:[%s643 + $0x7c] sm:$0x1]
        %v4788 = vld [vmem:[%s643 + $0x84] sm:$0xf]
        %v4789 = vld [vmem:[%s643 + $0x88] sm:$0xf]
        %v4790 = vld [vmem:[%s643 + $0x8c] sm:$0x1]
        %v4791 = vld [vmem:[%s643 + $0x94] sm:$0xf]
        %v4792 = vld [vmem:[%s643 + $0x98] sm:$0xf]
        %v4793 = vld [vmem:[%s643 + $0x9c] sm:$0x1]
        %v4794 = vld [vmem:[%s643 + $0xa4] sm:$0xf]
        %v4795 = vld [vmem:[%s643 + $0xa8] sm:$0xf]
        %v4796 = vld [vmem:[%s643 + $0xac] sm:$0x1]
        %v4797 = vld [vmem:[%s643 + $0xb4] sm:$0xf]
        %v4798 = vld [vmem:[%s643 + $0xb8] sm:$0xf]
        %v4799 = vld [vmem:[%s643 + $0xbc] sm:$0x1]
        %v4800 = vld [vmem:[%s643 + $0xc4] sm:$0xf]
        %v4801 = vld [vmem:[%s643 + $0xc8] sm:$0xf]
        %v4802 = vld [vmem:[%s643 + $0xcc] sm:$0x1]
        %v4803 = vld [vmem:[%s643 + $0xd4] sm:$0xf]
        %v4804 = vld [vmem:[%s643 + $0xd8] sm:$0xf]
        %v4805 = vld [vmem:[%s643 + $0xdc] sm:$0x1]
        %v4806 = vld [vmem:[%s643 + $0xe4] sm:$0xf]
        %v4807 = vld [vmem:[%s643 + $0xe8] sm:$0xf]
        %v4808 = vld [vmem:[%s643 + $0xec] sm:$0x1]
        %v4809 = vld [vmem:[%s643 + $0xf4] sm:$0xf]
        %v4810 = vld [vmem:[%s643 + $0xf8] sm:$0xf]
        %v4811 = vld [vmem:[%s643 + $0xfc] sm:$0x1]
        %v4813 = vshrl.u32 %v4764, 16
        %v4815 = vrot.slane %v4813, 4
        %v4816 = vshll.u32 %v4764, 16
        %v4818 = vrot.slane %v4816, 5
        %v4819 = vor.u32 %v4815, %v4818
        %v4820 = vrot.slane %v4819, 4
        %v4822 = vshll.u32 %v4765, 16
        %v4824 = vrot.slane %v4822, 5
        %v4825 = vsel %vm1583, %v4820, %v4824
        %v4826 = vshrl.u32 %v4765, 16
        %v4828 = vrot.slane %v4826, 4
        %v4829 = vor.u32 %v4828, %v4824
        %v4830 = vrot.slane %v4829, 4
        %v4832 = vshll.u32 %v4766, 16
        %v4834 = vrot.slane %v4832, 5
        %v4835 = vsel %vm1583, %v4830, %v4834
        %v4837 = vshrl.u32 %v4767, 16
        %v4839 = vrot.slane %v4837, 4
        %v4840 = vshll.u32 %v4767, 16
        %v4842 = vrot.slane %v4840, 5
        %v4843 = vor.u32 %v4839, %v4842
        %v4844 = vrot.slane %v4843, 4
        %v4846 = vshll.u32 %v4768, 16
        %v4848 = vrot.slane %v4846, 5
        %v4849 = vsel %vm1583, %v4844, %v4848
        %v4850 = vshrl.u32 %v4768, 16
        %v4852 = vrot.slane %v4850, 4
        %v4853 = vor.u32 %v4852, %v4848
        %v4854 = vrot.slane %v4853, 4
        %v4856 = vshll.u32 %v4769, 16
        %v4858 = vrot.slane %v4856, 5
        %v4859 = vsel %vm1583, %v4854, %v4858
        %v4861 = vshrl.u32 %v4770, 16
        %v4863 = vrot.slane %v4861, 4
        %v4864 = vshll.u32 %v4770, 16
        %v4866 = vrot.slane %v4864, 5
        %v4867 = vor.u32 %v4863, %v4866
        %v4868 = vrot.slane %v4867, 4
        %v4870 = vshll.u32 %v4771, 16
        %v4872 = vrot.slane %v4870, 5
        %v4873 = vsel %vm1583, %v4868, %v4872
        %v4874 = vshrl.u32 %v4771, 16
        %v4876 = vrot.slane %v4874, 4
        %v4877 = vor.u32 %v4876, %v4872
        %v4878 = vrot.slane %v4877, 4
        %v4880 = vshll.u32 %v4772, 16
        %v4882 = vrot.slane %v4880, 5
        %v4883 = vsel %vm1583, %v4878, %v4882
        %v4885 = vshrl.u32 %v4773, 16
        %v4887 = vrot.slane %v4885, 4
        %v4888 = vshll.u32 %v4773, 16
        %v4890 = vrot.slane %v4888, 5
        %v4891 = vor.u32 %v4887, %v4890
        %v4892 = vrot.slane %v4891, 4
        %v4894 = vshll.u32 %v4774, 16
        %v4896 = vrot.slane %v4894, 5
        %v4897 = vsel %vm1583, %v4892, %v4896
        %v4898 = vshrl.u32 %v4774, 16
        %v4900 = vrot.slane %v4898, 4
        %v4901 = vor.u32 %v4900, %v4896
        %v4902 = vrot.slane %v4901, 4
        %v4904 = vshll.u32 %v4775, 16
        %v4906 = vrot.slane %v4904, 5
        %v4907 = vsel %vm1583, %v4902, %v4906
        %v4909 = vshrl.u32 %v4776, 16
        %v4911 = vrot.slane %v4909, 4
        %v4912 = vshll.u32 %v4776, 16
        %v4914 = vrot.slane %v4912, 5
        %v4915 = vor.u32 %v4911, %v4914
        %v4916 = vrot.slane %v4915, 4
        %v4918 = vshll.u32 %v4777, 16
        %v4920 = vrot.slane %v4918, 5
        %v4921 = vsel %vm1583, %v4916, %v4920
        %v4922 = vshrl.u32 %v4777, 16
        %v4924 = vrot.slane %v4922, 4
        %v4925 = vor.u32 %v4924, %v4920
        %v4926 = vrot.slane %v4925, 4
        %v4928 = vshll.u32 %v4778, 16
        %v4930 = vrot.slane %v4928, 5
        %v4931 = vsel %vm1583, %v4926, %v4930
        %v4933 = vshrl.u32 %v4779, 16
        %v4935 = vrot.slane %v4933, 4
        %v4936 = vshll.u32 %v4779, 16
        %v4938 = vrot.slane %v4936, 5
        %v4939 = vor.u32 %v4935, %v4938
        %v4940 = vrot.slane %v4939, 4
        %v4942 = vshll.u32 %v4780, 16
        %v4944 = vrot.slane %v4942, 5
        %v4945 = vsel %vm1583, %v4940, %v4944
        %v4946 = vshrl.u32 %v4780, 16
        %v4948 = vrot.slane %v4946, 4
        %v4949 = vor.u32 %v4948, %v4944
        %v4950 = vrot.slane %v4949, 4
        %v4952 = vshll.u32 %v4781, 16
        %v4954 = vrot.slane %v4952, 5
        %v4955 = vsel %vm1583, %v4950, %v4954
        %v4957 = vshrl.u32 %v4782, 16
        %v4959 = vrot.slane %v4957, 4
        %v4960 = vshll.u32 %v4782, 16
        %v4962 = vrot.slane %v4960, 5
        %v4963 = vor.u32 %v4959, %v4962
        %v4964 = vrot.slane %v4963, 4
        %v4966 = vshll.u32 %v4783, 16
        %v4968 = vrot.slane %v4966, 5
        %v4969 = vsel %vm1583, %v4964, %v4968
        %v4970 = vshrl.u32 %v4783, 16
        %v4972 = vrot.slane %v4970, 4
        %v4973 = vor.u32 %v4972, %v4968
        %v4974 = vrot.slane %v4973, 4
        %v4976 = vshll.u32 %v4784, 16
        %v4978 = vrot.slane %v4976, 5
        %v4979 = vsel %vm1583, %v4974, %v4978
        %v4981 = vshrl.u32 %v4785, 16
        %v4983 = vrot.slane %v4981, 4
        %v4984 = vshll.u32 %v4785, 16
        %v4986 = vrot.slane %v4984, 5
        %v4987 = vor.u32 %v4983, %v4986
        %v4988 = vrot.slane %v4987, 4
        %v4990 = vshll.u32 %v4786, 16
        %v4992 = vrot.slane %v4990, 5
        %v4993 = vsel %vm1583, %v4988, %v4992
        %v4994 = vshrl.u32 %v4786, 16
        %v4996 = vrot.slane %v4994, 4
        %v4997 = vor.u32 %v4996, %v4992
        %v4998 = vrot.slane %v4997, 4
        %v5000 = vshll.u32 %v4787, 16
        %v5002 = vrot.slane %v5000, 5
        %v5003 = vsel %vm1583, %v4998, %v5002
        %v5005 = vshrl.u32 %v4788, 16
        %v5007 = vrot.slane %v5005, 4
        %v5008 = vshll.u32 %v4788, 16
        %v5010 = vrot.slane %v5008, 5
        %v5011 = vor.u32 %v5007, %v5010
        %v5012 = vrot.slane %v5011, 4
        %v5014 = vshll.u32 %v4789, 16
        %v5016 = vrot.slane %v5014, 5
        %v5017 = vsel %vm1583, %v5012, %v5016
        %v5018 = vshrl.u32 %v4789, 16
        %v5020 = vrot.slane %v5018, 4
        %v5021 = vor.u32 %v5020, %v5016
        %v5022 = vrot.slane %v5021, 4
        %v5024 = vshll.u32 %v4790, 16
        %v5026 = vrot.slane %v5024, 5
        %v5027 = vsel %vm1583, %v5022, %v5026
        %v5029 = vshrl.u32 %v4791, 16
        %v5031 = vrot.slane %v5029, 4
        %v5032 = vshll.u32 %v4791, 16
        %v5034 = vrot.slane %v5032, 5
        %v5035 = vor.u32 %v5031, %v5034
        %v5036 = vrot.slane %v5035, 4
        %v5038 = vshll.u32 %v4792, 16
        %v5040 = vrot.slane %v5038, 5
        %v5041 = vsel %vm1583, %v5036, %v5040
        %v5042 = vshrl.u32 %v4792, 16
        %v5044 = vrot.slane %v5042, 4
        %v5045 = vor.u32 %v5044, %v5040
        %v5046 = vrot.slane %v5045, 4
        %v5048 = vshll.u32 %v4793, 16
        %v5050 = vrot.slane %v5048, 5
        %v5051 = vsel %vm1583, %v5046, %v5050
        %v5053 = vshrl.u32 %v4794, 16
        %v5055 = vrot.slane %v5053, 4
        %v5056 = vshll.u32 %v4794, 16
        %v5058 = vrot.slane %v5056, 5
        %v5059 = vor.u32 %v5055, %v5058
        %v5060 = vrot.slane %v5059, 4
        %v5062 = vshll.u32 %v4795, 16
        %v5064 = vrot.slane %v5062, 5
        %v5065 = vsel %vm1583, %v5060, %v5064
        %v5066 = vshrl.u32 %v4795, 16
        %v5068 = vrot.slane %v5066, 4
        %v5069 = vor.u32 %v5068, %v5064
        %v5070 = vrot.slane %v5069, 4
        %v5072 = vshll.u32 %v4796, 16
        %v5074 = vrot.slane %v5072, 5
        %v5075 = vsel %vm1583, %v5070, %v5074
        %v5077 = vshrl.u32 %v4797, 16
        %v5079 = vrot.slane %v5077, 4
        %v5080 = vshll.u32 %v4797, 16
        %v5082 = vrot.slane %v5080, 5
        %v5083 = vor.u32 %v5079, %v5082
        %v5084 = vrot.slane %v5083, 4
        %v5086 = vshll.u32 %v4798, 16
        %v5088 = vrot.slane %v5086, 5
        %v5089 = vsel %vm1583, %v5084, %v5088
        %v5090 = vshrl.u32 %v4798, 16
        %v5092 = vrot.slane %v5090, 4
        %v5093 = vor.u32 %v5092, %v5088
        %v5094 = vrot.slane %v5093, 4
        %v5096 = vshll.u32 %v4799, 16
        %v5098 = vrot.slane %v5096, 5
        %v5099 = vsel %vm1583, %v5094, %v5098
        %v5101 = vshrl.u32 %v4800, 16
        %v5103 = vrot.slane %v5101, 4
        %v5104 = vshll.u32 %v4800, 16
        %v5106 = vrot.slane %v5104, 5
        %v5107 = vor.u32 %v5103, %v5106
        %v5108 = vrot.slane %v5107, 4
        %v5110 = vshll.u32 %v4801, 16
        %v5112 = vrot.slane %v5110, 5
        %v5113 = vsel %vm1583, %v5108, %v5112
        %v5114 = vshrl.u32 %v4801, 16
        %v5116 = vrot.slane %v5114, 4
        %v5117 = vor.u32 %v5116, %v5112
        %v5118 = vrot.slane %v5117, 4
        %v5120 = vshll.u32 %v4802, 16
        %v5122 = vrot.slane %v5120, 5
        %v5123 = vsel %vm1583, %v5118, %v5122
        %v5125 = vshrl.u32 %v4803, 16
        %v5127 = vrot.slane %v5125, 4
        %v5128 = vshll.u32 %v4803, 16
        %v5130 = vrot.slane %v5128, 5
        %v5131 = vor.u32 %v5127, %v5130
        %v5132 = vrot.slane %v5131, 4
        %v5134 = vshll.u32 %v4804, 16
        %v5136 = vrot.slane %v5134, 5
        %v5137 = vsel %vm1583, %v5132, %v5136
        %v5138 = vshrl.u32 %v4804, 16
        %v5140 = vrot.slane %v5138, 4
        %v5141 = vor.u32 %v5140, %v5136
        %v5142 = vrot.slane %v5141, 4
        %v5144 = vshll.u32 %v4805, 16
        %v5146 = vrot.slane %v5144, 5
        %v5147 = vsel %vm1583, %v5142, %v5146
        %v5149 = vshrl.u32 %v4806, 16
        %v5151 = vrot.slane %v5149, 4
        %v5152 = vshll.u32 %v4806, 16
        %v5154 = vrot.slane %v5152, 5
        %v5155 = vor.u32 %v5151, %v5154
        %v5156 = vrot.slane %v5155, 4
        %v5158 = vshll.u32 %v4807, 16
        %v5160 = vrot.slane %v5158, 5
        %v5161 = vsel %vm1583, %v5156, %v5160
        %v5162 = vshrl.u32 %v4807, 16
        %v5164 = vrot.slane %v5162, 4
        %v5165 = vor.u32 %v5164, %v5160
        %v5166 = vrot.slane %v5165, 4
        %v5168 = vshll.u32 %v4808, 16
        %v5170 = vrot.slane %v5168, 5
        %v5171 = vsel %vm1583, %v5166, %v5170
        %v5173 = vshrl.u32 %v4809, 16
        %v5175 = vrot.slane %v5173, 4
        %v5176 = vshll.u32 %v4809, 16
        %v5178 = vrot.slane %v5176, 5
        %v5179 = vor.u32 %v5175, %v5178
        %v5180 = vrot.slane %v5179, 4
        %v5182 = vshll.u32 %v4810, 16
        %v5184 = vrot.slane %v5182, 5
        %v5185 = vsel %vm1583, %v5180, %v5184
        %v5186 = vshrl.u32 %v4810, 16
        %v5188 = vrot.slane %v5186, 4
        %v5189 = vor.u32 %v5188, %v5184
        %v5190 = vrot.slane %v5189, 4
        %v5192 = vshll.u32 %v4811, 16
        %v5194 = vrot.slane %v5192, 5
        %v5195 = vsel %vm1583, %v5190, %v5194
        %s5196 = scalar_lea.vmem [#allocation6], 512
        %v5197 = vld [vmem:[%s5196] sm:$0xf]
        %v5198 = vld [vmem:[%s5196 + $0x4] sm:$0xf]
        %v5199 = vld [vmem:[%s5196 + $0x8] sm:$0xf]
        %v5200 = vld [vmem:[%s5196 + $0xc] sm:$0xf]
        %v5201 = vld [vmem:[%s5196 + $0x10] sm:$0xf]
        %v5202 = vld [vmem:[%s5196 + $0x14] sm:$0xf]
        %v5203 = vld [vmem:[%s5196 + $0x18] sm:$0xf]
        %v5204 = vld [vmem:[%s5196 + $0x1c] sm:$0xf]
        %v5205 = vld [vmem:[%s5196 + $0x20] sm:$0xf]
        %v5206 = vld [vmem:[%s5196 + $0x24] sm:$0xf]
        %v5207 = vld [vmem:[%s5196 + $0x28] sm:$0xf]
        %v5208 = vld [vmem:[%s5196 + $0x2c] sm:$0xf]
        %v5209 = vld [vmem:[%s5196 + $0x30] sm:$0xf]
        %v5210 = vld [vmem:[%s5196 + $0x34] sm:$0xf]
        %v5211 = vld [vmem:[%s5196 + $0x38] sm:$0xf]
        %v5212 = vld [vmem:[%s5196 + $0x3c] sm:$0xf]
        %v5213 = vunpack.c.l.b16 %v4825
        %v5214 = vunpack.c.l.b16 %v4835
        %v5215 = vunpack.c.l.b16 %v4849
        %v5216 = vunpack.c.l.b16 %v4859
        %v5217 = vunpack.c.l.b16 %v4873
        %v5218 = vunpack.c.l.b16 %v4883
        %v5219 = vunpack.c.l.b16 %v4897
        %v5220 = vunpack.c.l.b16 %v4907
        %v5221 = vunpack.c.l.b16 %v4921
        %v5222 = vunpack.c.l.b16 %v4931
        %v5223 = vunpack.c.l.b16 %v4945
        %v5224 = vunpack.c.l.b16 %v4955
        %v5225 = vunpack.c.l.b16 %v4969
        %v5226 = vunpack.c.l.b16 %v4979
        %v5227 = vunpack.c.l.b16 %v4993
        %v5228 = vunpack.c.l.b16 %v5003
        %v5229 = vunpack.c.l.b16 %v5017
        %v5230 = vunpack.c.l.b16 %v5027
        %v5231 = vunpack.c.l.b16 %v5041
        %v5232 = vunpack.c.l.b16 %v5051
        %v5233 = vunpack.c.l.b16 %v5065
        %v5234 = vunpack.c.l.b16 %v5075
        %v5235 = vunpack.c.l.b16 %v5089
        %v5236 = vunpack.c.l.b16 %v5099
        %v5237 = vunpack.c.l.b16 %v5113
        %v5238 = vunpack.c.l.b16 %v5123
        %v5239 = vunpack.c.l.b16 %v5137
        %v5240 = vunpack.c.l.b16 %v5147
        %v5241 = vunpack.c.l.b16 %v5161
        %v5242 = vunpack.c.l.b16 %v5171
        %v5243 = vunpack.c.l.b16 %v5185
        %v5244 = vunpack.c.l.b16 %v5195
        %v5245 = vpack.c.b16 %v5214, %v5213
        %v5246 = vpack.c.b16 %v5216, %v5215
        %v5247 = vpack.c.b16 %v5218, %v5217
        %v5248 = vpack.c.b16 %v5220, %v5219
        %v5249 = vpack.c.b16 %v5222, %v5221
        %v5250 = vpack.c.b16 %v5224, %v5223
        %v5251 = vpack.c.b16 %v5226, %v5225
        %v5252 = vpack.c.b16 %v5228, %v5227
        %v5253 = vpack.c.b16 %v5230, %v5229
        %v5254 = vpack.c.b16 %v5232, %v5231
        %v5255 = vpack.c.b16 %v5234, %v5233
        %v5256 = vpack.c.b16 %v5236, %v5235
        %v5257 = vpack.c.b16 %v5238, %v5237
        %v5258 = vpack.c.b16 %v5240, %v5239
        %v5259 = vpack.c.b16 %v5242, %v5241
        %v5260 = vpack.c.b16 %v5244, %v5243
        %v5293 = vunpack.c.l.b16 %v5197
        %v5294 = vunpack.c.l.b16 %v5198
        %v5295 = vunpack.c.l.b16 %v5199
        %v5296 = vunpack.c.l.b16 %v5200
        %v5297 = vunpack.c.l.b16 %v5201
        %v5298 = vunpack.c.l.b16 %v5202
        %v5299 = vunpack.c.l.b16 %v5203
        %v5300 = vunpack.c.l.b16 %v5204
        %v5301 = vunpack.c.l.b16 %v5205
        %v5302 = vunpack.c.l.b16 %v5206
        %v5303 = vunpack.c.l.b16 %v5207
        %v5304 = vunpack.c.l.b16 %v5208
        %v5305 = vunpack.c.l.b16 %v5209
        %v5306 = vunpack.c.l.b16 %v5210
        %v5307 = vunpack.c.l.b16 %v5211
        %v5308 = vunpack.c.l.b16 %v5212
        %v5309 = vpack.c.b16 %v5294, %v5293
        %v5310 = vpack.c.b16 %v5296, %v5295
        %v5311 = vpack.c.b16 %v5298, %v5297
        %v5312 = vpack.c.b16 %v5300, %v5299
        %v5313 = vpack.c.b16 %v5302, %v5301
        %v5314 = vpack.c.b16 %v5304, %v5303
        %v5315 = vpack.c.b16 %v5306, %v5305
        %v5316 = vpack.c.b16 %v5308, %v5307
        %5325 = vmatpush.bf16.msra.mxu0 %v5316
        %5326 = vmatpush.bf16.msra.mxu0 %v5315
        %5327 = vmatpush.bf16.msra.mxu0 %v5314
        %5328 = vmatpush.bf16.msra.mxu0 %v5313
        %5329 = vmatpush.bf16.msra.mxu0 %v5312
        %5330 = vmatpush.bf16.msra.mxu0 %v5311
        %5331 = vmatpush.bf16.msra.mxu0 %v5310
        %5332 = vmatpush.bf16.msra.mxu0 %v5309
        %5333 = vmatmul.bf16.gmra.mxu0 %v5245
        %v5334 = vpop.f32.mrf.mxu0
        %v5335 = vadd.f32 0.0, %v5334
        %v5336 = vpop.f32.mrf.mxu0
        %v5337 = vadd.f32 0.0, %v5336
        %5338 = vmatmul.bf16.gmra.mxu0 %v5246
        %v5339 = vpop.f32.mrf.mxu0
        %v5340 = vadd.f32 0.0, %v5339
        %v5341 = vpop.f32.mrf.mxu0
        %v5342 = vadd.f32 0.0, %v5341
        %5343 = vmatmul.bf16.gmra.mxu0 %v5247
        %v5344 = vpop.f32.mrf.mxu0
        %v5345 = vadd.f32 0.0, %v5344
        %v5346 = vpop.f32.mrf.mxu0
        %v5347 = vadd.f32 0.0, %v5346
        %5348 = vmatmul.bf16.gmra.mxu0 %v5248
        %v5349 = vpop.f32.mrf.mxu0
        %v5350 = vadd.f32 0.0, %v5349
        %v5351 = vpop.f32.mrf.mxu0
        %v5352 = vadd.f32 0.0, %v5351
        %5353 = vmatmul.bf16.gmra.mxu0 %v5249
        %v5354 = vpop.f32.mrf.mxu0
        %v5355 = vadd.f32 0.0, %v5354
        %v5356 = vpop.f32.mrf.mxu0
        %v5357 = vadd.f32 0.0, %v5356
        %5358 = vmatmul.bf16.gmra.mxu0 %v5250
        %v5359 = vpop.f32.mrf.mxu0
        %v5360 = vadd.f32 0.0, %v5359
        %v5361 = vpop.f32.mrf.mxu0
        %v5362 = vadd.f32 0.0, %v5361
        %5363 = vmatmul.bf16.gmra.mxu0 %v5251
        %v5364 = vpop.f32.mrf.mxu0
        %v5365 = vadd.f32 0.0, %v5364
        %v5366 = vpop.f32.mrf.mxu0
        %v5367 = vadd.f32 0.0, %v5366
        %5368 = vmatmul.bf16.gmra.mxu0 %v5252
        %v5369 = vpop.f32.mrf.mxu0
        %v5370 = vadd.f32 0.0, %v5369
        %v5371 = vpop.f32.mrf.mxu0
        %v5372 = vadd.f32 0.0, %v5371
        %5373 = vmatmul.bf16.gmra.mxu0 %v5253
        %v5374 = vpop.f32.mrf.mxu0
        %v5375 = vadd.f32 0.0, %v5374
        %v5376 = vpop.f32.mrf.mxu0
        %v5377 = vadd.f32 0.0, %v5376
        %5378 = vmatmul.bf16.gmra.mxu0 %v5254
        %v5379 = vpop.f32.mrf.mxu0
        %v5380 = vadd.f32 0.0, %v5379
        %v5381 = vpop.f32.mrf.mxu0
        %v5382 = vadd.f32 0.0, %v5381
        %5383 = vmatmul.bf16.gmra.mxu0 %v5255
        %v5384 = vpop.f32.mrf.mxu0
        %v5385 = vadd.f32 0.0, %v5384
        %v5386 = vpop.f32.mrf.mxu0
        %v5387 = vadd.f32 0.0, %v5386
        %5388 = vmatmul.bf16.gmra.mxu0 %v5256
        %v5389 = vpop.f32.mrf.mxu0
        %v5390 = vadd.f32 0.0, %v5389
        %v5391 = vpop.f32.mrf.mxu0
        %v5392 = vadd.f32 0.0, %v5391
        %5393 = vmatmul.bf16.gmra.mxu0 %v5257
        %v5394 = vpop.f32.mrf.mxu0
        %v5395 = vadd.f32 0.0, %v5394
        %v5396 = vpop.f32.mrf.mxu0
        %v5397 = vadd.f32 0.0, %v5396
        %5398 = vmatmul.bf16.gmra.mxu0 %v5258
        %v5399 = vpop.f32.mrf.mxu0
        %v5400 = vadd.f32 0.0, %v5399
        %v5401 = vpop.f32.mrf.mxu0
        %v5402 = vadd.f32 0.0, %v5401
        %5403 = vmatmul.bf16.gmra.mxu0 %v5259
        %v5404 = vpop.f32.mrf.mxu0
        %v5405 = vadd.f32 0.0, %v5404
        %v5406 = vpop.f32.mrf.mxu0
        %v5407 = vadd.f32 0.0, %v5406
        %5408 = vmatmul.bf16.gmra.mxu0 %v5260
        %v5409 = vpop.f32.mrf.mxu0
        %v5410 = vadd.f32 0.0, %v5409
        %v5411 = vpop.f32.mrf.mxu0
        %v5412 = vadd.f32 0.0, %v5411
        %5413 = vdwg.mxu0
        %v5414 = vadd.f32 %v4732, %v5335
        %v5415 = vadd.f32 %v4733, %v5337
        %v5416 = vadd.f32 %v4734, %v5340
        %v5417 = vadd.f32 %v4735, %v5342
        %v5418 = vadd.f32 %v4736, %v5345
        %v5419 = vadd.f32 %v4737, %v5347
        %v5420 = vadd.f32 %v4738, %v5350
        %v5421 = vadd.f32 %v4739, %v5352
        %v5422 = vadd.f32 %v4740, %v5355
        %v5423 = vadd.f32 %v4741, %v5357
        %v5424 = vadd.f32 %v4742, %v5360
        %v5425 = vadd.f32 %v4743, %v5362
        %v5426 = vadd.f32 %v4744, %v5365
        %v5427 = vadd.f32 %v4745, %v5367
        %v5428 = vadd.f32 %v4746, %v5370
        %v5429 = vadd.f32 %v4747, %v5372
        %v5430 = vadd.f32 %v4748, %v5375
        %v5431 = vadd.f32 %v4749, %v5377
        %v5432 = vadd.f32 %v4750, %v5380
        %v5433 = vadd.f32 %v4751, %v5382
        %v5434 = vadd.f32 %v4752, %v5385
        %v5435 = vadd.f32 %v4753, %v5387
        %v5436 = vadd.f32 %v4754, %v5390
        %v5437 = vadd.f32 %v4755, %v5392
        %v5438 = vadd.f32 %v4756, %v5395
        %v5439 = vadd.f32 %v4757, %v5397
        %v5440 = vadd.f32 %v4758, %v5400
        %v5441 = vadd.f32 %v4759, %v5402
        %v5442 = vadd.f32 %v4760, %v5405
        %v5443 = vadd.f32 %v4761, %v5407
        %v5444 = vadd.f32 %v4762, %v5410
        %v5445 = vadd.f32 %v4763, %v5412
        %v5446 = vadd.f32 %v5414, %v5415
        %v5447 = vadd.f32 %v5446, %v5416
        %v5448 = vadd.f32 %v5447, %v5417
        %v5449 = vadd.f32 %v5448, %v5418
        %v5450 = vadd.f32 %v5449, %v5419
        %v5451 = vadd.f32 %v5450, %v5420
        %v5452 = vadd.f32 %v5451, %v5421
        %v5453 = vadd.f32 %v5452, %v5422
        %v5454 = vadd.f32 %v5453, %v5423
        %v5455 = vadd.f32 %v5454, %v5424
        %v5456 = vadd.f32 %v5455, %v5425
        %v5457 = vadd.f32 %v5456, %v5426
        %v5458 = vadd.f32 %v5457, %v5427
        %v5459 = vadd.f32 %v5458, %v5428
        %v5460 = vadd.f32 %v5459, %v5429
        %v5461 = vadd.f32 %v5460, %v5430
        %v5462 = vadd.f32 %v5461, %v5431
        %v5463 = vadd.f32 %v5462, %v5432
        %v5464 = vadd.f32 %v5463, %v5433
        %v5465 = vadd.f32 %v5464, %v5434
        %v5466 = vadd.f32 %v5465, %v5435
        %v5467 = vadd.f32 %v5466, %v5436
        %v5468 = vadd.f32 %v5467, %v5437
        %v5469 = vadd.f32 %v5468, %v5438
        %v5470 = vadd.f32 %v5469, %v5439
        %v5471 = vadd.f32 %v5470, %v5440
        %v5472 = vadd.f32 %v5471, %v5441
        %v5473 = vadd.f32 %v5472, %v5442
        %v5474 = vadd.f32 %v5473, %v5443
        %v5475 = vadd.f32 %v5474, %v5444
        %v5476 = vadd.f32 %v5475, %v5445
        %v5477 = vrot.slane %v5476, 4
        %v5478 = vadd.f32 %v5476, %v5477
        %v5479 = vrot.slane %v5478, 2
        %v5480 = vadd.f32 %v5478, %v5479
        %v5481 = vrot.slane %v5480, 1
        %v5482 = vadd.f32 %v5480, %v5481
        %v5483 = vmul.f32 %v5414, %v5414
        %v5484 = vmul.f32 %v5415, %v5415
        %v5485 = vmul.f32 %v5416, %v5416
        %v5486 = vmul.f32 %v5417, %v5417
        %v5487 = vmul.f32 %v5418, %v5418
        %v5488 = vmul.f32 %v5419, %v5419
        %v5489 = vmul.f32 %v5420, %v5420
        %v5490 = vmul.f32 %v5421, %v5421
        %v5491 = vmul.f32 %v5422, %v5422
        %v5492 = vmul.f32 %v5423, %v5423
        %v5493 = vmul.f32 %v5424, %v5424
        %v5494 = vmul.f32 %v5425, %v5425
        %v5495 = vmul.f32 %v5426, %v5426
        %v5496 = vmul.f32 %v5427, %v5427
        %v5497 = vmul.f32 %v5428, %v5428
        %v5498 = vmul.f32 %v5429, %v5429
        %v5499 = vmul.f32 %v5430, %v5430
        %v5500 = vmul.f32 %v5431, %v5431
        %v5501 = vmul.f32 %v5432, %v5432
        %v5502 = vmul.f32 %v5433, %v5433
        %v5503 = vmul.f32 %v5434, %v5434
        %v5504 = vmul.f32 %v5435, %v5435
        %v5505 = vmul.f32 %v5436, %v5436
        %v5506 = vmul.f32 %v5437, %v5437
        %v5507 = vmul.f32 %v5438, %v5438
        %v5508 = vmul.f32 %v5439, %v5439
        %v5509 = vmul.f32 %v5440, %v5440
        %v5510 = vmul.f32 %v5441, %v5441
        %v5511 = vmul.f32 %v5442, %v5442
        %v5512 = vmul.f32 %v5443, %v5443
        %v5513 = vmul.f32 %v5444, %v5444
        %v5514 = vmul.f32 %v5445, %v5445
        %v5515 = vadd.f32 %v5483, %v5484
        %v5516 = vadd.f32 %v5515, %v5485
        %v5517 = vadd.f32 %v5516, %v5486
        %v5518 = vadd.f32 %v5517, %v5487
        %v5519 = vadd.f32 %v5518, %v5488
        %v5520 = vadd.f32 %v5519, %v5489
        %v5521 = vadd.f32 %v5520, %v5490
        %v5522 = vadd.f32 %v5521, %v5491
        %v5523 = vadd.f32 %v5522, %v5492
        %v5524 = vadd.f32 %v5523, %v5493
        %v5525 = vadd.f32 %v5524, %v5494
        %v5526 = vadd.f32 %v5525, %v5495
        %v5527 = vadd.f32 %v5526, %v5496
        %v5528 = vadd.f32 %v5527, %v5497
        %v5529 = vadd.f32 %v5528, %v5498
        %v5530 = vadd.f32 %v5529, %v5499
        %v5531 = vadd.f32 %v5530, %v5500
        %v5532 = vadd.f32 %v5531, %v5501
        %v5533 = vadd.f32 %v5532, %v5502
        %v5534 = vadd.f32 %v5533, %v5503
        %v5535 = vadd.f32 %v5534, %v5504
        %v5536 = vadd.f32 %v5535, %v5505
        %v5537 = vadd.f32 %v5536, %v5506
        %v5538 = vadd.f32 %v5537, %v5507
        %v5539 = vadd.f32 %v5538, %v5508
        %v5540 = vadd.f32 %v5539, %v5509
        %v5541 = vadd.f32 %v5540, %v5510
        %v5542 = vadd.f32 %v5541, %v5511
        %v5543 = vadd.f32 %v5542, %v5512
        %v5544 = vadd.f32 %v5543, %v5513
        %v5545 = vadd.f32 %v5544, %v5514
        %v5546 = vrot.slane %v5545, 4
        %v5547 = vadd.f32 %v5545, %v5546
        %v5548 = vrot.slane %v5547, 2
        %v5549 = vadd.f32 %v5547, %v5548
        %v5550 = vrot.slane %v5549, 1
        %v5551 = vadd.f32 %v5549, %v5550
        %v5552 = vmul.f32 %v5482, 0.00390625
        %v5553 = vmul.f32 %v5551, 0.00390625
        %v5554 = vmul.f32 %v5552, %v5552
        %v5555 = vsub.f32 %v5553, %v5554
        %v5556 = vmax.f32 %v5555, 0.0
        %v5557 = vsub.f32 %v5414, %v5552
        %v5558 = vsub.f32 %v5415, %v5552
        %v5559 = vsub.f32 %v5416, %v5552
        %v5560 = vsub.f32 %v5417, %v5552
        %v5561 = vsub.f32 %v5418, %v5552
        %v5562 = vsub.f32 %v5419, %v5552
        %v5563 = vsub.f32 %v5420, %v5552
        %v5564 = vsub.f32 %v5421, %v5552
        %v5565 = vsub.f32 %v5422, %v5552
        %v5566 = vsub.f32 %v5423, %v5552
        %v5567 = vsub.f32 %v5424, %v5552
        %v5568 = vsub.f32 %v5425, %v5552
        %v5569 = vsub.f32 %v5426, %v5552
        %v5570 = vsub.f32 %v5427, %v5552
        %v5571 = vsub.f32 %v5428, %v5552
        %v5572 = vsub.f32 %v5429, %v5552
        %v5573 = vsub.f32 %v5430, %v5552
        %v5574 = vsub.f32 %v5431, %v5552
        %v5575 = vsub.f32 %v5432, %v5552
        %v5576 = vsub.f32 %v5433, %v5552
        %v5577 = vsub.f32 %v5434, %v5552
        %v5578 = vsub.f32 %v5435, %v5552
        %v5579 = vsub.f32 %v5436, %v5552
        %v5580 = vsub.f32 %v5437, %v5552
        %v5581 = vsub.f32 %v5438, %v5552
        %v5582 = vsub.f32 %v5439, %v5552
        %v5583 = vsub.f32 %v5440, %v5552
        %v5584 = vsub.f32 %v5441, %v5552
        %v5585 = vsub.f32 %v5442, %v5552
        %v5586 = vsub.f32 %v5443, %v5552
        %v5587 = vsub.f32 %v5444, %v5552
        %v5588 = vsub.f32 %v5445, %v5552
        %v5589 = vadd.f32 %v5556, 1e-05
        %v5590 = vrsqrt.pop %v5589
        %v5591 = vmul.f32 %v5590, %v5589
        %v5592 = vmul.f32 %v5591, %v5590
        %v5593 = vmul.f32 0.5, %v5592
        %v5594 = vsub.f32 1.5, %v5593
        %v5595 = vmul.f32 %v5590, %v5594
        %vm5596 = vweird.f32 %v5589
        %vm5597 = vweird.f32 %v5590
        %vm5598 = vmor %vm5596, %vm5597
        %v5599 = vsel %vm5598, %v5590, %v5595
        %v5600 = vmul.f32 %v5557, %v5599
        %v5601 = vmul.f32 %v5558, %v5599
        %v5602 = vmul.f32 %v5559, %v5599
        %v5603 = vmul.f32 %v5560, %v5599
        %v5604 = vmul.f32 %v5561, %v5599
        %v5605 = vmul.f32 %v5562, %v5599
        %v5606 = vmul.f32 %v5563, %v5599
        %v5607 = vmul.f32 %v5564, %v5599
        %v5608 = vmul.f32 %v5565, %v5599
        %v5609 = vmul.f32 %v5566, %v5599
        %v5610 = vmul.f32 %v5567, %v5599
        %v5611 = vmul.f32 %v5568, %v5599
        %v5612 = vmul.f32 %v5569, %v5599
        %v5613 = vmul.f32 %v5570, %v5599
        %v5614 = vmul.f32 %v5571, %v5599
        %v5615 = vmul.f32 %v5572, %v5599
        %v5616 = vmul.f32 %v5573, %v5599
        %v5617 = vmul.f32 %v5574, %v5599
        %v5618 = vmul.f32 %v5575, %v5599
        %v5619 = vmul.f32 %v5576, %v5599
        %v5620 = vmul.f32 %v5577, %v5599
        %v5621 = vmul.f32 %v5578, %v5599
        %v5622 = vmul.f32 %v5579, %v5599
        %v5623 = vmul.f32 %v5580, %v5599
        %v5624 = vmul.f32 %v5581, %v5599
        %v5625 = vmul.f32 %v5582, %v5599
        %v5626 = vmul.f32 %v5583, %v5599
        %v5627 = vmul.f32 %v5584, %v5599
        %v5628 = vmul.f32 %v5585, %v5599
        %v5629 = vmul.f32 %v5586, %v5599
        %v5630 = vmul.f32 %v5587, %v5599
        %v5631 = vmul.f32 %v5588, %v5599
        %v5633 = vperm.slane %v662, 0
        %v5635 = vmul.f32 %v5600, %v5633
        %v5636 = vmul.f32 %v5601, %v5633
        %v5637 = vmul.f32 %v5602, %v5633
        %v5638 = vmul.f32 %v5603, %v5633
        %v5639 = vmul.f32 %v5604, %v5633
        %v5640 = vmul.f32 %v5605, %v5633
        %v5641 = vmul.f32 %v5606, %v5633
        %v5642 = vmul.f32 %v5607, %v5633
        %v5643 = vmul.f32 %v5608, %v5633
        %v5644 = vmul.f32 %v5609, %v5633
        %v5645 = vmul.f32 %v5610, %v5633
        %v5646 = vmul.f32 %v5611, %v5633
        %v5647 = vmul.f32 %v5612, %v5633
        %v5648 = vmul.f32 %v5613, %v5633
        %v5649 = vmul.f32 %v5614, %v5633
        %v5650 = vmul.f32 %v5615, %v5633
        %v5651 = vmul.f32 %v5616, %v5633
        %v5652 = vmul.f32 %v5617, %v5633
        %v5653 = vmul.f32 %v5618, %v5633
        %v5654 = vmul.f32 %v5619, %v5633
        %v5655 = vmul.f32 %v5620, %v5633
        %v5656 = vmul.f32 %v5621, %v5633
        %v5657 = vmul.f32 %v5622, %v5633
        %v5658 = vmul.f32 %v5623, %v5633
        %v5659 = vmul.f32 %v5624, %v5633
        %v5660 = vmul.f32 %v5625, %v5633
        %v5661 = vmul.f32 %v5626, %v5633
        %v5662 = vmul.f32 %v5627, %v5633
        %v5663 = vmul.f32 %v5628, %v5633
        %v5664 = vmul.f32 %v5629, %v5633
        %v5665 = vmul.f32 %v5630, %v5633
        %v5666 = vmul.f32 %v5631, %v5633
        %v5668 = vperm.slane %v663, 0
        %v5670 = vadd.f32 %v5635, %v5668
        %v5671 = vadd.f32 %v5636, %v5668
        %v5672 = vadd.f32 %v5637, %v5668
        %v5673 = vadd.f32 %v5638, %v5668
        %v5674 = vadd.f32 %v5639, %v5668
        %v5675 = vadd.f32 %v5640, %v5668
        %v5676 = vadd.f32 %v5641, %v5668
        %v5677 = vadd.f32 %v5642, %v5668
        %v5678 = vadd.f32 %v5643, %v5668
        %v5679 = vadd.f32 %v5644, %v5668
        %v5680 = vadd.f32 %v5645, %v5668
        %v5681 = vadd.f32 %v5646, %v5668
        %v5682 = vadd.f32 %v5647, %v5668
        %v5683 = vadd.f32 %v5648, %v5668
        %v5684 = vadd.f32 %v5649, %v5668
        %v5685 = vadd.f32 %v5650, %v5668
        %v5686 = vadd.f32 %v5651, %v5668
        %v5687 = vadd.f32 %v5652, %v5668
        %v5688 = vadd.f32 %v5653, %v5668
        %v5689 = vadd.f32 %v5654, %v5668
        %v5690 = vadd.f32 %v5655, %v5668
        %v5691 = vadd.f32 %v5656, %v5668
        %v5692 = vadd.f32 %v5657, %v5668
        %v5693 = vadd.f32 %v5658, %v5668
        %v5694 = vadd.f32 %v5659, %v5668
        %v5695 = vadd.f32 %v5660, %v5668
        %v5696 = vadd.f32 %v5661, %v5668
        %v5697 = vadd.f32 %v5662, %v5668
        %v5698 = vadd.f32 %v5663, %v5668
        %v5699 = vadd.f32 %v5664, %v5668
        %v5700 = vadd.f32 %v5665, %v5668
        %v5701 = vadd.f32 %v5666, %v5668
        %v5702 = vmax.f32 %v5670, 0.0
        %v5703 = vmax.f32 %v5671, 0.0
        %v5704 = vmax.f32 %v5672, 0.0
        %v5705 = vmax.f32 %v5673, 0.0
        %v5706 = vmax.f32 %v5674, 0.0
        %v5707 = vmax.f32 %v5675, 0.0
        %v5708 = vmax.f32 %v5676, 0.0
        %v5709 = vmax.f32 %v5677, 0.0
        %v5710 = vmax.f32 %v5678, 0.0
        %v5711 = vmax.f32 %v5679, 0.0
        %v5712 = vmax.f32 %v5680, 0.0
        %v5713 = vmax.f32 %v5681, 0.0
        %v5714 = vmax.f32 %v5682, 0.0
        %v5715 = vmax.f32 %v5683, 0.0
        %v5716 = vmax.f32 %v5684, 0.0
        %v5717 = vmax.f32 %v5685, 0.0
        %v5718 = vmax.f32 %v5686, 0.0
        %v5719 = vmax.f32 %v5687, 0.0
        %v5720 = vmax.f32 %v5688, 0.0
        %v5721 = vmax.f32 %v5689, 0.0
        %v5722 = vmax.f32 %v5690, 0.0
        %v5723 = vmax.f32 %v5691, 0.0
        %v5724 = vmax.f32 %v5692, 0.0
        %v5725 = vmax.f32 %v5693, 0.0
        %v5726 = vmax.f32 %v5694, 0.0
        %v5727 = vmax.f32 %v5695, 0.0
        %v5728 = vmax.f32 %v5696, 0.0
        %v5729 = vmax.f32 %v5697, 0.0
        %v5730 = vmax.f32 %v5698, 0.0
        %v5731 = vmax.f32 %v5699, 0.0
        %v5732 = vmax.f32 %v5700, 0.0
        %v5733 = vmax.f32 %v5701, 0.0
        %v5734 = vpack.c.bf16 %v5702, %v5702
        %v5735 = vpack.c.bf16 %v5703, %v5703
        %v5736 = vpack.c.bf16 %v5704, %v5704
        %v5737 = vpack.c.bf16 %v5705, %v5705
        %v5738 = vpack.c.bf16 %v5706, %v5706
        %v5739 = vpack.c.bf16 %v5707, %v5707
        %v5740 = vpack.c.bf16 %v5708, %v5708
        %v5741 = vpack.c.bf16 %v5709, %v5709
        %v5742 = vpack.c.bf16 %v5710, %v5710
        %v5743 = vpack.c.bf16 %v5711, %v5711
        %v5744 = vpack.c.bf16 %v5712, %v5712
        %v5745 = vpack.c.bf16 %v5713, %v5713
        %v5746 = vpack.c.bf16 %v5714, %v5714
        %v5747 = vpack.c.bf16 %v5715, %v5715
        %v5748 = vpack.c.bf16 %v5716, %v5716
        %v5749 = vpack.c.bf16 %v5717, %v5717
        %v5750 = vpack.c.bf16 %v5718, %v5718
        %v5751 = vpack.c.bf16 %v5719, %v5719
        %v5752 = vpack.c.bf16 %v5720, %v5720
        %v5753 = vpack.c.bf16 %v5721, %v5721
        %v5754 = vpack.c.bf16 %v5722, %v5722
        %v5755 = vpack.c.bf16 %v5723, %v5723
        %v5756 = vpack.c.bf16 %v5724, %v5724
        %v5757 = vpack.c.bf16 %v5725, %v5725
        %v5758 = vpack.c.bf16 %v5726, %v5726
        %v5759 = vpack.c.bf16 %v5727, %v5727
        %v5760 = vpack.c.bf16 %v5728, %v5728
        %v5761 = vpack.c.bf16 %v5729, %v5729
        %v5762 = vpack.c.bf16 %v5730, %v5730
        %v5763 = vpack.c.bf16 %v5731, %v5731
        %v5764 = vpack.c.bf16 %v5732, %v5732
        %v5765 = vpack.c.bf16 %v5733, %v5733
        %5766 = vst [vmem:[%s396 + $0x4] sm:$0xf] %v5734
        %5767 = vst [vmem:[%s396 + $0x8] sm:$0xf] %v5735
        %5768 = vst [vmem:[%s396 + $0x14] sm:$0xf] %v5736
        %5769 = vst [vmem:[%s396 + $0x18] sm:$0xf] %v5737
        %5770 = vst [vmem:[%s396 + $0x24] sm:$0xf] %v5738
        %5771 = vst [vmem:[%s396 + $0x28] sm:$0xf] %v5739
        %5772 = vst [vmem:[%s396 + $0x34] sm:$0xf] %v5740
        %5773 = vst [vmem:[%s396 + $0x38] sm:$0xf] %v5741
        %5774 = vst [vmem:[%s396 + $0x44] sm:$0xf] %v5742
        %5775 = vst [vmem:[%s396 + $0x48] sm:$0xf] %v5743
        %5776 = vst [vmem:[%s396 + $0x54] sm:$0xf] %v5744
        %5777 = vst [vmem:[%s396 + $0x58] sm:$0xf] %v5745
        %5778 = vst [vmem:[%s396 + $0x64] sm:$0xf] %v5746
        %5779 = vst [vmem:[%s396 + $0x68] sm:$0xf] %v5747
        %5780 = vst [vmem:[%s396 + $0x74] sm:$0xf] %v5748
        %5781 = vst [vmem:[%s396 + $0x78] sm:$0xf] %v5749
        %5782 = vst [vmem:[%s396 + $0x84] sm:$0xf] %v5750
        %5783 = vst [vmem:[%s396 + $0x88] sm:$0xf] %v5751
        %5784 = vst [vmem:[%s396 + $0x94] sm:$0xf] %v5752
        %5785 = vst [vmem:[%s396 + $0x98] sm:$0xf] %v5753
        %5786 = vst [vmem:[%s396 + $0xa4] sm:$0xf] %v5754
        %5787 = vst [vmem:[%s396 + $0xa8] sm:$0xf] %v5755
        %5788 = vst [vmem:[%s396 + $0xb4] sm:$0xf] %v5756
        %5789 = vst [vmem:[%s396 + $0xb8] sm:$0xf] %v5757
        %5790 = vst [vmem:[%s396 + $0xc4] sm:$0xf] %v5758
        %5791 = vst [vmem:[%s396 + $0xc8] sm:$0xf] %v5759
        %5792 = vst [vmem:[%s396 + $0xd4] sm:$0xf] %v5760
        %5793 = vst [vmem:[%s396 + $0xd8] sm:$0xf] %v5761
        %5794 = vst [vmem:[%s396 + $0xe4] sm:$0xf] %v5762
        %5795 = vst [vmem:[%s396 + $0xe8] sm:$0xf] %v5763
        %5796 = vst [vmem:[%s396 + $0xf4] sm:$0xf] %v5764
        %5797 = vst [vmem:[%s396 + $0xf8] sm:$0xf] %v5765
        %v5814 = vrot.slane %v5734, 5
        %v5815 = vrot.slane %v5736, 5
        %v5816 = vrot.slane %v5738, 5
        %v5817 = vrot.slane %v5740, 5
        %v5818 = vrot.slane %v5742, 5
        %v5819 = vrot.slane %v5744, 5
        %v5820 = vrot.slane %v5746, 5
        %v5821 = vrot.slane %v5748, 5
        %v5822 = vrot.slane %v5750, 5
        %v5823 = vrot.slane %v5752, 5
        %v5824 = vrot.slane %v5754, 5
        %v5825 = vrot.slane %v5756, 5
        %v5826 = vrot.slane %v5758, 5
        %v5827 = vrot.slane %v5760, 5
        %v5828 = vrot.slane %v5762, 5
        %v5829 = vrot.slane %v5764, 5
        %v5846 = vld [vmem:[%s396] sm:$0x8]
        %v5847 = vsel %vm479, %v5814, %v5846
        %5848 = vst [vmem:[%s396] sm:$0x8] %v5847
        %v5849 = vld [vmem:[%s396 + $0x10] sm:$0x8]
        %v5850 = vsel %vm479, %v5815, %v5849
        %5851 = vst [vmem:[%s396 + $0x10] sm:$0x8] %v5850
        %v5852 = vld [vmem:[%s396 + $0x20] sm:$0x8]
        %v5853 = vsel %vm479, %v5816, %v5852
        %5854 = vst [vmem:[%s396 + $0x20] sm:$0x8] %v5853
        %v5855 = vld [vmem:[%s396 + $0x30] sm:$0x8]
        %v5856 = vsel %vm479, %v5817, %v5855
        %5857 = vst [vmem:[%s396 + $0x30] sm:$0x8] %v5856
        %v5858 = vld [vmem:[%s396 + $0x40] sm:$0x8]
        %v5859 = vsel %vm479, %v5818, %v5858
        %5860 = vst [vmem:[%s396 + $0x40] sm:$0x8] %v5859
        %v5861 = vld [vmem:[%s396 + $0x50] sm:$0x8]
        %v5862 = vsel %vm479, %v5819, %v5861
        %5863 = vst [vmem:[%s396 + $0x50] sm:$0x8] %v5862
        %v5864 = vld [vmem:[%s396 + $0x60] sm:$0x8]
        %v5865 = vsel %vm479, %v5820, %v5864
        %5866 = vst [vmem:[%s396 + $0x60] sm:$0x8] %v5865
        %v5867 = vld [vmem:[%s396 + $0x70] sm:$0x8]
        %v5868 = vsel %vm479, %v5821, %v5867
        %5869 = vst [vmem:[%s396 + $0x70] sm:$0x8] %v5868
        %v5870 = vld [vmem:[%s396 + $0x80] sm:$0x8]
        %v5871 = vsel %vm479, %v5822, %v5870
        %5872 = vst [vmem:[%s396 + $0x80] sm:$0x8] %v5871
        %v5873 = vld [vmem:[%s396 + $0x90] sm:$0x8]
        %v5874 = vsel %vm479, %v5823, %v5873
        %5875 = vst [vmem:[%s396 + $0x90] sm:$0x8] %v5874
        %v5876 = vld [vmem:[%s396 + $0xa0] sm:$0x8]
        %v5877 = vsel %vm479, %v5824, %v5876
        %5878 = vst [vmem:[%s396 + $0xa0] sm:$0x8] %v5877
        %v5879 = vld [vmem:[%s396 + $0xb0] sm:$0x8]
        %v5880 = vsel %vm479, %v5825, %v5879
        %5881 = vst [vmem:[%s396 + $0xb0] sm:$0x8] %v5880
        %v5882 = vld [vmem:[%s396 + $0xc0] sm:$0x8]
        %v5883 = vsel %vm479, %v5826, %v5882
        %5884 = vst [vmem:[%s396 + $0xc0] sm:$0x8] %v5883
        %v5885 = vld [vmem:[%s396 + $0xd0] sm:$0x8]
        %v5886 = vsel %vm479, %v5827, %v5885
        %5887 = vst [vmem:[%s396 + $0xd0] sm:$0x8] %v5886
        %v5888 = vld [vmem:[%s396 + $0xe0] sm:$0x8]
        %v5889 = vsel %vm479, %v5828, %v5888
        %5890 = vst [vmem:[%s396 + $0xe0] sm:$0x8] %v5889
        %v5891 = vld [vmem:[%s396 + $0xf0] sm:$0x8]
        %v5892 = vsel %vm479, %v5829, %v5891
        %5893 = vst [vmem:[%s396 + $0xf0] sm:$0x8] %v5892
        %v5910 = vrot.slane %v5735, 7
        %v5911 = vrot.slane %v5910, 4
        %v5912 = vrot.slane %v5737, 7
        %v5913 = vrot.slane %v5912, 4
        %v5914 = vrot.slane %v5739, 7
        %v5915 = vrot.slane %v5914, 4
        %v5916 = vrot.slane %v5741, 7
        %v5917 = vrot.slane %v5916, 4
        %v5918 = vrot.slane %v5743, 7
        %v5919 = vrot.slane %v5918, 4
        %v5920 = vrot.slane %v5745, 7
        %v5921 = vrot.slane %v5920, 4
        %v5922 = vrot.slane %v5747, 7
        %v5923 = vrot.slane %v5922, 4
        %v5924 = vrot.slane %v5749, 7
        %v5925 = vrot.slane %v5924, 4
        %v5926 = vrot.slane %v5751, 7
        %v5927 = vrot.slane %v5926, 4
        %v5928 = vrot.slane %v5753, 7
        %v5929 = vrot.slane %v5928, 4
        %v5930 = vrot.slane %v5755, 7
        %v5931 = vrot.slane %v5930, 4
        %v5932 = vrot.slane %v5757, 7
        %v5933 = vrot.slane %v5932, 4
        %v5934 = vrot.slane %v5759, 7
        %v5935 = vrot.slane %v5934, 4
        %v5936 = vrot.slane %v5761, 7
        %v5937 = vrot.slane %v5936, 4
        %v5938 = vrot.slane %v5763, 7
        %v5939 = vrot.slane %v5938, 4
        %v5940 = vrot.slane %v5765, 7
        %v5941 = vrot.slane %v5940, 4
        %v5958 = vld [vmem:[%s396 + $0xc] sm:$0x1]
        %v5959 = vsel %vm594, %v5911, %v5958
        %5960 = vst [vmem:[%s396 + $0xc] sm:$0x1] %v5959
        %v5961 = vld [vmem:[%s396 + $0x1c] sm:$0x1]
        %v5962 = vsel %vm594, %v5913, %v5961
        %5963 = vst [vmem:[%s396 + $0x1c] sm:$0x1] %v5962
        %v5964 = vld [vmem:[%s396 + $0x2c] sm:$0x1]
        %v5965 = vsel %vm594, %v5915, %v5964
        %5966 = vst [vmem:[%s396 + $0x2c] sm:$0x1] %v5965
        %v5967 = vld [vmem:[%s396 + $0x3c] sm:$0x1]
        %v5968 = vsel %vm594, %v5917, %v5967
        %5969 = vst [vmem:[%s396 + $0x3c] sm:$0x1] %v5968
        %v5970 = vld [vmem:[%s396 + $0x4c] sm:$0x1]
        %v5971 = vsel %vm594, %v5919, %v5970
        %5972 = vst [vmem:[%s396 + $0x4c] sm:$0x1] %v5971
        %v5973 = vld [vmem:[%s396 + $0x5c] sm:$0x1]
        %v5974 = vsel %vm594, %v5921, %v5973
        %5975 = vst [vmem:[%s396 + $0x5c] sm:$0x1] %v5974
        %v5976 = vld [vmem:[%s396 + $0x6c] sm:$0x1]
        %v5977 = vsel %vm594, %v5923, %v5976
        %5978 = vst [vmem:[%s396 + $0x6c] sm:$0x1] %v5977
        %v5979 = vld [vmem:[%s396 + $0x7c] sm:$0x1]
        %v5980 = vsel %vm594, %v5925, %v5979
        %5981 = vst [vmem:[%s396 + $0x7c] sm:$0x1] %v5980
        %v5982 = vld [vmem:[%s396 + $0x8c] sm:$0x1]
        %v5983 = vsel %vm594, %v5927, %v5982
        %5984 = vst [vmem:[%s396 + $0x8c] sm:$0x1] %v5983
        %v5985 = vld [vmem:[%s396 + $0x9c] sm:$0x1]
        %v5986 = vsel %vm594, %v5929, %v5985
        %5987 = vst [vmem:[%s396 + $0x9c] sm:$0x1] %v5986
        %v5988 = vld [vmem:[%s396 + $0xac] sm:$0x1]
        %v5989 = vsel %vm594, %v5931, %v5988
        %5990 = vst [vmem:[%s396 + $0xac] sm:$0x1] %v5989
        %v5991 = vld [vmem:[%s396 + $0xbc] sm:$0x1]
        %v5992 = vsel %vm594, %v5933, %v5991
        %5993 = vst [vmem:[%s396 + $0xbc] sm:$0x1] %v5992
        %v5994 = vld [vmem:[%s396 + $0xcc] sm:$0x1]
        %v5995 = vsel %vm594, %v5935, %v5994
        %5996 = vst [vmem:[%s396 + $0xcc] sm:$0x1] %v5995
        %v5997 = vld [vmem:[%s396 + $0xdc] sm:$0x1]
        %v5998 = vsel %vm594, %v5937, %v5997
        %5999 = vst [vmem:[%s396 + $0xdc] sm:$0x1] %v5998
        %v6000 = vld [vmem:[%s396 + $0xec] sm:$0x1]
        %v6001 = vsel %vm594, %v5939, %v6000
        %6002 = vst [vmem:[%s396 + $0xec] sm:$0x1] %v6001
        %v6003 = vld [vmem:[%s396 + $0xfc] sm:$0x1]
        %v6004 = vsel %vm594, %v5941, %v6003
        %6005 = vst [vmem:[%s396 + $0xfc] sm:$0x1] %v6004
        %v6006 = vld [vmem:[%s643] sm:$0xf]
        %v6007 = vld [vmem:[%s643 + $0x4] sm:$0xf]
        %v6008 = vld [vmem:[%s643 + $0x8] sm:$0xf]
        %v6009 = vld [vmem:[%s643 + $0xc] sm:$0xf]
        %6010 = vst [vmem:[#allocation2] sm:$0xf] %v6006
        %6011 = vst [vmem:[#allocation2 + $0x4] sm:$0xf] %v6007
        %6012 = vst [vmem:[#allocation2 + $0x8] sm:$0xf] %v6008
        %6013 = vst [vmem:[#allocation2 + $0xc] sm:$0xf] %v6009
        %v6014 = vld [vmem:[%s652] sm:$0xf]
        %v6015 = vld [vmem:[%s652 + $0x4] sm:$0xf]
        %v6016 = vld [vmem:[%s652 + $0x8] sm:$0xf]
        %v6017 = vld [vmem:[%s652 + $0xc] sm:$0xf]
        %6018 = vst [vmem:[%s657] sm:$0xf] %v6014
        %6019 = vst [vmem:[%s657 + $0x4] sm:$0xf] %v6015
        %6020 = vst [vmem:[%s657 + $0x8] sm:$0xf] %v6016
        %6021 = vst [vmem:[%s657 + $0xc] sm:$0xf] %v6017
        %v6022 = vld [vmem:[%s5] sm:$0x1]
        %v6023 = vld [vmem:[%s6] sm:$0x1]
        %v6024 = vld [vmem:[#allocation2] sm:$0x8]
        %v6025 = vld [vmem:[#allocation2 + $0x4] sm:$0xf]
        %v6026 = vld [vmem:[#allocation2 + $0x8] sm:$0xf]
        %v6027 = vld [vmem:[#allocation2 + $0x10] sm:$0x8]
        %v6028 = vld [vmem:[#allocation2 + $0x14] sm:$0xf]
        %v6029 = vld [vmem:[#allocation2 + $0x18] sm:$0xf]
        %v6030 = vld [vmem:[#allocation2 + $0x20] sm:$0x8]
        %v6031 = vld [vmem:[#allocation2 + $0x24] sm:$0xf]
        %v6032 = vld [vmem:[#allocation2 + $0x28] sm:$0xf]
        %v6033 = vld [vmem:[#allocation2 + $0x30] sm:$0x8]
        %v6034 = vld [vmem:[#allocation2 + $0x34] sm:$0xf]
        %v6035 = vld [vmem:[#allocation2 + $0x38] sm:$0xf]
        %v6036 = vld [vmem:[#allocation2 + $0x40] sm:$0x8]
        %v6037 = vld [vmem:[#allocation2 + $0x44] sm:$0xf]
        %v6038 = vld [vmem:[#allocation2 + $0x48] sm:$0xf]
        %v6039 = vld [vmem:[#allocation2 + $0x50] sm:$0x8]
        %v6040 = vld [vmem:[#allocation2 + $0x54] sm:$0xf]
        %v6041 = vld [vmem:[#allocation2 + $0x58] sm:$0xf]
        %v6042 = vld [vmem:[#allocation2 + $0x60] sm:$0x8]
        %v6043 = vld [vmem:[#allocation2 + $0x64] sm:$0xf]
        %v6044 = vld [vmem:[#allocation2 + $0x68] sm:$0xf]
        %v6045 = vld [vmem:[#allocation2 + $0x70] sm:$0x8]
        %v6046 = vld [vmem:[#allocation2 + $0x74] sm:$0xf]
        %v6047 = vld [vmem:[#allocation2 + $0x78] sm:$0xf]
        %v6048 = vld [vmem:[#allocation2 + $0x80] sm:$0x8]
        %v6049 = vld [vmem:[#allocation2 + $0x84] sm:$0xf]
        %v6050 = vld [vmem:[#allocation2 + $0x88] sm:$0xf]
        %v6051 = vld [vmem:[#allocation2 + $0x90] sm:$0x8]
        %v6052 = vld [vmem:[#allocation2 + $0x94] sm:$0xf]
        %v6053 = vld [vmem:[#allocation2 + $0x98] sm:$0xf]
        %v6054 = vld [vmem:[#allocation2 + $0xa0] sm:$0x8]
        %v6055 = vld [vmem:[#allocation2 + $0xa4] sm:$0xf]
        %v6056 = vld [vmem:[#allocation2 + $0xa8] sm:$0xf]
        %v6057 = vld [vmem:[#allocation2 + $0xb0] sm:$0x8]
        %v6058 = vld [vmem:[#allocation2 + $0xb4] sm:$0xf]
        %v6059 = vld [vmem:[#allocation2 + $0xb8] sm:$0xf]
        %v6060 = vld [vmem:[#allocation2 + $0xc0] sm:$0x8]
        %v6061 = vld [vmem:[#allocation2 + $0xc4] sm:$0xf]
        %v6062 = vld [vmem:[#allocation2 + $0xc8] sm:$0xf]
        %v6063 = vld [vmem:[#allocation2 + $0xd0] sm:$0x8]
        %v6064 = vld [vmem:[#allocation2 + $0xd4] sm:$0xf]
        %v6065 = vld [vmem:[#allocation2 + $0xd8] sm:$0xf]
        %v6066 = vld [vmem:[#allocation2 + $0xe0] sm:$0x8]
        %v6067 = vld [vmem:[#allocation2 + $0xe4] sm:$0xf]
        %v6068 = vld [vmem:[#allocation2 + $0xe8] sm:$0xf]
        %v6069 = vld [vmem:[#allocation2 + $0xf0] sm:$0x8]
        %v6070 = vld [vmem:[#allocation2 + $0xf4] sm:$0xf]
        %v6071 = vld [vmem:[#allocation2 + $0xf8] sm:$0xf]
        %v6073 = vshrl.u32 %v6024, 16
        %v6075 = vrot.slane %v6073, 7
        %v6076 = vrot.slane %v6075, 4
        %v6078 = vshrl.u32 %v6025, 16
        %v6080 = vrot.slane %v6078, 7
        %v6081 = vshll.u32 %v6025, 16
        %v6083 = vor.u32 %v6080, %v6081
        %v6084 = vsel %vm713, %v6076, %v6083
        %v6085 = vrot.slane %v6080, 4
        %v6087 = vshrl.u32 %v6026, 16
        %v6089 = vrot.slane %v6087, 7
        %v6090 = vshll.u32 %v6026, 16
        %v6092 = vor.u32 %v6089, %v6090
        %v6093 = vsel %vm713, %v6085, %v6092
        %v6095 = vshrl.u32 %v6027, 16
        %v6097 = vrot.slane %v6095, 7
        %v6098 = vrot.slane %v6097, 4
        %v6100 = vshrl.u32 %v6028, 16
        %v6102 = vrot.slane %v6100, 7
        %v6103 = vshll.u32 %v6028, 16
        %v6105 = vor.u32 %v6102, %v6103
        %v6106 = vsel %vm713, %v6098, %v6105
        %v6107 = vrot.slane %v6102, 4
        %v6109 = vshrl.u32 %v6029, 16
        %v6111 = vrot.slane %v6109, 7
        %v6112 = vshll.u32 %v6029, 16
        %v6114 = vor.u32 %v6111, %v6112
        %v6115 = vsel %vm713, %v6107, %v6114
        %v6117 = vshrl.u32 %v6030, 16
        %v6119 = vrot.slane %v6117, 7
        %v6120 = vrot.slane %v6119, 4
        %v6122 = vshrl.u32 %v6031, 16
        %v6124 = vrot.slane %v6122, 7
        %v6125 = vshll.u32 %v6031, 16
        %v6127 = vor.u32 %v6124, %v6125
        %v6128 = vsel %vm713, %v6120, %v6127
        %v6129 = vrot.slane %v6124, 4
        %v6131 = vshrl.u32 %v6032, 16
        %v6133 = vrot.slane %v6131, 7
        %v6134 = vshll.u32 %v6032, 16
        %v6136 = vor.u32 %v6133, %v6134
        %v6137 = vsel %vm713, %v6129, %v6136
        %v6139 = vshrl.u32 %v6033, 16
        %v6141 = vrot.slane %v6139, 7
        %v6142 = vrot.slane %v6141, 4
        %v6144 = vshrl.u32 %v6034, 16
        %v6146 = vrot.slane %v6144, 7
        %v6147 = vshll.u32 %v6034, 16
        %v6149 = vor.u32 %v6146, %v6147
        %v6150 = vsel %vm713, %v6142, %v6149
        %v6151 = vrot.slane %v6146, 4
        %v6153 = vshrl.u32 %v6035, 16
        %v6155 = vrot.slane %v6153, 7
        %v6156 = vshll.u32 %v6035, 16
        %v6158 = vor.u32 %v6155, %v6156
        %v6159 = vsel %vm713, %v6151, %v6158
        %v6161 = vshrl.u32 %v6036, 16
        %v6163 = vrot.slane %v6161, 7
        %v6164 = vrot.slane %v6163, 4
        %v6166 = vshrl.u32 %v6037, 16
        %v6168 = vrot.slane %v6166, 7
        %v6169 = vshll.u32 %v6037, 16
        %v6171 = vor.u32 %v6168, %v6169
        %v6172 = vsel %vm713, %v6164, %v6171
        %v6173 = vrot.slane %v6168, 4
        %v6175 = vshrl.u32 %v6038, 16
        %v6177 = vrot.slane %v6175, 7
        %v6178 = vshll.u32 %v6038, 16
        %v6180 = vor.u32 %v6177, %v6178
        %v6181 = vsel %vm713, %v6173, %v6180
        %v6183 = vshrl.u32 %v6039, 16
        %v6185 = vrot.slane %v6183, 7
        %v6186 = vrot.slane %v6185, 4
        %v6188 = vshrl.u32 %v6040, 16
        %v6190 = vrot.slane %v6188, 7
        %v6191 = vshll.u32 %v6040, 16
        %v6193 = vor.u32 %v6190, %v6191
        %v6194 = vsel %vm713, %v6186, %v6193
        %v6195 = vrot.slane %v6190, 4
        %v6197 = vshrl.u32 %v6041, 16
        %v6199 = vrot.slane %v6197, 7
        %v6200 = vshll.u32 %v6041, 16
        %v6202 = vor.u32 %v6199, %v6200
        %v6203 = vsel %vm713, %v6195, %v6202
        %v6205 = vshrl.u32 %v6042, 16
        %v6207 = vrot.slane %v6205, 7
        %v6208 = vrot.slane %v6207, 4
        %v6210 = vshrl.u32 %v6043, 16
        %v6212 = vrot.slane %v6210, 7
        %v6213 = vshll.u32 %v6043, 16
        %v6215 = vor.u32 %v6212, %v6213
        %v6216 = vsel %vm713, %v6208, %v6215
        %v6217 = vrot.slane %v6212, 4
        %v6219 = vshrl.u32 %v6044, 16
        %v6221 = vrot.slane %v6219, 7
        %v6222 = vshll.u32 %v6044, 16
        %v6224 = vor.u32 %v6221, %v6222
        %v6225 = vsel %vm713, %v6217, %v6224
        %v6227 = vshrl.u32 %v6045, 16
        %v6229 = vrot.slane %v6227, 7
        %v6230 = vrot.slane %v6229, 4
        %v6232 = vshrl.u32 %v6046, 16
        %v6234 = vrot.slane %v6232, 7
        %v6235 = vshll.u32 %v6046, 16
        %v6237 = vor.u32 %v6234, %v6235
        %v6238 = vsel %vm713, %v6230, %v6237
        %v6239 = vrot.slane %v6234, 4
        %v6241 = vshrl.u32 %v6047, 16
        %v6243 = vrot.slane %v6241, 7
        %v6244 = vshll.u32 %v6047, 16
        %v6246 = vor.u32 %v6243, %v6244
        %v6247 = vsel %vm713, %v6239, %v6246
        %v6249 = vshrl.u32 %v6048, 16
        %v6251 = vrot.slane %v6249, 7
        %v6252 = vrot.slane %v6251, 4
        %v6254 = vshrl.u32 %v6049, 16
        %v6256 = vrot.slane %v6254, 7
        %v6257 = vshll.u32 %v6049, 16
        %v6259 = vor.u32 %v6256, %v6257
        %v6260 = vsel %vm713, %v6252, %v6259
        %v6261 = vrot.slane %v6256, 4
        %v6263 = vshrl.u32 %v6050, 16
        %v6265 = vrot.slane %v6263, 7
        %v6266 = vshll.u32 %v6050, 16
        %v6268 = vor.u32 %v6265, %v6266
        %v6269 = vsel %vm713, %v6261, %v6268
        %v6271 = vshrl.u32 %v6051, 16
        %v6273 = vrot.slane %v6271, 7
        %v6274 = vrot.slane %v6273, 4
        %v6276 = vshrl.u32 %v6052, 16
        %v6278 = vrot.slane %v6276, 7
        %v6279 = vshll.u32 %v6052, 16
        %v6281 = vor.u32 %v6278, %v6279
        %v6282 = vsel %vm713, %v6274, %v6281
        %v6283 = vrot.slane %v6278, 4
        %v6285 = vshrl.u32 %v6053, 16
        %v6287 = vrot.slane %v6285, 7
        %v6288 = vshll.u32 %v6053, 16
        %v6290 = vor.u32 %v6287, %v6288
        %v6291 = vsel %vm713, %v6283, %v6290
        %v6293 = vshrl.u32 %v6054, 16
        %v6295 = vrot.slane %v6293, 7
        %v6296 = vrot.slane %v6295, 4
        %v6298 = vshrl.u32 %v6055, 16
        %v6300 = vrot.slane %v6298, 7
        %v6301 = vshll.u32 %v6055, 16
        %v6303 = vor.u32 %v6300, %v6301
        %v6304 = vsel %vm713, %v6296, %v6303
        %v6305 = vrot.slane %v6300, 4
        %v6307 = vshrl.u32 %v6056, 16
        %v6309 = vrot.slane %v6307, 7
        %v6310 = vshll.u32 %v6056, 16
        %v6312 = vor.u32 %v6309, %v6310
        %v6313 = vsel %vm713, %v6305, %v6312
        %v6315 = vshrl.u32 %v6057, 16
        %v6317 = vrot.slane %v6315, 7
        %v6318 = vrot.slane %v6317, 4
        %v6320 = vshrl.u32 %v6058, 16
        %v6322 = vrot.slane %v6320, 7
        %v6323 = vshll.u32 %v6058, 16
        %v6325 = vor.u32 %v6322, %v6323
        %v6326 = vsel %vm713, %v6318, %v6325
        %v6327 = vrot.slane %v6322, 4
        %v6329 = vshrl.u32 %v6059, 16
        %v6331 = vrot.slane %v6329, 7
        %v6332 = vshll.u32 %v6059, 16
        %v6334 = vor.u32 %v6331, %v6332
        %v6335 = vsel %vm713, %v6327, %v6334
        %v6337 = vshrl.u32 %v6060, 16
        %v6339 = vrot.slane %v6337, 7
        %v6340 = vrot.slane %v6339, 4
        %v6342 = vshrl.u32 %v6061, 16
        %v6344 = vrot.slane %v6342, 7
        %v6345 = vshll.u32 %v6061, 16
        %v6347 = vor.u32 %v6344, %v6345
        %v6348 = vsel %vm713, %v6340, %v6347
        %v6349 = vrot.slane %v6344, 4
        %v6351 = vshrl.u32 %v6062, 16
        %v6353 = vrot.slane %v6351, 7
        %v6354 = vshll.u32 %v6062, 16
        %v6356 = vor.u32 %v6353, %v6354
        %v6357 = vsel %vm713, %v6349, %v6356
        %v6359 = vshrl.u32 %v6063, 16
        %v6361 = vrot.slane %v6359, 7
        %v6362 = vrot.slane %v6361, 4
        %v6364 = vshrl.u32 %v6064, 16
        %v6366 = vrot.slane %v6364, 7
        %v6367 = vshll.u32 %v6064, 16
        %v6369 = vor.u32 %v6366, %v6367
        %v6370 = vsel %vm713, %v6362, %v6369
        %v6371 = vrot.slane %v6366, 4
        %v6373 = vshrl.u32 %v6065, 16
        %v6375 = vrot.slane %v6373, 7
        %v6376 = vshll.u32 %v6065, 16
        %v6378 = vor.u32 %v6375, %v6376
        %v6379 = vsel %vm713, %v6371, %v6378
        %v6381 = vshrl.u32 %v6066, 16
        %v6383 = vrot.slane %v6381, 7
        %v6384 = vrot.slane %v6383, 4
        %v6386 = vshrl.u32 %v6067, 16
        %v6388 = vrot.slane %v6386, 7
        %v6389 = vshll.u32 %v6067, 16
        %v6391 = vor.u32 %v6388, %v6389
        %v6392 = vsel %vm713, %v6384, %v6391
        %v6393 = vrot.slane %v6388, 4
        %v6395 = vshrl.u32 %v6068, 16
        %v6397 = vrot.slane %v6395, 7
        %v6398 = vshll.u32 %v6068, 16
        %v6400 = vor.u32 %v6397, %v6398
        %v6401 = vsel %vm713, %v6393, %v6400
        %v6403 = vshrl.u32 %v6069, 16
        %v6405 = vrot.slane %v6403, 7
        %v6406 = vrot.slane %v6405, 4
        %v6408 = vshrl.u32 %v6070, 16
        %v6410 = vrot.slane %v6408, 7
        %v6411 = vshll.u32 %v6070, 16
        %v6413 = vor.u32 %v6410, %v6411
        %v6414 = vsel %vm713, %v6406, %v6413
        %v6415 = vrot.slane %v6410, 4
        %v6417 = vshrl.u32 %v6071, 16
        %v6419 = vrot.slane %v6417, 7
        %v6420 = vshll.u32 %v6071, 16
        %v6422 = vor.u32 %v6419, %v6420
        %v6423 = vsel %vm713, %v6415, %v6422
        %v6424 = vld [vmem:[#allocation8] sm:$0xf]
        %v6425 = vld [vmem:[#allocation8 + $0x4] sm:$0xf]
        %v6426 = vld [vmem:[#allocation8 + $0x8] sm:$0xf]
        %v6427 = vld [vmem:[#allocation8 + $0xc] sm:$0xf]
        %v6428 = vld [vmem:[#allocation8 + $0x10] sm:$0xf]
        %v6429 = vld [vmem:[#allocation8 + $0x14] sm:$0xf]
        %v6430 = vld [vmem:[#allocation8 + $0x18] sm:$0xf]
        %v6431 = vld [vmem:[#allocation8 + $0x1c] sm:$0xf]
        %v6432 = vld [vmem:[#allocation8 + $0x20] sm:$0xf]
        %v6433 = vld [vmem:[#allocation8 + $0x24] sm:$0xf]
        %v6434 = vld [vmem:[#allocation8 + $0x28] sm:$0xf]
        %v6435 = vld [vmem:[#allocation8 + $0x2c] sm:$0xf]
        %v6436 = vld [vmem:[#allocation8 + $0x30] sm:$0xf]
        %v6437 = vld [vmem:[#allocation8 + $0x34] sm:$0xf]
        %v6438 = vld [vmem:[#allocation8 + $0x38] sm:$0xf]
        %v6439 = vld [vmem:[#allocation8 + $0x3c] sm:$0xf]
        %s6440 = scalar_lea.vmem [#allocation8], 64
        %v6441 = vld [vmem:[%s6440] sm:$0xf]
        %v6442 = vld [vmem:[%s6440 + $0x4] sm:$0xf]
        %v6443 = vld [vmem:[%s6440 + $0x8] sm:$0xf]
        %v6444 = vld [vmem:[%s6440 + $0xc] sm:$0xf]
        %v6445 = vld [vmem:[%s6440 + $0x10] sm:$0xf]
        %v6446 = vld [vmem:[%s6440 + $0x14] sm:$0xf]
        %v6447 = vld [vmem:[%s6440 + $0x18] sm:$0xf]
        %v6448 = vld [vmem:[%s6440 + $0x1c] sm:$0xf]
        %v6449 = vld [vmem:[%s6440 + $0x20] sm:$0xf]
        %v6450 = vld [vmem:[%s6440 + $0x24] sm:$0xf]
        %v6451 = vld [vmem:[%s6440 + $0x28] sm:$0xf]
        %v6452 = vld [vmem:[%s6440 + $0x2c] sm:$0xf]
        %v6453 = vld [vmem:[%s6440 + $0x30] sm:$0xf]
        %v6454 = vld [vmem:[%s6440 + $0x34] sm:$0xf]
        %v6455 = vld [vmem:[%s6440 + $0x38] sm:$0xf]
        %v6456 = vld [vmem:[%s6440 + $0x3c] sm:$0xf]
        %v6489 = vunpack.c.l.b16 %v6025
        %v6490 = vunpack.c.l.b16 %v6026
        %v6491 = vunpack.c.l.b16 %v6028
        %v6492 = vunpack.c.l.b16 %v6029
        %v6493 = vunpack.c.l.b16 %v6031
        %v6494 = vunpack.c.l.b16 %v6032
        %v6495 = vunpack.c.l.b16 %v6034
        %v6496 = vunpack.c.l.b16 %v6035
        %v6497 = vunpack.c.l.b16 %v6037
        %v6498 = vunpack.c.l.b16 %v6038
        %v6499 = vunpack.c.l.b16 %v6040
        %v6500 = vunpack.c.l.b16 %v6041
        %v6501 = vunpack.c.l.b16 %v6043
        %v6502 = vunpack.c.l.b16 %v6044
        %v6503 = vunpack.c.l.b16 %v6046
        %v6504 = vunpack.c.l.b16 %v6047
        %v6505 = vunpack.c.l.b16 %v6049
        %v6506 = vunpack.c.l.b16 %v6050
        %v6507 = vunpack.c.l.b16 %v6052
        %v6508 = vunpack.c.l.b16 %v6053
        %v6509 = vunpack.c.l.b16 %v6055
        %v6510 = vunpack.c.l.b16 %v6056
        %v6511 = vunpack.c.l.b16 %v6058
        %v6512 = vunpack.c.l.b16 %v6059
        %v6513 = vunpack.c.l.b16 %v6061
        %v6514 = vunpack.c.l.b16 %v6062
        %v6515 = vunpack.c.l.b16 %v6064
        %v6516 = vunpack.c.l.b16 %v6065
        %v6517 = vunpack.c.l.b16 %v6067
        %v6518 = vunpack.c.l.b16 %v6068
        %v6519 = vunpack.c.l.b16 %v6070
        %v6520 = vunpack.c.l.b16 %v6071
        %v6521 = vpack.c.b16 %v6490, %v6489
        %v6522 = vpack.c.b16 %v6492, %v6491
        %v6523 = vpack.c.b16 %v6494, %v6493
        %v6524 = vpack.c.b16 %v6496, %v6495
        %v6525 = vpack.c.b16 %v6498, %v6497
        %v6526 = vpack.c.b16 %v6500, %v6499
        %v6527 = vpack.c.b16 %v6502, %v6501
        %v6528 = vpack.c.b16 %v6504, %v6503
        %v6529 = vpack.c.b16 %v6506, %v6505
        %v6530 = vpack.c.b16 %v6508, %v6507
        %v6531 = vpack.c.b16 %v6510, %v6509
        %v6532 = vpack.c.b16 %v6512, %v6511
        %v6533 = vpack.c.b16 %v6514, %v6513
        %v6534 = vpack.c.b16 %v6516, %v6515
        %v6535 = vpack.c.b16 %v6518, %v6517
        %v6536 = vpack.c.b16 %v6520, %v6519
        %v6569 = vunpack.c.l.b16 %v6441
        %v6570 = vunpack.c.l.b16 %v6442
        %v6571 = vunpack.c.l.b16 %v6443
        %v6572 = vunpack.c.l.b16 %v6444
        %v6573 = vunpack.c.l.b16 %v6445
        %v6574 = vunpack.c.l.b16 %v6446
        %v6575 = vunpack.c.l.b16 %v6447
        %v6576 = vunpack.c.l.b16 %v6448
        %v6577 = vunpack.c.l.b16 %v6449
        %v6578 = vunpack.c.l.b16 %v6450
        %v6579 = vunpack.c.l.b16 %v6451
        %v6580 = vunpack.c.l.b16 %v6452
        %v6581 = vunpack.c.l.b16 %v6453
        %v6582 = vunpack.c.l.b16 %v6454
        %v6583 = vunpack.c.l.b16 %v6455
        %v6584 = vunpack.c.l.b16 %v6456
        %v6585 = vpack.c.b16 %v6570, %v6569
        %v6586 = vpack.c.b16 %v6572, %v6571
        %v6587 = vpack.c.b16 %v6574, %v6573
        %v6588 = vpack.c.b16 %v6576, %v6575
        %v6589 = vpack.c.b16 %v6578, %v6577
        %v6590 = vpack.c.b16 %v6580, %v6579
        %v6591 = vpack.c.b16 %v6582, %v6581
        %v6592 = vpack.c.b16 %v6584, %v6583
        %6601 = vmatpush.bf16.msra.mxu0 %v6592
        %6602 = vmatpush.bf16.msra.mxu0 %v6591
        %6603 = vmatpush.bf16.msra.mxu0 %v6590
        %6604 = vmatpush.bf16.msra.mxu0 %v6589
        %6605 = vmatpush.bf16.msra.mxu0 %v6588
        %6606 = vmatpush.bf16.msra.mxu0 %v6587
        %6607 = vmatpush.bf16.msra.mxu0 %v6586
        %6608 = vmatpush.bf16.msra.mxu0 %v6585
        %6609 = vmatmul.bf16.gmra.mxu0 %v6521
        %v6610 = vpop.f32.mrf.mxu0
        %v6611 = vadd.f32 0.0, %v6610
        %v6612 = vpop.f32.mrf.mxu0
        %v6613 = vadd.f32 0.0, %v6612
        %6614 = vmatmul.bf16.gmra.mxu0 %v6522
        %v6615 = vpop.f32.mrf.mxu0
        %v6616 = vadd.f32 0.0, %v6615
        %v6617 = vpop.f32.mrf.mxu0
        %v6618 = vadd.f32 0.0, %v6617
        %6619 = vmatmul.bf16.gmra.mxu0 %v6523
        %v6620 = vpop.f32.mrf.mxu0
        %v6621 = vadd.f32 0.0, %v6620
        %v6622 = vpop.f32.mrf.mxu0
        %v6623 = vadd.f32 0.0, %v6622
        %6624 = vmatmul.bf16.gmra.mxu0 %v6524
        %v6625 = vpop.f32.mrf.mxu0
        %v6626 = vadd.f32 0.0, %v6625
        %v6627 = vpop.f32.mrf.mxu0
        %v6628 = vadd.f32 0.0, %v6627
        %6629 = vmatmul.bf16.gmra.mxu0 %v6525
        %v6630 = vpop.f32.mrf.mxu0
        %v6631 = vadd.f32 0.0, %v6630
        %v6632 = vpop.f32.mrf.mxu0
        %v6633 = vadd.f32 0.0, %v6632
        %6634 = vmatmul.bf16.gmra.mxu0 %v6526
        %v6635 = vpop.f32.mrf.mxu0
        %v6636 = vadd.f32 0.0, %v6635
        %v6637 = vpop.f32.mrf.mxu0
        %v6638 = vadd.f32 0.0, %v6637
        %6639 = vmatmul.bf16.gmra.mxu0 %v6527
        %v6640 = vpop.f32.mrf.mxu0
        %v6641 = vadd.f32 0.0, %v6640
        %v6642 = vpop.f32.mrf.mxu0
        %v6643 = vadd.f32 0.0, %v6642
        %6644 = vmatmul.bf16.gmra.mxu0 %v6528
        %v6645 = vpop.f32.mrf.mxu0
        %v6646 = vadd.f32 0.0, %v6645
        %v6647 = vpop.f32.mrf.mxu0
        %v6648 = vadd.f32 0.0, %v6647
        %6649 = vmatmul.bf16.gmra.mxu0 %v6529
        %v6650 = vpop.f32.mrf.mxu0
        %v6651 = vadd.f32 0.0, %v6650
        %v6652 = vpop.f32.mrf.mxu0
        %v6653 = vadd.f32 0.0, %v6652
        %6654 = vmatmul.bf16.gmra.mxu0 %v6530
        %v6655 = vpop.f32.mrf.mxu0
        %v6656 = vadd.f32 0.0, %v6655
        %v6657 = vpop.f32.mrf.mxu0
        %v6658 = vadd.f32 0.0, %v6657
        %6659 = vmatmul.bf16.gmra.mxu0 %v6531
        %v6660 = vpop.f32.mrf.mxu0
        %v6661 = vadd.f32 0.0, %v6660
        %v6662 = vpop.f32.mrf.mxu0
        %v6663 = vadd.f32 0.0, %v6662
        %6664 = vmatmul.bf16.gmra.mxu0 %v6532
        %v6665 = vpop.f32.mrf.mxu0
        %v6666 = vadd.f32 0.0, %v6665
        %v6667 = vpop.f32.mrf.mxu0
        %v6668 = vadd.f32 0.0, %v6667
        %6669 = vmatmul.bf16.gmra.mxu0 %v6533
        %v6670 = vpop.f32.mrf.mxu0
        %v6671 = vadd.f32 0.0, %v6670
        %v6672 = vpop.f32.mrf.mxu0
        %v6673 = vadd.f32 0.0, %v6672
        %6674 = vmatmul.bf16.gmra.mxu0 %v6534
        %v6675 = vpop.f32.mrf.mxu0
        %v6676 = vadd.f32 0.0, %v6675
        %v6677 = vpop.f32.mrf.mxu0
        %v6678 = vadd.f32 0.0, %v6677
        %6679 = vmatmul.bf16.gmra.mxu0 %v6535
        %v6680 = vpop.f32.mrf.mxu0
        %v6681 = vadd.f32 0.0, %v6680
        %v6682 = vpop.f32.mrf.mxu0
        %v6683 = vadd.f32 0.0, %v6682
        %6684 = vmatmul.bf16.gmra.mxu0 %v6536
        %v6685 = vpop.f32.mrf.mxu0
        %v6686 = vadd.f32 0.0, %v6685
        %v6687 = vpop.f32.mrf.mxu0
        %v6688 = vadd.f32 0.0, %v6687
        %6689 = vdwg.mxu0
        %v6690 = vunpack.c.l.b16 %v6084
        %v6691 = vunpack.c.l.b16 %v6093
        %v6692 = vunpack.c.l.b16 %v6106
        %v6693 = vunpack.c.l.b16 %v6115
        %v6694 = vunpack.c.l.b16 %v6128
        %v6695 = vunpack.c.l.b16 %v6137
        %v6696 = vunpack.c.l.b16 %v6150
        %v6697 = vunpack.c.l.b16 %v6159
        %v6698 = vunpack.c.l.b16 %v6172
        %v6699 = vunpack.c.l.b16 %v6181
        %v6700 = vunpack.c.l.b16 %v6194
        %v6701 = vunpack.c.l.b16 %v6203
        %v6702 = vunpack.c.l.b16 %v6216
        %v6703 = vunpack.c.l.b16 %v6225
        %v6704 = vunpack.c.l.b16 %v6238
        %v6705 = vunpack.c.l.b16 %v6247
        %v6706 = vunpack.c.l.b16 %v6260
        %v6707 = vunpack.c.l.b16 %v6269
        %v6708 = vunpack.c.l.b16 %v6282
        %v6709 = vunpack.c.l.b16 %v6291
        %v6710 = vunpack.c.l.b16 %v6304
        %v6711 = vunpack.c.l.b16 %v6313
        %v6712 = vunpack.c.l.b16 %v6326
        %v6713 = vunpack.c.l.b16 %v6335
        %v6714 = vunpack.c.l.b16 %v6348
        %v6715 = vunpack.c.l.b16 %v6357
        %v6716 = vunpack.c.l.b16 %v6370
        %v6717 = vunpack.c.l.b16 %v6379
        %v6718 = vunpack.c.l.b16 %v6392
        %v6719 = vunpack.c.l.b16 %v6401
        %v6720 = vunpack.c.l.b16 %v6414
        %v6721 = vunpack.c.l.b16 %v6423
        %v6722 = vpack.c.b16 %v6691, %v6690
        %v6723 = vpack.c.b16 %v6693, %v6692
        %v6724 = vpack.c.b16 %v6695, %v6694
        %v6725 = vpack.c.b16 %v6697, %v6696
        %v6726 = vpack.c.b16 %v6699, %v6698
        %v6727 = vpack.c.b16 %v6701, %v6700
        %v6728 = vpack.c.b16 %v6703, %v6702
        %v6729 = vpack.c.b16 %v6705, %v6704
        %v6730 = vpack.c.b16 %v6707, %v6706
        %v6731 = vpack.c.b16 %v6709, %v6708
        %v6732 = vpack.c.b16 %v6711, %v6710
        %v6733 = vpack.c.b16 %v6713, %v6712
        %v6734 = vpack.c.b16 %v6715, %v6714
        %v6735 = vpack.c.b16 %v6717, %v6716
        %v6736 = vpack.c.b16 %v6719, %v6718
        %v6737 = vpack.c.b16 %v6721, %v6720
        %v6770 = vunpack.c.l.b16 %v6424
        %v6771 = vunpack.c.l.b16 %v6425
        %v6772 = vunpack.c.l.b16 %v6426
        %v6773 = vunpack.c.l.b16 %v6427
        %v6774 = vunpack.c.l.b16 %v6428
        %v6775 = vunpack.c.l.b16 %v6429
        %v6776 = vunpack.c.l.b16 %v6430
        %v6777 = vunpack.c.l.b16 %v6431
        %v6778 = vunpack.c.l.b16 %v6432
        %v6779 = vunpack.c.l.b16 %v6433
        %v6780 = vunpack.c.l.b16 %v6434
        %v6781 = vunpack.c.l.b16 %v6435
        %v6782 = vunpack.c.l.b16 %v6436
        %v6783 = vunpack.c.l.b16 %v6437
        %v6784 = vunpack.c.l.b16 %v6438
        %v6785 = vunpack.c.l.b16 %v6439
        %v6786 = vpack.c.b16 %v6771, %v6770
        %v6787 = vpack.c.b16 %v6773, %v6772
        %v6788 = vpack.c.b16 %v6775, %v6774
        %v6789 = vpack.c.b16 %v6777, %v6776
        %v6790 = vpack.c.b16 %v6779, %v6778
        %v6791 = vpack.c.b16 %v6781, %v6780
        %v6792 = vpack.c.b16 %v6783, %v6782
        %v6793 = vpack.c.b16 %v6785, %v6784
        %6802 = vmatpush.bf16.msra.mxu0 %v6793
        %6803 = vmatpush.bf16.msra.mxu0 %v6792
        %6804 = vmatpush.bf16.msra.mxu0 %v6791
        %6805 = vmatpush.bf16.msra.mxu0 %v6790
        %6806 = vmatpush.bf16.msra.mxu0 %v6789
        %6807 = vmatpush.bf16.msra.mxu0 %v6788
        %6808 = vmatpush.bf16.msra.mxu0 %v6787
        %6809 = vmatpush.bf16.msra.mxu0 %v6786
        %6810 = vmatmul.bf16.gmra.mxu0 %v6722
        %v6811 = vpop.f32.mrf.mxu0
        %v6812 = vadd.f32 %v6611, %v6811
        %v6813 = vpop.f32.mrf.mxu0
        %v6814 = vadd.f32 %v6613, %v6813
        %6815 = vmatmul.bf16.gmra.mxu0 %v6723
        %v6816 = vpop.f32.mrf.mxu0
        %v6817 = vadd.f32 %v6616, %v6816
        %v6818 = vpop.f32.mrf.mxu0
        %v6819 = vadd.f32 %v6618, %v6818
        %6820 = vmatmul.bf16.gmra.mxu0 %v6724
        %v6821 = vpop.f32.mrf.mxu0
        %v6822 = vadd.f32 %v6621, %v6821
        %v6823 = vpop.f32.mrf.mxu0
        %v6824 = vadd.f32 %v6623, %v6823
        %6825 = vmatmul.bf16.gmra.mxu0 %v6725
        %v6826 = vpop.f32.mrf.mxu0
        %v6827 = vadd.f32 %v6626, %v6826
        %v6828 = vpop.f32.mrf.mxu0
        %v6829 = vadd.f32 %v6628, %v6828
        %6830 = vmatmul.bf16.gmra.mxu0 %v6726
        %v6831 = vpop.f32.mrf.mxu0
        %v6832 = vadd.f32 %v6631, %v6831
        %v6833 = vpop.f32.mrf.mxu0
        %v6834 = vadd.f32 %v6633, %v6833
        %6835 = vmatmul.bf16.gmra.mxu0 %v6727
        %v6836 = vpop.f32.mrf.mxu0
        %v6837 = vadd.f32 %v6636, %v6836
        %v6838 = vpop.f32.mrf.mxu0
        %v6839 = vadd.f32 %v6638, %v6838
        %6840 = vmatmul.bf16.gmra.mxu0 %v6728
        %v6841 = vpop.f32.mrf.mxu0
        %v6842 = vadd.f32 %v6641, %v6841
        %v6843 = vpop.f32.mrf.mxu0
        %v6844 = vadd.f32 %v6643, %v6843
        %6845 = vmatmul.bf16.gmra.mxu0 %v6729
        %v6846 = vpop.f32.mrf.mxu0
        %v6847 = vadd.f32 %v6646, %v6846
        %v6848 = vpop.f32.mrf.mxu0
        %v6849 = vadd.f32 %v6648, %v6848
        %6850 = vmatmul.bf16.gmra.mxu0 %v6730
        %v6851 = vpop.f32.mrf.mxu0
        %v6852 = vadd.f32 %v6651, %v6851
        %v6853 = vpop.f32.mrf.mxu0
        %v6854 = vadd.f32 %v6653, %v6853
        %6855 = vmatmul.bf16.gmra.mxu0 %v6731
        %v6856 = vpop.f32.mrf.mxu0
        %v6857 = vadd.f32 %v6656, %v6856
        %v6858 = vpop.f32.mrf.mxu0
        %v6859 = vadd.f32 %v6658, %v6858
        %6860 = vmatmul.bf16.gmra.mxu0 %v6732
        %v6861 = vpop.f32.mrf.mxu0
        %v6862 = vadd.f32 %v6661, %v6861
        %v6863 = vpop.f32.mrf.mxu0
        %v6864 = vadd.f32 %v6663, %v6863
        %6865 = vmatmul.bf16.gmra.mxu0 %v6733
        %v6866 = vpop.f32.mrf.mxu0
        %v6867 = vadd.f32 %v6666, %v6866
        %v6868 = vpop.f32.mrf.mxu0
        %v6869 = vadd.f32 %v6668, %v6868
        %6870 = vmatmul.bf16.gmra.mxu0 %v6734
        %v6871 = vpop.f32.mrf.mxu0
        %v6872 = vadd.f32 %v6671, %v6871
        %v6873 = vpop.f32.mrf.mxu0
        %v6874 = vadd.f32 %v6673, %v6873
        %6875 = vmatmul.bf16.gmra.mxu0 %v6735
        %v6876 = vpop.f32.mrf.mxu0
        %v6877 = vadd.f32 %v6676, %v6876
        %v6878 = vpop.f32.mrf.mxu0
        %v6879 = vadd.f32 %v6678, %v6878
        %6880 = vmatmul.bf16.gmra.mxu0 %v6736
        %v6881 = vpop.f32.mrf.mxu0
        %v6882 = vadd.f32 %v6681, %v6881
        %v6883 = vpop.f32.mrf.mxu0
        %v6884 = vadd.f32 %v6683, %v6883
        %6885 = vmatmul.bf16.gmra.mxu0 %v6737
        %v6886 = vpop.f32.mrf.mxu0
        %v6887 = vadd.f32 %v6686, %v6886
        %v6888 = vpop.f32.mrf.mxu0
        %v6889 = vadd.f32 %v6688, %v6888
        %6890 = vdwg.mxu0
        %v6891 = vld [vmem:[#allocation2 + $0x4] sm:$0xf]
        %v6892 = vld [vmem:[#allocation2 + $0x8] sm:$0xf]
        %v6893 = vld [vmem:[#allocation2 + $0xc] sm:$0x1]
        %v6894 = vld [vmem:[#allocation2 + $0x14] sm:$0xf]
        %v6895 = vld [vmem:[#allocation2 + $0x18] sm:$0xf]
        %v6896 = vld [vmem:[#allocation2 + $0x1c] sm:$0x1]
        %v6897 = vld [vmem:[#allocation2 + $0x24] sm:$0xf]
        %v6898 = vld [vmem:[#allocation2 + $0x28] sm:$0xf]
        %v6899 = vld [vmem:[#allocation2 + $0x2c] sm:$0x1]
        %v6900 = vld [vmem:[#allocation2 + $0x34] sm:$0xf]
        %v6901 = vld [vmem:[#allocation2 + $0x38] sm:$0xf]
        %v6902 = vld [vmem:[#allocation2 + $0x3c] sm:$0x1]
        %v6903 = vld [vmem:[#allocation2 + $0x44] sm:$0xf]
        %v6904 = vld [vmem:[#allocation2 + $0x48] sm:$0xf]
        %v6905 = vld [vmem:[#allocation2 + $0x4c] sm:$0x1]
        %v6906 = vld [vmem:[#allocation2 + $0x54] sm:$0xf]
        %v6907 = vld [vmem:[#allocation2 + $0x58] sm:$0xf]
        %v6908 = vld [vmem:[#allocation2 + $0x5c] sm:$0x1]
        %v6909 = vld [vmem:[#allocation2 + $0x64] sm:$0xf]
        %v6910 = vld [vmem:[#allocation2 + $0x68] sm:$0xf]
        %v6911 = vld [vmem:[#allocation2 + $0x6c] sm:$0x1]
        %v6912 = vld [vmem:[#allocation2 + $0x74] sm:$0xf]
        %v6913 = vld [vmem:[#allocation2 + $0x78] sm:$0xf]
        %v6914 = vld [vmem:[#allocation2 + $0x7c] sm:$0x1]
        %v6915 = vld [vmem:[#allocation2 + $0x84] sm:$0xf]
        %v6916 = vld [vmem:[#allocation2 + $0x88] sm:$0xf]
        %v6917 = vld [vmem:[#allocation2 + $0x8c] sm:$0x1]
        %v6918 = vld [vmem:[#allocation2 + $0x94] sm:$0xf]
        %v6919 = vld [vmem:[#allocation2 + $0x98] sm:$0xf]
        %v6920 = vld [vmem:[#allocation2 + $0x9c] sm:$0x1]
        %v6921 = vld [vmem:[#allocation2 + $0xa4] sm:$0xf]
        %v6922 = vld [vmem:[#allocation2 + $0xa8] sm:$0xf]
        %v6923 = vld [vmem:[#allocation2 + $0xac] sm:$0x1]
        %v6924 = vld [vmem:[#allocation2 + $0xb4] sm:$0xf]
        %v6925 = vld [vmem:[#allocation2 + $0xb8] sm:$0xf]
        %v6926 = vld [vmem:[#allocation2 + $0xbc] sm:$0x1]
        %v6927 = vld [vmem:[#allocation2 + $0xc4] sm:$0xf]
        %v6928 = vld [vmem:[#allocation2 + $0xc8] sm:$0xf]
        %v6929 = vld [vmem:[#allocation2 + $0xcc] sm:$0x1]
        %v6930 = vld [vmem:[#allocation2 + $0xd4] sm:$0xf]
        %v6931 = vld [vmem:[#allocation2 + $0xd8] sm:$0xf]
        %v6932 = vld [vmem:[#allocation2 + $0xdc] sm:$0x1]
        %v6933 = vld [vmem:[#allocation2 + $0xe4] sm:$0xf]
        %v6934 = vld [vmem:[#allocation2 + $0xe8] sm:$0xf]
        %v6935 = vld [vmem:[#allocation2 + $0xec] sm:$0x1]
        %v6936 = vld [vmem:[#allocation2 + $0xf4] sm:$0xf]
        %v6937 = vld [vmem:[#allocation2 + $0xf8] sm:$0xf]
        %v6938 = vld [vmem:[#allocation2 + $0xfc] sm:$0x1]
        %v6940 = vshrl.u32 %v6891, 16
        %v6942 = vrot.slane %v6940, 4
        %v6943 = vshll.u32 %v6891, 16
        %v6945 = vrot.slane %v6943, 5
        %v6946 = vor.u32 %v6942, %v6945
        %v6947 = vrot.slane %v6946, 4
        %v6949 = vshll.u32 %v6892, 16
        %v6951 = vrot.slane %v6949, 5
        %v6952 = vsel %vm1583, %v6947, %v6951
        %v6953 = vshrl.u32 %v6892, 16
        %v6955 = vrot.slane %v6953, 4
        %v6956 = vor.u32 %v6955, %v6951
        %v6957 = vrot.slane %v6956, 4
        %v6959 = vshll.u32 %v6893, 16
        %v6961 = vrot.slane %v6959, 5
        %v6962 = vsel %vm1583, %v6957, %v6961
        %v6964 = vshrl.u32 %v6894, 16
        %v6966 = vrot.slane %v6964, 4
        %v6967 = vshll.u32 %v6894, 16
        %v6969 = vrot.slane %v6967, 5
        %v6970 = vor.u32 %v6966, %v6969
        %v6971 = vrot.slane %v6970, 4
        %v6973 = vshll.u32 %v6895, 16
        %v6975 = vrot.slane %v6973, 5
        %v6976 = vsel %vm1583, %v6971, %v6975
        %v6977 = vshrl.u32 %v6895, 16
        %v6979 = vrot.slane %v6977, 4
        %v6980 = vor.u32 %v6979, %v6975
        %v6981 = vrot.slane %v6980, 4
        %v6983 = vshll.u32 %v6896, 16
        %v6985 = vrot.slane %v6983, 5
        %v6986 = vsel %vm1583, %v6981, %v6985
        %v6988 = vshrl.u32 %v6897, 16
        %v6990 = vrot.slane %v6988, 4
        %v6991 = vshll.u32 %v6897, 16
        %v6993 = vrot.slane %v6991, 5
        %v6994 = vor.u32 %v6990, %v6993
        %v6995 = vrot.slane %v6994, 4
        %v6997 = vshll.u32 %v6898, 16
        %v6999 = vrot.slane %v6997, 5
        %v7000 = vsel %vm1583, %v6995, %v6999
        %v7001 = vshrl.u32 %v6898, 16
        %v7003 = vrot.slane %v7001, 4
        %v7004 = vor.u32 %v7003, %v6999
        %v7005 = vrot.slane %v7004, 4
        %v7007 = vshll.u32 %v6899, 16
        %v7009 = vrot.slane %v7007, 5
        %v7010 = vsel %vm1583, %v7005, %v7009
        %v7012 = vshrl.u32 %v6900, 16
        %v7014 = vrot.slane %v7012, 4
        %v7015 = vshll.u32 %v6900, 16
        %v7017 = vrot.slane %v7015, 5
        %v7018 = vor.u32 %v7014, %v7017
        %v7019 = vrot.slane %v7018, 4
        %v7021 = vshll.u32 %v6901, 16
        %v7023 = vrot.slane %v7021, 5
        %v7024 = vsel %vm1583, %v7019, %v7023
        %v7025 = vshrl.u32 %v6901, 16
        %v7027 = vrot.slane %v7025, 4
        %v7028 = vor.u32 %v7027, %v7023
        %v7029 = vrot.slane %v7028, 4
        %v7031 = vshll.u32 %v6902, 16
        %v7033 = vrot.slane %v7031, 5
        %v7034 = vsel %vm1583, %v7029, %v7033
        %v7036 = vshrl.u32 %v6903, 16
        %v7038 = vrot.slane %v7036, 4
        %v7039 = vshll.u32 %v6903, 16
        %v7041 = vrot.slane %v7039, 5
        %v7042 = vor.u32 %v7038, %v7041
        %v7043 = vrot.slane %v7042, 4
        %v7045 = vshll.u32 %v6904, 16
        %v7047 = vrot.slane %v7045, 5
        %v7048 = vsel %vm1583, %v7043, %v7047
        %v7049 = vshrl.u32 %v6904, 16
        %v7051 = vrot.slane %v7049, 4
        %v7052 = vor.u32 %v7051, %v7047
        %v7053 = vrot.slane %v7052, 4
        %v7055 = vshll.u32 %v6905, 16
        %v7057 = vrot.slane %v7055, 5
        %v7058 = vsel %vm1583, %v7053, %v7057
        %v7060 = vshrl.u32 %v6906, 16
        %v7062 = vrot.slane %v7060, 4
        %v7063 = vshll.u32 %v6906, 16
        %v7065 = vrot.slane %v7063, 5
        %v7066 = vor.u32 %v7062, %v7065
        %v7067 = vrot.slane %v7066, 4
        %v7069 = vshll.u32 %v6907, 16
        %v7071 = vrot.slane %v7069, 5
        %v7072 = vsel %vm1583, %v7067, %v7071
        %v7073 = vshrl.u32 %v6907, 16
        %v7075 = vrot.slane %v7073, 4
        %v7076 = vor.u32 %v7075, %v7071
        %v7077 = vrot.slane %v7076, 4
        %v7079 = vshll.u32 %v6908, 16
        %v7081 = vrot.slane %v7079, 5
        %v7082 = vsel %vm1583, %v7077, %v7081
        %v7084 = vshrl.u32 %v6909, 16
        %v7086 = vrot.slane %v7084, 4
        %v7087 = vshll.u32 %v6909, 16
        %v7089 = vrot.slane %v7087, 5
        %v7090 = vor.u32 %v7086, %v7089
        %v7091 = vrot.slane %v7090, 4
        %v7093 = vshll.u32 %v6910, 16
        %v7095 = vrot.slane %v7093, 5
        %v7096 = vsel %vm1583, %v7091, %v7095
        %v7097 = vshrl.u32 %v6910, 16
        %v7099 = vrot.slane %v7097, 4
        %v7100 = vor.u32 %v7099, %v7095
        %v7101 = vrot.slane %v7100, 4
        %v7103 = vshll.u32 %v6911, 16
        %v7105 = vrot.slane %v7103, 5
        %v7106 = vsel %vm1583, %v7101, %v7105
        %v7108 = vshrl.u32 %v6912, 16
        %v7110 = vrot.slane %v7108, 4
        %v7111 = vshll.u32 %v6912, 16
        %v7113 = vrot.slane %v7111, 5
        %v7114 = vor.u32 %v7110, %v7113
        %v7115 = vrot.slane %v7114, 4
        %v7117 = vshll.u32 %v6913, 16
        %v7119 = vrot.slane %v7117, 5
        %v7120 = vsel %vm1583, %v7115, %v7119
        %v7121 = vshrl.u32 %v6913, 16
        %v7123 = vrot.slane %v7121, 4
        %v7124 = vor.u32 %v7123, %v7119
        %v7125 = vrot.slane %v7124, 4
        %v7127 = vshll.u32 %v6914, 16
        %v7129 = vrot.slane %v7127, 5
        %v7130 = vsel %vm1583, %v7125, %v7129
        %v7132 = vshrl.u32 %v6915, 16
        %v7134 = vrot.slane %v7132, 4
        %v7135 = vshll.u32 %v6915, 16
        %v7137 = vrot.slane %v7135, 5
        %v7138 = vor.u32 %v7134, %v7137
        %v7139 = vrot.slane %v7138, 4
        %v7141 = vshll.u32 %v6916, 16
        %v7143 = vrot.slane %v7141, 5
        %v7144 = vsel %vm1583, %v7139, %v7143
        %v7145 = vshrl.u32 %v6916, 16
        %v7147 = vrot.slane %v7145, 4
        %v7148 = vor.u32 %v7147, %v7143
        %v7149 = vrot.slane %v7148, 4
        %v7151 = vshll.u32 %v6917, 16
        %v7153 = vrot.slane %v7151, 5
        %v7154 = vsel %vm1583, %v7149, %v7153
        %v7156 = vshrl.u32 %v6918, 16
        %v7158 = vrot.slane %v7156, 4
        %v7159 = vshll.u32 %v6918, 16
        %v7161 = vrot.slane %v7159, 5
        %v7162 = vor.u32 %v7158, %v7161
        %v7163 = vrot.slane %v7162, 4
        %v7165 = vshll.u32 %v6919, 16
        %v7167 = vrot.slane %v7165, 5
        %v7168 = vsel %vm1583, %v7163, %v7167
        %v7169 = vshrl.u32 %v6919, 16
        %v7171 = vrot.slane %v7169, 4
        %v7172 = vor.u32 %v7171, %v7167
        %v7173 = vrot.slane %v7172, 4
        %v7175 = vshll.u32 %v6920, 16
        %v7177 = vrot.slane %v7175, 5
        %v7178 = vsel %vm1583, %v7173, %v7177
        %v7180 = vshrl.u32 %v6921, 16
        %v7182 = vrot.slane %v7180, 4
        %v7183 = vshll.u32 %v6921, 16
        %v7185 = vrot.slane %v7183, 5
        %v7186 = vor.u32 %v7182, %v7185
        %v7187 = vrot.slane %v7186, 4
        %v7189 = vshll.u32 %v6922, 16
        %v7191 = vrot.slane %v7189, 5
        %v7192 = vsel %vm1583, %v7187, %v7191
        %v7193 = vshrl.u32 %v6922, 16
        %v7195 = vrot.slane %v7193, 4
        %v7196 = vor.u32 %v7195, %v7191
        %v7197 = vrot.slane %v7196, 4
        %v7199 = vshll.u32 %v6923, 16
        %v7201 = vrot.slane %v7199, 5
        %v7202 = vsel %vm1583, %v7197, %v7201
        %v7204 = vshrl.u32 %v6924, 16
        %v7206 = vrot.slane %v7204, 4
        %v7207 = vshll.u32 %v6924, 16
        %v7209 = vrot.slane %v7207, 5
        %v7210 = vor.u32 %v7206, %v7209
        %v7211 = vrot.slane %v7210, 4
        %v7213 = vshll.u32 %v6925, 16
        %v7215 = vrot.slane %v7213, 5
        %v7216 = vsel %vm1583, %v7211, %v7215
        %v7217 = vshrl.u32 %v6925, 16
        %v7219 = vrot.slane %v7217, 4
        %v7220 = vor.u32 %v7219, %v7215
        %v7221 = vrot.slane %v7220, 4
        %v7223 = vshll.u32 %v6926, 16
        %v7225 = vrot.slane %v7223, 5
        %v7226 = vsel %vm1583, %v7221, %v7225
        %v7228 = vshrl.u32 %v6927, 16
        %v7230 = vrot.slane %v7228, 4
        %v7231 = vshll.u32 %v6927, 16
        %v7233 = vrot.slane %v7231, 5
        %v7234 = vor.u32 %v7230, %v7233
        %v7235 = vrot.slane %v7234, 4
        %v7237 = vshll.u32 %v6928, 16
        %v7239 = vrot.slane %v7237, 5
        %v7240 = vsel %vm1583, %v7235, %v7239
        %v7241 = vshrl.u32 %v6928, 16
        %v7243 = vrot.slane %v7241, 4
        %v7244 = vor.u32 %v7243, %v7239
        %v7245 = vrot.slane %v7244, 4
        %v7247 = vshll.u32 %v6929, 16
        %v7249 = vrot.slane %v7247, 5
        %v7250 = vsel %vm1583, %v7245, %v7249
        %v7252 = vshrl.u32 %v6930, 16
        %v7254 = vrot.slane %v7252, 4
        %v7255 = vshll.u32 %v6930, 16
        %v7257 = vrot.slane %v7255, 5
        %v7258 = vor.u32 %v7254, %v7257
        %v7259 = vrot.slane %v7258, 4
        %v7261 = vshll.u32 %v6931, 16
        %v7263 = vrot.slane %v7261, 5
        %v7264 = vsel %vm1583, %v7259, %v7263
        %v7265 = vshrl.u32 %v6931, 16
        %v7267 = vrot.slane %v7265, 4
        %v7268 = vor.u32 %v7267, %v7263
        %v7269 = vrot.slane %v7268, 4
        %v7271 = vshll.u32 %v6932, 16
        %v7273 = vrot.slane %v7271, 5
        %v7274 = vsel %vm1583, %v7269, %v7273
        %v7276 = vshrl.u32 %v6933, 16
        %v7278 = vrot.slane %v7276, 4
        %v7279 = vshll.u32 %v6933, 16
        %v7281 = vrot.slane %v7279, 5
        %v7282 = vor.u32 %v7278, %v7281
        %v7283 = vrot.slane %v7282, 4
        %v7285 = vshll.u32 %v6934, 16
        %v7287 = vrot.slane %v7285, 5
        %v7288 = vsel %vm1583, %v7283, %v7287
        %v7289 = vshrl.u32 %v6934, 16
        %v7291 = vrot.slane %v7289, 4
        %v7292 = vor.u32 %v7291, %v7287
        %v7293 = vrot.slane %v7292, 4
        %v7295 = vshll.u32 %v6935, 16
        %v7297 = vrot.slane %v7295, 5
        %v7298 = vsel %vm1583, %v7293, %v7297
        %v7300 = vshrl.u32 %v6936, 16
        %v7302 = vrot.slane %v7300, 4
        %v7303 = vshll.u32 %v6936, 16
        %v7305 = vrot.slane %v7303, 5
        %v7306 = vor.u32 %v7302, %v7305
        %v7307 = vrot.slane %v7306, 4
        %v7309 = vshll.u32 %v6937, 16
        %v7311 = vrot.slane %v7309, 5
        %v7312 = vsel %vm1583, %v7307, %v7311
        %v7313 = vshrl.u32 %v6937, 16
        %v7315 = vrot.slane %v7313, 4
        %v7316 = vor.u32 %v7315, %v7311
        %v7317 = vrot.slane %v7316, 4
        %v7319 = vshll.u32 %v6938, 16
        %v7321 = vrot.slane %v7319, 5
        %v7322 = vsel %vm1583, %v7317, %v7321
        %s7323 = scalar_lea.vmem [#allocation8], 128
        %v7324 = vld [vmem:[%s7323] sm:$0xf]
        %v7325 = vld [vmem:[%s7323 + $0x4] sm:$0xf]
        %v7326 = vld [vmem:[%s7323 + $0x8] sm:$0xf]
        %v7327 = vld [vmem:[%s7323 + $0xc] sm:$0xf]
        %v7328 = vld [vmem:[%s7323 + $0x10] sm:$0xf]
        %v7329 = vld [vmem:[%s7323 + $0x14] sm:$0xf]
        %v7330 = vld [vmem:[%s7323 + $0x18] sm:$0xf]
        %v7331 = vld [vmem:[%s7323 + $0x1c] sm:$0xf]
        %v7332 = vld [vmem:[%s7323 + $0x20] sm:$0xf]
        %v7333 = vld [vmem:[%s7323 + $0x24] sm:$0xf]
        %v7334 = vld [vmem:[%s7323 + $0x28] sm:$0xf]
        %v7335 = vld [vmem:[%s7323 + $0x2c] sm:$0xf]
        %v7336 = vld [vmem:[%s7323 + $0x30] sm:$0xf]
        %v7337 = vld [vmem:[%s7323 + $0x34] sm:$0xf]
        %v7338 = vld [vmem:[%s7323 + $0x38] sm:$0xf]
        %v7339 = vld [vmem:[%s7323 + $0x3c] sm:$0xf]
        %v7340 = vunpack.c.l.b16 %v6952
        %v7341 = vunpack.c.l.b16 %v6962
        %v7342 = vunpack.c.l.b16 %v6976
        %v7343 = vunpack.c.l.b16 %v6986
        %v7344 = vunpack.c.l.b16 %v7000
        %v7345 = vunpack.c.l.b16 %v7010
        %v7346 = vunpack.c.l.b16 %v7024
        %v7347 = vunpack.c.l.b16 %v7034
        %v7348 = vunpack.c.l.b16 %v7048
        %v7349 = vunpack.c.l.b16 %v7058
        %v7350 = vunpack.c.l.b16 %v7072
        %v7351 = vunpack.c.l.b16 %v7082
        %v7352 = vunpack.c.l.b16 %v7096
        %v7353 = vunpack.c.l.b16 %v7106
        %v7354 = vunpack.c.l.b16 %v7120
        %v7355 = vunpack.c.l.b16 %v7130
        %v7356 = vunpack.c.l.b16 %v7144
        %v7357 = vunpack.c.l.b16 %v7154
        %v7358 = vunpack.c.l.b16 %v7168
        %v7359 = vunpack.c.l.b16 %v7178
        %v7360 = vunpack.c.l.b16 %v7192
        %v7361 = vunpack.c.l.b16 %v7202
        %v7362 = vunpack.c.l.b16 %v7216
        %v7363 = vunpack.c.l.b16 %v7226
        %v7364 = vunpack.c.l.b16 %v7240
        %v7365 = vunpack.c.l.b16 %v7250
        %v7366 = vunpack.c.l.b16 %v7264
        %v7367 = vunpack.c.l.b16 %v7274
        %v7368 = vunpack.c.l.b16 %v7288
        %v7369 = vunpack.c.l.b16 %v7298
        %v7370 = vunpack.c.l.b16 %v7312
        %v7371 = vunpack.c.l.b16 %v7322
        %v7372 = vpack.c.b16 %v7341, %v7340
        %v7373 = vpack.c.b16 %v7343, %v7342
        %v7374 = vpack.c.b16 %v7345, %v7344
        %v7375 = vpack.c.b16 %v7347, %v7346
        %v7376 = vpack.c.b16 %v7349, %v7348
        %v7377 = vpack.c.b16 %v7351, %v7350
        %v7378 = vpack.c.b16 %v7353, %v7352
        %v7379 = vpack.c.b16 %v7355, %v7354
        %v7380 = vpack.c.b16 %v7357, %v7356
        %v7381 = vpack.c.b16 %v7359, %v7358
        %v7382 = vpack.c.b16 %v7361, %v7360
        %v7383 = vpack.c.b16 %v7363, %v7362
        %v7384 = vpack.c.b16 %v7365, %v7364
        %v7385 = vpack.c.b16 %v7367, %v7366
        %v7386 = vpack.c.b16 %v7369, %v7368
        %v7387 = vpack.c.b16 %v7371, %v7370
        %v7420 = vunpack.c.l.b16 %v7324
        %v7421 = vunpack.c.l.b16 %v7325
        %v7422 = vunpack.c.l.b16 %v7326
        %v7423 = vunpack.c.l.b16 %v7327
        %v7424 = vunpack.c.l.b16 %v7328
        %v7425 = vunpack.c.l.b16 %v7329
        %v7426 = vunpack.c.l.b16 %v7330
        %v7427 = vunpack.c.l.b16 %v7331
        %v7428 = vunpack.c.l.b16 %v7332
        %v7429 = vunpack.c.l.b16 %v7333
        %v7430 = vunpack.c.l.b16 %v7334
        %v7431 = vunpack.c.l.b16 %v7335
        %v7432 = vunpack.c.l.b16 %v7336
        %v7433 = vunpack.c.l.b16 %v7337
        %v7434 = vunpack.c.l.b16 %v7338
        %v7435 = vunpack.c.l.b16 %v7339
        %v7436 = vpack.c.b16 %v7421, %v7420
        %v7437 = vpack.c.b16 %v7423, %v7422
        %v7438 = vpack.c.b16 %v7425, %v7424
        %v7439 = vpack.c.b16 %v7427, %v7426
        %v7440 = vpack.c.b16 %v7429, %v7428
        %v7441 = vpack.c.b16 %v7431, %v7430
        %v7442 = vpack.c.b16 %v7433, %v7432
        %v7443 = vpack.c.b16 %v7435, %v7434
        %7452 = vmatpush.bf16.msra.mxu0 %v7443
        %7453 = vmatpush.bf16.msra.mxu0 %v7442
        %7454 = vmatpush.bf16.msra.mxu0 %v7441
        %7455 = vmatpush.bf16.msra.mxu0 %v7440
        %7456 = vmatpush.bf16.msra.mxu0 %v7439
        %7457 = vmatpush.bf16.msra.mxu0 %v7438
        %7458 = vmatpush.bf16.msra.mxu0 %v7437
        %7459 = vmatpush.bf16.msra.mxu0 %v7436
        %7460 = vmatmul.bf16.gmra.mxu0 %v7372
        %v7461 = vpop.f32.mrf.mxu0
        %v7462 = vadd.f32 0.0, %v7461
        %v7463 = vpop.f32.mrf.mxu0
        %v7464 = vadd.f32 0.0, %v7463
        %7465 = vmatmul.bf16.gmra.mxu0 %v7373
        %v7466 = vpop.f32.mrf.mxu0
        %v7467 = vadd.f32 0.0, %v7466
        %v7468 = vpop.f32.mrf.mxu0
        %v7469 = vadd.f32 0.0, %v7468
        %7470 = vmatmul.bf16.gmra.mxu0 %v7374
        %v7471 = vpop.f32.mrf.mxu0
        %v7472 = vadd.f32 0.0, %v7471
        %v7473 = vpop.f32.mrf.mxu0
        %v7474 = vadd.f32 0.0, %v7473
        %7475 = vmatmul.bf16.gmra.mxu0 %v7375
        %v7476 = vpop.f32.mrf.mxu0
        %v7477 = vadd.f32 0.0, %v7476
        %v7478 = vpop.f32.mrf.mxu0
        %v7479 = vadd.f32 0.0, %v7478
        %7480 = vmatmul.bf16.gmra.mxu0 %v7376
        %v7481 = vpop.f32.mrf.mxu0
        %v7482 = vadd.f32 0.0, %v7481
        %v7483 = vpop.f32.mrf.mxu0
        %v7484 = vadd.f32 0.0, %v7483
        %7485 = vmatmul.bf16.gmra.mxu0 %v7377
        %v7486 = vpop.f32.mrf.mxu0
        %v7487 = vadd.f32 0.0, %v7486
        %v7488 = vpop.f32.mrf.mxu0
        %v7489 = vadd.f32 0.0, %v7488
        %7490 = vmatmul.bf16.gmra.mxu0 %v7378
        %v7491 = vpop.f32.mrf.mxu0
        %v7492 = vadd.f32 0.0, %v7491
        %v7493 = vpop.f32.mrf.mxu0
        %v7494 = vadd.f32 0.0, %v7493
        %7495 = vmatmul.bf16.gmra.mxu0 %v7379
        %v7496 = vpop.f32.mrf.mxu0
        %v7497 = vadd.f32 0.0, %v7496
        %v7498 = vpop.f32.mrf.mxu0
        %v7499 = vadd.f32 0.0, %v7498
        %7500 = vmatmul.bf16.gmra.mxu0 %v7380
        %v7501 = vpop.f32.mrf.mxu0
        %v7502 = vadd.f32 0.0, %v7501
        %v7503 = vpop.f32.mrf.mxu0
        %v7504 = vadd.f32 0.0, %v7503
        %7505 = vmatmul.bf16.gmra.mxu0 %v7381
        %v7506 = vpop.f32.mrf.mxu0
        %v7507 = vadd.f32 0.0, %v7506
        %v7508 = vpop.f32.mrf.mxu0
        %v7509 = vadd.f32 0.0, %v7508
        %7510 = vmatmul.bf16.gmra.mxu0 %v7382
        %v7511 = vpop.f32.mrf.mxu0
        %v7512 = vadd.f32 0.0, %v7511
        %v7513 = vpop.f32.mrf.mxu0
        %v7514 = vadd.f32 0.0, %v7513
        %7515 = vmatmul.bf16.gmra.mxu0 %v7383
        %v7516 = vpop.f32.mrf.mxu0
        %v7517 = vadd.f32 0.0, %v7516
        %v7518 = vpop.f32.mrf.mxu0
        %v7519 = vadd.f32 0.0, %v7518
        %7520 = vmatmul.bf16.gmra.mxu0 %v7384
        %v7521 = vpop.f32.mrf.mxu0
        %v7522 = vadd.f32 0.0, %v7521
        %v7523 = vpop.f32.mrf.mxu0
        %v7524 = vadd.f32 0.0, %v7523
        %7525 = vmatmul.bf16.gmra.mxu0 %v7385
        %v7526 = vpop.f32.mrf.mxu0
        %v7527 = vadd.f32 0.0, %v7526
        %v7528 = vpop.f32.mrf.mxu0
        %v7529 = vadd.f32 0.0, %v7528
        %7530 = vmatmul.bf16.gmra.mxu0 %v7386
        %v7531 = vpop.f32.mrf.mxu0
        %v7532 = vadd.f32 0.0, %v7531
        %v7533 = vpop.f32.mrf.mxu0
        %v7534 = vadd.f32 0.0, %v7533
        %7535 = vmatmul.bf16.gmra.mxu0 %v7387
        %v7536 = vpop.f32.mrf.mxu0
        %v7537 = vadd.f32 0.0, %v7536
        %v7538 = vpop.f32.mrf.mxu0
        %v7539 = vadd.f32 0.0, %v7538
        %7540 = vdwg.mxu0
        %v7541 = vadd.f32 %v6812, %v7462
        %v7542 = vadd.f32 %v6814, %v7464
        %v7543 = vadd.f32 %v6817, %v7467
        %v7544 = vadd.f32 %v6819, %v7469
        %v7545 = vadd.f32 %v6822, %v7472
        %v7546 = vadd.f32 %v6824, %v7474
        %v7547 = vadd.f32 %v6827, %v7477
        %v7548 = vadd.f32 %v6829, %v7479
        %v7549 = vadd.f32 %v6832, %v7482
        %v7550 = vadd.f32 %v6834, %v7484
        %v7551 = vadd.f32 %v6837, %v7487
        %v7552 = vadd.f32 %v6839, %v7489
        %v7553 = vadd.f32 %v6842, %v7492
        %v7554 = vadd.f32 %v6844, %v7494
        %v7555 = vadd.f32 %v6847, %v7497
        %v7556 = vadd.f32 %v6849, %v7499
        %v7557 = vadd.f32 %v6852, %v7502
        %v7558 = vadd.f32 %v6854, %v7504
        %v7559 = vadd.f32 %v6857, %v7507
        %v7560 = vadd.f32 %v6859, %v7509
        %v7561 = vadd.f32 %v6862, %v7512
        %v7562 = vadd.f32 %v6864, %v7514
        %v7563 = vadd.f32 %v6867, %v7517
        %v7564 = vadd.f32 %v6869, %v7519
        %v7565 = vadd.f32 %v6872, %v7522
        %v7566 = vadd.f32 %v6874, %v7524
        %v7567 = vadd.f32 %v6877, %v7527
        %v7568 = vadd.f32 %v6879, %v7529
        %v7569 = vadd.f32 %v6882, %v7532
        %v7570 = vadd.f32 %v6884, %v7534
        %v7571 = vadd.f32 %v6887, %v7537
        %v7572 = vadd.f32 %v6889, %v7539
        %v7573 = vld [vmem:[%s396] sm:$0x8]
        %v7574 = vld [vmem:[%s396 + $0x4] sm:$0xf]
        %v7575 = vld [vmem:[%s396 + $0x8] sm:$0xf]
        %v7576 = vld [vmem:[%s396 + $0x10] sm:$0x8]
        %v7577 = vld [vmem:[%s396 + $0x14] sm:$0xf]
        %v7578 = vld [vmem:[%s396 + $0x18] sm:$0xf]
        %v7579 = vld [vmem:[%s396 + $0x20] sm:$0x8]
        %v7580 = vld [vmem:[%s396 + $0x24] sm:$0xf]
        %v7581 = vld [vmem:[%s396 + $0x28] sm:$0xf]
        %v7582 = vld [vmem:[%s396 + $0x30] sm:$0x8]
        %v7583 = vld [vmem:[%s396 + $0x34] sm:$0xf]
        %v7584 = vld [vmem:[%s396 + $0x38] sm:$0xf]
        %v7585 = vld [vmem:[%s396 + $0x40] sm:$0x8]
        %v7586 = vld [vmem:[%s396 + $0x44] sm:$0xf]
        %v7587 = vld [vmem:[%s396 + $0x48] sm:$0xf]
        %v7588 = vld [vmem:[%s396 + $0x50] sm:$0x8]
        %v7589 = vld [vmem:[%s396 + $0x54] sm:$0xf]
        %v7590 = vld [vmem:[%s396 + $0x58] sm:$0xf]
        %v7591 = vld [vmem:[%s396 + $0x60] sm:$0x8]
        %v7592 = vld [vmem:[%s396 + $0x64] sm:$0xf]
        %v7593 = vld [vmem:[%s396 + $0x68] sm:$0xf]
        %v7594 = vld [vmem:[%s396 + $0x70] sm:$0x8]
        %v7595 = vld [vmem:[%s396 + $0x74] sm:$0xf]
        %v7596 = vld [vmem:[%s396 + $0x78] sm:$0xf]
        %v7597 = vld [vmem:[%s396 + $0x80] sm:$0x8]
        %v7598 = vld [vmem:[%s396 + $0x84] sm:$0xf]
        %v7599 = vld [vmem:[%s396 + $0x88] sm:$0xf]
        %v7600 = vld [vmem:[%s396 + $0x90] sm:$0x8]
        %v7601 = vld [vmem:[%s396 + $0x94] sm:$0xf]
        %v7602 = vld [vmem:[%s396 + $0x98] sm:$0xf]
        %v7603 = vld [vmem:[%s396 + $0xa0] sm:$0x8]
        %v7604 = vld [vmem:[%s396 + $0xa4] sm:$0xf]
        %v7605 = vld [vmem:[%s396 + $0xa8] sm:$0xf]
        %v7606 = vld [vmem:[%s396 + $0xb0] sm:$0x8]
        %v7607 = vld [vmem:[%s396 + $0xb4] sm:$0xf]
        %v7608 = vld [vmem:[%s396 + $0xb8] sm:$0xf]
        %v7609 = vld [vmem:[%s396 + $0xc0] sm:$0x8]
        %v7610 = vld [vmem:[%s396 + $0xc4] sm:$0xf]
        %v7611 = vld [vmem:[%s396 + $0xc8] sm:$0xf]
        %v7612 = vld [vmem:[%s396 + $0xd0] sm:$0x8]
        %v7613 = vld [vmem:[%s396 + $0xd4] sm:$0xf]
        %v7614 = vld [vmem:[%s396 + $0xd8] sm:$0xf]
        %v7615 = vld [vmem:[%s396 + $0xe0] sm:$0x8]
        %v7616 = vld [vmem:[%s396 + $0xe4] sm:$0xf]
        %v7617 = vld [vmem:[%s396 + $0xe8] sm:$0xf]
        %v7618 = vld [vmem:[%s396 + $0xf0] sm:$0x8]
        %v7619 = vld [vmem:[%s396 + $0xf4] sm:$0xf]
        %v7620 = vld [vmem:[%s396 + $0xf8] sm:$0xf]
        %v7622 = vshrl.u32 %v7573, 16
        %v7624 = vrot.slane %v7622, 7
        %v7625 = vrot.slane %v7624, 4
        %v7627 = vshrl.u32 %v7574, 16
        %v7629 = vrot.slane %v7627, 7
        %v7630 = vshll.u32 %v7574, 16
        %v7632 = vor.u32 %v7629, %v7630
        %v7633 = vsel %vm713, %v7625, %v7632
        %v7634 = vrot.slane %v7629, 4
        %v7636 = vshrl.u32 %v7575, 16
        %v7638 = vrot.slane %v7636, 7
        %v7639 = vshll.u32 %v7575, 16
        %v7641 = vor.u32 %v7638, %v7639
        %v7642 = vsel %vm713, %v7634, %v7641
        %v7644 = vshrl.u32 %v7576, 16
        %v7646 = vrot.slane %v7644, 7
        %v7647 = vrot.slane %v7646, 4
        %v7649 = vshrl.u32 %v7577, 16
        %v7651 = vrot.slane %v7649, 7
        %v7652 = vshll.u32 %v7577, 16
        %v7654 = vor.u32 %v7651, %v7652
        %v7655 = vsel %vm713, %v7647, %v7654
        %v7656 = vrot.slane %v7651, 4
        %v7658 = vshrl.u32 %v7578, 16
        %v7660 = vrot.slane %v7658, 7
        %v7661 = vshll.u32 %v7578, 16
        %v7663 = vor.u32 %v7660, %v7661
        %v7664 = vsel %vm713, %v7656, %v7663
        %v7666 = vshrl.u32 %v7579, 16
        %v7668 = vrot.slane %v7666, 7
        %v7669 = vrot.slane %v7668, 4
        %v7671 = vshrl.u32 %v7580, 16
        %v7673 = vrot.slane %v7671, 7
        %v7674 = vshll.u32 %v7580, 16
        %v7676 = vor.u32 %v7673, %v7674
        %v7677 = vsel %vm713, %v7669, %v7676
        %v7678 = vrot.slane %v7673, 4
        %v7680 = vshrl.u32 %v7581, 16
        %v7682 = vrot.slane %v7680, 7
        %v7683 = vshll.u32 %v7581, 16
        %v7685 = vor.u32 %v7682, %v7683
        %v7686 = vsel %vm713, %v7678, %v7685
        %v7688 = vshrl.u32 %v7582, 16
        %v7690 = vrot.slane %v7688, 7
        %v7691 = vrot.slane %v7690, 4
        %v7693 = vshrl.u32 %v7583, 16
        %v7695 = vrot.slane %v7693, 7
        %v7696 = vshll.u32 %v7583, 16
        %v7698 = vor.u32 %v7695, %v7696
        %v7699 = vsel %vm713, %v7691, %v7698
        %v7700 = vrot.slane %v7695, 4
        %v7702 = vshrl.u32 %v7584, 16
        %v7704 = vrot.slane %v7702, 7
        %v7705 = vshll.u32 %v7584, 16
        %v7707 = vor.u32 %v7704, %v7705
        %v7708 = vsel %vm713, %v7700, %v7707
        %v7710 = vshrl.u32 %v7585, 16
        %v7712 = vrot.slane %v7710, 7
        %v7713 = vrot.slane %v7712, 4
        %v7715 = vshrl.u32 %v7586, 16
        %v7717 = vrot.slane %v7715, 7
        %v7718 = vshll.u32 %v7586, 16
        %v7720 = vor.u32 %v7717, %v7718
        %v7721 = vsel %vm713, %v7713, %v7720
        %v7722 = vrot.slane %v7717, 4
        %v7724 = vshrl.u32 %v7587, 16
        %v7726 = vrot.slane %v7724, 7
        %v7727 = vshll.u32 %v7587, 16
        %v7729 = vor.u32 %v7726, %v7727
        %v7730 = vsel %vm713, %v7722, %v7729
        %v7732 = vshrl.u32 %v7588, 16
        %v7734 = vrot.slane %v7732, 7
        %v7735 = vrot.slane %v7734, 4
        %v7737 = vshrl.u32 %v7589, 16
        %v7739 = vrot.slane %v7737, 7
        %v7740 = vshll.u32 %v7589, 16
        %v7742 = vor.u32 %v7739, %v7740
        %v7743 = vsel %vm713, %v7735, %v7742
        %v7744 = vrot.slane %v7739, 4
        %v7746 = vshrl.u32 %v7590, 16
        %v7748 = vrot.slane %v7746, 7
        %v7749 = vshll.u32 %v7590, 16
        %v7751 = vor.u32 %v7748, %v7749
        %v7752 = vsel %vm713, %v7744, %v7751
        %v7754 = vshrl.u32 %v7591, 16
        %v7756 = vrot.slane %v7754, 7
        %v7757 = vrot.slane %v7756, 4
        %v7759 = vshrl.u32 %v7592, 16
        %v7761 = vrot.slane %v7759, 7
        %v7762 = vshll.u32 %v7592, 16
        %v7764 = vor.u32 %v7761, %v7762
        %v7765 = vsel %vm713, %v7757, %v7764
        %v7766 = vrot.slane %v7761, 4
        %v7768 = vshrl.u32 %v7593, 16
        %v7770 = vrot.slane %v7768, 7
        %v7771 = vshll.u32 %v7593, 16
        %v7773 = vor.u32 %v7770, %v7771
        %v7774 = vsel %vm713, %v7766, %v7773
        %v7776 = vshrl.u32 %v7594, 16
        %v7778 = vrot.slane %v7776, 7
        %v7779 = vrot.slane %v7778, 4
        %v7781 = vshrl.u32 %v7595, 16
        %v7783 = vrot.slane %v7781, 7
        %v7784 = vshll.u32 %v7595, 16
        %v7786 = vor.u32 %v7783, %v7784
        %v7787 = vsel %vm713, %v7779, %v7786
        %v7788 = vrot.slane %v7783, 4
        %v7790 = vshrl.u32 %v7596, 16
        %v7792 = vrot.slane %v7790, 7
        %v7793 = vshll.u32 %v7596, 16
        %v7795 = vor.u32 %v7792, %v7793
        %v7796 = vsel %vm713, %v7788, %v7795
        %v7798 = vshrl.u32 %v7597, 16
        %v7800 = vrot.slane %v7798, 7
        %v7801 = vrot.slane %v7800, 4
        %v7803 = vshrl.u32 %v7598, 16
        %v7805 = vrot.slane %v7803, 7
        %v7806 = vshll.u32 %v7598, 16
        %v7808 = vor.u32 %v7805, %v7806
        %v7809 = vsel %vm713, %v7801, %v7808
        %v7810 = vrot.slane %v7805, 4
        %v7812 = vshrl.u32 %v7599, 16
        %v7814 = vrot.slane %v7812, 7
        %v7815 = vshll.u32 %v7599, 16
        %v7817 = vor.u32 %v7814, %v7815
        %v7818 = vsel %vm713, %v7810, %v7817
        %v7820 = vshrl.u32 %v7600, 16
        %v7822 = vrot.slane %v7820, 7
        %v7823 = vrot.slane %v7822, 4
        %v7825 = vshrl.u32 %v7601, 16
        %v7827 = vrot.slane %v7825, 7
        %v7828 = vshll.u32 %v7601, 16
        %v7830 = vor.u32 %v7827, %v7828
        %v7831 = vsel %vm713, %v7823, %v7830
        %v7832 = vrot.slane %v7827, 4
        %v7834 = vshrl.u32 %v7602, 16
        %v7836 = vrot.slane %v7834, 7
        %v7837 = vshll.u32 %v7602, 16
        %v7839 = vor.u32 %v7836, %v7837
        %v7840 = vsel %vm713, %v7832, %v7839
        %v7842 = vshrl.u32 %v7603, 16
        %v7844 = vrot.slane %v7842, 7
        %v7845 = vrot.slane %v7844, 4
        %v7847 = vshrl.u32 %v7604, 16
        %v7849 = vrot.slane %v7847, 7
        %v7850 = vshll.u32 %v7604, 16
        %v7852 = vor.u32 %v7849, %v7850
        %v7853 = vsel %vm713, %v7845, %v7852
        %v7854 = vrot.slane %v7849, 4
        %v7856 = vshrl.u32 %v7605, 16
        %v7858 = vrot.slane %v7856, 7
        %v7859 = vshll.u32 %v7605, 16
        %v7861 = vor.u32 %v7858, %v7859
        %v7862 = vsel %vm713, %v7854, %v7861
        %v7864 = vshrl.u32 %v7606, 16
        %v7866 = vrot.slane %v7864, 7
        %v7867 = vrot.slane %v7866, 4
        %v7869 = vshrl.u32 %v7607, 16
        %v7871 = vrot.slane %v7869, 7
        %v7872 = vshll.u32 %v7607, 16
        %v7874 = vor.u32 %v7871, %v7872
        %v7875 = vsel %vm713, %v7867, %v7874
        %v7876 = vrot.slane %v7871, 4
        %v7878 = vshrl.u32 %v7608, 16
        %v7880 = vrot.slane %v7878, 7
        %v7881 = vshll.u32 %v7608, 16
        %v7883 = vor.u32 %v7880, %v7881
        %v7884 = vsel %vm713, %v7876, %v7883
        %v7886 = vshrl.u32 %v7609, 16
        %v7888 = vrot.slane %v7886, 7
        %v7889 = vrot.slane %v7888, 4
        %v7891 = vshrl.u32 %v7610, 16
        %v7893 = vrot.slane %v7891, 7
        %v7894 = vshll.u32 %v7610, 16
        %v7896 = vor.u32 %v7893, %v7894
        %v7897 = vsel %vm713, %v7889, %v7896
        %v7898 = vrot.slane %v7893, 4
        %v7900 = vshrl.u32 %v7611, 16
        %v7902 = vrot.slane %v7900, 7
        %v7903 = vshll.u32 %v7611, 16
        %v7905 = vor.u32 %v7902, %v7903
        %v7906 = vsel %vm713, %v7898, %v7905
        %v7908 = vshrl.u32 %v7612, 16
        %v7910 = vrot.slane %v7908, 7
        %v7911 = vrot.slane %v7910, 4
        %v7913 = vshrl.u32 %v7613, 16
        %v7915 = vrot.slane %v7913, 7
        %v7916 = vshll.u32 %v7613, 16
        %v7918 = vor.u32 %v7915, %v7916
        %v7919 = vsel %vm713, %v7911, %v7918
        %v7920 = vrot.slane %v7915, 4
        %v7922 = vshrl.u32 %v7614, 16
        %v7924 = vrot.slane %v7922, 7
        %v7925 = vshll.u32 %v7614, 16
        %v7927 = vor.u32 %v7924, %v7925
        %v7928 = vsel %vm713, %v7920, %v7927
        %v7930 = vshrl.u32 %v7615, 16
        %v7932 = vrot.slane %v7930, 7
        %v7933 = vrot.slane %v7932, 4
        %v7935 = vshrl.u32 %v7616, 16
        %v7937 = vrot.slane %v7935, 7
        %v7938 = vshll.u32 %v7616, 16
        %v7940 = vor.u32 %v7937, %v7938
        %v7941 = vsel %vm713, %v7933, %v7940
        %v7942 = vrot.slane %v7937, 4
        %v7944 = vshrl.u32 %v7617, 16
        %v7946 = vrot.slane %v7944, 7
        %v7947 = vshll.u32 %v7617, 16
        %v7949 = vor.u32 %v7946, %v7947
        %v7950 = vsel %vm713, %v7942, %v7949
        %v7952 = vshrl.u32 %v7618, 16
        %v7954 = vrot.slane %v7952, 7
        %v7955 = vrot.slane %v7954, 4
        %v7957 = vshrl.u32 %v7619, 16
        %v7959 = vrot.slane %v7957, 7
        %v7960 = vshll.u32 %v7619, 16
        %v7962 = vor.u32 %v7959, %v7960
        %v7963 = vsel %vm713, %v7955, %v7962
        %v7964 = vrot.slane %v7959, 4
        %v7966 = vshrl.u32 %v7620, 16
        %v7968 = vrot.slane %v7966, 7
        %v7969 = vshll.u32 %v7620, 16
        %v7971 = vor.u32 %v7968, %v7969
        %v7972 = vsel %vm713, %v7964, %v7971
        %s7973 = scalar_lea.vmem [#allocation8], 192
        %v7974 = vld [vmem:[%s7973] sm:$0xf]
        %v7975 = vld [vmem:[%s7973 + $0x4] sm:$0xf]
        %v7976 = vld [vmem:[%s7973 + $0x8] sm:$0xf]
        %v7977 = vld [vmem:[%s7973 + $0xc] sm:$0xf]
        %v7978 = vld [vmem:[%s7973 + $0x10] sm:$0xf]
        %v7979 = vld [vmem:[%s7973 + $0x14] sm:$0xf]
        %v7980 = vld [vmem:[%s7973 + $0x18] sm:$0xf]
        %v7981 = vld [vmem:[%s7973 + $0x1c] sm:$0xf]
        %v7982 = vld [vmem:[%s7973 + $0x20] sm:$0xf]
        %v7983 = vld [vmem:[%s7973 + $0x24] sm:$0xf]
        %v7984 = vld [vmem:[%s7973 + $0x28] sm:$0xf]
        %v7985 = vld [vmem:[%s7973 + $0x2c] sm:$0xf]
        %v7986 = vld [vmem:[%s7973 + $0x30] sm:$0xf]
        %v7987 = vld [vmem:[%s7973 + $0x34] sm:$0xf]
        %v7988 = vld [vmem:[%s7973 + $0x38] sm:$0xf]
        %v7989 = vld [vmem:[%s7973 + $0x3c] sm:$0xf]
        %v7990 = vunpack.c.l.b16 %v7633
        %v7991 = vunpack.c.l.b16 %v7642
        %v7992 = vunpack.c.l.b16 %v7655
        %v7993 = vunpack.c.l.b16 %v7664
        %v7994 = vunpack.c.l.b16 %v7677
        %v7995 = vunpack.c.l.b16 %v7686
        %v7996 = vunpack.c.l.b16 %v7699
        %v7997 = vunpack.c.l.b16 %v7708
        %v7998 = vunpack.c.l.b16 %v7721
        %v7999 = vunpack.c.l.b16 %v7730
        %v8000 = vunpack.c.l.b16 %v7743
        %v8001 = vunpack.c.l.b16 %v7752
        %v8002 = vunpack.c.l.b16 %v7765
        %v8003 = vunpack.c.l.b16 %v7774
        %v8004 = vunpack.c.l.b16 %v7787
        %v8005 = vunpack.c.l.b16 %v7796
        %v8006 = vunpack.c.l.b16 %v7809
        %v8007 = vunpack.c.l.b16 %v7818
        %v8008 = vunpack.c.l.b16 %v7831
        %v8009 = vunpack.c.l.b16 %v7840
        %v8010 = vunpack.c.l.b16 %v7853
        %v8011 = vunpack.c.l.b16 %v7862
        %v8012 = vunpack.c.l.b16 %v7875
        %v8013 = vunpack.c.l.b16 %v7884
        %v8014 = vunpack.c.l.b16 %v7897
        %v8015 = vunpack.c.l.b16 %v7906
        %v8016 = vunpack.c.l.b16 %v7919
        %v8017 = vunpack.c.l.b16 %v7928
        %v8018 = vunpack.c.l.b16 %v7941
        %v8019 = vunpack.c.l.b16 %v7950
        %v8020 = vunpack.c.l.b16 %v7963
        %v8021 = vunpack.c.l.b16 %v7972
        %v8022 = vpack.c.b16 %v7991, %v7990
        %v8023 = vpack.c.b16 %v7993, %v7992
        %v8024 = vpack.c.b16 %v7995, %v7994
        %v8025 = vpack.c.b16 %v7997, %v7996
        %v8026 = vpack.c.b16 %v7999, %v7998
        %v8027 = vpack.c.b16 %v8001, %v8000
        %v8028 = vpack.c.b16 %v8003, %v8002
        %v8029 = vpack.c.b16 %v8005, %v8004
        %v8030 = vpack.c.b16 %v8007, %v8006
        %v8031 = vpack.c.b16 %v8009, %v8008
        %v8032 = vpack.c.b16 %v8011, %v8010
        %v8033 = vpack.c.b16 %v8013, %v8012
        %v8034 = vpack.c.b16 %v8015, %v8014
        %v8035 = vpack.c.b16 %v8017, %v8016
        %v8036 = vpack.c.b16 %v8019, %v8018
        %v8037 = vpack.c.b16 %v8021, %v8020
        %v8070 = vunpack.c.l.b16 %v7974
        %v8071 = vunpack.c.l.b16 %v7975
        %v8072 = vunpack.c.l.b16 %v7976
        %v8073 = vunpack.c.l.b16 %v7977
        %v8074 = vunpack.c.l.b16 %v7978
        %v8075 = vunpack.c.l.b16 %v7979
        %v8076 = vunpack.c.l.b16 %v7980
        %v8077 = vunpack.c.l.b16 %v7981
        %v8078 = vunpack.c.l.b16 %v7982
        %v8079 = vunpack.c.l.b16 %v7983
        %v8080 = vunpack.c.l.b16 %v7984
        %v8081 = vunpack.c.l.b16 %v7985
        %v8082 = vunpack.c.l.b16 %v7986
        %v8083 = vunpack.c.l.b16 %v7987
        %v8084 = vunpack.c.l.b16 %v7988
        %v8085 = vunpack.c.l.b16 %v7989
        %v8086 = vpack.c.b16 %v8071, %v8070
        %v8087 = vpack.c.b16 %v8073, %v8072
        %v8088 = vpack.c.b16 %v8075, %v8074
        %v8089 = vpack.c.b16 %v8077, %v8076
        %v8090 = vpack.c.b16 %v8079, %v8078
        %v8091 = vpack.c.b16 %v8081, %v8080
        %v8092 = vpack.c.b16 %v8083, %v8082
        %v8093 = vpack.c.b16 %v8085, %v8084
        %8102 = vmatpush.bf16.msra.mxu0 %v8093
        %8103 = vmatpush.bf16.msra.mxu0 %v8092
        %8104 = vmatpush.bf16.msra.mxu0 %v8091
        %8105 = vmatpush.bf16.msra.mxu0 %v8090
        %8106 = vmatpush.bf16.msra.mxu0 %v8089
        %8107 = vmatpush.bf16.msra.mxu0 %v8088
        %8108 = vmatpush.bf16.msra.mxu0 %v8087
        %8109 = vmatpush.bf16.msra.mxu0 %v8086
        %8110 = vmatmul.bf16.gmra.mxu0 %v8022
        %v8111 = vpop.f32.mrf.mxu0
        %v8112 = vadd.f32 0.0, %v8111
        %v8113 = vpop.f32.mrf.mxu0
        %v8114 = vadd.f32 0.0, %v8113
        %8115 = vmatmul.bf16.gmra.mxu0 %v8023
        %v8116 = vpop.f32.mrf.mxu0
        %v8117 = vadd.f32 0.0, %v8116
        %v8118 = vpop.f32.mrf.mxu0
        %v8119 = vadd.f32 0.0, %v8118
        %8120 = vmatmul.bf16.gmra.mxu0 %v8024
        %v8121 = vpop.f32.mrf.mxu0
        %v8122 = vadd.f32 0.0, %v8121
        %v8123 = vpop.f32.mrf.mxu0
        %v8124 = vadd.f32 0.0, %v8123
        %8125 = vmatmul.bf16.gmra.mxu0 %v8025
        %v8126 = vpop.f32.mrf.mxu0
        %v8127 = vadd.f32 0.0, %v8126
        %v8128 = vpop.f32.mrf.mxu0
        %v8129 = vadd.f32 0.0, %v8128
        %8130 = vmatmul.bf16.gmra.mxu0 %v8026
        %v8131 = vpop.f32.mrf.mxu0
        %v8132 = vadd.f32 0.0, %v8131
        %v8133 = vpop.f32.mrf.mxu0
        %v8134 = vadd.f32 0.0, %v8133
        %8135 = vmatmul.bf16.gmra.mxu0 %v8027
        %v8136 = vpop.f32.mrf.mxu0
        %v8137 = vadd.f32 0.0, %v8136
        %v8138 = vpop.f32.mrf.mxu0
        %v8139 = vadd.f32 0.0, %v8138
        %8140 = vmatmul.bf16.gmra.mxu0 %v8028
        %v8141 = vpop.f32.mrf.mxu0
        %v8142 = vadd.f32 0.0, %v8141
        %v8143 = vpop.f32.mrf.mxu0
        %v8144 = vadd.f32 0.0, %v8143
        %8145 = vmatmul.bf16.gmra.mxu0 %v8029
        %v8146 = vpop.f32.mrf.mxu0
        %v8147 = vadd.f32 0.0, %v8146
        %v8148 = vpop.f32.mrf.mxu0
        %v8149 = vadd.f32 0.0, %v8148
        %8150 = vmatmul.bf16.gmra.mxu0 %v8030
        %v8151 = vpop.f32.mrf.mxu0
        %v8152 = vadd.f32 0.0, %v8151
        %v8153 = vpop.f32.mrf.mxu0
        %v8154 = vadd.f32 0.0, %v8153
        %8155 = vmatmul.bf16.gmra.mxu0 %v8031
        %v8156 = vpop.f32.mrf.mxu0
        %v8157 = vadd.f32 0.0, %v8156
        %v8158 = vpop.f32.mrf.mxu0
        %v8159 = vadd.f32 0.0, %v8158
        %8160 = vmatmul.bf16.gmra.mxu0 %v8032
        %v8161 = vpop.f32.mrf.mxu0
        %v8162 = vadd.f32 0.0, %v8161
        %v8163 = vpop.f32.mrf.mxu0
        %v8164 = vadd.f32 0.0, %v8163
        %8165 = vmatmul.bf16.gmra.mxu0 %v8033
        %v8166 = vpop.f32.mrf.mxu0
        %v8167 = vadd.f32 0.0, %v8166
        %v8168 = vpop.f32.mrf.mxu0
        %v8169 = vadd.f32 0.0, %v8168
        %8170 = vmatmul.bf16.gmra.mxu0 %v8034
        %v8171 = vpop.f32.mrf.mxu0
        %v8172 = vadd.f32 0.0, %v8171
        %v8173 = vpop.f32.mrf.mxu0
        %v8174 = vadd.f32 0.0, %v8173
        %8175 = vmatmul.bf16.gmra.mxu0 %v8035
        %v8176 = vpop.f32.mrf.mxu0
        %v8177 = vadd.f32 0.0, %v8176
        %v8178 = vpop.f32.mrf.mxu0
        %v8179 = vadd.f32 0.0, %v8178
        %8180 = vmatmul.bf16.gmra.mxu0 %v8036
        %v8181 = vpop.f32.mrf.mxu0
        %v8182 = vadd.f32 0.0, %v8181
        %v8183 = vpop.f32.mrf.mxu0
        %v8184 = vadd.f32 0.0, %v8183
        %8185 = vmatmul.bf16.gmra.mxu0 %v8037
        %v8186 = vpop.f32.mrf.mxu0
        %v8187 = vadd.f32 0.0, %v8186
        %v8188 = vpop.f32.mrf.mxu0
        %v8189 = vadd.f32 0.0, %v8188
        %8190 = vdwg.mxu0
        %v8191 = vadd.f32 %v7541, %v8112
        %v8192 = vadd.f32 %v7542, %v8114
        %v8193 = vadd.f32 %v7543, %v8117
        %v8194 = vadd.f32 %v7544, %v8119
        %v8195 = vadd.f32 %v7545, %v8122
        %v8196 = vadd.f32 %v7546, %v8124
        %v8197 = vadd.f32 %v7547, %v8127
        %v8198 = vadd.f32 %v7548, %v8129
        %v8199 = vadd.f32 %v7549, %v8132
        %v8200 = vadd.f32 %v7550, %v8134
        %v8201 = vadd.f32 %v7551, %v8137
        %v8202 = vadd.f32 %v7552, %v8139
        %v8203 = vadd.f32 %v7553, %v8142
        %v8204 = vadd.f32 %v7554, %v8144
        %v8205 = vadd.f32 %v7555, %v8147
        %v8206 = vadd.f32 %v7556, %v8149
        %v8207 = vadd.f32 %v7557, %v8152
        %v8208 = vadd.f32 %v7558, %v8154
        %v8209 = vadd.f32 %v7559, %v8157
        %v8210 = vadd.f32 %v7560, %v8159
        %v8211 = vadd.f32 %v7561, %v8162
        %v8212 = vadd.f32 %v7562, %v8164
        %v8213 = vadd.f32 %v7563, %v8167
        %v8214 = vadd.f32 %v7564, %v8169
        %v8215 = vadd.f32 %v7565, %v8172
        %v8216 = vadd.f32 %v7566, %v8174
        %v8217 = vadd.f32 %v7567, %v8177
        %v8218 = vadd.f32 %v7568, %v8179
        %v8219 = vadd.f32 %v7569, %v8182
        %v8220 = vadd.f32 %v7570, %v8184
        %v8221 = vadd.f32 %v7571, %v8187
        %v8222 = vadd.f32 %v7572, %v8189
        %s8223 = scalar_lea.vmem [#allocation8], 256
        %v8224 = vld [vmem:[%s8223] sm:$0xf]
        %v8225 = vld [vmem:[%s8223 + $0x4] sm:$0xf]
        %v8226 = vld [vmem:[%s8223 + $0x8] sm:$0xf]
        %v8227 = vld [vmem:[%s8223 + $0xc] sm:$0xf]
        %v8228 = vld [vmem:[%s8223 + $0x10] sm:$0xf]
        %v8229 = vld [vmem:[%s8223 + $0x14] sm:$0xf]
        %v8230 = vld [vmem:[%s8223 + $0x18] sm:$0xf]
        %v8231 = vld [vmem:[%s8223 + $0x1c] sm:$0xf]
        %v8232 = vld [vmem:[%s8223 + $0x20] sm:$0xf]
        %v8233 = vld [vmem:[%s8223 + $0x24] sm:$0xf]
        %v8234 = vld [vmem:[%s8223 + $0x28] sm:$0xf]
        %v8235 = vld [vmem:[%s8223 + $0x2c] sm:$0xf]
        %v8236 = vld [vmem:[%s8223 + $0x30] sm:$0xf]
        %v8237 = vld [vmem:[%s8223 + $0x34] sm:$0xf]
        %v8238 = vld [vmem:[%s8223 + $0x38] sm:$0xf]
        %v8239 = vld [vmem:[%s8223 + $0x3c] sm:$0xf]
        %v8272 = vunpack.c.l.b16 %v7574
        %v8273 = vunpack.c.l.b16 %v7575
        %v8274 = vunpack.c.l.b16 %v7577
        %v8275 = vunpack.c.l.b16 %v7578
        %v8276 = vunpack.c.l.b16 %v7580
        %v8277 = vunpack.c.l.b16 %v7581
        %v8278 = vunpack.c.l.b16 %v7583
        %v8279 = vunpack.c.l.b16 %v7584
        %v8280 = vunpack.c.l.b16 %v7586
        %v8281 = vunpack.c.l.b16 %v7587
        %v8282 = vunpack.c.l.b16 %v7589
        %v8283 = vunpack.c.l.b16 %v7590
        %v8284 = vunpack.c.l.b16 %v7592
        %v8285 = vunpack.c.l.b16 %v7593
        %v8286 = vunpack.c.l.b16 %v7595
        %v8287 = vunpack.c.l.b16 %v7596
        %v8288 = vunpack.c.l.b16 %v7598
        %v8289 = vunpack.c.l.b16 %v7599
        %v8290 = vunpack.c.l.b16 %v7601
        %v8291 = vunpack.c.l.b16 %v7602
        %v8292 = vunpack.c.l.b16 %v7604
        %v8293 = vunpack.c.l.b16 %v7605
        %v8294 = vunpack.c.l.b16 %v7607
        %v8295 = vunpack.c.l.b16 %v7608
        %v8296 = vunpack.c.l.b16 %v7610
        %v8297 = vunpack.c.l.b16 %v7611
        %v8298 = vunpack.c.l.b16 %v7613
        %v8299 = vunpack.c.l.b16 %v7614
        %v8300 = vunpack.c.l.b16 %v7616
        %v8301 = vunpack.c.l.b16 %v7617
        %v8302 = vunpack.c.l.b16 %v7619
        %v8303 = vunpack.c.l.b16 %v7620
        %v8304 = vpack.c.b16 %v8273, %v8272
        %v8305 = vpack.c.b16 %v8275, %v8274
        %v8306 = vpack.c.b16 %v8277, %v8276
        %v8307 = vpack.c.b16 %v8279, %v8278
        %v8308 = vpack.c.b16 %v8281, %v8280
        %v8309 = vpack.c.b16 %v8283, %v8282
        %v8310 = vpack.c.b16 %v8285, %v8284
        %v8311 = vpack.c.b16 %v8287, %v8286
        %v8312 = vpack.c.b16 %v8289, %v8288
        %v8313 = vpack.c.b16 %v8291, %v8290
        %v8314 = vpack.c.b16 %v8293, %v8292
        %v8315 = vpack.c.b16 %v8295, %v8294
        %v8316 = vpack.c.b16 %v8297, %v8296
        %v8317 = vpack.c.b16 %v8299, %v8298
        %v8318 = vpack.c.b16 %v8301, %v8300
        %v8319 = vpack.c.b16 %v8303, %v8302
        %v8352 = vunpack.c.l.b16 %v8224
        %v8353 = vunpack.c.l.b16 %v8225
        %v8354 = vunpack.c.l.b16 %v8226
        %v8355 = vunpack.c.l.b16 %v8227
        %v8356 = vunpack.c.l.b16 %v8228
        %v8357 = vunpack.c.l.b16 %v8229
        %v8358 = vunpack.c.l.b16 %v8230
        %v8359 = vunpack.c.l.b16 %v8231
        %v8360 = vunpack.c.l.b16 %v8232
        %v8361 = vunpack.c.l.b16 %v8233
        %v8362 = vunpack.c.l.b16 %v8234
        %v8363 = vunpack.c.l.b16 %v8235
        %v8364 = vunpack.c.l.b16 %v8236
        %v8365 = vunpack.c.l.b16 %v8237
        %v8366 = vunpack.c.l.b16 %v8238
        %v8367 = vunpack.c.l.b16 %v8239
        %v8368 = vpack.c.b16 %v8353, %v8352
        %v8369 = vpack.c.b16 %v8355, %v8354
        %v8370 = vpack.c.b16 %v8357, %v8356
        %v8371 = vpack.c.b16 %v8359, %v8358
        %v8372 = vpack.c.b16 %v8361, %v8360
        %v8373 = vpack.c.b16 %v8363, %v8362
        %v8374 = vpack.c.b16 %v8365, %v8364
        %v8375 = vpack.c.b16 %v8367, %v8366
        %8384 = vmatpush.bf16.msra.mxu0 %v8375
        %8385 = vmatpush.bf16.msra.mxu0 %v8374
        %8386 = vmatpush.bf16.msra.mxu0 %v8373
        %8387 = vmatpush.bf16.msra.mxu0 %v8372
        %8388 = vmatpush.bf16.msra.mxu0 %v8371
        %8389 = vmatpush.bf16.msra.mxu0 %v8370
        %8390 = vmatpush.bf16.msra.mxu0 %v8369
        %8391 = vmatpush.bf16.msra.mxu0 %v8368
        %8392 = vmatmul.bf16.gmra.mxu0 %v8304
        %v8393 = vpop.f32.mrf.mxu0
        %v8394 = vadd.f32 0.0, %v8393
        %v8395 = vpop.f32.mrf.mxu0
        %v8396 = vadd.f32 0.0, %v8395
        %8397 = vmatmul.bf16.gmra.mxu0 %v8305
        %v8398 = vpop.f32.mrf.mxu0
        %v8399 = vadd.f32 0.0, %v8398
        %v8400 = vpop.f32.mrf.mxu0
        %v8401 = vadd.f32 0.0, %v8400
        %8402 = vmatmul.bf16.gmra.mxu0 %v8306
        %v8403 = vpop.f32.mrf.mxu0
        %v8404 = vadd.f32 0.0, %v8403
        %v8405 = vpop.f32.mrf.mxu0
        %v8406 = vadd.f32 0.0, %v8405
        %8407 = vmatmul.bf16.gmra.mxu0 %v8307
        %v8408 = vpop.f32.mrf.mxu0
        %v8409 = vadd.f32 0.0, %v8408
        %v8410 = vpop.f32.mrf.mxu0
        %v8411 = vadd.f32 0.0, %v8410
        %8412 = vmatmul.bf16.gmra.mxu0 %v8308
        %v8413 = vpop.f32.mrf.mxu0
        %v8414 = vadd.f32 0.0, %v8413
        %v8415 = vpop.f32.mrf.mxu0
        %v8416 = vadd.f32 0.0, %v8415
        %8417 = vmatmul.bf16.gmra.mxu0 %v8309
        %v8418 = vpop.f32.mrf.mxu0
        %v8419 = vadd.f32 0.0, %v8418
        %v8420 = vpop.f32.mrf.mxu0
        %v8421 = vadd.f32 0.0, %v8420
        %8422 = vmatmul.bf16.gmra.mxu0 %v8310
        %v8423 = vpop.f32.mrf.mxu0
        %v8424 = vadd.f32 0.0, %v8423
        %v8425 = vpop.f32.mrf.mxu0
        %v8426 = vadd.f32 0.0, %v8425
        %8427 = vmatmul.bf16.gmra.mxu0 %v8311
        %v8428 = vpop.f32.mrf.mxu0
        %v8429 = vadd.f32 0.0, %v8428
        %v8430 = vpop.f32.mrf.mxu0
        %v8431 = vadd.f32 0.0, %v8430
        %8432 = vmatmul.bf16.gmra.mxu0 %v8312
        %v8433 = vpop.f32.mrf.mxu0
        %v8434 = vadd.f32 0.0, %v8433
        %v8435 = vpop.f32.mrf.mxu0
        %v8436 = vadd.f32 0.0, %v8435
        %8437 = vmatmul.bf16.gmra.mxu0 %v8313
        %v8438 = vpop.f32.mrf.mxu0
        %v8439 = vadd.f32 0.0, %v8438
        %v8440 = vpop.f32.mrf.mxu0
        %v8441 = vadd.f32 0.0, %v8440
        %8442 = vmatmul.bf16.gmra.mxu0 %v8314
        %v8443 = vpop.f32.mrf.mxu0
        %v8444 = vadd.f32 0.0, %v8443
        %v8445 = vpop.f32.mrf.mxu0
        %v8446 = vadd.f32 0.0, %v8445
        %8447 = vmatmul.bf16.gmra.mxu0 %v8315
        %v8448 = vpop.f32.mrf.mxu0
        %v8449 = vadd.f32 0.0, %v8448
        %v8450 = vpop.f32.mrf.mxu0
        %v8451 = vadd.f32 0.0, %v8450
        %8452 = vmatmul.bf16.gmra.mxu0 %v8316
        %v8453 = vpop.f32.mrf.mxu0
        %v8454 = vadd.f32 0.0, %v8453
        %v8455 = vpop.f32.mrf.mxu0
        %v8456 = vadd.f32 0.0, %v8455
        %8457 = vmatmul.bf16.gmra.mxu0 %v8317
        %v8458 = vpop.f32.mrf.mxu0
        %v8459 = vadd.f32 0.0, %v8458
        %v8460 = vpop.f32.mrf.mxu0
        %v8461 = vadd.f32 0.0, %v8460
        %8462 = vmatmul.bf16.gmra.mxu0 %v8318
        %v8463 = vpop.f32.mrf.mxu0
        %v8464 = vadd.f32 0.0, %v8463
        %v8465 = vpop.f32.mrf.mxu0
        %v8466 = vadd.f32 0.0, %v8465
        %8467 = vmatmul.bf16.gmra.mxu0 %v8319
        %v8468 = vpop.f32.mrf.mxu0
        %v8469 = vadd.f32 0.0, %v8468
        %v8470 = vpop.f32.mrf.mxu0
        %v8471 = vadd.f32 0.0, %v8470
        %8472 = vdwg.mxu0
        %v8473 = vadd.f32 %v8191, %v8394
        %v8474 = vadd.f32 %v8192, %v8396
        %v8475 = vadd.f32 %v8193, %v8399
        %v8476 = vadd.f32 %v8194, %v8401
        %v8477 = vadd.f32 %v8195, %v8404
        %v8478 = vadd.f32 %v8196, %v8406
        %v8479 = vadd.f32 %v8197, %v8409
        %v8480 = vadd.f32 %v8198, %v8411
        %v8481 = vadd.f32 %v8199, %v8414
        %v8482 = vadd.f32 %v8200, %v8416
        %v8483 = vadd.f32 %v8201, %v8419
        %v8484 = vadd.f32 %v8202, %v8421
        %v8485 = vadd.f32 %v8203, %v8424
        %v8486 = vadd.f32 %v8204, %v8426
        %v8487 = vadd.f32 %v8205, %v8429
        %v8488 = vadd.f32 %v8206, %v8431
        %v8489 = vadd.f32 %v8207, %v8434
        %v8490 = vadd.f32 %v8208, %v8436
        %v8491 = vadd.f32 %v8209, %v8439
        %v8492 = vadd.f32 %v8210, %v8441
        %v8493 = vadd.f32 %v8211, %v8444
        %v8494 = vadd.f32 %v8212, %v8446
        %v8495 = vadd.f32 %v8213, %v8449
        %v8496 = vadd.f32 %v8214, %v8451
        %v8497 = vadd.f32 %v8215, %v8454
        %v8498 = vadd.f32 %v8216, %v8456
        %v8499 = vadd.f32 %v8217, %v8459
        %v8500 = vadd.f32 %v8218, %v8461
        %v8501 = vadd.f32 %v8219, %v8464
        %v8502 = vadd.f32 %v8220, %v8466
        %v8503 = vadd.f32 %v8221, %v8469
        %v8504 = vadd.f32 %v8222, %v8471
        %v8505 = vld [vmem:[%s396 + $0x4] sm:$0xf]
        %v8506 = vld [vmem:[%s396 + $0x8] sm:$0xf]
        %v8507 = vld [vmem:[%s396 + $0xc] sm:$0x1]
        %v8508 = vld [vmem:[%s396 + $0x14] sm:$0xf]
        %v8509 = vld [vmem:[%s396 + $0x18] sm:$0xf]
        %v8510 = vld [vmem:[%s396 + $0x1c] sm:$0x1]
        %v8511 = vld [vmem:[%s396 + $0x24] sm:$0xf]
        %v8512 = vld [vmem:[%s396 + $0x28] sm:$0xf]
        %v8513 = vld [vmem:[%s396 + $0x2c] sm:$0x1]
        %v8514 = vld [vmem:[%s396 + $0x34] sm:$0xf]
        %v8515 = vld [vmem:[%s396 + $0x38] sm:$0xf]
        %v8516 = vld [vmem:[%s396 + $0x3c] sm:$0x1]
        %v8517 = vld [vmem:[%s396 + $0x44] sm:$0xf]
        %v8518 = vld [vmem:[%s396 + $0x48] sm:$0xf]
        %v8519 = vld [vmem:[%s396 + $0x4c] sm:$0x1]
        %v8520 = vld [vmem:[%s396 + $0x54] sm:$0xf]
        %v8521 = vld [vmem:[%s396 + $0x58] sm:$0xf]
        %v8522 = vld [vmem:[%s396 + $0x5c] sm:$0x1]
        %v8523 = vld [vmem:[%s396 + $0x64] sm:$0xf]
        %v8524 = vld [vmem:[%s396 + $0x68] sm:$0xf]
        %v8525 = vld [vmem:[%s396 + $0x6c] sm:$0x1]
        %v8526 = vld [vmem:[%s396 + $0x74] sm:$0xf]
        %v8527 = vld [vmem:[%s396 + $0x78] sm:$0xf]
        %v8528 = vld [vmem:[%s396 + $0x7c] sm:$0x1]
        %v8529 = vld [vmem:[%s396 + $0x84] sm:$0xf]
        %v8530 = vld [vmem:[%s396 + $0x88] sm:$0xf]
        %v8531 = vld [vmem:[%s396 + $0x8c] sm:$0x1]
        %v8532 = vld [vmem:[%s396 + $0x94] sm:$0xf]
        %v8533 = vld [vmem:[%s396 + $0x98] sm:$0xf]
        %v8534 = vld [vmem:[%s396 + $0x9c] sm:$0x1]
        %v8535 = vld [vmem:[%s396 + $0xa4] sm:$0xf]
        %v8536 = vld [vmem:[%s396 + $0xa8] sm:$0xf]
        %v8537 = vld [vmem:[%s396 + $0xac] sm:$0x1]
        %v8538 = vld [vmem:[%s396 + $0xb4] sm:$0xf]
        %v8539 = vld [vmem:[%s396 + $0xb8] sm:$0xf]
        %v8540 = vld [vmem:[%s396 + $0xbc] sm:$0x1]
        %v8541 = vld [vmem:[%s396 + $0xc4] sm:$0xf]
        %v8542 = vld [vmem:[%s396 + $0xc8] sm:$0xf]
        %v8543 = vld [vmem:[%s396 + $0xcc] sm:$0x1]
        %v8544 = vld [vmem:[%s396 + $0xd4] sm:$0xf]
        %v8545 = vld [vmem:[%s396 + $0xd8] sm:$0xf]
        %v8546 = vld [vmem:[%s396 + $0xdc] sm:$0x1]
        %v8547 = vld [vmem:[%s396 + $0xe4] sm:$0xf]
        %v8548 = vld [vmem:[%s396 + $0xe8] sm:$0xf]
        %v8549 = vld [vmem:[%s396 + $0xec] sm:$0x1]
        %v8550 = vld [vmem:[%s396 + $0xf4] sm:$0xf]
        %v8551 = vld [vmem:[%s396 + $0xf8] sm:$0xf]
        %v8552 = vld [vmem:[%s396 + $0xfc] sm:$0x1]
        %v8554 = vshrl.u32 %v8505, 16
        %v8556 = vrot.slane %v8554, 4
        %v8557 = vshll.u32 %v8505, 16
        %v8559 = vrot.slane %v8557, 5
        %v8560 = vor.u32 %v8556, %v8559
        %v8561 = vrot.slane %v8560, 4
        %v8563 = vshll.u32 %v8506, 16
        %v8565 = vrot.slane %v8563, 5
        %v8566 = vsel %vm1583, %v8561, %v8565
        %v8567 = vshrl.u32 %v8506, 16
        %v8569 = vrot.slane %v8567, 4
        %v8570 = vor.u32 %v8569, %v8565
        %v8571 = vrot.slane %v8570, 4
        %v8573 = vshll.u32 %v8507, 16
        %v8575 = vrot.slane %v8573, 5
        %v8576 = vsel %vm1583, %v8571, %v8575
        %v8578 = vshrl.u32 %v8508, 16
        %v8580 = vrot.slane %v8578, 4
        %v8581 = vshll.u32 %v8508, 16
        %v8583 = vrot.slane %v8581, 5
        %v8584 = vor.u32 %v8580, %v8583
        %v8585 = vrot.slane %v8584, 4
        %v8587 = vshll.u32 %v8509, 16
        %v8589 = vrot.slane %v8587, 5
        %v8590 = vsel %vm1583, %v8585, %v8589
        %v8591 = vshrl.u32 %v8509, 16
        %v8593 = vrot.slane %v8591, 4
        %v8594 = vor.u32 %v8593, %v8589
        %v8595 = vrot.slane %v8594, 4
        %v8597 = vshll.u32 %v8510, 16
        %v8599 = vrot.slane %v8597, 5
        %v8600 = vsel %vm1583, %v8595, %v8599
        %v8602 = vshrl.u32 %v8511, 16
        %v8604 = vrot.slane %v8602, 4
        %v8605 = vshll.u32 %v8511, 16
        %v8607 = vrot.slane %v8605, 5
        %v8608 = vor.u32 %v8604, %v8607
        %v8609 = vrot.slane %v8608, 4
        %v8611 = vshll.u32 %v8512, 16
        %v8613 = vrot.slane %v8611, 5
        %v8614 = vsel %vm1583, %v8609, %v8613
        %v8615 = vshrl.u32 %v8512, 16
        %v8617 = vrot.slane %v8615, 4
        %v8618 = vor.u32 %v8617, %v8613
        %v8619 = vrot.slane %v8618, 4
        %v8621 = vshll.u32 %v8513, 16
        %v8623 = vrot.slane %v8621, 5
        %v8624 = vsel %vm1583, %v8619, %v8623
        %v8626 = vshrl.u32 %v8514, 16
        %v8628 = vrot.slane %v8626, 4
        %v8629 = vshll.u32 %v8514, 16
        %v8631 = vrot.slane %v8629, 5
        %v8632 = vor.u32 %v8628, %v8631
        %v8633 = vrot.slane %v8632, 4
        %v8635 = vshll.u32 %v8515, 16
        %v8637 = vrot.slane %v8635, 5
        %v8638 = vsel %vm1583, %v8633, %v8637
        %v8639 = vshrl.u32 %v8515, 16
        %v8641 = vrot.slane %v8639, 4
        %v8642 = vor.u32 %v8641, %v8637
        %v8643 = vrot.slane %v8642, 4
        %v8645 = vshll.u32 %v8516, 16
        %v8647 = vrot.slane %v8645, 5
        %v8648 = vsel %vm1583, %v8643, %v8647
        %v8650 = vshrl.u32 %v8517, 16
        %v8652 = vrot.slane %v8650, 4
        %v8653 = vshll.u32 %v8517, 16
        %v8655 = vrot.slane %v8653, 5
        %v8656 = vor.u32 %v8652, %v8655
        %v8657 = vrot.slane %v8656, 4
        %v8659 = vshll.u32 %v8518, 16
        %v8661 = vrot.slane %v8659, 5
        %v8662 = vsel %vm1583, %v8657, %v8661
        %v8663 = vshrl.u32 %v8518, 16
        %v8665 = vrot.slane %v8663, 4
        %v8666 = vor.u32 %v8665, %v8661
        %v8667 = vrot.slane %v8666, 4
        %v8669 = vshll.u32 %v8519, 16
        %v8671 = vrot.slane %v8669, 5
        %v8672 = vsel %vm1583, %v8667, %v8671
        %v8674 = vshrl.u32 %v8520, 16
        %v8676 = vrot.slane %v8674, 4
        %v8677 = vshll.u32 %v8520, 16
        %v8679 = vrot.slane %v8677, 5
        %v8680 = vor.u32 %v8676, %v8679
        %v8681 = vrot.slane %v8680, 4
        %v8683 = vshll.u32 %v8521, 16
        %v8685 = vrot.slane %v8683, 5
        %v8686 = vsel %vm1583, %v8681, %v8685
        %v8687 = vshrl.u32 %v8521, 16
        %v8689 = vrot.slane %v8687, 4
        %v8690 = vor.u32 %v8689, %v8685
        %v8691 = vrot.slane %v8690, 4
        %v8693 = vshll.u32 %v8522, 16
        %v8695 = vrot.slane %v8693, 5
        %v8696 = vsel %vm1583, %v8691, %v8695
        %v8698 = vshrl.u32 %v8523, 16
        %v8700 = vrot.slane %v8698, 4
        %v8701 = vshll.u32 %v8523, 16
        %v8703 = vrot.slane %v8701, 5
        %v8704 = vor.u32 %v8700, %v8703
        %v8705 = vrot.slane %v8704, 4
        %v8707 = vshll.u32 %v8524, 16
        %v8709 = vrot.slane %v8707, 5
        %v8710 = vsel %vm1583, %v8705, %v8709
        %v8711 = vshrl.u32 %v8524, 16
        %v8713 = vrot.slane %v8711, 4
        %v8714 = vor.u32 %v8713, %v8709
        %v8715 = vrot.slane %v8714, 4
        %v8717 = vshll.u32 %v8525, 16
        %v8719 = vrot.slane %v8717, 5
        %v8720 = vsel %vm1583, %v8715, %v8719
        %v8722 = vshrl.u32 %v8526, 16
        %v8724 = vrot.slane %v8722, 4
        %v8725 = vshll.u32 %v8526, 16
        %v8727 = vrot.slane %v8725, 5
        %v8728 = vor.u32 %v8724, %v8727
        %v8729 = vrot.slane %v8728, 4
        %v8731 = vshll.u32 %v8527, 16
        %v8733 = vrot.slane %v8731, 5
        %v8734 = vsel %vm1583, %v8729, %v8733
        %v8735 = vshrl.u32 %v8527, 16
        %v8737 = vrot.slane %v8735, 4
        %v8738 = vor.u32 %v8737, %v8733
        %v8739 = vrot.slane %v8738, 4
        %v8741 = vshll.u32 %v8528, 16
        %v8743 = vrot.slane %v8741, 5
        %v8744 = vsel %vm1583, %v8739, %v8743
        %v8746 = vshrl.u32 %v8529, 16
        %v8748 = vrot.slane %v8746, 4
        %v8749 = vshll.u32 %v8529, 16
        %v8751 = vrot.slane %v8749, 5
        %v8752 = vor.u32 %v8748, %v8751
        %v8753 = vrot.slane %v8752, 4
        %v8755 = vshll.u32 %v8530, 16
        %v8757 = vrot.slane %v8755, 5
        %v8758 = vsel %vm1583, %v8753, %v8757
        %v8759 = vshrl.u32 %v8530, 16
        %v8761 = vrot.slane %v8759, 4
        %v8762 = vor.u32 %v8761, %v8757
        %v8763 = vrot.slane %v8762, 4
        %v8765 = vshll.u32 %v8531, 16
        %v8767 = vrot.slane %v8765, 5
        %v8768 = vsel %vm1583, %v8763, %v8767
        %v8770 = vshrl.u32 %v8532, 16
        %v8772 = vrot.slane %v8770, 4
        %v8773 = vshll.u32 %v8532, 16
        %v8775 = vrot.slane %v8773, 5
        %v8776 = vor.u32 %v8772, %v8775
        %v8777 = vrot.slane %v8776, 4
        %v8779 = vshll.u32 %v8533, 16
        %v8781 = vrot.slane %v8779, 5
        %v8782 = vsel %vm1583, %v8777, %v8781
        %v8783 = vshrl.u32 %v8533, 16
        %v8785 = vrot.slane %v8783, 4
        %v8786 = vor.u32 %v8785, %v8781
        %v8787 = vrot.slane %v8786, 4
        %v8789 = vshll.u32 %v8534, 16
        %v8791 = vrot.slane %v8789, 5
        %v8792 = vsel %vm1583, %v8787, %v8791
        %v8794 = vshrl.u32 %v8535, 16
        %v8796 = vrot.slane %v8794, 4
        %v8797 = vshll.u32 %v8535, 16
        %v8799 = vrot.slane %v8797, 5
        %v8800 = vor.u32 %v8796, %v8799
        %v8801 = vrot.slane %v8800, 4
        %v8803 = vshll.u32 %v8536, 16
        %v8805 = vrot.slane %v8803, 5
        %v8806 = vsel %vm1583, %v8801, %v8805
        %v8807 = vshrl.u32 %v8536, 16
        %v8809 = vrot.slane %v8807, 4
        %v8810 = vor.u32 %v8809, %v8805
        %v8811 = vrot.slane %v8810, 4
        %v8813 = vshll.u32 %v8537, 16
        %v8815 = vrot.slane %v8813, 5
        %v8816 = vsel %vm1583, %v8811, %v8815
        %v8818 = vshrl.u32 %v8538, 16
        %v8820 = vrot.slane %v8818, 4
        %v8821 = vshll.u32 %v8538, 16
        %v8823 = vrot.slane %v8821, 5
        %v8824 = vor.u32 %v8820, %v8823
        %v8825 = vrot.slane %v8824, 4
        %v8827 = vshll.u32 %v8539, 16
        %v8829 = vrot.slane %v8827, 5
        %v8830 = vsel %vm1583, %v8825, %v8829
        %v8831 = vshrl.u32 %v8539, 16
        %v8833 = vrot.slane %v8831, 4
        %v8834 = vor.u32 %v8833, %v8829
        %v8835 = vrot.slane %v8834, 4
        %v8837 = vshll.u32 %v8540, 16
        %v8839 = vrot.slane %v8837, 5
        %v8840 = vsel %vm1583, %v8835, %v8839
        %v8842 = vshrl.u32 %v8541, 16
        %v8844 = vrot.slane %v8842, 4
        %v8845 = vshll.u32 %v8541, 16
        %v8847 = vrot.slane %v8845, 5
        %v8848 = vor.u32 %v8844, %v8847
        %v8849 = vrot.slane %v8848, 4
        %v8851 = vshll.u32 %v8542, 16
        %v8853 = vrot.slane %v8851, 5
        %v8854 = vsel %vm1583, %v8849, %v8853
        %v8855 = vshrl.u32 %v8542, 16
        %v8857 = vrot.slane %v8855, 4
        %v8858 = vor.u32 %v8857, %v8853
        %v8859 = vrot.slane %v8858, 4
        %v8861 = vshll.u32 %v8543, 16
        %v8863 = vrot.slane %v8861, 5
        %v8864 = vsel %vm1583, %v8859, %v8863
        %v8866 = vshrl.u32 %v8544, 16
        %v8868 = vrot.slane %v8866, 4
        %v8869 = vshll.u32 %v8544, 16
        %v8871 = vrot.slane %v8869, 5
        %v8872 = vor.u32 %v8868, %v8871
        %v8873 = vrot.slane %v8872, 4
        %v8875 = vshll.u32 %v8545, 16
        %v8877 = vrot.slane %v8875, 5
        %v8878 = vsel %vm1583, %v8873, %v8877
        %v8879 = vshrl.u32 %v8545, 16
        %v8881 = vrot.slane %v8879, 4
        %v8882 = vor.u32 %v8881, %v8877
        %v8883 = vrot.slane %v8882, 4
        %v8885 = vshll.u32 %v8546, 16
        %v8887 = vrot.slane %v8885, 5
        %v8888 = vsel %vm1583, %v8883, %v8887
        %v8890 = vshrl.u32 %v8547, 16
        %v8892 = vrot.slane %v8890, 4
        %v8893 = vshll.u32 %v8547, 16
        %v8895 = vrot.slane %v8893, 5
        %v8896 = vor.u32 %v8892, %v8895
        %v8897 = vrot.slane %v8896, 4
        %v8899 = vshll.u32 %v8548, 16
        %v8901 = vrot.slane %v8899, 5
        %v8902 = vsel %vm1583, %v8897, %v8901
        %v8903 = vshrl.u32 %v8548, 16
        %v8905 = vrot.slane %v8903, 4
        %v8906 = vor.u32 %v8905, %v8901
        %v8907 = vrot.slane %v8906, 4
        %v8909 = vshll.u32 %v8549, 16
        %v8911 = vrot.slane %v8909, 5
        %v8912 = vsel %vm1583, %v8907, %v8911
        %v8914 = vshrl.u32 %v8550, 16
        %v8916 = vrot.slane %v8914, 4
        %v8917 = vshll.u32 %v8550, 16
        %v8919 = vrot.slane %v8917, 5
        %v8920 = vor.u32 %v8916, %v8919
        %v8921 = vrot.slane %v8920, 4
        %v8923 = vshll.u32 %v8551, 16
        %v8925 = vrot.slane %v8923, 5
        %v8926 = vsel %vm1583, %v8921, %v8925
        %v8927 = vshrl.u32 %v8551, 16
        %v8929 = vrot.slane %v8927, 4
        %v8930 = vor.u32 %v8929, %v8925
        %v8931 = vrot.slane %v8930, 4
        %v8933 = vshll.u32 %v8552, 16
        %v8935 = vrot.slane %v8933, 5
        %v8936 = vsel %vm1583, %v8931, %v8935
        %s8937 = scalar_lea.vmem [#allocation8], 320
        %v8938 = vld [vmem:[%s8937] sm:$0xf]
        %v8939 = vld [vmem:[%s8937 + $0x4] sm:$0xf]
        %v8940 = vld [vmem:[%s8937 + $0x8] sm:$0xf]
        %v8941 = vld [vmem:[%s8937 + $0xc] sm:$0xf]
        %v8942 = vld [vmem:[%s8937 + $0x10] sm:$0xf]
        %v8943 = vld [vmem:[%s8937 + $0x14] sm:$0xf]
        %v8944 = vld [vmem:[%s8937 + $0x18] sm:$0xf]
        %v8945 = vld [vmem:[%s8937 + $0x1c] sm:$0xf]
        %v8946 = vld [vmem:[%s8937 + $0x20] sm:$0xf]
        %v8947 = vld [vmem:[%s8937 + $0x24] sm:$0xf]
        %v8948 = vld [vmem:[%s8937 + $0x28] sm:$0xf]
        %v8949 = vld [vmem:[%s8937 + $0x2c] sm:$0xf]
        %v8950 = vld [vmem:[%s8937 + $0x30] sm:$0xf]
        %v8951 = vld [vmem:[%s8937 + $0x34] sm:$0xf]
        %v8952 = vld [vmem:[%s8937 + $0x38] sm:$0xf]
        %v8953 = vld [vmem:[%s8937 + $0x3c] sm:$0xf]
        %v8954 = vunpack.c.l.b16 %v8566
        %v8955 = vunpack.c.l.b16 %v8576
        %v8956 = vunpack.c.l.b16 %v8590
        %v8957 = vunpack.c.l.b16 %v8600
        %v8958 = vunpack.c.l.b16 %v8614
        %v8959 = vunpack.c.l.b16 %v8624
        %v8960 = vunpack.c.l.b16 %v8638
        %v8961 = vunpack.c.l.b16 %v8648
        %v8962 = vunpack.c.l.b16 %v8662
        %v8963 = vunpack.c.l.b16 %v8672
        %v8964 = vunpack.c.l.b16 %v8686
        %v8965 = vunpack.c.l.b16 %v8696
        %v8966 = vunpack.c.l.b16 %v8710
        %v8967 = vunpack.c.l.b16 %v8720
        %v8968 = vunpack.c.l.b16 %v8734
        %v8969 = vunpack.c.l.b16 %v8744
        %v8970 = vunpack.c.l.b16 %v8758
        %v8971 = vunpack.c.l.b16 %v8768
        %v8972 = vunpack.c.l.b16 %v8782
        %v8973 = vunpack.c.l.b16 %v8792
        %v8974 = vunpack.c.l.b16 %v8806
        %v8975 = vunpack.c.l.b16 %v8816
        %v8976 = vunpack.c.l.b16 %v8830
        %v8977 = vunpack.c.l.b16 %v8840
        %v8978 = vunpack.c.l.b16 %v8854
        %v8979 = vunpack.c.l.b16 %v8864
        %v8980 = vunpack.c.l.b16 %v8878
        %v8981 = vunpack.c.l.b16 %v8888
        %v8982 = vunpack.c.l.b16 %v8902
        %v8983 = vunpack.c.l.b16 %v8912
        %v8984 = vunpack.c.l.b16 %v8926
        %v8985 = vunpack.c.l.b16 %v8936
        %v8986 = vpack.c.b16 %v8955, %v8954
        %v8987 = vpack.c.b16 %v8957, %v8956
        %v8988 = vpack.c.b16 %v8959, %v8958
        %v8989 = vpack.c.b16 %v8961, %v8960
        %v8990 = vpack.c.b16 %v8963, %v8962
        %v8991 = vpack.c.b16 %v8965, %v8964
        %v8992 = vpack.c.b16 %v8967, %v8966
        %v8993 = vpack.c.b16 %v8969, %v8968
        %v8994 = vpack.c.b16 %v8971, %v8970
        %v8995 = vpack.c.b16 %v8973, %v8972
        %v8996 = vpack.c.b16 %v8975, %v8974
        %v8997 = vpack.c.b16 %v8977, %v8976
        %v8998 = vpack.c.b16 %v8979, %v8978
        %v8999 = vpack.c.b16 %v8981, %v8980
        %v9000 = vpack.c.b16 %v8983, %v8982
        %v9001 = vpack.c.b16 %v8985, %v8984
        %v9034 = vunpack.c.l.b16 %v8938
        %v9035 = vunpack.c.l.b16 %v8939
        %v9036 = vunpack.c.l.b16 %v8940
        %v9037 = vunpack.c.l.b16 %v8941
        %v9038 = vunpack.c.l.b16 %v8942
        %v9039 = vunpack.c.l.b16 %v8943
        %v9040 = vunpack.c.l.b16 %v8944
        %v9041 = vunpack.c.l.b16 %v8945
        %v9042 = vunpack.c.l.b16 %v8946
        %v9043 = vunpack.c.l.b16 %v8947
        %v9044 = vunpack.c.l.b16 %v8948
        %v9045 = vunpack.c.l.b16 %v8949
        %v9046 = vunpack.c.l.b16 %v8950
        %v9047 = vunpack.c.l.b16 %v8951
        %v9048 = vunpack.c.l.b16 %v8952
        %v9049 = vunpack.c.l.b16 %v8953
        %v9050 = vpack.c.b16 %v9035, %v9034
        %v9051 = vpack.c.b16 %v9037, %v9036
        %v9052 = vpack.c.b16 %v9039, %v9038
        %v9053 = vpack.c.b16 %v9041, %v9040
        %v9054 = vpack.c.b16 %v9043, %v9042
        %v9055 = vpack.c.b16 %v9045, %v9044
        %v9056 = vpack.c.b16 %v9047, %v9046
        %v9057 = vpack.c.b16 %v9049, %v9048
        %9066 = vmatpush.bf16.msra.mxu0 %v9057
        %9067 = vmatpush.bf16.msra.mxu0 %v9056
        %9068 = vmatpush.bf16.msra.mxu0 %v9055
        %9069 = vmatpush.bf16.msra.mxu0 %v9054
        %9070 = vmatpush.bf16.msra.mxu0 %v9053
        %9071 = vmatpush.bf16.msra.mxu0 %v9052
        %9072 = vmatpush.bf16.msra.mxu0 %v9051
        %9073 = vmatpush.bf16.msra.mxu0 %v9050
        %9074 = vmatmul.bf16.gmra.mxu0 %v8986
        %v9075 = vpop.f32.mrf.mxu0
        %v9076 = vadd.f32 0.0, %v9075
        %v9077 = vpop.f32.mrf.mxu0
        %v9078 = vadd.f32 0.0, %v9077
        %9079 = vmatmul.bf16.gmra.mxu0 %v8987
        %v9080 = vpop.f32.mrf.mxu0
        %v9081 = vadd.f32 0.0, %v9080
        %v9082 = vpop.f32.mrf.mxu0
        %v9083 = vadd.f32 0.0, %v9082
        %9084 = vmatmul.bf16.gmra.mxu0 %v8988
        %v9085 = vpop.f32.mrf.mxu0
        %v9086 = vadd.f32 0.0, %v9085
        %v9087 = vpop.f32.mrf.mxu0
        %v9088 = vadd.f32 0.0, %v9087
        %9089 = vmatmul.bf16.gmra.mxu0 %v8989
        %v9090 = vpop.f32.mrf.mxu0
        %v9091 = vadd.f32 0.0, %v9090
        %v9092 = vpop.f32.mrf.mxu0
        %v9093 = vadd.f32 0.0, %v9092
        %9094 = vmatmul.bf16.gmra.mxu0 %v8990
        %v9095 = vpop.f32.mrf.mxu0
        %v9096 = vadd.f32 0.0, %v9095
        %v9097 = vpop.f32.mrf.mxu0
        %v9098 = vadd.f32 0.0, %v9097
        %9099 = vmatmul.bf16.gmra.mxu0 %v8991
        %v9100 = vpop.f32.mrf.mxu0
        %v9101 = vadd.f32 0.0, %v9100
        %v9102 = vpop.f32.mrf.mxu0
        %v9103 = vadd.f32 0.0, %v9102
        %9104 = vmatmul.bf16.gmra.mxu0 %v8992
        %v9105 = vpop.f32.mrf.mxu0
        %v9106 = vadd.f32 0.0, %v9105
        %v9107 = vpop.f32.mrf.mxu0
        %v9108 = vadd.f32 0.0, %v9107
        %9109 = vmatmul.bf16.gmra.mxu0 %v8993
        %v9110 = vpop.f32.mrf.mxu0
        %v9111 = vadd.f32 0.0, %v9110
        %v9112 = vpop.f32.mrf.mxu0
        %v9113 = vadd.f32 0.0, %v9112
        %9114 = vmatmul.bf16.gmra.mxu0 %v8994
        %v9115 = vpop.f32.mrf.mxu0
        %v9116 = vadd.f32 0.0, %v9115
        %v9117 = vpop.f32.mrf.mxu0
        %v9118 = vadd.f32 0.0, %v9117
        %9119 = vmatmul.bf16.gmra.mxu0 %v8995
        %v9120 = vpop.f32.mrf.mxu0
        %v9121 = vadd.f32 0.0, %v9120
        %v9122 = vpop.f32.mrf.mxu0
        %v9123 = vadd.f32 0.0, %v9122
        %9124 = vmatmul.bf16.gmra.mxu0 %v8996
        %v9125 = vpop.f32.mrf.mxu0
        %v9126 = vadd.f32 0.0, %v9125
        %v9127 = vpop.f32.mrf.mxu0
        %v9128 = vadd.f32 0.0, %v9127
        %9129 = vmatmul.bf16.gmra.mxu0 %v8997
        %v9130 = vpop.f32.mrf.mxu0
        %v9131 = vadd.f32 0.0, %v9130
        %v9132 = vpop.f32.mrf.mxu0
        %v9133 = vadd.f32 0.0, %v9132
        %9134 = vmatmul.bf16.gmra.mxu0 %v8998
        %v9135 = vpop.f32.mrf.mxu0
        %v9136 = vadd.f32 0.0, %v9135
        %v9137 = vpop.f32.mrf.mxu0
        %v9138 = vadd.f32 0.0, %v9137
        %9139 = vmatmul.bf16.gmra.mxu0 %v8999
        %v9140 = vpop.f32.mrf.mxu0
        %v9141 = vadd.f32 0.0, %v9140
        %v9142 = vpop.f32.mrf.mxu0
        %v9143 = vadd.f32 0.0, %v9142
        %9144 = vmatmul.bf16.gmra.mxu0 %v9000
        %v9145 = vpop.f32.mrf.mxu0
        %v9146 = vadd.f32 0.0, %v9145
        %v9147 = vpop.f32.mrf.mxu0
        %v9148 = vadd.f32 0.0, %v9147
        %9149 = vmatmul.bf16.gmra.mxu0 %v9001
        %v9150 = vpop.f32.mrf.mxu0
        %v9151 = vadd.f32 0.0, %v9150
        %v9152 = vpop.f32.mrf.mxu0
        %v9153 = vadd.f32 0.0, %v9152
        %9154 = vdwg.mxu0
        %v9155 = vadd.f32 %v8473, %v9076
        %v9156 = vadd.f32 %v8474, %v9078
        %v9157 = vadd.f32 %v8475, %v9081
        %v9158 = vadd.f32 %v8476, %v9083
        %v9159 = vadd.f32 %v8477, %v9086
        %v9160 = vadd.f32 %v8478, %v9088
        %v9161 = vadd.f32 %v8479, %v9091
        %v9162 = vadd.f32 %v8480, %v9093
        %v9163 = vadd.f32 %v8481, %v9096
        %v9164 = vadd.f32 %v8482, %v9098
        %v9165 = vadd.f32 %v8483, %v9101
        %v9166 = vadd.f32 %v8484, %v9103
        %v9167 = vadd.f32 %v8485, %v9106
        %v9168 = vadd.f32 %v8486, %v9108
        %v9169 = vadd.f32 %v8487, %v9111
        %v9170 = vadd.f32 %v8488, %v9113
        %v9171 = vadd.f32 %v8489, %v9116
        %v9172 = vadd.f32 %v8490, %v9118
        %v9173 = vadd.f32 %v8491, %v9121
        %v9174 = vadd.f32 %v8492, %v9123
        %v9175 = vadd.f32 %v8493, %v9126
        %v9176 = vadd.f32 %v8494, %v9128
        %v9177 = vadd.f32 %v8495, %v9131
        %v9178 = vadd.f32 %v8496, %v9133
        %v9179 = vadd.f32 %v8497, %v9136
        %v9180 = vadd.f32 %v8498, %v9138
        %v9181 = vadd.f32 %v8499, %v9141
        %v9182 = vadd.f32 %v8500, %v9143
        %v9183 = vadd.f32 %v8501, %v9146
        %v9184 = vadd.f32 %v8502, %v9148
        %v9185 = vadd.f32 %v8503, %v9151
        %v9186 = vadd.f32 %v8504, %v9153
        %v9187 = vld [vmem:[%s643] sm:$0x8]
        %v9188 = vld [vmem:[%s643 + $0x4] sm:$0xf]
        %v9189 = vld [vmem:[%s643 + $0x8] sm:$0xf]
        %v9190 = vld [vmem:[%s643 + $0x10] sm:$0x8]
        %v9191 = vld [vmem:[%s643 + $0x14] sm:$0xf]
        %v9192 = vld [vmem:[%s643 + $0x18] sm:$0xf]
        %v9193 = vld [vmem:[%s643 + $0x20] sm:$0x8]
        %v9194 = vld [vmem:[%s643 + $0x24] sm:$0xf]
        %v9195 = vld [vmem:[%s643 + $0x28] sm:$0xf]
        %v9196 = vld [vmem:[%s643 + $0x30] sm:$0x8]
        %v9197 = vld [vmem:[%s643 + $0x34] sm:$0xf]
        %v9198 = vld [vmem:[%s643 + $0x38] sm:$0xf]
        %v9199 = vld [vmem:[%s643 + $0x40] sm:$0x8]
        %v9200 = vld [vmem:[%s643 + $0x44] sm:$0xf]
        %v9201 = vld [vmem:[%s643 + $0x48] sm:$0xf]
        %v9202 = vld [vmem:[%s643 + $0x50] sm:$0x8]
        %v9203 = vld [vmem:[%s643 + $0x54] sm:$0xf]
        %v9204 = vld [vmem:[%s643 + $0x58] sm:$0xf]
        %v9205 = vld [vmem:[%s643 + $0x60] sm:$0x8]
        %v9206 = vld [vmem:[%s643 + $0x64] sm:$0xf]
        %v9207 = vld [vmem:[%s643 + $0x68] sm:$0xf]
        %v9208 = vld [vmem:[%s643 + $0x70] sm:$0x8]
        %v9209 = vld [vmem:[%s643 + $0x74] sm:$0xf]
        %v9210 = vld [vmem:[%s643 + $0x78] sm:$0xf]
        %v9211 = vld [vmem:[%s643 + $0x80] sm:$0x8]
        %v9212 = vld [vmem:[%s643 + $0x84] sm:$0xf]
        %v9213 = vld [vmem:[%s643 + $0x88] sm:$0xf]
        %v9214 = vld [vmem:[%s643 + $0x90] sm:$0x8]
        %v9215 = vld [vmem:[%s643 + $0x94] sm:$0xf]
        %v9216 = vld [vmem:[%s643 + $0x98] sm:$0xf]
        %v9217 = vld [vmem:[%s643 + $0xa0] sm:$0x8]
        %v9218 = vld [vmem:[%s643 + $0xa4] sm:$0xf]
        %v9219 = vld [vmem:[%s643 + $0xa8] sm:$0xf]
        %v9220 = vld [vmem:[%s643 + $0xb0] sm:$0x8]
        %v9221 = vld [vmem:[%s643 + $0xb4] sm:$0xf]
        %v9222 = vld [vmem:[%s643 + $0xb8] sm:$0xf]
        %v9223 = vld [vmem:[%s643 + $0xc0] sm:$0x8]
        %v9224 = vld [vmem:[%s643 + $0xc4] sm:$0xf]
        %v9225 = vld [vmem:[%s643 + $0xc8] sm:$0xf]
        %v9226 = vld [vmem:[%s643 + $0xd0] sm:$0x8]
        %v9227 = vld [vmem:[%s643 + $0xd4] sm:$0xf]
        %v9228 = vld [vmem:[%s643 + $0xd8] sm:$0xf]
        %v9229 = vld [vmem:[%s643 + $0xe0] sm:$0x8]
        %v9230 = vld [vmem:[%s643 + $0xe4] sm:$0xf]
        %v9231 = vld [vmem:[%s643 + $0xe8] sm:$0xf]
        %v9232 = vld [vmem:[%s643 + $0xf0] sm:$0x8]
        %v9233 = vld [vmem:[%s643 + $0xf4] sm:$0xf]
        %v9234 = vld [vmem:[%s643 + $0xf8] sm:$0xf]
        %v9236 = vshrl.u32 %v9187, 16
        %v9238 = vrot.slane %v9236, 7
        %v9239 = vrot.slane %v9238, 4
        %v9241 = vshrl.u32 %v9188, 16
        %v9243 = vrot.slane %v9241, 7
        %v9244 = vshll.u32 %v9188, 16
        %v9246 = vor.u32 %v9243, %v9244
        %v9247 = vsel %vm713, %v9239, %v9246
        %v9248 = vrot.slane %v9243, 4
        %v9250 = vshrl.u32 %v9189, 16
        %v9252 = vrot.slane %v9250, 7
        %v9253 = vshll.u32 %v9189, 16
        %v9255 = vor.u32 %v9252, %v9253
        %v9256 = vsel %vm713, %v9248, %v9255
        %v9258 = vshrl.u32 %v9190, 16
        %v9260 = vrot.slane %v9258, 7
        %v9261 = vrot.slane %v9260, 4
        %v9263 = vshrl.u32 %v9191, 16
        %v9265 = vrot.slane %v9263, 7
        %v9266 = vshll.u32 %v9191, 16
        %v9268 = vor.u32 %v9265, %v9266
        %v9269 = vsel %vm713, %v9261, %v9268
        %v9270 = vrot.slane %v9265, 4
        %v9272 = vshrl.u32 %v9192, 16
        %v9274 = vrot.slane %v9272, 7
        %v9275 = vshll.u32 %v9192, 16
        %v9277 = vor.u32 %v9274, %v9275
        %v9278 = vsel %vm713, %v9270, %v9277
        %v9280 = vshrl.u32 %v9193, 16
        %v9282 = vrot.slane %v9280, 7
        %v9283 = vrot.slane %v9282, 4
        %v9285 = vshrl.u32 %v9194, 16
        %v9287 = vrot.slane %v9285, 7
        %v9288 = vshll.u32 %v9194, 16
        %v9290 = vor.u32 %v9287, %v9288
        %v9291 = vsel %vm713, %v9283, %v9290
        %v9292 = vrot.slane %v9287, 4
        %v9294 = vshrl.u32 %v9195, 16
        %v9296 = vrot.slane %v9294, 7
        %v9297 = vshll.u32 %v9195, 16
        %v9299 = vor.u32 %v9296, %v9297
        %v9300 = vsel %vm713, %v9292, %v9299
        %v9302 = vshrl.u32 %v9196, 16
        %v9304 = vrot.slane %v9302, 7
        %v9305 = vrot.slane %v9304, 4
        %v9307 = vshrl.u32 %v9197, 16
        %v9309 = vrot.slane %v9307, 7
        %v9310 = vshll.u32 %v9197, 16
        %v9312 = vor.u32 %v9309, %v9310
        %v9313 = vsel %vm713, %v9305, %v9312
        %v9314 = vrot.slane %v9309, 4
        %v9316 = vshrl.u32 %v9198, 16
        %v9318 = vrot.slane %v9316, 7
        %v9319 = vshll.u32 %v9198, 16
        %v9321 = vor.u32 %v9318, %v9319
        %v9322 = vsel %vm713, %v9314, %v9321
        %v9324 = vshrl.u32 %v9199, 16
        %v9326 = vrot.slane %v9324, 7
        %v9327 = vrot.slane %v9326, 4
        %v9329 = vshrl.u32 %v9200, 16
        %v9331 = vrot.slane %v9329, 7
        %v9332 = vshll.u32 %v9200, 16
        %v9334 = vor.u32 %v9331, %v9332
        %v9335 = vsel %vm713, %v9327, %v9334
        %v9336 = vrot.slane %v9331, 4
        %v9338 = vshrl.u32 %v9201, 16
        %v9340 = vrot.slane %v9338, 7
        %v9341 = vshll.u32 %v9201, 16
        %v9343 = vor.u32 %v9340, %v9341
        %v9344 = vsel %vm713, %v9336, %v9343
        %v9346 = vshrl.u32 %v9202, 16
        %v9348 = vrot.slane %v9346, 7
        %v9349 = vrot.slane %v9348, 4
        %v9351 = vshrl.u32 %v9203, 16
        %v9353 = vrot.slane %v9351, 7
        %v9354 = vshll.u32 %v9203, 16
        %v9356 = vor.u32 %v9353, %v9354
        %v9357 = vsel %vm713, %v9349, %v9356
        %v9358 = vrot.slane %v9353, 4
        %v9360 = vshrl.u32 %v9204, 16
        %v9362 = vrot.slane %v9360, 7
        %v9363 = vshll.u32 %v9204, 16
        %v9365 = vor.u32 %v9362, %v9363
        %v9366 = vsel %vm713, %v9358, %v9365
        %v9368 = vshrl.u32 %v9205, 16
        %v9370 = vrot.slane %v9368, 7
        %v9371 = vrot.slane %v9370, 4
        %v9373 = vshrl.u32 %v9206, 16
        %v9375 = vrot.slane %v9373, 7
        %v9376 = vshll.u32 %v9206, 16
        %v9378 = vor.u32 %v9375, %v9376
        %v9379 = vsel %vm713, %v9371, %v9378
        %v9380 = vrot.slane %v9375, 4
        %v9382 = vshrl.u32 %v9207, 16
        %v9384 = vrot.slane %v9382, 7
        %v9385 = vshll.u32 %v9207, 16
        %v9387 = vor.u32 %v9384, %v9385
        %v9388 = vsel %vm713, %v9380, %v9387
        %v9390 = vshrl.u32 %v9208, 16
        %v9392 = vrot.slane %v9390, 7
        %v9393 = vrot.slane %v9392, 4
        %v9395 = vshrl.u32 %v9209, 16
        %v9397 = vrot.slane %v9395, 7
        %v9398 = vshll.u32 %v9209, 16
        %v9400 = vor.u32 %v9397, %v9398
        %v9401 = vsel %vm713, %v9393, %v9400
        %v9402 = vrot.slane %v9397, 4
        %v9404 = vshrl.u32 %v9210, 16
        %v9406 = vrot.slane %v9404, 7
        %v9407 = vshll.u32 %v9210, 16
        %v9409 = vor.u32 %v9406, %v9407
        %v9410 = vsel %vm713, %v9402, %v9409
        %v9412 = vshrl.u32 %v9211, 16
        %v9414 = vrot.slane %v9412, 7
        %v9415 = vrot.slane %v9414, 4
        %v9417 = vshrl.u32 %v9212, 16
        %v9419 = vrot.slane %v9417, 7
        %v9420 = vshll.u32 %v9212, 16
        %v9422 = vor.u32 %v9419, %v9420
        %v9423 = vsel %vm713, %v9415, %v9422
        %v9424 = vrot.slane %v9419, 4
        %v9426 = vshrl.u32 %v9213, 16
        %v9428 = vrot.slane %v9426, 7
        %v9429 = vshll.u32 %v9213, 16
        %v9431 = vor.u32 %v9428, %v9429
        %v9432 = vsel %vm713, %v9424, %v9431
        %v9434 = vshrl.u32 %v9214, 16
        %v9436 = vrot.slane %v9434, 7
        %v9437 = vrot.slane %v9436, 4
        %v9439 = vshrl.u32 %v9215, 16
        %v9441 = vrot.slane %v9439, 7
        %v9442 = vshll.u32 %v9215, 16
        %v9444 = vor.u32 %v9441, %v9442
        %v9445 = vsel %vm713, %v9437, %v9444
        %v9446 = vrot.slane %v9441, 4
        %v9448 = vshrl.u32 %v9216, 16
        %v9450 = vrot.slane %v9448, 7
        %v9451 = vshll.u32 %v9216, 16
        %v9453 = vor.u32 %v9450, %v9451
        %v9454 = vsel %vm713, %v9446, %v9453
        %v9456 = vshrl.u32 %v9217, 16
        %v9458 = vrot.slane %v9456, 7
        %v9459 = vrot.slane %v9458, 4
        %v9461 = vshrl.u32 %v9218, 16
        %v9463 = vrot.slane %v9461, 7
        %v9464 = vshll.u32 %v9218, 16
        %v9466 = vor.u32 %v9463, %v9464
        %v9467 = vsel %vm713, %v9459, %v9466
        %v9468 = vrot.slane %v9463, 4
        %v9470 = vshrl.u32 %v9219, 16
        %v9472 = vrot.slane %v9470, 7
        %v9473 = vshll.u32 %v9219, 16
        %v9475 = vor.u32 %v9472, %v9473
        %v9476 = vsel %vm713, %v9468, %v9475
        %v9478 = vshrl.u32 %v9220, 16
        %v9480 = vrot.slane %v9478, 7
        %v9481 = vrot.slane %v9480, 4
        %v9483 = vshrl.u32 %v9221, 16
        %v9485 = vrot.slane %v9483, 7
        %v9486 = vshll.u32 %v9221, 16
        %v9488 = vor.u32 %v9485, %v9486
        %v9489 = vsel %vm713, %v9481, %v9488
        %v9490 = vrot.slane %v9485, 4
        %v9492 = vshrl.u32 %v9222, 16
        %v9494 = vrot.slane %v9492, 7
        %v9495 = vshll.u32 %v9222, 16
        %v9497 = vor.u32 %v9494, %v9495
        %v9498 = vsel %vm713, %v9490, %v9497
        %v9500 = vshrl.u32 %v9223, 16
        %v9502 = vrot.slane %v9500, 7
        %v9503 = vrot.slane %v9502, 4
        %v9505 = vshrl.u32 %v9224, 16
        %v9507 = vrot.slane %v9505, 7
        %v9508 = vshll.u32 %v9224, 16
        %v9510 = vor.u32 %v9507, %v9508
        %v9511 = vsel %vm713, %v9503, %v9510
        %v9512 = vrot.slane %v9507, 4
        %v9514 = vshrl.u32 %v9225, 16
        %v9516 = vrot.slane %v9514, 7
        %v9517 = vshll.u32 %v9225, 16
        %v9519 = vor.u32 %v9516, %v9517
        %v9520 = vsel %vm713, %v9512, %v9519
        %v9522 = vshrl.u32 %v9226, 16
        %v9524 = vrot.slane %v9522, 7
        %v9525 = vrot.slane %v9524, 4
        %v9527 = vshrl.u32 %v9227, 16
        %v9529 = vrot.slane %v9527, 7
        %v9530 = vshll.u32 %v9227, 16
        %v9532 = vor.u32 %v9529, %v9530
        %v9533 = vsel %vm713, %v9525, %v9532
        %v9534 = vrot.slane %v9529, 4
        %v9536 = vshrl.u32 %v9228, 16
        %v9538 = vrot.slane %v9536, 7
        %v9539 = vshll.u32 %v9228, 16
        %v9541 = vor.u32 %v9538, %v9539
        %v9542 = vsel %vm713, %v9534, %v9541
        %v9544 = vshrl.u32 %v9229, 16
        %v9546 = vrot.slane %v9544, 7
        %v9547 = vrot.slane %v9546, 4
        %v9549 = vshrl.u32 %v9230, 16
        %v9551 = vrot.slane %v9549, 7
        %v9552 = vshll.u32 %v9230, 16
        %v9554 = vor.u32 %v9551, %v9552
        %v9555 = vsel %vm713, %v9547, %v9554
        %v9556 = vrot.slane %v9551, 4
        %v9558 = vshrl.u32 %v9231, 16
        %v9560 = vrot.slane %v9558, 7
        %v9561 = vshll.u32 %v9231, 16
        %v9563 = vor.u32 %v9560, %v9561
        %v9564 = vsel %vm713, %v9556, %v9563
        %v9566 = vshrl.u32 %v9232, 16
        %v9568 = vrot.slane %v9566, 7
        %v9569 = vrot.slane %v9568, 4
        %v9571 = vshrl.u32 %v9233, 16
        %v9573 = vrot.slane %v9571, 7
        %v9574 = vshll.u32 %v9233, 16
        %v9576 = vor.u32 %v9573, %v9574
        %v9577 = vsel %vm713, %v9569, %v9576
        %v9578 = vrot.slane %v9573, 4
        %v9580 = vshrl.u32 %v9234, 16
        %v9582 = vrot.slane %v9580, 7
        %v9583 = vshll.u32 %v9234, 16
        %v9585 = vor.u32 %v9582, %v9583
        %v9586 = vsel %vm713, %v9578, %v9585
        %s9587 = scalar_lea.vmem [#allocation8], 384
        %v9588 = vld [vmem:[%s9587] sm:$0xf]
        %v9589 = vld [vmem:[%s9587 + $0x4] sm:$0xf]
        %v9590 = vld [vmem:[%s9587 + $0x8] sm:$0xf]
        %v9591 = vld [vmem:[%s9587 + $0xc] sm:$0xf]
        %v9592 = vld [vmem:[%s9587 + $0x10] sm:$0xf]
        %v9593 = vld [vmem:[%s9587 + $0x14] sm:$0xf]
        %v9594 = vld [vmem:[%s9587 + $0x18] sm:$0xf]
        %v9595 = vld [vmem:[%s9587 + $0x1c] sm:$0xf]
        %v9596 = vld [vmem:[%s9587 + $0x20] sm:$0xf]
        %v9597 = vld [vmem:[%s9587 + $0x24] sm:$0xf]
        %v9598 = vld [vmem:[%s9587 + $0x28] sm:$0xf]
        %v9599 = vld [vmem:[%s9587 + $0x2c] sm:$0xf]
        %v9600 = vld [vmem:[%s9587 + $0x30] sm:$0xf]
        %v9601 = vld [vmem:[%s9587 + $0x34] sm:$0xf]
        %v9602 = vld [vmem:[%s9587 + $0x38] sm:$0xf]
        %v9603 = vld [vmem:[%s9587 + $0x3c] sm:$0xf]
        %v9604 = vunpack.c.l.b16 %v9247
        %v9605 = vunpack.c.l.b16 %v9256
        %v9606 = vunpack.c.l.b16 %v9269
        %v9607 = vunpack.c.l.b16 %v9278
        %v9608 = vunpack.c.l.b16 %v9291
        %v9609 = vunpack.c.l.b16 %v9300
        %v9610 = vunpack.c.l.b16 %v9313
        %v9611 = vunpack.c.l.b16 %v9322
        %v9612 = vunpack.c.l.b16 %v9335
        %v9613 = vunpack.c.l.b16 %v9344
        %v9614 = vunpack.c.l.b16 %v9357
        %v9615 = vunpack.c.l.b16 %v9366
        %v9616 = vunpack.c.l.b16 %v9379
        %v9617 = vunpack.c.l.b16 %v9388
        %v9618 = vunpack.c.l.b16 %v9401
        %v9619 = vunpack.c.l.b16 %v9410
        %v9620 = vunpack.c.l.b16 %v9423
        %v9621 = vunpack.c.l.b16 %v9432
        %v9622 = vunpack.c.l.b16 %v9445
        %v9623 = vunpack.c.l.b16 %v9454
        %v9624 = vunpack.c.l.b16 %v9467
        %v9625 = vunpack.c.l.b16 %v9476
        %v9626 = vunpack.c.l.b16 %v9489
        %v9627 = vunpack.c.l.b16 %v9498
        %v9628 = vunpack.c.l.b16 %v9511
        %v9629 = vunpack.c.l.b16 %v9520
        %v9630 = vunpack.c.l.b16 %v9533
        %v9631 = vunpack.c.l.b16 %v9542
        %v9632 = vunpack.c.l.b16 %v9555
        %v9633 = vunpack.c.l.b16 %v9564
        %v9634 = vunpack.c.l.b16 %v9577
        %v9635 = vunpack.c.l.b16 %v9586
        %v9636 = vpack.c.b16 %v9605, %v9604
        %v9637 = vpack.c.b16 %v9607, %v9606
        %v9638 = vpack.c.b16 %v9609, %v9608
        %v9639 = vpack.c.b16 %v9611, %v9610
        %v9640 = vpack.c.b16 %v9613, %v9612
        %v9641 = vpack.c.b16 %v9615, %v9614
        %v9642 = vpack.c.b16 %v9617, %v9616
        %v9643 = vpack.c.b16 %v9619, %v9618
        %v9644 = vpack.c.b16 %v9621, %v9620
        %v9645 = vpack.c.b16 %v9623, %v9622
        %v9646 = vpack.c.b16 %v9625, %v9624
        %v9647 = vpack.c.b16 %v9627, %v9626
        %v9648 = vpack.c.b16 %v9629, %v9628
        %v9649 = vpack.c.b16 %v9631, %v9630
        %v9650 = vpack.c.b16 %v9633, %v9632
        %v9651 = vpack.c.b16 %v9635, %v9634
        %v9684 = vunpack.c.l.b16 %v9588
        %v9685 = vunpack.c.l.b16 %v9589
        %v9686 = vunpack.c.l.b16 %v9590
        %v9687 = vunpack.c.l.b16 %v9591
        %v9688 = vunpack.c.l.b16 %v9592
        %v9689 = vunpack.c.l.b16 %v9593
        %v9690 = vunpack.c.l.b16 %v9594
        %v9691 = vunpack.c.l.b16 %v9595
        %v9692 = vunpack.c.l.b16 %v9596
        %v9693 = vunpack.c.l.b16 %v9597
        %v9694 = vunpack.c.l.b16 %v9598
        %v9695 = vunpack.c.l.b16 %v9599
        %v9696 = vunpack.c.l.b16 %v9600
        %v9697 = vunpack.c.l.b16 %v9601
        %v9698 = vunpack.c.l.b16 %v9602
        %v9699 = vunpack.c.l.b16 %v9603
        %v9700 = vpack.c.b16 %v9685, %v9684
        %v9701 = vpack.c.b16 %v9687, %v9686
        %v9702 = vpack.c.b16 %v9689, %v9688
        %v9703 = vpack.c.b16 %v9691, %v9690
        %v9704 = vpack.c.b16 %v9693, %v9692
        %v9705 = vpack.c.b16 %v9695, %v9694
        %v9706 = vpack.c.b16 %v9697, %v9696
        %v9707 = vpack.c.b16 %v9699, %v9698
        %9716 = vmatpush.bf16.msra.mxu0 %v9707
        %9717 = vmatpush.bf16.msra.mxu0 %v9706
        %9718 = vmatpush.bf16.msra.mxu0 %v9705
        %9719 = vmatpush.bf16.msra.mxu0 %v9704
        %9720 = vmatpush.bf16.msra.mxu0 %v9703
        %9721 = vmatpush.bf16.msra.mxu0 %v9702
        %9722 = vmatpush.bf16.msra.mxu0 %v9701
        %9723 = vmatpush.bf16.msra.mxu0 %v9700
        %9724 = vmatmul.bf16.gmra.mxu0 %v9636
        %v9725 = vpop.f32.mrf.mxu0
        %v9726 = vadd.f32 0.0, %v9725
        %v9727 = vpop.f32.mrf.mxu0
        %v9728 = vadd.f32 0.0, %v9727
        %9729 = vmatmul.bf16.gmra.mxu0 %v9637
        %v9730 = vpop.f32.mrf.mxu0
        %v9731 = vadd.f32 0.0, %v9730
        %v9732 = vpop.f32.mrf.mxu0
        %v9733 = vadd.f32 0.0, %v9732
        %9734 = vmatmul.bf16.gmra.mxu0 %v9638
        %v9735 = vpop.f32.mrf.mxu0
        %v9736 = vadd.f32 0.0, %v9735
        %v9737 = vpop.f32.mrf.mxu0
        %v9738 = vadd.f32 0.0, %v9737
        %9739 = vmatmul.bf16.gmra.mxu0 %v9639
        %v9740 = vpop.f32.mrf.mxu0
        %v9741 = vadd.f32 0.0, %v9740
        %v9742 = vpop.f32.mrf.mxu0
        %v9743 = vadd.f32 0.0, %v9742
        %9744 = vmatmul.bf16.gmra.mxu0 %v9640
        %v9745 = vpop.f32.mrf.mxu0
        %v9746 = vadd.f32 0.0, %v9745
        %v9747 = vpop.f32.mrf.mxu0
        %v9748 = vadd.f32 0.0, %v9747
        %9749 = vmatmul.bf16.gmra.mxu0 %v9641
        %v9750 = vpop.f32.mrf.mxu0
        %v9751 = vadd.f32 0.0, %v9750
        %v9752 = vpop.f32.mrf.mxu0
        %v9753 = vadd.f32 0.0, %v9752
        %9754 = vmatmul.bf16.gmra.mxu0 %v9642
        %v9755 = vpop.f32.mrf.mxu0
        %v9756 = vadd.f32 0.0, %v9755
        %v9757 = vpop.f32.mrf.mxu0
        %v9758 = vadd.f32 0.0, %v9757
        %9759 = vmatmul.bf16.gmra.mxu0 %v9643
        %v9760 = vpop.f32.mrf.mxu0
        %v9761 = vadd.f32 0.0, %v9760
        %v9762 = vpop.f32.mrf.mxu0
        %v9763 = vadd.f32 0.0, %v9762
        %9764 = vmatmul.bf16.gmra.mxu0 %v9644
        %v9765 = vpop.f32.mrf.mxu0
        %v9766 = vadd.f32 0.0, %v9765
        %v9767 = vpop.f32.mrf.mxu0
        %v9768 = vadd.f32 0.0, %v9767
        %9769 = vmatmul.bf16.gmra.mxu0 %v9645
        %v9770 = vpop.f32.mrf.mxu0
        %v9771 = vadd.f32 0.0, %v9770
        %v9772 = vpop.f32.mrf.mxu0
        %v9773 = vadd.f32 0.0, %v9772
        %9774 = vmatmul.bf16.gmra.mxu0 %v9646
        %v9775 = vpop.f32.mrf.mxu0
        %v9776 = vadd.f32 0.0, %v9775
        %v9777 = vpop.f32.mrf.mxu0
        %v9778 = vadd.f32 0.0, %v9777
        %9779 = vmatmul.bf16.gmra.mxu0 %v9647
        %v9780 = vpop.f32.mrf.mxu0
        %v9781 = vadd.f32 0.0, %v9780
        %v9782 = vpop.f32.mrf.mxu0
        %v9783 = vadd.f32 0.0, %v9782
        %9784 = vmatmul.bf16.gmra.mxu0 %v9648
        %v9785 = vpop.f32.mrf.mxu0
        %v9786 = vadd.f32 0.0, %v9785
        %v9787 = vpop.f32.mrf.mxu0
        %v9788 = vadd.f32 0.0, %v9787
        %9789 = vmatmul.bf16.gmra.mxu0 %v9649
        %v9790 = vpop.f32.mrf.mxu0
        %v9791 = vadd.f32 0.0, %v9790
        %v9792 = vpop.f32.mrf.mxu0
        %v9793 = vadd.f32 0.0, %v9792
        %9794 = vmatmul.bf16.gmra.mxu0 %v9650
        %v9795 = vpop.f32.mrf.mxu0
        %v9796 = vadd.f32 0.0, %v9795
        %v9797 = vpop.f32.mrf.mxu0
        %v9798 = vadd.f32 0.0, %v9797
        %9799 = vmatmul.bf16.gmra.mxu0 %v9651
        %v9800 = vpop.f32.mrf.mxu0
        %v9801 = vadd.f32 0.0, %v9800
        %v9802 = vpop.f32.mrf.mxu0
        %v9803 = vadd.f32 0.0, %v9802
        %9804 = vdwg.mxu0
        %v9805 = vadd.f32 %v9155, %v9726
        %v9806 = vadd.f32 %v9156, %v9728
        %v9807 = vadd.f32 %v9157, %v9731
        %v9808 = vadd.f32 %v9158, %v9733
        %v9809 = vadd.f32 %v9159, %v9736
        %v9810 = vadd.f32 %v9160, %v9738
        %v9811 = vadd.f32 %v9161, %v9741
        %v9812 = vadd.f32 %v9162, %v9743
        %v9813 = vadd.f32 %v9163, %v9746
        %v9814 = vadd.f32 %v9164, %v9748
        %v9815 = vadd.f32 %v9165, %v9751
        %v9816 = vadd.f32 %v9166, %v9753
        %v9817 = vadd.f32 %v9167, %v9756
        %v9818 = vadd.f32 %v9168, %v9758
        %v9819 = vadd.f32 %v9169, %v9761
        %v9820 = vadd.f32 %v9170, %v9763
        %v9821 = vadd.f32 %v9171, %v9766
        %v9822 = vadd.f32 %v9172, %v9768
        %v9823 = vadd.f32 %v9173, %v9771
        %v9824 = vadd.f32 %v9174, %v9773
        %v9825 = vadd.f32 %v9175, %v9776
        %v9826 = vadd.f32 %v9176, %v9778
        %v9827 = vadd.f32 %v9177, %v9781
        %v9828 = vadd.f32 %v9178, %v9783
        %v9829 = vadd.f32 %v9179, %v9786
        %v9830 = vadd.f32 %v9180, %v9788
        %v9831 = vadd.f32 %v9181, %v9791
        %v9832 = vadd.f32 %v9182, %v9793
        %v9833 = vadd.f32 %v9183, %v9796
        %v9834 = vadd.f32 %v9184, %v9798
        %v9835 = vadd.f32 %v9185, %v9801
        %v9836 = vadd.f32 %v9186, %v9803
        %s9837 = scalar_lea.vmem [#allocation8], 448
        %v9838 = vld [vmem:[%s9837] sm:$0xf]
        %v9839 = vld [vmem:[%s9837 + $0x4] sm:$0xf]
        %v9840 = vld [vmem:[%s9837 + $0x8] sm:$0xf]
        %v9841 = vld [vmem:[%s9837 + $0xc] sm:$0xf]
        %v9842 = vld [vmem:[%s9837 + $0x10] sm:$0xf]
        %v9843 = vld [vmem:[%s9837 + $0x14] sm:$0xf]
        %v9844 = vld [vmem:[%s9837 + $0x18] sm:$0xf]
        %v9845 = vld [vmem:[%s9837 + $0x1c] sm:$0xf]
        %v9846 = vld [vmem:[%s9837 + $0x20] sm:$0xf]
        %v9847 = vld [vmem:[%s9837 + $0x24] sm:$0xf]
        %v9848 = vld [vmem:[%s9837 + $0x28] sm:$0xf]
        %v9849 = vld [vmem:[%s9837 + $0x2c] sm:$0xf]
        %v9850 = vld [vmem:[%s9837 + $0x30] sm:$0xf]
        %v9851 = vld [vmem:[%s9837 + $0x34] sm:$0xf]
        %v9852 = vld [vmem:[%s9837 + $0x38] sm:$0xf]
        %v9853 = vld [vmem:[%s9837 + $0x3c] sm:$0xf]
        %v9886 = vunpack.c.l.b16 %v9188
        %v9887 = vunpack.c.l.b16 %v9189
        %v9888 = vunpack.c.l.b16 %v9191
        %v9889 = vunpack.c.l.b16 %v9192
        %v9890 = vunpack.c.l.b16 %v9194
        %v9891 = vunpack.c.l.b16 %v9195
        %v9892 = vunpack.c.l.b16 %v9197
        %v9893 = vunpack.c.l.b16 %v9198
        %v9894 = vunpack.c.l.b16 %v9200
        %v9895 = vunpack.c.l.b16 %v9201
        %v9896 = vunpack.c.l.b16 %v9203
        %v9897 = vunpack.c.l.b16 %v9204
        %v9898 = vunpack.c.l.b16 %v9206
        %v9899 = vunpack.c.l.b16 %v9207
        %v9900 = vunpack.c.l.b16 %v9209
        %v9901 = vunpack.c.l.b16 %v9210
        %v9902 = vunpack.c.l.b16 %v9212
        %v9903 = vunpack.c.l.b16 %v9213
        %v9904 = vunpack.c.l.b16 %v9215
        %v9905 = vunpack.c.l.b16 %v9216
        %v9906 = vunpack.c.l.b16 %v9218
        %v9907 = vunpack.c.l.b16 %v9219
        %v9908 = vunpack.c.l.b16 %v9221
        %v9909 = vunpack.c.l.b16 %v9222
        %v9910 = vunpack.c.l.b16 %v9224
        %v9911 = vunpack.c.l.b16 %v9225
        %v9912 = vunpack.c.l.b16 %v9227
        %v9913 = vunpack.c.l.b16 %v9228
        %v9914 = vunpack.c.l.b16 %v9230
        %v9915 = vunpack.c.l.b16 %v9231
        %v9916 = vunpack.c.l.b16 %v9233
        %v9917 = vunpack.c.l.b16 %v9234
        %v9918 = vpack.c.b16 %v9887, %v9886
        %v9919 = vpack.c.b16 %v9889, %v9888
        %v9920 = vpack.c.b16 %v9891, %v9890
        %v9921 = vpack.c.b16 %v9893, %v9892
        %v9922 = vpack.c.b16 %v9895, %v9894
        %v9923 = vpack.c.b16 %v9897, %v9896
        %v9924 = vpack.c.b16 %v9899, %v9898
        %v9925 = vpack.c.b16 %v9901, %v9900
        %v9926 = vpack.c.b16 %v9903, %v9902
        %v9927 = vpack.c.b16 %v9905, %v9904
        %v9928 = vpack.c.b16 %v9907, %v9906
        %v9929 = vpack.c.b16 %v9909, %v9908
        %v9930 = vpack.c.b16 %v9911, %v9910
        %v9931 = vpack.c.b16 %v9913, %v9912
        %v9932 = vpack.c.b16 %v9915, %v9914
        %v9933 = vpack.c.b16 %v9917, %v9916
        %v9966 = vunpack.c.l.b16 %v9838
        %v9967 = vunpack.c.l.b16 %v9839
        %v9968 = vunpack.c.l.b16 %v9840
        %v9969 = vunpack.c.l.b16 %v9841
        %v9970 = vunpack.c.l.b16 %v9842
        %v9971 = vunpack.c.l.b16 %v9843
        %v9972 = vunpack.c.l.b16 %v9844
        %v9973 = vunpack.c.l.b16 %v9845
        %v9974 = vunpack.c.l.b16 %v9846
        %v9975 = vunpack.c.l.b16 %v9847
        %v9976 = vunpack.c.l.b16 %v9848
        %v9977 = vunpack.c.l.b16 %v9849
        %v9978 = vunpack.c.l.b16 %v9850
        %v9979 = vunpack.c.l.b16 %v9851
        %v9980 = vunpack.c.l.b16 %v9852
        %v9981 = vunpack.c.l.b16 %v9853
        %v9982 = vpack.c.b16 %v9967, %v9966
        %v9983 = vpack.c.b16 %v9969, %v9968
        %v9984 = vpack.c.b16 %v9971, %v9970
        %v9985 = vpack.c.b16 %v9973, %v9972
        %v9986 = vpack.c.b16 %v9975, %v9974
        %v9987 = vpack.c.b16 %v9977, %v9976
        %v9988 = vpack.c.b16 %v9979, %v9978
        %v9989 = vpack.c.b16 %v9981, %v9980
        %9998 = vmatpush.bf16.msra.mxu0 %v9989
        %9999 = vmatpush.bf16.msra.mxu0 %v9988
        %10000 = vmatpush.bf16.msra.mxu0 %v9987
        %10001 = vmatpush.bf16.msra.mxu0 %v9986
        %10002 = vmatpush.bf16.msra.mxu0 %v9985
        %10003 = vmatpush.bf16.msra.mxu0 %v9984
        %10004 = vmatpush.bf16.msra.mxu0 %v9983
        %10005 = vmatpush.bf16.msra.mxu0 %v9982
        %10006 = vmatmul.bf16.gmra.mxu0 %v9918
        %v10007 = vpop.f32.mrf.mxu0
        %v10008 = vadd.f32 0.0, %v10007
        %v10009 = vpop.f32.mrf.mxu0
        %v10010 = vadd.f32 0.0, %v10009
        %10011 = vmatmul.bf16.gmra.mxu0 %v9919
        %v10012 = vpop.f32.mrf.mxu0
        %v10013 = vadd.f32 0.0, %v10012
        %v10014 = vpop.f32.mrf.mxu0
        %v10015 = vadd.f32 0.0, %v10014
        %10016 = vmatmul.bf16.gmra.mxu0 %v9920
        %v10017 = vpop.f32.mrf.mxu0
        %v10018 = vadd.f32 0.0, %v10017
        %v10019 = vpop.f32.mrf.mxu0
        %v10020 = vadd.f32 0.0, %v10019
        %10021 = vmatmul.bf16.gmra.mxu0 %v9921
        %v10022 = vpop.f32.mrf.mxu0
        %v10023 = vadd.f32 0.0, %v10022
        %v10024 = vpop.f32.mrf.mxu0
        %v10025 = vadd.f32 0.0, %v10024
        %10026 = vmatmul.bf16.gmra.mxu0 %v9922
        %v10027 = vpop.f32.mrf.mxu0
        %v10028 = vadd.f32 0.0, %v10027
        %v10029 = vpop.f32.mrf.mxu0
        %v10030 = vadd.f32 0.0, %v10029
        %10031 = vmatmul.bf16.gmra.mxu0 %v9923
        %v10032 = vpop.f32.mrf.mxu0
        %v10033 = vadd.f32 0.0, %v10032
        %v10034 = vpop.f32.mrf.mxu0
        %v10035 = vadd.f32 0.0, %v10034
        %10036 = vmatmul.bf16.gmra.mxu0 %v9924
        %v10037 = vpop.f32.mrf.mxu0
        %v10038 = vadd.f32 0.0, %v10037
        %v10039 = vpop.f32.mrf.mxu0
        %v10040 = vadd.f32 0.0, %v10039
        %10041 = vmatmul.bf16.gmra.mxu0 %v9925
        %v10042 = vpop.f32.mrf.mxu0
        %v10043 = vadd.f32 0.0, %v10042
        %v10044 = vpop.f32.mrf.mxu0
        %v10045 = vadd.f32 0.0, %v10044
        %10046 = vmatmul.bf16.gmra.mxu0 %v9926
        %v10047 = vpop.f32.mrf.mxu0
        %v10048 = vadd.f32 0.0, %v10047
        %v10049 = vpop.f32.mrf.mxu0
        %v10050 = vadd.f32 0.0, %v10049
        %10051 = vmatmul.bf16.gmra.mxu0 %v9927
        %v10052 = vpop.f32.mrf.mxu0
        %v10053 = vadd.f32 0.0, %v10052
        %v10054 = vpop.f32.mrf.mxu0
        %v10055 = vadd.f32 0.0, %v10054
        %10056 = vmatmul.bf16.gmra.mxu0 %v9928
        %v10057 = vpop.f32.mrf.mxu0
        %v10058 = vadd.f32 0.0, %v10057
        %v10059 = vpop.f32.mrf.mxu0
        %v10060 = vadd.f32 0.0, %v10059
        %10061 = vmatmul.bf16.gmra.mxu0 %v9929
        %v10062 = vpop.f32.mrf.mxu0
        %v10063 = vadd.f32 0.0, %v10062
        %v10064 = vpop.f32.mrf.mxu0
        %v10065 = vadd.f32 0.0, %v10064
        %10066 = vmatmul.bf16.gmra.mxu0 %v9930
        %v10067 = vpop.f32.mrf.mxu0
        %v10068 = vadd.f32 0.0, %v10067
        %v10069 = vpop.f32.mrf.mxu0
        %v10070 = vadd.f32 0.0, %v10069
        %10071 = vmatmul.bf16.gmra.mxu0 %v9931
        %v10072 = vpop.f32.mrf.mxu0
        %v10073 = vadd.f32 0.0, %v10072
        %v10074 = vpop.f32.mrf.mxu0
        %v10075 = vadd.f32 0.0, %v10074
        %10076 = vmatmul.bf16.gmra.mxu0 %v9932
        %v10077 = vpop.f32.mrf.mxu0
        %v10078 = vadd.f32 0.0, %v10077
        %v10079 = vpop.f32.mrf.mxu0
        %v10080 = vadd.f32 0.0, %v10079
        %10081 = vmatmul.bf16.gmra.mxu0 %v9933
        %v10082 = vpop.f32.mrf.mxu0
        %v10083 = vadd.f32 0.0, %v10082
        %v10084 = vpop.f32.mrf.mxu0
        %v10085 = vadd.f32 0.0, %v10084
        %10086 = vdwg.mxu0
        %v10087 = vadd.f32 %v9805, %v10008
        %v10088 = vadd.f32 %v9806, %v10010
        %v10089 = vadd.f32 %v9807, %v10013
        %v10090 = vadd.f32 %v9808, %v10015
        %v10091 = vadd.f32 %v9809, %v10018
        %v10092 = vadd.f32 %v9810, %v10020
        %v10093 = vadd.f32 %v9811, %v10023
        %v10094 = vadd.f32 %v9812, %v10025
        %v10095 = vadd.f32 %v9813, %v10028
        %v10096 = vadd.f32 %v9814, %v10030
        %v10097 = vadd.f32 %v9815, %v10033
        %v10098 = vadd.f32 %v9816, %v10035
        %v10099 = vadd.f32 %v9817, %v10038
        %v10100 = vadd.f32 %v9818, %v10040
        %v10101 = vadd.f32 %v9819, %v10043
        %v10102 = vadd.f32 %v9820, %v10045
        %v10103 = vadd.f32 %v9821, %v10048
        %v10104 = vadd.f32 %v9822, %v10050
        %v10105 = vadd.f32 %v9823, %v10053
        %v10106 = vadd.f32 %v9824, %v10055
        %v10107 = vadd.f32 %v9825, %v10058
        %v10108 = vadd.f32 %v9826, %v10060
        %v10109 = vadd.f32 %v9827, %v10063
        %v10110 = vadd.f32 %v9828, %v10065
        %v10111 = vadd.f32 %v9829, %v10068
        %v10112 = vadd.f32 %v9830, %v10070
        %v10113 = vadd.f32 %v9831, %v10073
        %v10114 = vadd.f32 %v9832, %v10075
        %v10115 = vadd.f32 %v9833, %v10078
        %v10116 = vadd.f32 %v9834, %v10080
        %v10117 = vadd.f32 %v9835, %v10083
        %v10118 = vadd.f32 %v9836, %v10085
        %v10119 = vld [vmem:[%s643 + $0x4] sm:$0xf]
        %v10120 = vld [vmem:[%s643 + $0x8] sm:$0xf]
        %v10121 = vld [vmem:[%s643 + $0xc] sm:$0x1]
        %v10122 = vld [vmem:[%s643 + $0x14] sm:$0xf]
        %v10123 = vld [vmem:[%s643 + $0x18] sm:$0xf]
        %v10124 = vld [vmem:[%s643 + $0x1c] sm:$0x1]
        %v10125 = vld [vmem:[%s643 + $0x24] sm:$0xf]
        %v10126 = vld [vmem:[%s643 + $0x28] sm:$0xf]
        %v10127 = vld [vmem:[%s643 + $0x2c] sm:$0x1]
        %v10128 = vld [vmem:[%s643 + $0x34] sm:$0xf]
        %v10129 = vld [vmem:[%s643 + $0x38] sm:$0xf]
        %v10130 = vld [vmem:[%s643 + $0x3c] sm:$0x1]
        %v10131 = vld [vmem:[%s643 + $0x44] sm:$0xf]
        %v10132 = vld [vmem:[%s643 + $0x48] sm:$0xf]
        %v10133 = vld [vmem:[%s643 + $0x4c] sm:$0x1]
        %v10134 = vld [vmem:[%s643 + $0x54] sm:$0xf]
        %v10135 = vld [vmem:[%s643 + $0x58] sm:$0xf]
        %v10136 = vld [vmem:[%s643 + $0x5c] sm:$0x1]
        %v10137 = vld [vmem:[%s643 + $0x64] sm:$0xf]
        %v10138 = vld [vmem:[%s643 + $0x68] sm:$0xf]
        %v10139 = vld [vmem:[%s643 + $0x6c] sm:$0x1]
        %v10140 = vld [vmem:[%s643 + $0x74] sm:$0xf]
        %v10141 = vld [vmem:[%s643 + $0x78] sm:$0xf]
        %v10142 = vld [vmem:[%s643 + $0x7c] sm:$0x1]
        %v10143 = vld [vmem:[%s643 + $0x84] sm:$0xf]
        %v10144 = vld [vmem:[%s643 + $0x88] sm:$0xf]
        %v10145 = vld [vmem:[%s643 + $0x8c] sm:$0x1]
        %v10146 = vld [vmem:[%s643 + $0x94] sm:$0xf]
        %v10147 = vld [vmem:[%s643 + $0x98] sm:$0xf]
        %v10148 = vld [vmem:[%s643 + $0x9c] sm:$0x1]
        %v10149 = vld [vmem:[%s643 + $0xa4] sm:$0xf]
        %v10150 = vld [vmem:[%s643 + $0xa8] sm:$0xf]
        %v10151 = vld [vmem:[%s643 + $0xac] sm:$0x1]
        %v10152 = vld [vmem:[%s643 + $0xb4] sm:$0xf]
        %v10153 = vld [vmem:[%s643 + $0xb8] sm:$0xf]
        %v10154 = vld [vmem:[%s643 + $0xbc] sm:$0x1]
        %v10155 = vld [vmem:[%s643 + $0xc4] sm:$0xf]
        %v10156 = vld [vmem:[%s643 + $0xc8] sm:$0xf]
        %v10157 = vld [vmem:[%s643 + $0xcc] sm:$0x1]
        %v10158 = vld [vmem:[%s643 + $0xd4] sm:$0xf]
        %v10159 = vld [vmem:[%s643 + $0xd8] sm:$0xf]
        %v10160 = vld [vmem:[%s643 + $0xdc] sm:$0x1]
        %v10161 = vld [vmem:[%s643 + $0xe4] sm:$0xf]
        %v10162 = vld [vmem:[%s643 + $0xe8] sm:$0xf]
        %v10163 = vld [vmem:[%s643 + $0xec] sm:$0x1]
        %v10164 = vld [vmem:[%s643 + $0xf4] sm:$0xf]
        %v10165 = vld [vmem:[%s643 + $0xf8] sm:$0xf]
        %v10166 = vld [vmem:[%s643 + $0xfc] sm:$0x1]
        %v10168 = vshrl.u32 %v10119, 16
        %v10170 = vrot.slane %v10168, 4
        %v10171 = vshll.u32 %v10119, 16
        %v10173 = vrot.slane %v10171, 5
        %v10174 = vor.u32 %v10170, %v10173
        %v10175 = vrot.slane %v10174, 4
        %v10177 = vshll.u32 %v10120, 16
        %v10179 = vrot.slane %v10177, 5
        %v10180 = vsel %vm1583, %v10175, %v10179
        %v10181 = vshrl.u32 %v10120, 16
        %v10183 = vrot.slane %v10181, 4
        %v10184 = vor.u32 %v10183, %v10179
        %v10185 = vrot.slane %v10184, 4
        %v10187 = vshll.u32 %v10121, 16
        %v10189 = vrot.slane %v10187, 5
        %v10190 = vsel %vm1583, %v10185, %v10189
        %v10192 = vshrl.u32 %v10122, 16
        %v10194 = vrot.slane %v10192, 4
        %v10195 = vshll.u32 %v10122, 16
        %v10197 = vrot.slane %v10195, 5
        %v10198 = vor.u32 %v10194, %v10197
        %v10199 = vrot.slane %v10198, 4
        %v10201 = vshll.u32 %v10123, 16
        %v10203 = vrot.slane %v10201, 5
        %v10204 = vsel %vm1583, %v10199, %v10203
        %v10205 = vshrl.u32 %v10123, 16
        %v10207 = vrot.slane %v10205, 4
        %v10208 = vor.u32 %v10207, %v10203
        %v10209 = vrot.slane %v10208, 4
        %v10211 = vshll.u32 %v10124, 16
        %v10213 = vrot.slane %v10211, 5
        %v10214 = vsel %vm1583, %v10209, %v10213
        %v10216 = vshrl.u32 %v10125, 16
        %v10218 = vrot.slane %v10216, 4
        %v10219 = vshll.u32 %v10125, 16
        %v10221 = vrot.slane %v10219, 5
        %v10222 = vor.u32 %v10218, %v10221
        %v10223 = vrot.slane %v10222, 4
        %v10225 = vshll.u32 %v10126, 16
        %v10227 = vrot.slane %v10225, 5
        %v10228 = vsel %vm1583, %v10223, %v10227
        %v10229 = vshrl.u32 %v10126, 16
        %v10231 = vrot.slane %v10229, 4
        %v10232 = vor.u32 %v10231, %v10227
        %v10233 = vrot.slane %v10232, 4
        %v10235 = vshll.u32 %v10127, 16
        %v10237 = vrot.slane %v10235, 5
        %v10238 = vsel %vm1583, %v10233, %v10237
        %v10240 = vshrl.u32 %v10128, 16
        %v10242 = vrot.slane %v10240, 4
        %v10243 = vshll.u32 %v10128, 16
        %v10245 = vrot.slane %v10243, 5
        %v10246 = vor.u32 %v10242, %v10245
        %v10247 = vrot.slane %v10246, 4
        %v10249 = vshll.u32 %v10129, 16
        %v10251 = vrot.slane %v10249, 5
        %v10252 = vsel %vm1583, %v10247, %v10251
        %v10253 = vshrl.u32 %v10129, 16
        %v10255 = vrot.slane %v10253, 4
        %v10256 = vor.u32 %v10255, %v10251
        %v10257 = vrot.slane %v10256, 4
        %v10259 = vshll.u32 %v10130, 16
        %v10261 = vrot.slane %v10259, 5
        %v10262 = vsel %vm1583, %v10257, %v10261
        %v10264 = vshrl.u32 %v10131, 16
        %v10266 = vrot.slane %v10264, 4
        %v10267 = vshll.u32 %v10131, 16
        %v10269 = vrot.slane %v10267, 5
        %v10270 = vor.u32 %v10266, %v10269
        %v10271 = vrot.slane %v10270, 4
        %v10273 = vshll.u32 %v10132, 16
        %v10275 = vrot.slane %v10273, 5
        %v10276 = vsel %vm1583, %v10271, %v10275
        %v10277 = vshrl.u32 %v10132, 16
        %v10279 = vrot.slane %v10277, 4
        %v10280 = vor.u32 %v10279, %v10275
        %v10281 = vrot.slane %v10280, 4
        %v10283 = vshll.u32 %v10133, 16
        %v10285 = vrot.slane %v10283, 5
        %v10286 = vsel %vm1583, %v10281, %v10285
        %v10288 = vshrl.u32 %v10134, 16
        %v10290 = vrot.slane %v10288, 4
        %v10291 = vshll.u32 %v10134, 16
        %v10293 = vrot.slane %v10291, 5
        %v10294 = vor.u32 %v10290, %v10293
        %v10295 = vrot.slane %v10294, 4
        %v10297 = vshll.u32 %v10135, 16
        %v10299 = vrot.slane %v10297, 5
        %v10300 = vsel %vm1583, %v10295, %v10299
        %v10301 = vshrl.u32 %v10135, 16
        %v10303 = vrot.slane %v10301, 4
        %v10304 = vor.u32 %v10303, %v10299
        %v10305 = vrot.slane %v10304, 4
        %v10307 = vshll.u32 %v10136, 16
        %v10309 = vrot.slane %v10307, 5
        %v10310 = vsel %vm1583, %v10305, %v10309
        %v10312 = vshrl.u32 %v10137, 16
        %v10314 = vrot.slane %v10312, 4
        %v10315 = vshll.u32 %v10137, 16
        %v10317 = vrot.slane %v10315, 5
        %v10318 = vor.u32 %v10314, %v10317
        %v10319 = vrot.slane %v10318, 4
        %v10321 = vshll.u32 %v10138, 16
        %v10323 = vrot.slane %v10321, 5
        %v10324 = vsel %vm1583, %v10319, %v10323
        %v10325 = vshrl.u32 %v10138, 16
        %v10327 = vrot.slane %v10325, 4
        %v10328 = vor.u32 %v10327, %v10323
        %v10329 = vrot.slane %v10328, 4
        %v10331 = vshll.u32 %v10139, 16
        %v10333 = vrot.slane %v10331, 5
        %v10334 = vsel %vm1583, %v10329, %v10333
        %v10336 = vshrl.u32 %v10140, 16
        %v10338 = vrot.slane %v10336, 4
        %v10339 = vshll.u32 %v10140, 16
        %v10341 = vrot.slane %v10339, 5
        %v10342 = vor.u32 %v10338, %v10341
        %v10343 = vrot.slane %v10342, 4
        %v10345 = vshll.u32 %v10141, 16
        %v10347 = vrot.slane %v10345, 5
        %v10348 = vsel %vm1583, %v10343, %v10347
        %v10349 = vshrl.u32 %v10141, 16
        %v10351 = vrot.slane %v10349, 4
        %v10352 = vor.u32 %v10351, %v10347
        %v10353 = vrot.slane %v10352, 4
        %v10355 = vshll.u32 %v10142, 16
        %v10357 = vrot.slane %v10355, 5
        %v10358 = vsel %vm1583, %v10353, %v10357
        %v10360 = vshrl.u32 %v10143, 16
        %v10362 = vrot.slane %v10360, 4
        %v10363 = vshll.u32 %v10143, 16
        %v10365 = vrot.slane %v10363, 5
        %v10366 = vor.u32 %v10362, %v10365
        %v10367 = vrot.slane %v10366, 4
        %v10369 = vshll.u32 %v10144, 16
        %v10371 = vrot.slane %v10369, 5
        %v10372 = vsel %vm1583, %v10367, %v10371
        %v10373 = vshrl.u32 %v10144, 16
        %v10375 = vrot.slane %v10373, 4
        %v10376 = vor.u32 %v10375, %v10371
        %v10377 = vrot.slane %v10376, 4
        %v10379 = vshll.u32 %v10145, 16
        %v10381 = vrot.slane %v10379, 5
        %v10382 = vsel %vm1583, %v10377, %v10381
        %v10384 = vshrl.u32 %v10146, 16
        %v10386 = vrot.slane %v10384, 4
        %v10387 = vshll.u32 %v10146, 16
        %v10389 = vrot.slane %v10387, 5
        %v10390 = vor.u32 %v10386, %v10389
        %v10391 = vrot.slane %v10390, 4
        %v10393 = vshll.u32 %v10147, 16
        %v10395 = vrot.slane %v10393, 5
        %v10396 = vsel %vm1583, %v10391, %v10395
        %v10397 = vshrl.u32 %v10147, 16
        %v10399 = vrot.slane %v10397, 4
        %v10400 = vor.u32 %v10399, %v10395
        %v10401 = vrot.slane %v10400, 4
        %v10403 = vshll.u32 %v10148, 16
        %v10405 = vrot.slane %v10403, 5
        %v10406 = vsel %vm1583, %v10401, %v10405
        %v10408 = vshrl.u32 %v10149, 16
        %v10410 = vrot.slane %v10408, 4
        %v10411 = vshll.u32 %v10149, 16
        %v10413 = vrot.slane %v10411, 5
        %v10414 = vor.u32 %v10410, %v10413
        %v10415 = vrot.slane %v10414, 4
        %v10417 = vshll.u32 %v10150, 16
        %v10419 = vrot.slane %v10417, 5
        %v10420 = vsel %vm1583, %v10415, %v10419
        %v10421 = vshrl.u32 %v10150, 16
        %v10423 = vrot.slane %v10421, 4
        %v10424 = vor.u32 %v10423, %v10419
        %v10425 = vrot.slane %v10424, 4
        %v10427 = vshll.u32 %v10151, 16
        %v10429 = vrot.slane %v10427, 5
        %v10430 = vsel %vm1583, %v10425, %v10429
        %v10432 = vshrl.u32 %v10152, 16
        %v10434 = vrot.slane %v10432, 4
        %v10435 = vshll.u32 %v10152, 16
        %v10437 = vrot.slane %v10435, 5
        %v10438 = vor.u32 %v10434, %v10437
        %v10439 = vrot.slane %v10438, 4
        %v10441 = vshll.u32 %v10153, 16
        %v10443 = vrot.slane %v10441, 5
        %v10444 = vsel %vm1583, %v10439, %v10443
        %v10445 = vshrl.u32 %v10153, 16
        %v10447 = vrot.slane %v10445, 4
        %v10448 = vor.u32 %v10447, %v10443
        %v10449 = vrot.slane %v10448, 4
        %v10451 = vshll.u32 %v10154, 16
        %v10453 = vrot.slane %v10451, 5
        %v10454 = vsel %vm1583, %v10449, %v10453
        %v10456 = vshrl.u32 %v10155, 16
        %v10458 = vrot.slane %v10456, 4
        %v10459 = vshll.u32 %v10155, 16
        %v10461 = vrot.slane %v10459, 5
        %v10462 = vor.u32 %v10458, %v10461
        %v10463 = vrot.slane %v10462, 4
        %v10465 = vshll.u32 %v10156, 16
        %v10467 = vrot.slane %v10465, 5
        %v10468 = vsel %vm1583, %v10463, %v10467
        %v10469 = vshrl.u32 %v10156, 16
        %v10471 = vrot.slane %v10469, 4
        %v10472 = vor.u32 %v10471, %v10467
        %v10473 = vrot.slane %v10472, 4
        %v10475 = vshll.u32 %v10157, 16
        %v10477 = vrot.slane %v10475, 5
        %v10478 = vsel %vm1583, %v10473, %v10477
        %v10480 = vshrl.u32 %v10158, 16
        %v10482 = vrot.slane %v10480, 4
        %v10483 = vshll.u32 %v10158, 16
        %v10485 = vrot.slane %v10483, 5
        %v10486 = vor.u32 %v10482, %v10485
        %v10487 = vrot.slane %v10486, 4
        %v10489 = vshll.u32 %v10159, 16
        %v10491 = vrot.slane %v10489, 5
        %v10492 = vsel %vm1583, %v10487, %v10491
        %v10493 = vshrl.u32 %v10159, 16
        %v10495 = vrot.slane %v10493, 4
        %v10496 = vor.u32 %v10495, %v10491
        %v10497 = vrot.slane %v10496, 4
        %v10499 = vshll.u32 %v10160, 16
        %v10501 = vrot.slane %v10499, 5
        %v10502 = vsel %vm1583, %v10497, %v10501
        %v10504 = vshrl.u32 %v10161, 16
        %v10506 = vrot.slane %v10504, 4
        %v10507 = vshll.u32 %v10161, 16
        %v10509 = vrot.slane %v10507, 5
        %v10510 = vor.u32 %v10506, %v10509
        %v10511 = vrot.slane %v10510, 4
        %v10513 = vshll.u32 %v10162, 16
        %v10515 = vrot.slane %v10513, 5
        %v10516 = vsel %vm1583, %v10511, %v10515
        %v10517 = vshrl.u32 %v10162, 16
        %v10519 = vrot.slane %v10517, 4
        %v10520 = vor.u32 %v10519, %v10515
        %v10521 = vrot.slane %v10520, 4
        %v10523 = vshll.u32 %v10163, 16
        %v10525 = vrot.slane %v10523, 5
        %v10526 = vsel %vm1583, %v10521, %v10525
        %v10528 = vshrl.u32 %v10164, 16
        %v10530 = vrot.slane %v10528, 4
        %v10531 = vshll.u32 %v10164, 16
        %v10533 = vrot.slane %v10531, 5
        %v10534 = vor.u32 %v10530, %v10533
        %v10535 = vrot.slane %v10534, 4
        %v10537 = vshll.u32 %v10165, 16
        %v10539 = vrot.slane %v10537, 5
        %v10540 = vsel %vm1583, %v10535, %v10539
        %v10541 = vshrl.u32 %v10165, 16
        %v10543 = vrot.slane %v10541, 4
        %v10544 = vor.u32 %v10543, %v10539
        %v10545 = vrot.slane %v10544, 4
        %v10547 = vshll.u32 %v10166, 16
        %v10549 = vrot.slane %v10547, 5
        %v10550 = vsel %vm1583, %v10545, %v10549
        %s10551 = scalar_lea.vmem [#allocation8], 512
        %v10552 = vld [vmem:[%s10551] sm:$0xf]
        %v10553 = vld [vmem:[%s10551 + $0x4] sm:$0xf]
        %v10554 = vld [vmem:[%s10551 + $0x8] sm:$0xf]
        %v10555 = vld [vmem:[%s10551 + $0xc] sm:$0xf]
        %v10556 = vld [vmem:[%s10551 + $0x10] sm:$0xf]
        %v10557 = vld [vmem:[%s10551 + $0x14] sm:$0xf]
        %v10558 = vld [vmem:[%s10551 + $0x18] sm:$0xf]
        %v10559 = vld [vmem:[%s10551 + $0x1c] sm:$0xf]
        %v10560 = vld [vmem:[%s10551 + $0x20] sm:$0xf]
        %v10561 = vld [vmem:[%s10551 + $0x24] sm:$0xf]
        %v10562 = vld [vmem:[%s10551 + $0x28] sm:$0xf]
        %v10563 = vld [vmem:[%s10551 + $0x2c] sm:$0xf]
        %v10564 = vld [vmem:[%s10551 + $0x30] sm:$0xf]
        %v10565 = vld [vmem:[%s10551 + $0x34] sm:$0xf]
        %v10566 = vld [vmem:[%s10551 + $0x38] sm:$0xf]
        %v10567 = vld [vmem:[%s10551 + $0x3c] sm:$0xf]
        %v10568 = vunpack.c.l.b16 %v10180
        %v10569 = vunpack.c.l.b16 %v10190
        %v10570 = vunpack.c.l.b16 %v10204
        %v10571 = vunpack.c.l.b16 %v10214
        %v10572 = vunpack.c.l.b16 %v10228
        %v10573 = vunpack.c.l.b16 %v10238
        %v10574 = vunpack.c.l.b16 %v10252
        %v10575 = vunpack.c.l.b16 %v10262
        %v10576 = vunpack.c.l.b16 %v10276
        %v10577 = vunpack.c.l.b16 %v10286
        %v10578 = vunpack.c.l.b16 %v10300
        %v10579 = vunpack.c.l.b16 %v10310
        %v10580 = vunpack.c.l.b16 %v10324
        %v10581 = vunpack.c.l.b16 %v10334
        %v10582 = vunpack.c.l.b16 %v10348
        %v10583 = vunpack.c.l.b16 %v10358
        %v10584 = vunpack.c.l.b16 %v10372
        %v10585 = vunpack.c.l.b16 %v10382
        %v10586 = vunpack.c.l.b16 %v10396
        %v10587 = vunpack.c.l.b16 %v10406
        %v10588 = vunpack.c.l.b16 %v10420
        %v10589 = vunpack.c.l.b16 %v10430
        %v10590 = vunpack.c.l.b16 %v10444
        %v10591 = vunpack.c.l.b16 %v10454
        %v10592 = vunpack.c.l.b16 %v10468
        %v10593 = vunpack.c.l.b16 %v10478
        %v10594 = vunpack.c.l.b16 %v10492
        %v10595 = vunpack.c.l.b16 %v10502
        %v10596 = vunpack.c.l.b16 %v10516
        %v10597 = vunpack.c.l.b16 %v10526
        %v10598 = vunpack.c.l.b16 %v10540
        %v10599 = vunpack.c.l.b16 %v10550
        %v10600 = vpack.c.b16 %v10569, %v10568
        %v10601 = vpack.c.b16 %v10571, %v10570
        %v10602 = vpack.c.b16 %v10573, %v10572
        %v10603 = vpack.c.b16 %v10575, %v10574
        %v10604 = vpack.c.b16 %v10577, %v10576
        %v10605 = vpack.c.b16 %v10579, %v10578
        %v10606 = vpack.c.b16 %v10581, %v10580
        %v10607 = vpack.c.b16 %v10583, %v10582
        %v10608 = vpack.c.b16 %v10585, %v10584
        %v10609 = vpack.c.b16 %v10587, %v10586
        %v10610 = vpack.c.b16 %v10589, %v10588
        %v10611 = vpack.c.b16 %v10591, %v10590
        %v10612 = vpack.c.b16 %v10593, %v10592
        %v10613 = vpack.c.b16 %v10595, %v10594
        %v10614 = vpack.c.b16 %v10597, %v10596
        %v10615 = vpack.c.b16 %v10599, %v10598
        %v10648 = vunpack.c.l.b16 %v10552
        %v10649 = vunpack.c.l.b16 %v10553
        %v10650 = vunpack.c.l.b16 %v10554
        %v10651 = vunpack.c.l.b16 %v10555
        %v10652 = vunpack.c.l.b16 %v10556
        %v10653 = vunpack.c.l.b16 %v10557
        %v10654 = vunpack.c.l.b16 %v10558
        %v10655 = vunpack.c.l.b16 %v10559
        %v10656 = vunpack.c.l.b16 %v10560
        %v10657 = vunpack.c.l.b16 %v10561
        %v10658 = vunpack.c.l.b16 %v10562
        %v10659 = vunpack.c.l.b16 %v10563
        %v10660 = vunpack.c.l.b16 %v10564
        %v10661 = vunpack.c.l.b16 %v10565
        %v10662 = vunpack.c.l.b16 %v10566
        %v10663 = vunpack.c.l.b16 %v10567
        %v10664 = vpack.c.b16 %v10649, %v10648
        %v10665 = vpack.c.b16 %v10651, %v10650
        %v10666 = vpack.c.b16 %v10653, %v10652
        %v10667 = vpack.c.b16 %v10655, %v10654
        %v10668 = vpack.c.b16 %v10657, %v10656
        %v10669 = vpack.c.b16 %v10659, %v10658
        %v10670 = vpack.c.b16 %v10661, %v10660
        %v10671 = vpack.c.b16 %v10663, %v10662
        %10680 = vmatpush.bf16.msra.mxu0 %v10671
        %10681 = vmatpush.bf16.msra.mxu0 %v10670
        %10682 = vmatpush.bf16.msra.mxu0 %v10669
        %10683 = vmatpush.bf16.msra.mxu0 %v10668
        %10684 = vmatpush.bf16.msra.mxu0 %v10667
        %10685 = vmatpush.bf16.msra.mxu0 %v10666
        %10686 = vmatpush.bf16.msra.mxu0 %v10665
        %10687 = vmatpush.bf16.msra.mxu0 %v10664
        %10688 = vmatmul.bf16.gmra.mxu0 %v10600
        %v10689 = vpop.f32.mrf.mxu0
        %v10690 = vadd.f32 0.0, %v10689
        %v10691 = vpop.f32.mrf.mxu0
        %v10692 = vadd.f32 0.0, %v10691
        %10693 = vmatmul.bf16.gmra.mxu0 %v10601
        %v10694 = vpop.f32.mrf.mxu0
        %v10695 = vadd.f32 0.0, %v10694
        %v10696 = vpop.f32.mrf.mxu0
        %v10697 = vadd.f32 0.0, %v10696
        %10698 = vmatmul.bf16.gmra.mxu0 %v10602
        %v10699 = vpop.f32.mrf.mxu0
        %v10700 = vadd.f32 0.0, %v10699
        %v10701 = vpop.f32.mrf.mxu0
        %v10702 = vadd.f32 0.0, %v10701
        %10703 = vmatmul.bf16.gmra.mxu0 %v10603
        %v10704 = vpop.f32.mrf.mxu0
        %v10705 = vadd.f32 0.0, %v10704
        %v10706 = vpop.f32.mrf.mxu0
        %v10707 = vadd.f32 0.0, %v10706
        %10708 = vmatmul.bf16.gmra.mxu0 %v10604
        %v10709 = vpop.f32.mrf.mxu0
        %v10710 = vadd.f32 0.0, %v10709
        %v10711 = vpop.f32.mrf.mxu0
        %v10712 = vadd.f32 0.0, %v10711
        %10713 = vmatmul.bf16.gmra.mxu0 %v10605
        %v10714 = vpop.f32.mrf.mxu0
        %v10715 = vadd.f32 0.0, %v10714
        %v10716 = vpop.f32.mrf.mxu0
        %v10717 = vadd.f32 0.0, %v10716
        %10718 = vmatmul.bf16.gmra.mxu0 %v10606
        %v10719 = vpop.f32.mrf.mxu0
        %v10720 = vadd.f32 0.0, %v10719
        %v10721 = vpop.f32.mrf.mxu0
        %v10722 = vadd.f32 0.0, %v10721
        %10723 = vmatmul.bf16.gmra.mxu0 %v10607
        %v10724 = vpop.f32.mrf.mxu0
        %v10725 = vadd.f32 0.0, %v10724
        %v10726 = vpop.f32.mrf.mxu0
        %v10727 = vadd.f32 0.0, %v10726
        %10728 = vmatmul.bf16.gmra.mxu0 %v10608
        %v10729 = vpop.f32.mrf.mxu0
        %v10730 = vadd.f32 0.0, %v10729
        %v10731 = vpop.f32.mrf.mxu0
        %v10732 = vadd.f32 0.0, %v10731
        %10733 = vmatmul.bf16.gmra.mxu0 %v10609
        %v10734 = vpop.f32.mrf.mxu0
        %v10735 = vadd.f32 0.0, %v10734
        %v10736 = vpop.f32.mrf.mxu0
        %v10737 = vadd.f32 0.0, %v10736
        %10738 = vmatmul.bf16.gmra.mxu0 %v10610
        %v10739 = vpop.f32.mrf.mxu0
        %v10740 = vadd.f32 0.0, %v10739
        %v10741 = vpop.f32.mrf.mxu0
        %v10742 = vadd.f32 0.0, %v10741
        %10743 = vmatmul.bf16.gmra.mxu0 %v10611
        %v10744 = vpop.f32.mrf.mxu0
        %v10745 = vadd.f32 0.0, %v10744
        %v10746 = vpop.f32.mrf.mxu0
        %v10747 = vadd.f32 0.0, %v10746
        %10748 = vmatmul.bf16.gmra.mxu0 %v10612
        %v10749 = vpop.f32.mrf.mxu0
        %v10750 = vadd.f32 0.0, %v10749
        %v10751 = vpop.f32.mrf.mxu0
        %v10752 = vadd.f32 0.0, %v10751
        %10753 = vmatmul.bf16.gmra.mxu0 %v10613
        %v10754 = vpop.f32.mrf.mxu0
        %v10755 = vadd.f32 0.0, %v10754
        %v10756 = vpop.f32.mrf.mxu0
        %v10757 = vadd.f32 0.0, %v10756
        %10758 = vmatmul.bf16.gmra.mxu0 %v10614
        %v10759 = vpop.f32.mrf.mxu0
        %v10760 = vadd.f32 0.0, %v10759
        %v10761 = vpop.f32.mrf.mxu0
        %v10762 = vadd.f32 0.0, %v10761
        %10763 = vmatmul.bf16.gmra.mxu0 %v10615
        %v10764 = vpop.f32.mrf.mxu0
        %v10765 = vadd.f32 0.0, %v10764
        %v10766 = vpop.f32.mrf.mxu0
        %v10767 = vadd.f32 0.0, %v10766
        %10768 = vdwg.mxu0
        %v10769 = vadd.f32 %v10087, %v10690
        %v10770 = vadd.f32 %v10088, %v10692
        %v10771 = vadd.f32 %v10089, %v10695
        %v10772 = vadd.f32 %v10090, %v10697
        %v10773 = vadd.f32 %v10091, %v10700
        %v10774 = vadd.f32 %v10092, %v10702
        %v10775 = vadd.f32 %v10093, %v10705
        %v10776 = vadd.f32 %v10094, %v10707
        %v10777 = vadd.f32 %v10095, %v10710
        %v10778 = vadd.f32 %v10096, %v10712
        %v10779 = vadd.f32 %v10097, %v10715
        %v10780 = vadd.f32 %v10098, %v10717
        %v10781 = vadd.f32 %v10099, %v10720
        %v10782 = vadd.f32 %v10100, %v10722
        %v10783 = vadd.f32 %v10101, %v10725
        %v10784 = vadd.f32 %v10102, %v10727
        %v10785 = vadd.f32 %v10103, %v10730
        %v10786 = vadd.f32 %v10104, %v10732
        %v10787 = vadd.f32 %v10105, %v10735
        %v10788 = vadd.f32 %v10106, %v10737
        %v10789 = vadd.f32 %v10107, %v10740
        %v10790 = vadd.f32 %v10108, %v10742
        %v10791 = vadd.f32 %v10109, %v10745
        %v10792 = vadd.f32 %v10110, %v10747
        %v10793 = vadd.f32 %v10111, %v10750
        %v10794 = vadd.f32 %v10112, %v10752
        %v10795 = vadd.f32 %v10113, %v10755
        %v10796 = vadd.f32 %v10114, %v10757
        %v10797 = vadd.f32 %v10115, %v10760
        %v10798 = vadd.f32 %v10116, %v10762
        %v10799 = vadd.f32 %v10117, %v10765
        %v10800 = vadd.f32 %v10118, %v10767
        %v10801 = vadd.f32 %v10769, %v10770
        %v10802 = vadd.f32 %v10801, %v10771
        %v10803 = vadd.f32 %v10802, %v10772
        %v10804 = vadd.f32 %v10803, %v10773
        %v10805 = vadd.f32 %v10804, %v10774
        %v10806 = vadd.f32 %v10805, %v10775
        %v10807 = vadd.f32 %v10806, %v10776
        %v10808 = vadd.f32 %v10807, %v10777
        %v10809 = vadd.f32 %v10808, %v10778
        %v10810 = vadd.f32 %v10809, %v10779
        %v10811 = vadd.f32 %v10810, %v10780
        %v10812 = vadd.f32 %v10811, %v10781
        %v10813 = vadd.f32 %v10812, %v10782
        %v10814 = vadd.f32 %v10813, %v10783
        %v10815 = vadd.f32 %v10814, %v10784
        %v10816 = vadd.f32 %v10815, %v10785
        %v10817 = vadd.f32 %v10816, %v10786
        %v10818 = vadd.f32 %v10817, %v10787
        %v10819 = vadd.f32 %v10818, %v10788
        %v10820 = vadd.f32 %v10819, %v10789
        %v10821 = vadd.f32 %v10820, %v10790
        %v10822 = vadd.f32 %v10821, %v10791
        %v10823 = vadd.f32 %v10822, %v10792
        %v10824 = vadd.f32 %v10823, %v10793
        %v10825 = vadd.f32 %v10824, %v10794
        %v10826 = vadd.f32 %v10825, %v10795
        %v10827 = vadd.f32 %v10826, %v10796
        %v10828 = vadd.f32 %v10827, %v10797
        %v10829 = vadd.f32 %v10828, %v10798
        %v10830 = vadd.f32 %v10829, %v10799
        %v10831 = vadd.f32 %v10830, %v10800
        %v10832 = vrot.slane %v10831, 4
        %v10833 = vadd.f32 %v10831, %v10832
        %v10834 = vrot.slane %v10833, 2
        %v10835 = vadd.f32 %v10833, %v10834
        %v10836 = vrot.slane %v10835, 1
        %v10837 = vadd.f32 %v10835, %v10836
        %v10838 = vmul.f32 %v10769, %v10769
        %v10839 = vmul.f32 %v10770, %v10770
        %v10840 = vmul.f32 %v10771, %v10771
        %v10841 = vmul.f32 %v10772, %v10772
        %v10842 = vmul.f32 %v10773, %v10773
        %v10843 = vmul.f32 %v10774, %v10774
        %v10844 = vmul.f32 %v10775, %v10775
        %v10845 = vmul.f32 %v10776, %v10776
        %v10846 = vmul.f32 %v10777, %v10777
        %v10847 = vmul.f32 %v10778, %v10778
        %v10848 = vmul.f32 %v10779, %v10779
        %v10849 = vmul.f32 %v10780, %v10780
        %v10850 = vmul.f32 %v10781, %v10781
        %v10851 = vmul.f32 %v10782, %v10782
        %v10852 = vmul.f32 %v10783, %v10783
        %v10853 = vmul.f32 %v10784, %v10784
        %v10854 = vmul.f32 %v10785, %v10785
        %v10855 = vmul.f32 %v10786, %v10786
        %v10856 = vmul.f32 %v10787, %v10787
        %v10857 = vmul.f32 %v10788, %v10788
        %v10858 = vmul.f32 %v10789, %v10789
        %v10859 = vmul.f32 %v10790, %v10790
        %v10860 = vmul.f32 %v10791, %v10791
        %v10861 = vmul.f32 %v10792, %v10792
        %v10862 = vmul.f32 %v10793, %v10793
        %v10863 = vmul.f32 %v10794, %v10794
        %v10864 = vmul.f32 %v10795, %v10795
        %v10865 = vmul.f32 %v10796, %v10796
        %v10866 = vmul.f32 %v10797, %v10797
        %v10867 = vmul.f32 %v10798, %v10798
        %v10868 = vmul.f32 %v10799, %v10799
        %v10869 = vmul.f32 %v10800, %v10800
        %v10870 = vadd.f32 %v10838, %v10839
        %v10871 = vadd.f32 %v10870, %v10840
        %v10872 = vadd.f32 %v10871, %v10841
        %v10873 = vadd.f32 %v10872, %v10842
        %v10874 = vadd.f32 %v10873, %v10843
        %v10875 = vadd.f32 %v10874, %v10844
        %v10876 = vadd.f32 %v10875, %v10845
        %v10877 = vadd.f32 %v10876, %v10846
        %v10878 = vadd.f32 %v10877, %v10847
        %v10879 = vadd.f32 %v10878, %v10848
        %v10880 = vadd.f32 %v10879, %v10849
        %v10881 = vadd.f32 %v10880, %v10850
        %v10882 = vadd.f32 %v10881, %v10851
        %v10883 = vadd.f32 %v10882, %v10852
        %v10884 = vadd.f32 %v10883, %v10853
        %v10885 = vadd.f32 %v10884, %v10854
        %v10886 = vadd.f32 %v10885, %v10855
        %v10887 = vadd.f32 %v10886, %v10856
        %v10888 = vadd.f32 %v10887, %v10857
        %v10889 = vadd.f32 %v10888, %v10858
        %v10890 = vadd.f32 %v10889, %v10859
        %v10891 = vadd.f32 %v10890, %v10860
        %v10892 = vadd.f32 %v10891, %v10861
        %v10893 = vadd.f32 %v10892, %v10862
        %v10894 = vadd.f32 %v10893, %v10863
        %v10895 = vadd.f32 %v10894, %v10864
        %v10896 = vadd.f32 %v10895, %v10865
        %v10897 = vadd.f32 %v10896, %v10866
        %v10898 = vadd.f32 %v10897, %v10867
        %v10899 = vadd.f32 %v10898, %v10868
        %v10900 = vadd.f32 %v10899, %v10869
        %v10901 = vrot.slane %v10900, 4
        %v10902 = vadd.f32 %v10900, %v10901
        %v10903 = vrot.slane %v10902, 2
        %v10904 = vadd.f32 %v10902, %v10903
        %v10905 = vrot.slane %v10904, 1
        %v10906 = vadd.f32 %v10904, %v10905
        %v10907 = vmul.f32 %v10837, 0.00390625
        %v10908 = vmul.f32 %v10906, 0.00390625
        %v10909 = vmul.f32 %v10907, %v10907
        %v10910 = vsub.f32 %v10908, %v10909
        %v10911 = vmax.f32 %v10910, 0.0
        %v10912 = vsub.f32 %v10769, %v10907
        %v10913 = vsub.f32 %v10770, %v10907
        %v10914 = vsub.f32 %v10771, %v10907
        %v10915 = vsub.f32 %v10772, %v10907
        %v10916 = vsub.f32 %v10773, %v10907
        %v10917 = vsub.f32 %v10774, %v10907
        %v10918 = vsub.f32 %v10775, %v10907
        %v10919 = vsub.f32 %v10776, %v10907
        %v10920 = vsub.f32 %v10777, %v10907
        %v10921 = vsub.f32 %v10778, %v10907
        %v10922 = vsub.f32 %v10779, %v10907
        %v10923 = vsub.f32 %v10780, %v10907
        %v10924 = vsub.f32 %v10781, %v10907
        %v10925 = vsub.f32 %v10782, %v10907
        %v10926 = vsub.f32 %v10783, %v10907
        %v10927 = vsub.f32 %v10784, %v10907
        %v10928 = vsub.f32 %v10785, %v10907
        %v10929 = vsub.f32 %v10786, %v10907
        %v10930 = vsub.f32 %v10787, %v10907
        %v10931 = vsub.f32 %v10788, %v10907
        %v10932 = vsub.f32 %v10789, %v10907
        %v10933 = vsub.f32 %v10790, %v10907
        %v10934 = vsub.f32 %v10791, %v10907
        %v10935 = vsub.f32 %v10792, %v10907
        %v10936 = vsub.f32 %v10793, %v10907
        %v10937 = vsub.f32 %v10794, %v10907
        %v10938 = vsub.f32 %v10795, %v10907
        %v10939 = vsub.f32 %v10796, %v10907
        %v10940 = vsub.f32 %v10797, %v10907
        %v10941 = vsub.f32 %v10798, %v10907
        %v10942 = vsub.f32 %v10799, %v10907
        %v10943 = vsub.f32 %v10800, %v10907
        %v10944 = vadd.f32 %v10911, 1e-05
        %v10945 = vrsqrt.pop %v10944
        %v10946 = vmul.f32 %v10945, %v10944
        %v10947 = vmul.f32 %v10946, %v10945
        %v10948 = vmul.f32 0.5, %v10947
        %v10949 = vsub.f32 1.5, %v10948
        %v10950 = vmul.f32 %v10945, %v10949
        %vm10951 = vweird.f32 %v10944
        %vm10952 = vweird.f32 %v10945
        %vm10953 = vmor %vm10951, %vm10952
        %v10954 = vsel %vm10953, %v10945, %v10950
        %v10955 = vmul.f32 %v10912, %v10954
        %v10956 = vmul.f32 %v10913, %v10954
        %v10957 = vmul.f32 %v10914, %v10954
        %v10958 = vmul.f32 %v10915, %v10954
        %v10959 = vmul.f32 %v10916, %v10954
        %v10960 = vmul.f32 %v10917, %v10954
        %v10961 = vmul.f32 %v10918, %v10954
        %v10962 = vmul.f32 %v10919, %v10954
        %v10963 = vmul.f32 %v10920, %v10954
        %v10964 = vmul.f32 %v10921, %v10954
        %v10965 = vmul.f32 %v10922, %v10954
        %v10966 = vmul.f32 %v10923, %v10954
        %v10967 = vmul.f32 %v10924, %v10954
        %v10968 = vmul.f32 %v10925, %v10954
        %v10969 = vmul.f32 %v10926, %v10954
        %v10970 = vmul.f32 %v10927, %v10954
        %v10971 = vmul.f32 %v10928, %v10954
        %v10972 = vmul.f32 %v10929, %v10954
        %v10973 = vmul.f32 %v10930, %v10954
        %v10974 = vmul.f32 %v10931, %v10954
        %v10975 = vmul.f32 %v10932, %v10954
        %v10976 = vmul.f32 %v10933, %v10954
        %v10977 = vmul.f32 %v10934, %v10954
        %v10978 = vmul.f32 %v10935, %v10954
        %v10979 = vmul.f32 %v10936, %v10954
        %v10980 = vmul.f32 %v10937, %v10954
        %v10981 = vmul.f32 %v10938, %v10954
        %v10982 = vmul.f32 %v10939, %v10954
        %v10983 = vmul.f32 %v10940, %v10954
        %v10984 = vmul.f32 %v10941, %v10954
        %v10985 = vmul.f32 %v10942, %v10954
        %v10986 = vmul.f32 %v10943, %v10954
        %v10988 = vperm.slane %v6022, 0
        %v10990 = vmul.f32 %v10955, %v10988
        %v10991 = vmul.f32 %v10956, %v10988
        %v10992 = vmul.f32 %v10957, %v10988
        %v10993 = vmul.f32 %v10958, %v10988
        %v10994 = vmul.f32 %v10959, %v10988
        %v10995 = vmul.f32 %v10960, %v10988
        %v10996 = vmul.f32 %v10961, %v10988
        %v10997 = vmul.f32 %v10962, %v10988
        %v10998 = vmul.f32 %v10963, %v10988
        %v10999 = vmul.f32 %v10964, %v10988
        %v11000 = vmul.f32 %v10965, %v10988
        %v11001 = vmul.f32 %v10966, %v10988
        %v11002 = vmul.f32 %v10967, %v10988
        %v11003 = vmul.f32 %v10968, %v10988
        %v11004 = vmul.f32 %v10969, %v10988
        %v11005 = vmul.f32 %v10970, %v10988
        %v11006 = vmul.f32 %v10971, %v10988
        %v11007 = vmul.f32 %v10972, %v10988
        %v11008 = vmul.f32 %v10973, %v10988
        %v11009 = vmul.f32 %v10974, %v10988
        %v11010 = vmul.f32 %v10975, %v10988
        %v11011 = vmul.f32 %v10976, %v10988
        %v11012 = vmul.f32 %v10977, %v10988
        %v11013 = vmul.f32 %v10978, %v10988
        %v11014 = vmul.f32 %v10979, %v10988
        %v11015 = vmul.f32 %v10980, %v10988
        %v11016 = vmul.f32 %v10981, %v10988
        %v11017 = vmul.f32 %v10982, %v10988
        %v11018 = vmul.f32 %v10983, %v10988
        %v11019 = vmul.f32 %v10984, %v10988
        %v11020 = vmul.f32 %v10985, %v10988
        %v11021 = vmul.f32 %v10986, %v10988
        %v11023 = vperm.slane %v6023, 0
        %v11025 = vadd.f32 %v10990, %v11023
        %v11026 = vadd.f32 %v10991, %v11023
        %v11027 = vadd.f32 %v10992, %v11023
        %v11028 = vadd.f32 %v10993, %v11023
        %v11029 = vadd.f32 %v10994, %v11023
        %v11030 = vadd.f32 %v10995, %v11023
        %v11031 = vadd.f32 %v10996, %v11023
        %v11032 = vadd.f32 %v10997, %v11023
        %v11033 = vadd.f32 %v10998, %v11023
        %v11034 = vadd.f32 %v10999, %v11023
        %v11035 = vadd.f32 %v11000, %v11023
        %v11036 = vadd.f32 %v11001, %v11023
        %v11037 = vadd.f32 %v11002, %v11023
        %v11038 = vadd.f32 %v11003, %v11023
        %v11039 = vadd.f32 %v11004, %v11023
        %v11040 = vadd.f32 %v11005, %v11023
        %v11041 = vadd.f32 %v11006, %v11023
        %v11042 = vadd.f32 %v11007, %v11023
        %v11043 = vadd.f32 %v11008, %v11023
        %v11044 = vadd.f32 %v11009, %v11023
        %v11045 = vadd.f32 %v11010, %v11023
        %v11046 = vadd.f32 %v11011, %v11023
        %v11047 = vadd.f32 %v11012, %v11023
        %v11048 = vadd.f32 %v11013, %v11023
        %v11049 = vadd.f32 %v11014, %v11023
        %v11050 = vadd.f32 %v11015, %v11023
        %v11051 = vadd.f32 %v11016, %v11023
        %v11052 = vadd.f32 %v11017, %v11023
        %v11053 = vadd.f32 %v11018, %v11023
        %v11054 = vadd.f32 %v11019, %v11023
        %v11055 = vadd.f32 %v11020, %v11023
        %v11056 = vadd.f32 %v11021, %v11023
        %v11057 = vadd.f32 %v11025, %v332
        %v11058 = vadd.f32 %v11026, %v333
        %v11059 = vadd.f32 %v11027, %v334
        %v11060 = vadd.f32 %v11028, %v335
        %v11061 = vadd.f32 %v11029, %v336
        %v11062 = vadd.f32 %v11030, %v337
        %v11063 = vadd.f32 %v11031, %v338
        %v11064 = vadd.f32 %v11032, %v339
        %v11065 = vadd.f32 %v11033, %v340
        %v11066 = vadd.f32 %v11034, %v341
        %v11067 = vadd.f32 %v11035, %v342
        %v11068 = vadd.f32 %v11036, %v343
        %v11069 = vadd.f32 %v11037, %v344
        %v11070 = vadd.f32 %v11038, %v345
        %v11071 = vadd.f32 %v11039, %v346
        %v11072 = vadd.f32 %v11040, %v347
        %v11073 = vadd.f32 %v11041, %v348
        %v11074 = vadd.f32 %v11042, %v349
        %v11075 = vadd.f32 %v11043, %v350
        %v11076 = vadd.f32 %v11044, %v351
        %v11077 = vadd.f32 %v11045, %v352
        %v11078 = vadd.f32 %v11046, %v353
        %v11079 = vadd.f32 %v11047, %v354
        %v11080 = vadd.f32 %v11048, %v355
        %v11081 = vadd.f32 %v11049, %v356
        %v11082 = vadd.f32 %v11050, %v357
        %v11083 = vadd.f32 %v11051, %v358
        %v11084 = vadd.f32 %v11052, %v359
        %v11085 = vadd.f32 %v11053, %v360
        %v11086 = vadd.f32 %v11054, %v361
        %v11087 = vadd.f32 %v11055, %v362
        %v11088 = vadd.f32 %v11056, %v363
        %11089 = vst [vmem:[%s331] sm:$0xff] %v11057
        %11090 = vst [vmem:[%s331 + $0x8] sm:$0xff] %v11058
        %11091 = vst [vmem:[%s331 + $0x10] sm:$0xff] %v11059
        %11092 = vst [vmem:[%s331 + $0x18] sm:$0xff] %v11060
        %11093 = vst [vmem:[%s331 + $0x20] sm:$0xff] %v11061
        %11094 = vst [vmem:[%s331 + $0x28] sm:$0xff] %v11062
        %11095 = vst [vmem:[%s331 + $0x30] sm:$0xff] %v11063
        %11096 = vst [vmem:[%s331 + $0x38] sm:$0xff] %v11064
        %11097 = vst [vmem:[%s331 + $0x40] sm:$0xff] %v11065
        %11098 = vst [vmem:[%s331 + $0x48] sm:$0xff] %v11066
        %11099 = vst [vmem:[%s331 + $0x50] sm:$0xff] %v11067
        %11100 = vst [vmem:[%s331 + $0x58] sm:$0xff] %v11068
        %11101 = vst [vmem:[%s331 + $0x60] sm:$0xff] %v11069
        %11102 = vst [vmem:[%s331 + $0x68] sm:$0xff] %v11070
        %11103 = vst [vmem:[%s331 + $0x70] sm:$0xff] %v11071
        %11104 = vst [vmem:[%s331 + $0x78] sm:$0xff] %v11072
        %11105 = vst [vmem:[%s331 + $0x80] sm:$0xff] %v11073
        %11106 = vst [vmem:[%s331 + $0x88] sm:$0xff] %v11074
        %11107 = vst [vmem:[%s331 + $0x90] sm:$0xff] %v11075
        %11108 = vst [vmem:[%s331 + $0x98] sm:$0xff] %v11076
        %11109 = vst [vmem:[%s331 + $0xa0] sm:$0xff] %v11077
        %11110 = vst [vmem:[%s331 + $0xa8] sm:$0xff] %v11078
        %11111 = vst [vmem:[%s331 + $0xb0] sm:$0xff] %v11079
        %11112 = vst [vmem:[%s331 + $0xb8] sm:$0xff] %v11080
        %11113 = vst [vmem:[%s331 + $0xc0] sm:$0xff] %v11081
        %11114 = vst [vmem:[%s331 + $0xc8] sm:$0xff] %v11082
        %11115 = vst [vmem:[%s331 + $0xd0] sm:$0xff] %v11083
        %11116 = vst [vmem:[%s331 + $0xd8] sm:$0xff] %v11084
        %11117 = vst [vmem:[%s331 + $0xe0] sm:$0xff] %v11085
        %11118 = vst [vmem:[%s331 + $0xe8] sm:$0xff] %v11086
        %11119 = vst [vmem:[%s331 + $0xf0] sm:$0xff] %v11087
        %11120 = vst [vmem:[%s331 + $0xf8] sm:$0xff] %v11088
        %s11121 = sand.u32 %s185, 1
        %s11122 = scalar_lea.sflag [#allocation5], %s11121
        %s11123 = sand.u32 %s185, 1
        %s11124 = smul.addr %s11123, 256
        %s11125 = scalar_lea.vmem [#allocation9], %s11124
        // Predicated region
        $region61: #{tpu_custom_call.1} parent=47 // pred_check
          %p11126 = pneg %p195
        $region62: #{tpu_custom_call.1} parent=47 // pred_check_branch
          %11128 = sbr.rel (%p11126) target = $region64
        $region63: #{tpu_custom_call.1} parent=47 // pred_region
          %11130 = vsyncadd %s11122, 0
          %s11131 = smul.addr %s25, 32
          %s11132 = smul.addr %s11131, 8
          %s11133 = scalar_lea.hbm %s7, %s11132
          %s11134 = sshll.u32 %s11125, 4
          %s11135 = int_to_ptr.vmem [resolvable:$true] %s11134
          %s11136 = sshll.u32 %s11133, 4
          %s11137 = int_to_ptr.hbm [resolvable:$true] %s11136
          %11142 = dma.vmem_to_hbm [thread:$0]  %s11135, 4096, %s11137, %s11122, 128, 128, 8
        $region64: #{tpu_custom_call.1} parent=47 // pred_fallthru
          _
      $region48: #{tpu_custom_call.1} parent=5 // pred_fallthru
        _
      %p11143 = scmp.le.s32.totalorder 2, %s20
      // Predicated region
      $region65: #{tpu_custom_call.1} parent=5 // pred_check
        %p11144 = pneg %p11143
      $region66: #{tpu_custom_call.1} parent=5 // pred_check_branch
        %11146 = sbr.rel (%p11144) target = $region68
      $region67: #{tpu_custom_call.1} parent=5 // pred_region
        %s11147 = ssub.s32 %s20, 2
        // Predicated region
        $region69: #{tpu_custom_call.1} parent=67 // pred_check
          %p11148 = pneg %p201
        $region70: #{tpu_custom_call.1} parent=67 // pred_check_branch
          %11150 = sbr.rel (%p11148) target = $region72
        $region71: #{tpu_custom_call.1} parent=67 // pred_region
          %s11151 = sand.u32 %s186, 1
          %s11152 = scalar_lea.sflag [#allocation5], %s11151
          %s11153 = sand.u32 %s186, 1
          %s11154 = smul.addr %s11153, 256
          %s11155 = scalar_lea.vmem [#allocation9], %s11154
          %11157 = dma.done %s11152, 4096
        $region72: #{tpu_custom_call.1} parent=67 // pred_fallthru
          _
      $region68: #{tpu_custom_call.1} parent=5 // pred_fallthru
        _
    $region6: #{tpu_custom_call.1} parent=1 // loop_footer
      %s24 = sadd.s32 1, %s20
    $region7: #{tpu_custom_call.1} parent=1 // loop_footer_branch
      %19 = sbr.rel target = $region3
    $region8: #{tpu_custom_call.1} parent=1 // loop_exit
      _
    %11158 = vsyncpa [#allocation4], 1
    %s11159 = scalar_lea.sflag [#allocation4], 1
    %11160 = vsyncpa %s11159, 1
    %11161 = vsyncpa [#allocation7], 1
    %11162 = vsyncpa [#allocation5], 1
    %s11163 = scalar_lea.sflag [#allocation5], 1
    %11164 = vsyncpa %s11163, 1

</llo_original>
